<compile_context>
chip_gen: v7x
topology: tpu7x:2x2x1
jax: 0.10.0
libtpu: 0.0.40
codegen_flags: <defaults>
</compile_context>

<pallas_src>
import functools
import math

import jax
import jax.numpy as jnp
from jax import lax
from jax.experimental import pallas as pl
from jax.experimental.pallas import tpu as pltpu


# --------------------------------------------------------------------------
# in-kernel helpers
# --------------------------------------------------------------------------
def _layernorm(x, g, b, eps=1e-5):
    mu = jnp.mean(x, axis=-1, keepdims=True)
    var = jnp.mean((x - mu) ** 2, axis=-1, keepdims=True)
    return (x - mu) * lax.rsqrt(var + eps) * g + b


def _gelu_exact(x):
    # PyTorch TransformerEncoderLayer(activation='gelu') uses the exact erf GELU.
    return 0.5 * x * (1.0 + lax.erf(x * (1.0 / math.sqrt(2.0))))


def _encoder_branch(x, in_w_ref, bvec_ref, wqkv_ref, wsq_ref, lvec_ref,
                    *, nhead, layer_num):
    """input linear+ReLU -> `layer_num` post-LN encoder layers -> final LN -> mean over seq.

    x: (S, F_in).  Returns (1, D) pooled features.
    bvec_ref: (3, D)  rows = [input_bias, final_norm_gamma, final_norm_beta]
    wqkv_ref: (L, D, 3D)
    wsq_ref : (L, 3, D, D)  [out_proj_w, ffn1_w, ffn2_w]
    lvec_ref: (L, 10, D) rows = [bq, bk, bv, bo, ln1_g, ln1_b, b1, b2, ln2_g, ln2_b]
    """
    d = in_w_ref.shape[1]
    dh = d // nhead
    scale = 1.0 / math.sqrt(dh)
    bvec = bvec_ref[...]                                          # (3, D)

    # input projection + ReLU
    h = jnp.maximum(
        jnp.dot(x, in_w_ref[...], preferred_element_type=jnp.float32) + bvec[0:1, :],
        0.0)                                                      # (S, D)

    for l in range(layer_num):                                    # static layer loop (L small)
        wqkv = wqkv_ref[l]                                        # (D, 3D)
        wmat = wsq_ref[l]                                         # (3, D, D)
        vv = lvec_ref[l]                                          # (10, D)

        # ---- multi-head self-attention (single packed QKV matmul) ----
        qkv = jnp.dot(h, wqkv, preferred_element_type=jnp.float32)   # (S, 3D)
        q = (qkv[:, 0:d] + vv[0:1, :]) * scale
        k = qkv[:, d:2 * d] + vv[1:2, :]
        v = qkv[:, 2 * d:3 * d] + vv[2:3, :]

        wo = wmat[0]
        attn = jnp.zeros_like(h)
        for hh in range(nhead):                                   # static head loop (<=4)
            sl = slice(hh * dh, (hh + 1) * dh)
            s = lax.dot_general(q[:, sl], k[:, sl], (((1,), (1,)), ((), ())),
                                preferred_element_type=jnp.float32)           # (S, S)
            s = s - jnp.max(s, axis=-1, keepdims=True)
            p = jnp.exp(s)
            p = p * pl.reciprocal(jnp.sum(p, axis=-1, keepdims=True), approx=True)
            oh = jnp.dot(p, v[:, sl], preferred_element_type=jnp.float32)     # (S, dh)
            # concat-over-heads followed by out_proj == sum of per-head partials
            attn = attn + jnp.dot(oh, wo[sl, :], preferred_element_type=jnp.float32)
        attn = attn + vv[3:4, :]

        # residual + LayerNorm1 (post-LN, PyTorch default norm_first=False)
        y = _layernorm(h + attn, vv[4:5, :], vv[5:6, :])

        # feed-forward: linear1 -> GELU -> linear2
        f = _gelu_exact(jnp.dot(y, wmat[1], preferred_element_type=jnp.float32) + vv[6:7, :])
        f = jnp.dot(f, wmat[2], preferred_element_type=jnp.float32) + vv[7:8, :]
        h = _layernorm(y + f, vv[8:9, :], vv[9:10, :])

    # TransformerEncoder final norm, then mean over the sequence
    h = _layernorm(h, bvec[1:2, :], bvec[2:3, :])
    return jnp.mean(h, axis=0, keepdims=True)                     # (1, D)


# --------------------------------------------------------------------------
# Single fused kernel: whole forward pass, one grid step per batch element.
# --------------------------------------------------------------------------
def fused_forward_kernel(talk_ref, gaze_ref, candi_ref,
                         t_inw, t_bv, t_wqkv, t_wsq, t_lv,
                         g_inw, g_bv, g_wqkv, g_wsq, g_lv,
                         m_inw, m_bv, m_wqkv, m_wsq, m_lv,
                         clf_w_ref, clf_b_ref,
                         o_ref, *, heads, layer_num):
    pt = _encoder_branch(talk_ref[0], t_inw, t_bv, t_wqkv, t_wsq, t_lv,
                         nhead=heads[0], layer_num=layer_num)      # (1, Dt)
    pg = _encoder_branch(gaze_ref[0], g_inw, g_bv, g_wqkv, g_wsq, g_lv,
                         nhead=heads[1], layer_num=layer_num)      # (1, Dg)
    pm = _encoder_branch(candi_ref[0], m_inw, m_bv, m_wqkv, m_wsq, m_lv,
                         nhead=heads[2], layer_num=layer_num)      # (1, Dm)

    dt, dg, dm = pt.shape[1], pg.shape[1], pm.shape[1]
    w = clf_w_ref[...]                                             # (Dt+Dg+Dm, out)
    # concat([pt, pg, pm]) @ W  ==  sum of row-sliced partial matmuls (avoids lane concat)
    logits = (jnp.dot(pt, w[0:dt, :], preferred_element_type=jnp.float32)
              + jnp.dot(pg, w[dt:dt + dg, :], preferred_element_type=jnp.float32)
              + jnp.dot(pm, w[dt + dg:dt + dg + dm, :], preferred_element_type=jnp.float32)
              + clf_b_ref[...])
    o_ref[0] = jax.nn.sigmoid(logits)


def forward(params, cfg, talk, candi, right, middle, left):
    B, S, _ = talk.shape
    other_gaze = jnp.concatenate([right, middle, left], axis=2)

    def _bspec(shape):
        n = len(shape)
        return pl.BlockSpec(shape, lambda b: (0,) * n)

    t, g, m = params["talk"], params["gaze"], params["me"]
    weights = (t["in_w"], t["bvec"], t["wqkv"], t["wsq"], t["lvec"],
               g["in_w"], g["bvec"], g["wqkv"], g["wsq"], g["lvec"],
               m["in_w"], m["bvec"], m["wqkv"], m["wsq"], m["lvec"],
               params["clf_w"], params["clf_b"])

    out = pl.pallas_call(
        functools.partial(
            fused_forward_kernel,
            heads=(cfg["tfm_head_talk"], cfg["tfm_head_gaze"], cfg["head_me_gaze"]),
            layer_num=cfg["layer_num"]),
        out_shape=jax.ShapeDtypeStruct((B, 1, cfg["out_dim"]), jnp.float32),
        grid=(B,),
        in_specs=[pl.BlockSpec((1, S, talk.shape[2]), lambda b: (b, 0, 0)),
                  pl.BlockSpec((1, S, other_gaze.shape[2]), lambda b: (b, 0, 0)),
                  pl.BlockSpec((1, S, candi.shape[2]), lambda b: (b, 0, 0))]
                 + [_bspec(w.shape) for w in weights],
        out_specs=pl.BlockSpec((1, 1, cfg["out_dim"]), lambda b: (b, 0, 0)),
        compiler_params=pltpu.CompilerParams(dimension_semantics=("parallel",)),
    )(talk, other_gaze, candi, *weights)
    return out[:, 0, :]


# --------------------------------------------------------------------------
# Parameter init (deterministic, synthetic) — packed layout for the kernel.
# --------------------------------------------------------------------------
def _make_linear(key, fan_in, fan_out):
    kw, kb = jax.random.split(key)
    w = jax.random.normal(kw, (fan_in, fan_out), jnp.float32) * (1.0 / math.sqrt(fan_in))
    b = jax.random.normal(kb, (fan_out,), jnp.float32) * 0.01
    return w, b


def _make_encoder_layer(key, d):
    ks = jax.random.split(key, 6)
    wq, bq = _make_linear(ks[0], d, d)
    wk, bk = _make_linear(ks[1], d, d)
    wv, bv = _make_linear(ks[2], d, d)
    wo, bo = _make_linear(ks[3], d, d)
    w1, b1 = _make_linear(ks[4], d, d)     # dim_feedforward == d_model in the module
    w2, b2 = _make_linear(ks[5], d, d)
    ones = jnp.ones((d,), jnp.float32)
    zeros = jnp.zeros((d,), jnp.float32)
    wqkv = jnp.concatenate([wq, wk, wv], axis=1)                                   # (d, 3d)
    wsq = jnp.stack([wo, w1, w2], axis=0)                                          # (3, d, d)
    lvec = jnp.stack([bq, bk, bv, bo, ones, zeros, b1, b2, ones, zeros], axis=0)   # (10, d)
    return wqkv, wsq, lvec


def _make_branch(key, fan_in, d, layer_num):
    k_in, k_layers = jax.random.split(key)
    in_w, in_b = _make_linear(k_in, fan_in, d)
    per_layer = [_make_encoder_layer(k, d) for k in jax.random.split(k_layers, layer_num)]
    return dict(
        in_w=in_w,                                                                  # (fan_in, d)
        bvec=jnp.stack([in_b,
                        jnp.ones((d,), jnp.float32),
                        jnp.zeros((d,), jnp.float32)], axis=0),                     # (3, d)
        wqkv=jnp.stack([p[0] for p in per_layer], axis=0),                          # (L, d, 3d)
        wsq=jnp.stack([p[1] for p in per_layer], axis=0),                           # (L, 3, d, d)
        lvec=jnp.stack([p[2] for p in per_layer], axis=0))                          # (L, 10, d)


def init_params(key, cfg):
    k_talk, k_gaze, k_me, k_clf = jax.random.split(key, 4)
    total = cfg["talk_hidden"] + cfg["gaze_hidden"] + cfg["me_gaze_hidden"]
    clf_w, clf_b = _make_linear(k_clf, total, cfg["out_dim"])
    return dict(
        talk=_make_branch(k_talk, cfg["talk_fea"], cfg["talk_hidden"], cfg["layer_num"]),
        gaze=_make_branch(k_gaze, cfg["gaze_fea"] * 3, cfg["gaze_hidden"], cfg["layer_num"]),
        me=_make_branch(k_me, cfg["me_gaze_fea"], cfg["me_gaze_hidden"], cfg["layer_num"]),
        clf_w=clf_w,
        clf_b=clf_b.reshape(1, -1))


# --------------------------------------------------------------------------
if __name__ == "__main__":
    cfg = dict(talk_fea=6, talk_hidden=32,
               me_gaze_fea=4, me_gaze_hidden=16,
               gaze_fea=5, gaze_hidden=16,
               layer_num=2,
               tfm_head_talk=4, tfm_head_gaze=2, head_me_gaze=2,
               out_dim=3)
    B, S = 2, 8

    root = jax.random.PRNGKey(0)
    k_param, k_talk, k_candi, k_r, k_m, k_l = jax.random.split(root, 6)
    params = init_params(k_param, cfg)

    talk = jax.random.normal(k_talk, (B, S, cfg["talk_fea"]), jnp.float32)
    candi = jax.random.normal(k_candi, (B, S, cfg["me_gaze_fea"]), jnp.float32)
    right = jax.random.normal(k_r, (B, S, cfg["gaze_fea"]), jnp.float32)
    middle = jax.random.normal(k_m, (B, S, cfg["gaze_fea"]), jnp.float32)
    left = jax.random.normal(k_l, (B, S, cfg["gaze_fea"]), jnp.float32)

    fwd = jax.jit(lambda tk, cd, r, mi, le: forward(params, cfg, tk, cd, r, mi, le))
    out = fwd(talk, candi, right, middle, left)
    out = jax.block_until_ready(out)
    assert out.shape == (B, cfg["out_dim"])
    assert bool(jnp.all(jnp.isfinite(out)))
    # TODO(synk): dropout layers (p=0.2) are identity here (inference / eval mode).
    print("KERNEL_OK")
</pallas_src>

<mosaic_0001>
module attributes {stable_mosaic.version = 11 : i64} {
  func.func @fused_forward_kernel(%arg0: i32, %arg1: memref<1x8x6xf32, #tpu.memory_space<vmem>>, %arg2: memref<1x8x15xf32, #tpu.memory_space<vmem>>, %arg3: memref<1x8x4xf32, #tpu.memory_space<vmem>>, %arg4: memref<6x32xf32, #tpu.memory_space<vmem>>, %arg5: memref<3x32xf32, #tpu.memory_space<vmem>>, %arg6: memref<2x32x96xf32, #tpu.memory_space<vmem>>, %arg7: memref<2x3x32x32xf32, #tpu.memory_space<vmem>>, %arg8: memref<2x10x32xf32, #tpu.memory_space<vmem>>, %arg9: memref<15x16xf32, #tpu.memory_space<vmem>>, %arg10: memref<3x16xf32, #tpu.memory_space<vmem>>, %arg11: memref<2x16x48xf32, #tpu.memory_space<vmem>>, %arg12: memref<2x3x16x16xf32, #tpu.memory_space<vmem>>, %arg13: memref<2x10x16xf32, #tpu.memory_space<vmem>>, %arg14: memref<4x16xf32, #tpu.memory_space<vmem>>, %arg15: memref<3x16xf32, #tpu.memory_space<vmem>>, %arg16: memref<2x16x48xf32, #tpu.memory_space<vmem>>, %arg17: memref<2x3x16x16xf32, #tpu.memory_space<vmem>>, %arg18: memref<2x10x16xf32, #tpu.memory_space<vmem>>, %arg19: memref<64x3xf32, #tpu.memory_space<vmem>>, %arg20: memref<1x3xf32, #tpu.memory_space<vmem>>, %arg21: memref<1x1x3xf32, #tpu.memory_space<vmem>>) attributes {dimension_semantics = [#tpu.dimension_semantics<parallel>], iteration_bounds = array<i64: 2>, scalar_prefetch = 0 : i64, scratch_operands = 0 : i64, tpu.core_type = #tpu.core_type<tc>, window_params = [{transform_indices = @transform_0, window_bounds = array<i64: 1, 8, 6>}, {transform_indices = @transform_1, window_bounds = array<i64: 1, 8, 15>}, {transform_indices = @transform_2, window_bounds = array<i64: 1, 8, 4>}, {pipeline_mode = #tpu.pipeline_mode<synchronous>, transform_indices = @transform_3, window_bounds = array<i64: 6, 32>}, {pipeline_mode = #tpu.pipeline_mode<synchronous>, transform_indices = @transform_4, window_bounds = array<i64: 3, 32>}, {pipeline_mode = #tpu.pipeline_mode<synchronous>, transform_indices = @transform_5, window_bounds = array<i64: 2, 32, 96>}, {pipeline_mode = #tpu.pipeline_mode<synchronous>, transform_indices = @transform_6, window_bounds = array<i64: 2, 3, 32, 32>}, {pipeline_mode = #tpu.pipeline_mode<synchronous>, transform_indices = @transform_7, window_bounds = array<i64: 2, 10, 32>}, {pipeline_mode = #tpu.pipeline_mode<synchronous>, transform_indices = @transform_8, window_bounds = array<i64: 15, 16>}, {pipeline_mode = #tpu.pipeline_mode<synchronous>, transform_indices = @transform_9, window_bounds = array<i64: 3, 16>}, {pipeline_mode = #tpu.pipeline_mode<synchronous>, transform_indices = @transform_10, window_bounds = array<i64: 2, 16, 48>}, {pipeline_mode = #tpu.pipeline_mode<synchronous>, transform_indices = @transform_11, window_bounds = array<i64: 2, 3, 16, 16>}, {pipeline_mode = #tpu.pipeline_mode<synchronous>, transform_indices = @transform_12, window_bounds = array<i64: 2, 10, 16>}, {pipeline_mode = #tpu.pipeline_mode<synchronous>, transform_indices = @transform_13, window_bounds = array<i64: 4, 16>}, {pipeline_mode = #tpu.pipeline_mode<synchronous>, transform_indices = @transform_14, window_bounds = array<i64: 3, 16>}, {pipeline_mode = #tpu.pipeline_mode<synchronous>, transform_indices = @transform_15, window_bounds = array<i64: 2, 16, 48>}, {pipeline_mode = #tpu.pipeline_mode<synchronous>, transform_indices = @transform_16, window_bounds = array<i64: 2, 3, 16, 16>}, {pipeline_mode = #tpu.pipeline_mode<synchronous>, transform_indices = @transform_17, window_bounds = array<i64: 2, 10, 16>}, {pipeline_mode = #tpu.pipeline_mode<synchronous>, transform_indices = @transform_18, window_bounds = array<i64: 64, 3>}, {pipeline_mode = #tpu.pipeline_mode<synchronous>, transform_indices = @transform_19, window_bounds = array<i64: 1, 3>}, {transform_indices = @transform_20, window_bounds = array<i64: 1, 1, 3>}]} {
    %c0 = arith.constant 0 : index
    %c0_0 = arith.constant 0 : index
    %c0_1 = arith.constant 0 : index
    %0 = vector.load %arg1[%c0, %c0_0, %c0_1] : memref<1x8x6xf32, #tpu.memory_space<vmem>>, vector<1x8x6xf32>
    %1 = vector.shape_cast %0 : vector<1x8x6xf32> to vector<8x6xf32>
    %c0_2 = arith.constant 0 : index
    %c0_3 = arith.constant 0 : index
    %2 = vector.load %arg5[%c0_2, %c0_3] : memref<3x32xf32, #tpu.memory_space<vmem>>, vector<3x32xf32>
    %c0_4 = arith.constant 0 : index
    %c0_5 = arith.constant 0 : index
    %3 = vector.load %arg4[%c0_4, %c0_5] : memref<6x32xf32, #tpu.memory_space<vmem>>, vector<6x32xf32>
    %cst = arith.constant dense<0.000000e+00> : vector<8x32xf32>
    %4 = tpu.matmul %1, %3, %cst {dimension_numbers = #tpu.dot_dimension_numbers<[1], [0], [0], [1], [0, 0, 1, 1], [], []>} : vector<8x6xf32>, vector<6x32xf32>, vector<8x32xf32> -> vector<8x32xf32>
    %5 = vector.extract_strided_slice %2 {offsets = [0, 0], sizes = [1, 32], strides = [1, 1]} : vector<3x32xf32> to vector<1x32xf32>
    %6 = vector.broadcast %5 : vector<1x32xf32> to vector<8x32xf32>
    %7 = arith.addf %4, %6 : vector<8x32xf32>
    %cst_6 = arith.constant 0.000000e+00 : f32
    %8 = vector.broadcast %cst_6 : f32 to vector<8x32xf32>
    %9 = arith.maximumf %7, %8 : vector<8x32xf32>
    %c0_7 = arith.constant 0 : index
    %c0_8 = arith.constant 0 : index
    %c0_9 = arith.constant 0 : index
    %10 = vector.load %arg6[%c0_7, %c0_8, %c0_9] : memref<2x32x96xf32, #tpu.memory_space<vmem>>, vector<1x32x96xf32>
    %11 = vector.shape_cast %10 : vector<1x32x96xf32> to vector<32x96xf32>
    %c0_10 = arith.constant 0 : index
    %c0_11 = arith.constant 0 : index
    %c0_12 = arith.constant 0 : index
    %c0_13 = arith.constant 0 : index
    %12 = vector.load %arg7[%c0_10, %c0_11, %c0_12, %c0_13] : memref<2x3x32x32xf32, #tpu.memory_space<vmem>>, vector<1x3x32x32xf32>
    %13 = vector.shape_cast %12 : vector<1x3x32x32xf32> to vector<3x32x32xf32>
    %c0_14 = arith.constant 0 : index
    %c0_15 = arith.constant 0 : index
    %c0_16 = arith.constant 0 : index
    %14 = vector.load %arg8[%c0_14, %c0_15, %c0_16] : memref<2x10x32xf32, #tpu.memory_space<vmem>>, vector<1x10x32xf32>
    %15 = vector.shape_cast %14 : vector<1x10x32xf32> to vector<10x32xf32>
    %cst_17 = arith.constant dense<0.000000e+00> : vector<8x96xf32>
    %16 = tpu.matmul %9, %11, %cst_17 {dimension_numbers = #tpu.dot_dimension_numbers<[1], [0], [0], [1], [0, 0, 1, 1], [], []>} : vector<8x32xf32>, vector<32x96xf32>, vector<8x96xf32> -> vector<8x96xf32>
    %17 = vector.extract_strided_slice %16 {offsets = [0, 0], sizes = [8, 32], strides = [1, 1]} : vector<8x96xf32> to vector<8x32xf32>
    %18 = vector.extract_strided_slice %15 {offsets = [0, 0], sizes = [1, 32], strides = [1, 1]} : vector<10x32xf32> to vector<1x32xf32>
    %19 = vector.broadcast %18 : vector<1x32xf32> to vector<8x32xf32>
    %20 = arith.addf %17, %19 : vector<8x32xf32>
    %cst_18 = arith.constant 0.353553385 : f32
    %21 = vector.broadcast %cst_18 : f32 to vector<8x32xf32>
    %22 = arith.mulf %20, %21 : vector<8x32xf32>
    %23 = vector.extract_strided_slice %16 {offsets = [0, 32], sizes = [8, 32], strides = [1, 1]} : vector<8x96xf32> to vector<8x32xf32>
    %24 = vector.extract_strided_slice %15 {offsets = [1, 0], sizes = [1, 32], strides = [1, 1]} : vector<10x32xf32> to vector<1x32xf32>
    %25 = vector.broadcast %24 : vector<1x32xf32> to vector<8x32xf32>
    %26 = arith.addf %23, %25 : vector<8x32xf32>
    %27 = vector.extract_strided_slice %16 {offsets = [0, 64], sizes = [8, 32], strides = [1, 1]} : vector<8x96xf32> to vector<8x32xf32>
    %28 = vector.extract_strided_slice %15 {offsets = [2, 0], sizes = [1, 32], strides = [1, 1]} : vector<10x32xf32> to vector<1x32xf32>
    %29 = vector.broadcast %28 : vector<1x32xf32> to vector<8x32xf32>
    %30 = arith.addf %27, %29 : vector<8x32xf32>
    %31 = vector.extract_strided_slice %13 {offsets = [0, 0, 0], sizes = [1, 32, 32], strides = [1, 1, 1]} : vector<3x32x32xf32> to vector<1x32x32xf32>
    %32 = vector.shape_cast %31 : vector<1x32x32xf32> to vector<32x32xf32>
    %cst_19 = arith.constant 0.000000e+00 : f32
    %33 = vector.broadcast %cst_19 : f32 to vector<8x32xf32>
    %34 = vector.extract_strided_slice %22 {offsets = [0, 0], sizes = [8, 8], strides = [1, 1]} : vector<8x32xf32> to vector<8x8xf32>
    %35 = vector.extract_strided_slice %26 {offsets = [0, 0], sizes = [8, 8], strides = [1, 1]} : vector<8x32xf32> to vector<8x8xf32>
    %cst_20 = arith.constant dense<0.000000e+00> : vector<8x8xf32>
    %36 = tpu.matmul %34, %35, %cst_20 {dimension_numbers = #tpu.dot_dimension_numbers<[1], [1], [0], [0], [0, 0, 1, 0], [], []>} : vector<8x8xf32>, vector<8x8xf32>, vector<8x8xf32> -> vector<8x8xf32>
    %cst_21 = arith.constant dense<0xFF800000> : vector<8xf32>
    %37 = vector.multi_reduction <maximumf>, %36, %cst_21 [1] : vector<8x8xf32> to vector<8xf32>
    %38 = vector.shape_cast %37 : vector<8xf32> to vector<8x1xf32>
    %39 = vector.broadcast %38 : vector<8x1xf32> to vector<8x8xf32>
    %40 = arith.subf %36, %39 : vector<8x8xf32>
    %41 = math.exp %40 : vector<8x8xf32>
    %cst_22 = arith.constant dense<0.000000e+00> : vector<8xf32>
    %42 = vector.multi_reduction <add>, %41, %cst_22 [1] : vector<8x8xf32> to vector<8xf32>
    %43 = vector.shape_cast %42 : vector<8xf32> to vector<8x1xf32>
    %44 = tpu.reciprocal %43 {approx = true} : vector<8x1xf32> -> vector<8x1xf32>
    %45 = vector.broadcast %44 : vector<8x1xf32> to vector<8x8xf32>
    %46 = arith.mulf %41, %45 : vector<8x8xf32>
    %47 = vector.extract_strided_slice %30 {offsets = [0, 0], sizes = [8, 8], strides = [1, 1]} : vector<8x32xf32> to vector<8x8xf32>
    %cst_23 = arith.constant dense<0.000000e+00> : vector<8x8xf32>
    %48 = tpu.matmul %46, %47, %cst_23 {dimension_numbers = #tpu.dot_dimension_numbers<[1], [0], [0], [1], [0, 0, 1, 1], [], []>} : vector<8x8xf32>, vector<8x8xf32>, vector<8x8xf32> -> vector<8x8xf32>
    %49 = vector.extract_strided_slice %32 {offsets = [0, 0], sizes = [8, 32], strides = [1, 1]} : vector<32x32xf32> to vector<8x32xf32>
    %cst_24 = arith.constant dense<0.000000e+00> : vector<8x32xf32>
    %50 = tpu.matmul %48, %49, %cst_24 {dimension_numbers = #tpu.dot_dimension_numbers<[1], [0], [0], [1], [0, 0, 1, 1], [], []>} : vector<8x8xf32>, vector<8x32xf32>, vector<8x32xf32> -> vector<8x32xf32>
    %51 = arith.addf %33, %50 : vector<8x32xf32>
    %52 = vector.extract_strided_slice %22 {offsets = [0, 8], sizes = [8, 8], strides = [1, 1]} : vector<8x32xf32> to vector<8x8xf32>
    %53 = vector.extract_strided_slice %26 {offsets = [0, 8], sizes = [8, 8], strides = [1, 1]} : vector<8x32xf32> to vector<8x8xf32>
    %cst_25 = arith.constant dense<0.000000e+00> : vector<8x8xf32>
    %54 = tpu.matmul %52, %53, %cst_25 {dimension_numbers = #tpu.dot_dimension_numbers<[1], [1], [0], [0], [0, 0, 1, 0], [], []>} : vector<8x8xf32>, vector<8x8xf32>, vector<8x8xf32> -> vector<8x8xf32>
    %cst_26 = arith.constant dense<0xFF800000> : vector<8xf32>
    %55 = vector.multi_reduction <maximumf>, %54, %cst_26 [1] : vector<8x8xf32> to vector<8xf32>
    %56 = vector.shape_cast %55 : vector<8xf32> to vector<8x1xf32>
    %57 = vector.broadcast %56 : vector<8x1xf32> to vector<8x8xf32>
    %58 = arith.subf %54, %57 : vector<8x8xf32>
    %59 = math.exp %58 : vector<8x8xf32>
    %cst_27 = arith.constant dense<0.000000e+00> : vector<8xf32>
    %60 = vector.multi_reduction <add>, %59, %cst_27 [1] : vector<8x8xf32> to vector<8xf32>
    %61 = vector.shape_cast %60 : vector<8xf32> to vector<8x1xf32>
    %62 = tpu.reciprocal %61 {approx = true} : vector<8x1xf32> -> vector<8x1xf32>
    %63 = vector.broadcast %62 : vector<8x1xf32> to vector<8x8xf32>
    %64 = arith.mulf %59, %63 : vector<8x8xf32>
    %65 = vector.extract_strided_slice %30 {offsets = [0, 8], sizes = [8, 8], strides = [1, 1]} : vector<8x32xf32> to vector<8x8xf32>
    %cst_28 = arith.constant dense<0.000000e+00> : vector<8x8xf32>
    %66 = tpu.matmul %64, %65, %cst_28 {dimension_numbers = #tpu.dot_dimension_numbers<[1], [0], [0], [1], [0, 0, 1, 1], [], []>} : vector<8x8xf32>, vector<8x8xf32>, vector<8x8xf32> -> vector<8x8xf32>
    %67 = vector.extract_strided_slice %32 {offsets = [8, 0], sizes = [8, 32], strides = [1, 1]} : vector<32x32xf32> to vector<8x32xf32>
    %cst_29 = arith.constant dense<0.000000e+00> : vector<8x32xf32>
    %68 = tpu.matmul %66, %67, %cst_29 {dimension_numbers = #tpu.dot_dimension_numbers<[1], [0], [0], [1], [0, 0, 1, 1], [], []>} : vector<8x8xf32>, vector<8x32xf32>, vector<8x32xf32> -> vector<8x32xf32>
    %69 = arith.addf %51, %68 : vector<8x32xf32>
    %70 = vector.extract_strided_slice %22 {offsets = [0, 16], sizes = [8, 8], strides = [1, 1]} : vector<8x32xf32> to vector<8x8xf32>
    %71 = vector.extract_strided_slice %26 {offsets = [0, 16], sizes = [8, 8], strides = [1, 1]} : vector<8x32xf32> to vector<8x8xf32>
    %cst_30 = arith.constant dense<0.000000e+00> : vector<8x8xf32>
    %72 = tpu.matmul %70, %71, %cst_30 {dimension_numbers = #tpu.dot_dimension_numbers<[1], [1], [0], [0], [0, 0, 1, 0], [], []>} : vector<8x8xf32>, vector<8x8xf32>, vector<8x8xf32> -> vector<8x8xf32>
    %cst_31 = arith.constant dense<0xFF800000> : vector<8xf32>
    %73 = vector.multi_reduction <maximumf>, %72, %cst_31 [1] : vector<8x8xf32> to vector<8xf32>
    %74 = vector.shape_cast %73 : vector<8xf32> to vector<8x1xf32>
    %75 = vector.broadcast %74 : vector<8x1xf32> to vector<8x8xf32>
    %76 = arith.subf %72, %75 : vector<8x8xf32>
    %77 = math.exp %76 : vector<8x8xf32>
    %cst_32 = arith.constant dense<0.000000e+00> : vector<8xf32>
    %78 = vector.multi_reduction <add>, %77, %cst_32 [1] : vector<8x8xf32> to vector<8xf32>
    %79 = vector.shape_cast %78 : vector<8xf32> to vector<8x1xf32>
    %80 = tpu.reciprocal %79 {approx = true} : vector<8x1xf32> -> vector<8x1xf32>
    %81 = vector.broadcast %80 : vector<8x1xf32> to vector<8x8xf32>
    %82 = arith.mulf %77, %81 : vector<8x8xf32>
    %83 = vector.extract_strided_slice %30 {offsets = [0, 16], sizes = [8, 8], strides = [1, 1]} : vector<8x32xf32> to vector<8x8xf32>
    %cst_33 = arith.constant dense<0.000000e+00> : vector<8x8xf32>
    %84 = tpu.matmul %82, %83, %cst_33 {dimension_numbers = #tpu.dot_dimension_numbers<[1], [0], [0], [1], [0, 0, 1, 1], [], []>} : vector<8x8xf32>, vector<8x8xf32>, vector<8x8xf32> -> vector<8x8xf32>
    %85 = vector.extract_strided_slice %32 {offsets = [16, 0], sizes = [8, 32], strides = [1, 1]} : vector<32x32xf32> to vector<8x32xf32>
    %cst_34 = arith.constant dense<0.000000e+00> : vector<8x32xf32>
    %86 = tpu.matmul %84, %85, %cst_34 {dimension_numbers = #tpu.dot_dimension_numbers<[1], [0], [0], [1], [0, 0, 1, 1], [], []>} : vector<8x8xf32>, vector<8x32xf32>, vector<8x32xf32> -> vector<8x32xf32>
    %87 = arith.addf %69, %86 : vector<8x32xf32>
    %88 = vector.extract_strided_slice %22 {offsets = [0, 24], sizes = [8, 8], strides = [1, 1]} : vector<8x32xf32> to vector<8x8xf32>
    %89 = vector.extract_strided_slice %26 {offsets = [0, 24], sizes = [8, 8], strides = [1, 1]} : vector<8x32xf32> to vector<8x8xf32>
    %cst_35 = arith.constant dense<0.000000e+00> : vector<8x8xf32>
    %90 = tpu.matmul %88, %89, %cst_35 {dimension_numbers = #tpu.dot_dimension_numbers<[1], [1], [0], [0], [0, 0, 1, 0], [], []>} : vector<8x8xf32>, vector<8x8xf32>, vector<8x8xf32> -> vector<8x8xf32>
    %cst_36 = arith.constant dense<0xFF800000> : vector<8xf32>
    %91 = vector.multi_reduction <maximumf>, %90, %cst_36 [1] : vector<8x8xf32> to vector<8xf32>
    %92 = vector.shape_cast %91 : vector<8xf32> to vector<8x1xf32>
    %93 = vector.broadcast %92 : vector<8x1xf32> to vector<8x8xf32>
    %94 = arith.subf %90, %93 : vector<8x8xf32>
    %95 = math.exp %94 : vector<8x8xf32>
    %cst_37 = arith.constant dense<0.000000e+00> : vector<8xf32>
    %96 = vector.multi_reduction <add>, %95, %cst_37 [1] : vector<8x8xf32> to vector<8xf32>
    %97 = vector.shape_cast %96 : vector<8xf32> to vector<8x1xf32>
    %98 = tpu.reciprocal %97 {approx = true} : vector<8x1xf32> -> vector<8x1xf32>
    %99 = vector.broadcast %98 : vector<8x1xf32> to vector<8x8xf32>
    %100 = arith.mulf %95, %99 : vector<8x8xf32>
    %101 = vector.extract_strided_slice %30 {offsets = [0, 24], sizes = [8, 8], strides = [1, 1]} : vector<8x32xf32> to vector<8x8xf32>
    %cst_38 = arith.constant dense<0.000000e+00> : vector<8x8xf32>
    %102 = tpu.matmul %100, %101, %cst_38 {dimension_numbers = #tpu.dot_dimension_numbers<[1], [0], [0], [1], [0, 0, 1, 1], [], []>} : vector<8x8xf32>, vector<8x8xf32>, vector<8x8xf32> -> vector<8x8xf32>
    %103 = vector.extract_strided_slice %32 {offsets = [24, 0], sizes = [8, 32], strides = [1, 1]} : vector<32x32xf32> to vector<8x32xf32>
    %cst_39 = arith.constant dense<0.000000e+00> : vector<8x32xf32>
    %104 = tpu.matmul %102, %103, %cst_39 {dimension_numbers = #tpu.dot_dimension_numbers<[1], [0], [0], [1], [0, 0, 1, 1], [], []>} : vector<8x8xf32>, vector<8x32xf32>, vector<8x32xf32> -> vector<8x32xf32>
    %105 = arith.addf %87, %104 : vector<8x32xf32>
    %106 = vector.extract_strided_slice %15 {offsets = [3, 0], sizes = [1, 32], strides = [1, 1]} : vector<10x32xf32> to vector<1x32xf32>
    %107 = vector.broadcast %106 : vector<1x32xf32> to vector<8x32xf32>
    %108 = arith.addf %105, %107 : vector<8x32xf32>
    %109 = arith.addf %9, %108 : vector<8x32xf32>
    %110 = vector.extract_strided_slice %15 {offsets = [4, 0], sizes = [1, 32], strides = [1, 1]} : vector<10x32xf32> to vector<1x32xf32>
    %111 = vector.extract_strided_slice %15 {offsets = [5, 0], sizes = [1, 32], strides = [1, 1]} : vector<10x32xf32> to vector<1x32xf32>
    %cst_40 = arith.constant dense<0.000000e+00> : vector<8xf32>
    %112 = vector.multi_reduction <add>, %109, %cst_40 [1] : vector<8x32xf32> to vector<8xf32>
    %113 = vector.shape_cast %112 : vector<8xf32> to vector<8x1xf32>
    %cst_41 = arith.constant 3.200000e+01 : f32
    %114 = vector.broadcast %cst_41 : f32 to vector<8x1xf32>
    %115 = arith.divf %113, %114 : vector<8x1xf32>
    %116 = vector.broadcast %115 : vector<8x1xf32> to vector<8x32xf32>
    %117 = arith.subf %109, %116 : vector<8x32xf32>
    %118 = arith.mulf %117, %117 : vector<8x32xf32>
    %cst_42 = arith.constant dense<0.000000e+00> : vector<8xf32>
    %119 = vector.multi_reduction <add>, %118, %cst_42 [1] : vector<8x32xf32> to vector<8xf32>
    %120 = vector.shape_cast %119 : vector<8xf32> to vector<8x1xf32>
    %cst_43 = arith.constant 3.200000e+01 : f32
    %121 = vector.broadcast %cst_43 : f32 to vector<8x1xf32>
    %122 = arith.divf %120, %121 : vector<8x1xf32>
    %123 = vector.broadcast %115 : vector<8x1xf32> to vector<8x32xf32>
    %124 = arith.subf %109, %123 : vector<8x32xf32>
    %cst_44 = arith.constant 9.99999974E-6 : f32
    %125 = vector.broadcast %cst_44 : f32 to vector<8x1xf32>
    %126 = arith.addf %122, %125 : vector<8x1xf32>
    %127 = math.rsqrt %126 : vector<8x1xf32>
    %128 = vector.broadcast %127 : vector<8x1xf32> to vector<8x32xf32>
    %129 = arith.mulf %124, %128 : vector<8x32xf32>
    %130 = vector.broadcast %110 : vector<1x32xf32> to vector<8x32xf32>
    %131 = arith.mulf %129, %130 : vector<8x32xf32>
    %132 = vector.broadcast %111 : vector<1x32xf32> to vector<8x32xf32>
    %133 = arith.addf %131, %132 : vector<8x32xf32>
    %134 = vector.extract_strided_slice %13 {offsets = [1, 0, 0], sizes = [1, 32, 32], strides = [1, 1, 1]} : vector<3x32x32xf32> to vector<1x32x32xf32>
    %135 = vector.shape_cast %134 : vector<1x32x32xf32> to vector<32x32xf32>
    %cst_45 = arith.constant dense<0.000000e+00> : vector<8x32xf32>
    %136 = tpu.matmul %133, %135, %cst_45 {dimension_numbers = #tpu.dot_dimension_numbers<[1], [0], [0], [1], [0, 0, 1, 1], [], []>} : vector<8x32xf32>, vector<32x32xf32>, vector<8x32xf32> -> vector<8x32xf32>
    %137 = vector.extract_strided_slice %15 {offsets = [6, 0], sizes = [1, 32], strides = [1, 1]} : vector<10x32xf32> to vector<1x32xf32>
    %138 = vector.broadcast %137 : vector<1x32xf32> to vector<8x32xf32>
    %139 = arith.addf %136, %138 : vector<8x32xf32>
    %cst_46 = arith.constant 5.000000e-01 : f32
    %140 = vector.broadcast %cst_46 : f32 to vector<8x32xf32>
    %141 = arith.mulf %140, %139 : vector<8x32xf32>
    %cst_47 = arith.constant 0.707106769 : f32
    %142 = vector.broadcast %cst_47 : f32 to vector<8x32xf32>
    %143 = arith.mulf %139, %142 : vector<8x32xf32>
    %144 = math.erf %143 : vector<8x32xf32>
    %cst_48 = arith.constant 1.000000e+00 : f32
    %145 = vector.broadcast %cst_48 : f32 to vector<8x32xf32>
    %146 = arith.addf %145, %144 : vector<8x32xf32>
    %147 = arith.mulf %141, %146 : vector<8x32xf32>
    %148 = vector.extract_strided_slice %13 {offsets = [2, 0, 0], sizes = [1, 32, 32], strides = [1, 1, 1]} : vector<3x32x32xf32> to vector<1x32x32xf32>
    %149 = vector.shape_cast %148 : vector<1x32x32xf32> to vector<32x32xf32>
    %cst_49 = arith.constant dense<0.000000e+00> : vector<8x32xf32>
    %150 = tpu.matmul %147, %149, %cst_49 {dimension_numbers = #tpu.dot_dimension_numbers<[1], [0], [0], [1], [0, 0, 1, 1], [], []>} : vector<8x32xf32>, vector<32x32xf32>, vector<8x32xf32> -> vector<8x32xf32>
    %151 = vector.extract_strided_slice %15 {offsets = [7, 0], sizes = [1, 32], strides = [1, 1]} : vector<10x32xf32> to vector<1x32xf32>
    %152 = vector.broadcast %151 : vector<1x32xf32> to vector<8x32xf32>
    %153 = arith.addf %150, %152 : vector<8x32xf32>
    %154 = arith.addf %133, %153 : vector<8x32xf32>
    %155 = vector.extract_strided_slice %15 {offsets = [8, 0], sizes = [1, 32], strides = [1, 1]} : vector<10x32xf32> to vector<1x32xf32>
    %156 = vector.extract_strided_slice %15 {offsets = [9, 0], sizes = [1, 32], strides = [1, 1]} : vector<10x32xf32> to vector<1x32xf32>
    %cst_50 = arith.constant dense<0.000000e+00> : vector<8xf32>
    %157 = vector.multi_reduction <add>, %154, %cst_50 [1] : vector<8x32xf32> to vector<8xf32>
    %158 = vector.shape_cast %157 : vector<8xf32> to vector<8x1xf32>
    %cst_51 = arith.constant 3.200000e+01 : f32
    %159 = vector.broadcast %cst_51 : f32 to vector<8x1xf32>
    %160 = arith.divf %158, %159 : vector<8x1xf32>
    %161 = vector.broadcast %160 : vector<8x1xf32> to vector<8x32xf32>
    %162 = arith.subf %154, %161 : vector<8x32xf32>
    %163 = arith.mulf %162, %162 : vector<8x32xf32>
    %cst_52 = arith.constant dense<0.000000e+00> : vector<8xf32>
    %164 = vector.multi_reduction <add>, %163, %cst_52 [1] : vector<8x32xf32> to vector<8xf32>
    %165 = vector.shape_cast %164 : vector<8xf32> to vector<8x1xf32>
    %cst_53 = arith.constant 3.200000e+01 : f32
    %166 = vector.broadcast %cst_53 : f32 to vector<8x1xf32>
    %167 = arith.divf %165, %166 : vector<8x1xf32>
    %168 = vector.broadcast %160 : vector<8x1xf32> to vector<8x32xf32>
    %169 = arith.subf %154, %168 : vector<8x32xf32>
    %cst_54 = arith.constant 9.99999974E-6 : f32
    %170 = vector.broadcast %cst_54 : f32 to vector<8x1xf32>
    %171 = arith.addf %167, %170 : vector<8x1xf32>
    %172 = math.rsqrt %171 : vector<8x1xf32>
    %173 = vector.broadcast %172 : vector<8x1xf32> to vector<8x32xf32>
    %174 = arith.mulf %169, %173 : vector<8x32xf32>
    %175 = vector.broadcast %155 : vector<1x32xf32> to vector<8x32xf32>
    %176 = arith.mulf %174, %175 : vector<8x32xf32>
    %177 = vector.broadcast %156 : vector<1x32xf32> to vector<8x32xf32>
    %178 = arith.addf %176, %177 : vector<8x32xf32>
    %c1 = arith.constant 1 : index
    %c0_55 = arith.constant 0 : index
    %c0_56 = arith.constant 0 : index
    %179 = vector.load %arg6[%c1, %c0_55, %c0_56] : memref<2x32x96xf32, #tpu.memory_space<vmem>>, vector<1x32x96xf32>
    %180 = vector.shape_cast %179 : vector<1x32x96xf32> to vector<32x96xf32>
    %c1_57 = arith.constant 1 : index
    %c0_58 = arith.constant 0 : index
    %c0_59 = arith.constant 0 : index
    %c0_60 = arith.constant 0 : index
    %181 = vector.load %arg7[%c1_57, %c0_58, %c0_59, %c0_60] : memref<2x3x32x32xf32, #tpu.memory_space<vmem>>, vector<1x3x32x32xf32>
    %182 = vector.shape_cast %181 : vector<1x3x32x32xf32> to vector<3x32x32xf32>
    %c1_61 = arith.constant 1 : index
    %c0_62 = arith.constant 0 : index
    %c0_63 = arith.constant 0 : index
    %183 = vector.load %arg8[%c1_61, %c0_62, %c0_63] : memref<2x10x32xf32, #tpu.memory_space<vmem>>, vector<1x10x32xf32>
    %184 = vector.shape_cast %183 : vector<1x10x32xf32> to vector<10x32xf32>
    %cst_64 = arith.constant dense<0.000000e+00> : vector<8x96xf32>
    %185 = tpu.matmul %178, %180, %cst_64 {dimension_numbers = #tpu.dot_dimension_numbers<[1], [0], [0], [1], [0, 0, 1, 1], [], []>} : vector<8x32xf32>, vector<32x96xf32>, vector<8x96xf32> -> vector<8x96xf32>
    %186 = vector.extract_strided_slice %185 {offsets = [0, 0], sizes = [8, 32], strides = [1, 1]} : vector<8x96xf32> to vector<8x32xf32>
    %187 = vector.extract_strided_slice %184 {offsets = [0, 0], sizes = [1, 32], strides = [1, 1]} : vector<10x32xf32> to vector<1x32xf32>
    %188 = vector.broadcast %187 : vector<1x32xf32> to vector<8x32xf32>
    %189 = arith.addf %186, %188 : vector<8x32xf32>
    %cst_65 = arith.constant 0.353553385 : f32
    %190 = vector.broadcast %cst_65 : f32 to vector<8x32xf32>
    %191 = arith.mulf %189, %190 : vector<8x32xf32>
    %192 = vector.extract_strided_slice %185 {offsets = [0, 32], sizes = [8, 32], strides = [1, 1]} : vector<8x96xf32> to vector<8x32xf32>
    %193 = vector.extract_strided_slice %184 {offsets = [1, 0], sizes = [1, 32], strides = [1, 1]} : vector<10x32xf32> to vector<1x32xf32>
    %194 = vector.broadcast %193 : vector<1x32xf32> to vector<8x32xf32>
    %195 = arith.addf %192, %194 : vector<8x32xf32>
    %196 = vector.extract_strided_slice %185 {offsets = [0, 64], sizes = [8, 32], strides = [1, 1]} : vector<8x96xf32> to vector<8x32xf32>
    %197 = vector.extract_strided_slice %184 {offsets = [2, 0], sizes = [1, 32], strides = [1, 1]} : vector<10x32xf32> to vector<1x32xf32>
    %198 = vector.broadcast %197 : vector<1x32xf32> to vector<8x32xf32>
    %199 = arith.addf %196, %198 : vector<8x32xf32>
    %200 = vector.extract_strided_slice %182 {offsets = [0, 0, 0], sizes = [1, 32, 32], strides = [1, 1, 1]} : vector<3x32x32xf32> to vector<1x32x32xf32>
    %201 = vector.shape_cast %200 : vector<1x32x32xf32> to vector<32x32xf32>
    %cst_66 = arith.constant 0.000000e+00 : f32
    %202 = vector.broadcast %cst_66 : f32 to vector<8x32xf32>
    %203 = vector.extract_strided_slice %191 {offsets = [0, 0], sizes = [8, 8], strides = [1, 1]} : vector<8x32xf32> to vector<8x8xf32>
    %204 = vector.extract_strided_slice %195 {offsets = [0, 0], sizes = [8, 8], strides = [1, 1]} : vector<8x32xf32> to vector<8x8xf32>
    %cst_67 = arith.constant dense<0.000000e+00> : vector<8x8xf32>
    %205 = tpu.matmul %203, %204, %cst_67 {dimension_numbers = #tpu.dot_dimension_numbers<[1], [1], [0], [0], [0, 0, 1, 0], [], []>} : vector<8x8xf32>, vector<8x8xf32>, vector<8x8xf32> -> vector<8x8xf32>
    %cst_68 = arith.constant dense<0xFF800000> : vector<8xf32>
    %206 = vector.multi_reduction <maximumf>, %205, %cst_68 [1] : vector<8x8xf32> to vector<8xf32>
    %207 = vector.shape_cast %206 : vector<8xf32> to vector<8x1xf32>
    %208 = vector.broadcast %207 : vector<8x1xf32> to vector<8x8xf32>
    %209 = arith.subf %205, %208 : vector<8x8xf32>
    %210 = math.exp %209 : vector<8x8xf32>
    %cst_69 = arith.constant dense<0.000000e+00> : vector<8xf32>
    %211 = vector.multi_reduction <add>, %210, %cst_69 [1] : vector<8x8xf32> to vector<8xf32>
    %212 = vector.shape_cast %211 : vector<8xf32> to vector<8x1xf32>
    %213 = tpu.reciprocal %212 {approx = true} : vector<8x1xf32> -> vector<8x1xf32>
    %214 = vector.broadcast %213 : vector<8x1xf32> to vector<8x8xf32>
    %215 = arith.mulf %210, %214 : vector<8x8xf32>
    %216 = vector.extract_strided_slice %199 {offsets = [0, 0], sizes = [8, 8], strides = [1, 1]} : vector<8x32xf32> to vector<8x8xf32>
    %cst_70 = arith.constant dense<0.000000e+00> : vector<8x8xf32>
    %217 = tpu.matmul %215, %216, %cst_70 {dimension_numbers = #tpu.dot_dimension_numbers<[1], [0], [0], [1], [0, 0, 1, 1], [], []>} : vector<8x8xf32>, vector<8x8xf32>, vector<8x8xf32> -> vector<8x8xf32>
    %218 = vector.extract_strided_slice %201 {offsets = [0, 0], sizes = [8, 32], strides = [1, 1]} : vector<32x32xf32> to vector<8x32xf32>
    %cst_71 = arith.constant dense<0.000000e+00> : vector<8x32xf32>
    %219 = tpu.matmul %217, %218, %cst_71 {dimension_numbers = #tpu.dot_dimension_numbers<[1], [0], [0], [1], [0, 0, 1, 1], [], []>} : vector<8x8xf32>, vector<8x32xf32>, vector<8x32xf32> -> vector<8x32xf32>
    %220 = arith.addf %202, %219 : vector<8x32xf32>
    %221 = vector.extract_strided_slice %191 {offsets = [0, 8], sizes = [8, 8], strides = [1, 1]} : vector<8x32xf32> to vector<8x8xf32>
    %222 = vector.extract_strided_slice %195 {offsets = [0, 8], sizes = [8, 8], strides = [1, 1]} : vector<8x32xf32> to vector<8x8xf32>
    %cst_72 = arith.constant dense<0.000000e+00> : vector<8x8xf32>
    %223 = tpu.matmul %221, %222, %cst_72 {dimension_numbers = #tpu.dot_dimension_numbers<[1], [1], [0], [0], [0, 0, 1, 0], [], []>} : vector<8x8xf32>, vector<8x8xf32>, vector<8x8xf32> -> vector<8x8xf32>
    %cst_73 = arith.constant dense<0xFF800000> : vector<8xf32>
    %224 = vector.multi_reduction <maximumf>, %223, %cst_73 [1] : vector<8x8xf32> to vector<8xf32>
    %225 = vector.shape_cast %224 : vector<8xf32> to vector<8x1xf32>
    %226 = vector.broadcast %225 : vector<8x1xf32> to vector<8x8xf32>
    %227 = arith.subf %223, %226 : vector<8x8xf32>
    %228 = math.exp %227 : vector<8x8xf32>
    %cst_74 = arith.constant dense<0.000000e+00> : vector<8xf32>
    %229 = vector.multi_reduction <add>, %228, %cst_74 [1] : vector<8x8xf32> to vector<8xf32>
    %230 = vector.shape_cast %229 : vector<8xf32> to vector<8x1xf32>
    %231 = tpu.reciprocal %230 {approx = true} : vector<8x1xf32> -> vector<8x1xf32>
    %232 = vector.broadcast %231 : vector<8x1xf32> to vector<8x8xf32>
    %233 = arith.mulf %228, %232 : vector<8x8xf32>
    %234 = vector.extract_strided_slice %199 {offsets = [0, 8], sizes = [8, 8], strides = [1, 1]} : vector<8x32xf32> to vector<8x8xf32>
    %cst_75 = arith.constant dense<0.000000e+00> : vector<8x8xf32>
    %235 = tpu.matmul %233, %234, %cst_75 {dimension_numbers = #tpu.dot_dimension_numbers<[1], [0], [0], [1], [0, 0, 1, 1], [], []>} : vector<8x8xf32>, vector<8x8xf32>, vector<8x8xf32> -> vector<8x8xf32>
    %236 = vector.extract_strided_slice %201 {offsets = [8, 0], sizes = [8, 32], strides = [1, 1]} : vector<32x32xf32> to vector<8x32xf32>
    %cst_76 = arith.constant dense<0.000000e+00> : vector<8x32xf32>
    %237 = tpu.matmul %235, %236, %cst_76 {dimension_numbers = #tpu.dot_dimension_numbers<[1], [0], [0], [1], [0, 0, 1, 1], [], []>} : vector<8x8xf32>, vector<8x32xf32>, vector<8x32xf32> -> vector<8x32xf32>
    %238 = arith.addf %220, %237 : vector<8x32xf32>
    %239 = vector.extract_strided_slice %191 {offsets = [0, 16], sizes = [8, 8], strides = [1, 1]} : vector<8x32xf32> to vector<8x8xf32>
    %240 = vector.extract_strided_slice %195 {offsets = [0, 16], sizes = [8, 8], strides = [1, 1]} : vector<8x32xf32> to vector<8x8xf32>
    %cst_77 = arith.constant dense<0.000000e+00> : vector<8x8xf32>
    %241 = tpu.matmul %239, %240, %cst_77 {dimension_numbers = #tpu.dot_dimension_numbers<[1], [1], [0], [0], [0, 0, 1, 0], [], []>} : vector<8x8xf32>, vector<8x8xf32>, vector<8x8xf32> -> vector<8x8xf32>
    %cst_78 = arith.constant dense<0xFF800000> : vector<8xf32>
    %242 = vector.multi_reduction <maximumf>, %241, %cst_78 [1] : vector<8x8xf32> to vector<8xf32>
    %243 = vector.shape_cast %242 : vector<8xf32> to vector<8x1xf32>
    %244 = vector.broadcast %243 : vector<8x1xf32> to vector<8x8xf32>
    %245 = arith.subf %241, %244 : vector<8x8xf32>
    %246 = math.exp %245 : vector<8x8xf32>
    %cst_79 = arith.constant dense<0.000000e+00> : vector<8xf32>
    %247 = vector.multi_reduction <add>, %246, %cst_79 [1] : vector<8x8xf32> to vector<8xf32>
    %248 = vector.shape_cast %247 : vector<8xf32> to vector<8x1xf32>
    %249 = tpu.reciprocal %248 {approx = true} : vector<8x1xf32> -> vector<8x1xf32>
    %250 = vector.broadcast %249 : vector<8x1xf32> to vector<8x8xf32>
    %251 = arith.mulf %246, %250 : vector<8x8xf32>
    %252 = vector.extract_strided_slice %199 {offsets = [0, 16], sizes = [8, 8], strides = [1, 1]} : vector<8x32xf32> to vector<8x8xf32>
    %cst_80 = arith.constant dense<0.000000e+00> : vector<8x8xf32>
    %253 = tpu.matmul %251, %252, %cst_80 {dimension_numbers = #tpu.dot_dimension_numbers<[1], [0], [0], [1], [0, 0, 1, 1], [], []>} : vector<8x8xf32>, vector<8x8xf32>, vector<8x8xf32> -> vector<8x8xf32>
    %254 = vector.extract_strided_slice %201 {offsets = [16, 0], sizes = [8, 32], strides = [1, 1]} : vector<32x32xf32> to vector<8x32xf32>
    %cst_81 = arith.constant dense<0.000000e+00> : vector<8x32xf32>
    %255 = tpu.matmul %253, %254, %cst_81 {dimension_numbers = #tpu.dot_dimension_numbers<[1], [0], [0], [1], [0, 0, 1, 1], [], []>} : vector<8x8xf32>, vector<8x32xf32>, vector<8x32xf32> -> vector<8x32xf32>
    %256 = arith.addf %238, %255 : vector<8x32xf32>
    %257 = vector.extract_strided_slice %191 {offsets = [0, 24], sizes = [8, 8], strides = [1, 1]} : vector<8x32xf32> to vector<8x8xf32>
    %258 = vector.extract_strided_slice %195 {offsets = [0, 24], sizes = [8, 8], strides = [1, 1]} : vector<8x32xf32> to vector<8x8xf32>
    %cst_82 = arith.constant dense<0.000000e+00> : vector<8x8xf32>
    %259 = tpu.matmul %257, %258, %cst_82 {dimension_numbers = #tpu.dot_dimension_numbers<[1], [1], [0], [0], [0, 0, 1, 0], [], []>} : vector<8x8xf32>, vector<8x8xf32>, vector<8x8xf32> -> vector<8x8xf32>
    %cst_83 = arith.constant dense<0xFF800000> : vector<8xf32>
    %260 = vector.multi_reduction <maximumf>, %259, %cst_83 [1] : vector<8x8xf32> to vector<8xf32>
    %261 = vector.shape_cast %260 : vector<8xf32> to vector<8x1xf32>
    %262 = vector.broadcast %261 : vector<8x1xf32> to vector<8x8xf32>
    %263 = arith.subf %259, %262 : vector<8x8xf32>
    %264 = math.exp %263 : vector<8x8xf32>
    %cst_84 = arith.constant dense<0.000000e+00> : vector<8xf32>
    %265 = vector.multi_reduction <add>, %264, %cst_84 [1] : vector<8x8xf32> to vector<8xf32>
    %266 = vector.shape_cast %265 : vector<8xf32> to vector<8x1xf32>
    %267 = tpu.reciprocal %266 {approx = true} : vector<8x1xf32> -> vector<8x1xf32>
    %268 = vector.broadcast %267 : vector<8x1xf32> to vector<8x8xf32>
    %269 = arith.mulf %264, %268 : vector<8x8xf32>
    %270 = vector.extract_strided_slice %199 {offsets = [0, 24], sizes = [8, 8], strides = [1, 1]} : vector<8x32xf32> to vector<8x8xf32>
    %cst_85 = arith.constant dense<0.000000e+00> : vector<8x8xf32>
    %271 = tpu.matmul %269, %270, %cst_85 {dimension_numbers = #tpu.dot_dimension_numbers<[1], [0], [0], [1], [0, 0, 1, 1], [], []>} : vector<8x8xf32>, vector<8x8xf32>, vector<8x8xf32> -> vector<8x8xf32>
    %272 = vector.extract_strided_slice %201 {offsets = [24, 0], sizes = [8, 32], strides = [1, 1]} : vector<32x32xf32> to vector<8x32xf32>
    %cst_86 = arith.constant dense<0.000000e+00> : vector<8x32xf32>
    %273 = tpu.matmul %271, %272, %cst_86 {dimension_numbers = #tpu.dot_dimension_numbers<[1], [0], [0], [1], [0, 0, 1, 1], [], []>} : vector<8x8xf32>, vector<8x32xf32>, vector<8x32xf32> -> vector<8x32xf32>
    %274 = arith.addf %256, %273 : vector<8x32xf32>
    %275 = vector.extract_strided_slice %184 {offsets = [3, 0], sizes = [1, 32], strides = [1, 1]} : vector<10x32xf32> to vector<1x32xf32>
    %276 = vector.broadcast %275 : vector<1x32xf32> to vector<8x32xf32>
    %277 = arith.addf %274, %276 : vector<8x32xf32>
    %278 = arith.addf %178, %277 : vector<8x32xf32>
    %279 = vector.extract_strided_slice %184 {offsets = [4, 0], sizes = [1, 32], strides = [1, 1]} : vector<10x32xf32> to vector<1x32xf32>
    %280 = vector.extract_strided_slice %184 {offsets = [5, 0], sizes = [1, 32], strides = [1, 1]} : vector<10x32xf32> to vector<1x32xf32>
    %cst_87 = arith.constant dense<0.000000e+00> : vector<8xf32>
    %281 = vector.multi_reduction <add>, %278, %cst_87 [1] : vector<8x32xf32> to vector<8xf32>
    %282 = vector.shape_cast %281 : vector<8xf32> to vector<8x1xf32>
    %cst_88 = arith.constant 3.200000e+01 : f32
    %283 = vector.broadcast %cst_88 : f32 to vector<8x1xf32>
    %284 = arith.divf %282, %283 : vector<8x1xf32>
    %285 = vector.broadcast %284 : vector<8x1xf32> to vector<8x32xf32>
    %286 = arith.subf %278, %285 : vector<8x32xf32>
    %287 = arith.mulf %286, %286 : vector<8x32xf32>
    %cst_89 = arith.constant dense<0.000000e+00> : vector<8xf32>
    %288 = vector.multi_reduction <add>, %287, %cst_89 [1] : vector<8x32xf32> to vector<8xf32>
    %289 = vector.shape_cast %288 : vector<8xf32> to vector<8x1xf32>
    %cst_90 = arith.constant 3.200000e+01 : f32
    %290 = vector.broadcast %cst_90 : f32 to vector<8x1xf32>
    %291 = arith.divf %289, %290 : vector<8x1xf32>
    %292 = vector.broadcast %284 : vector<8x1xf32> to vector<8x32xf32>
    %293 = arith.subf %278, %292 : vector<8x32xf32>
    %cst_91 = arith.constant 9.99999974E-6 : f32
    %294 = vector.broadcast %cst_91 : f32 to vector<8x1xf32>
    %295 = arith.addf %291, %294 : vector<8x1xf32>
    %296 = math.rsqrt %295 : vector<8x1xf32>
    %297 = vector.broadcast %296 : vector<8x1xf32> to vector<8x32xf32>
    %298 = arith.mulf %293, %297 : vector<8x32xf32>
    %299 = vector.broadcast %279 : vector<1x32xf32> to vector<8x32xf32>
    %300 = arith.mulf %298, %299 : vector<8x32xf32>
    %301 = vector.broadcast %280 : vector<1x32xf32> to vector<8x32xf32>
    %302 = arith.addf %300, %301 : vector<8x32xf32>
    %303 = vector.extract_strided_slice %182 {offsets = [1, 0, 0], sizes = [1, 32, 32], strides = [1, 1, 1]} : vector<3x32x32xf32> to vector<1x32x32xf32>
    %304 = vector.shape_cast %303 : vector<1x32x32xf32> to vector<32x32xf32>
    %cst_92 = arith.constant dense<0.000000e+00> : vector<8x32xf32>
    %305 = tpu.matmul %302, %304, %cst_92 {dimension_numbers = #tpu.dot_dimension_numbers<[1], [0], [0], [1], [0, 0, 1, 1], [], []>} : vector<8x32xf32>, vector<32x32xf32>, vector<8x32xf32> -> vector<8x32xf32>
    %306 = vector.extract_strided_slice %184 {offsets = [6, 0], sizes = [1, 32], strides = [1, 1]} : vector<10x32xf32> to vector<1x32xf32>
    %307 = vector.broadcast %306 : vector<1x32xf32> to vector<8x32xf32>
    %308 = arith.addf %305, %307 : vector<8x32xf32>
    %cst_93 = arith.constant 5.000000e-01 : f32
    %309 = vector.broadcast %cst_93 : f32 to vector<8x32xf32>
    %310 = arith.mulf %309, %308 : vector<8x32xf32>
    %cst_94 = arith.constant 0.707106769 : f32
    %311 = vector.broadcast %cst_94 : f32 to vector<8x32xf32>
    %312 = arith.mulf %308, %311 : vector<8x32xf32>
    %313 = math.erf %312 : vector<8x32xf32>
    %cst_95 = arith.constant 1.000000e+00 : f32
    %314 = vector.broadcast %cst_95 : f32 to vector<8x32xf32>
    %315 = arith.addf %314, %313 : vector<8x32xf32>
    %316 = arith.mulf %310, %315 : vector<8x32xf32>
    %317 = vector.extract_strided_slice %182 {offsets = [2, 0, 0], sizes = [1, 32, 32], strides = [1, 1, 1]} : vector<3x32x32xf32> to vector<1x32x32xf32>
    %318 = vector.shape_cast %317 : vector<1x32x32xf32> to vector<32x32xf32>
    %cst_96 = arith.constant dense<0.000000e+00> : vector<8x32xf32>
    %319 = tpu.matmul %316, %318, %cst_96 {dimension_numbers = #tpu.dot_dimension_numbers<[1], [0], [0], [1], [0, 0, 1, 1], [], []>} : vector<8x32xf32>, vector<32x32xf32>, vector<8x32xf32> -> vector<8x32xf32>
    %320 = vector.extract_strided_slice %184 {offsets = [7, 0], sizes = [1, 32], strides = [1, 1]} : vector<10x32xf32> to vector<1x32xf32>
    %321 = vector.broadcast %320 : vector<1x32xf32> to vector<8x32xf32>
    %322 = arith.addf %319, %321 : vector<8x32xf32>
    %323 = arith.addf %302, %322 : vector<8x32xf32>
    %324 = vector.extract_strided_slice %184 {offsets = [8, 0], sizes = [1, 32], strides = [1, 1]} : vector<10x32xf32> to vector<1x32xf32>
    %325 = vector.extract_strided_slice %184 {offsets = [9, 0], sizes = [1, 32], strides = [1, 1]} : vector<10x32xf32> to vector<1x32xf32>
    %cst_97 = arith.constant dense<0.000000e+00> : vector<8xf32>
    %326 = vector.multi_reduction <add>, %323, %cst_97 [1] : vector<8x32xf32> to vector<8xf32>
    %327 = vector.shape_cast %326 : vector<8xf32> to vector<8x1xf32>
    %cst_98 = arith.constant 3.200000e+01 : f32
    %328 = vector.broadcast %cst_98 : f32 to vector<8x1xf32>
    %329 = arith.divf %327, %328 : vector<8x1xf32>
    %330 = vector.broadcast %329 : vector<8x1xf32> to vector<8x32xf32>
    %331 = arith.subf %323, %330 : vector<8x32xf32>
    %332 = arith.mulf %331, %331 : vector<8x32xf32>
    %cst_99 = arith.constant dense<0.000000e+00> : vector<8xf32>
    %333 = vector.multi_reduction <add>, %332, %cst_99 [1] : vector<8x32xf32> to vector<8xf32>
    %334 = vector.shape_cast %333 : vector<8xf32> to vector<8x1xf32>
    %cst_100 = arith.constant 3.200000e+01 : f32
    %335 = vector.broadcast %cst_100 : f32 to vector<8x1xf32>
    %336 = arith.divf %334, %335 : vector<8x1xf32>
    %337 = vector.broadcast %329 : vector<8x1xf32> to vector<8x32xf32>
    %338 = arith.subf %323, %337 : vector<8x32xf32>
    %cst_101 = arith.constant 9.99999974E-6 : f32
    %339 = vector.broadcast %cst_101 : f32 to vector<8x1xf32>
    %340 = arith.addf %336, %339 : vector<8x1xf32>
    %341 = math.rsqrt %340 : vector<8x1xf32>
    %342 = vector.broadcast %341 : vector<8x1xf32> to vector<8x32xf32>
    %343 = arith.mulf %338, %342 : vector<8x32xf32>
    %344 = vector.broadcast %324 : vector<1x32xf32> to vector<8x32xf32>
    %345 = arith.mulf %343, %344 : vector<8x32xf32>
    %346 = vector.broadcast %325 : vector<1x32xf32> to vector<8x32xf32>
    %347 = arith.addf %345, %346 : vector<8x32xf32>
    %348 = vector.extract_strided_slice %2 {offsets = [1, 0], sizes = [1, 32], strides = [1, 1]} : vector<3x32xf32> to vector<1x32xf32>
    %349 = vector.extract_strided_slice %2 {offsets = [2, 0], sizes = [1, 32], strides = [1, 1]} : vector<3x32xf32> to vector<1x32xf32>
    %cst_102 = arith.constant dense<0.000000e+00> : vector<8xf32>
    %350 = vector.multi_reduction <add>, %347, %cst_102 [1] : vector<8x32xf32> to vector<8xf32>
    %351 = vector.shape_cast %350 : vector<8xf32> to vector<8x1xf32>
    %cst_103 = arith.constant 3.200000e+01 : f32
    %352 = vector.broadcast %cst_103 : f32 to vector<8x1xf32>
    %353 = arith.divf %351, %352 : vector<8x1xf32>
    %354 = vector.broadcast %353 : vector<8x1xf32> to vector<8x32xf32>
    %355 = arith.subf %347, %354 : vector<8x32xf32>
    %356 = arith.mulf %355, %355 : vector<8x32xf32>
    %cst_104 = arith.constant dense<0.000000e+00> : vector<8xf32>
    %357 = vector.multi_reduction <add>, %356, %cst_104 [1] : vector<8x32xf32> to vector<8xf32>
    %358 = vector.shape_cast %357 : vector<8xf32> to vector<8x1xf32>
    %cst_105 = arith.constant 3.200000e+01 : f32
    %359 = vector.broadcast %cst_105 : f32 to vector<8x1xf32>
    %360 = arith.divf %358, %359 : vector<8x1xf32>
    %361 = vector.broadcast %353 : vector<8x1xf32> to vector<8x32xf32>
    %362 = arith.subf %347, %361 : vector<8x32xf32>
    %cst_106 = arith.constant 9.99999974E-6 : f32
    %363 = vector.broadcast %cst_106 : f32 to vector<8x1xf32>
    %364 = arith.addf %360, %363 : vector<8x1xf32>
    %365 = math.rsqrt %364 : vector<8x1xf32>
    %366 = vector.broadcast %365 : vector<8x1xf32> to vector<8x32xf32>
    %367 = arith.mulf %362, %366 : vector<8x32xf32>
    %368 = vector.broadcast %348 : vector<1x32xf32> to vector<8x32xf32>
    %369 = arith.mulf %367, %368 : vector<8x32xf32>
    %370 = vector.broadcast %349 : vector<1x32xf32> to vector<8x32xf32>
    %371 = arith.addf %369, %370 : vector<8x32xf32>
    %cst_107 = arith.constant dense<0.000000e+00> : vector<32xf32>
    %372 = vector.multi_reduction <add>, %371, %cst_107 [0] : vector<8x32xf32> to vector<32xf32>
    %373 = vector.shape_cast %372 : vector<32xf32> to vector<1x32xf32>
    %cst_108 = arith.constant 8.000000e+00 : f32
    %374 = vector.broadcast %cst_108 : f32 to vector<1x32xf32>
    %375 = arith.divf %373, %374 : vector<1x32xf32>
    %c0_109 = arith.constant 0 : index
    %c0_110 = arith.constant 0 : index
    %c0_111 = arith.constant 0 : index
    %376 = vector.load %arg2[%c0_109, %c0_110, %c0_111] : memref<1x8x15xf32, #tpu.memory_space<vmem>>, vector<1x8x15xf32>
    %377 = vector.shape_cast %376 : vector<1x8x15xf32> to vector<8x15xf32>
    %c0_112 = arith.constant 0 : index
    %c0_113 = arith.constant 0 : index
    %378 = vector.load %arg10[%c0_112, %c0_113] : memref<3x16xf32, #tpu.memory_space<vmem>>, vector<3x16xf32>
    %c0_114 = arith.constant 0 : index
    %c0_115 = arith.constant 0 : index
    %379 = vector.load %arg9[%c0_114, %c0_115] : memref<15x16xf32, #tpu.memory_space<vmem>>, vector<15x16xf32>
    %cst_116 = arith.constant dense<0.000000e+00> : vector<8x16xf32>
    %380 = tpu.matmul %377, %379, %cst_116 {dimension_numbers = #tpu.dot_dimension_numbers<[1], [0], [0], [1], [0, 0, 1, 1], [], []>} : vector<8x15xf32>, vector<15x16xf32>, vector<8x16xf32> -> vector<8x16xf32>
    %381 = vector.extract_strided_slice %378 {offsets = [0, 0], sizes = [1, 16], strides = [1, 1]} : vector<3x16xf32> to vector<1x16xf32>
    %382 = vector.broadcast %381 : vector<1x16xf32> to vector<8x16xf32>
    %383 = arith.addf %380, %382 : vector<8x16xf32>
    %cst_117 = arith.constant 0.000000e+00 : f32
    %384 = vector.broadcast %cst_117 : f32 to vector<8x16xf32>
    %385 = arith.maximumf %383, %384 : vector<8x16xf32>
    %c0_118 = arith.constant 0 : index
    %c0_119 = arith.constant 0 : index
    %c0_120 = arith.constant 0 : index
    %386 = vector.load %arg11[%c0_118, %c0_119, %c0_120] : memref<2x16x48xf32, #tpu.memory_space<vmem>>, vector<1x16x48xf32>
    %387 = vector.shape_cast %386 : vector<1x16x48xf32> to vector<16x48xf32>
    %c0_121 = arith.constant 0 : index
    %c0_122 = arith.constant 0 : index
    %c0_123 = arith.constant 0 : index
    %c0_124 = arith.constant 0 : index
    %388 = vector.load %arg12[%c0_121, %c0_122, %c0_123, %c0_124] : memref<2x3x16x16xf32, #tpu.memory_space<vmem>>, vector<1x3x16x16xf32>
    %389 = vector.shape_cast %388 : vector<1x3x16x16xf32> to vector<3x16x16xf32>
    %c0_125 = arith.constant 0 : index
    %c0_126 = arith.constant 0 : index
    %c0_127 = arith.constant 0 : index
    %390 = vector.load %arg13[%c0_125, %c0_126, %c0_127] : memref<2x10x16xf32, #tpu.memory_space<vmem>>, vector<1x10x16xf32>
    %391 = vector.shape_cast %390 : vector<1x10x16xf32> to vector<10x16xf32>
    %cst_128 = arith.constant dense<0.000000e+00> : vector<8x48xf32>
    %392 = tpu.matmul %385, %387, %cst_128 {dimension_numbers = #tpu.dot_dimension_numbers<[1], [0], [0], [1], [0, 0, 1, 1], [], []>} : vector<8x16xf32>, vector<16x48xf32>, vector<8x48xf32> -> vector<8x48xf32>
    %393 = vector.extract_strided_slice %392 {offsets = [0, 0], sizes = [8, 16], strides = [1, 1]} : vector<8x48xf32> to vector<8x16xf32>
    %394 = vector.extract_strided_slice %391 {offsets = [0, 0], sizes = [1, 16], strides = [1, 1]} : vector<10x16xf32> to vector<1x16xf32>
    %395 = vector.broadcast %394 : vector<1x16xf32> to vector<8x16xf32>
    %396 = arith.addf %393, %395 : vector<8x16xf32>
    %cst_129 = arith.constant 0.353553385 : f32
    %397 = vector.broadcast %cst_129 : f32 to vector<8x16xf32>
    %398 = arith.mulf %396, %397 : vector<8x16xf32>
    %399 = vector.extract_strided_slice %392 {offsets = [0, 16], sizes = [8, 16], strides = [1, 1]} : vector<8x48xf32> to vector<8x16xf32>
    %400 = vector.extract_strided_slice %391 {offsets = [1, 0], sizes = [1, 16], strides = [1, 1]} : vector<10x16xf32> to vector<1x16xf32>
    %401 = vector.broadcast %400 : vector<1x16xf32> to vector<8x16xf32>
    %402 = arith.addf %399, %401 : vector<8x16xf32>
    %403 = vector.extract_strided_slice %392 {offsets = [0, 32], sizes = [8, 16], strides = [1, 1]} : vector<8x48xf32> to vector<8x16xf32>
    %404 = vector.extract_strided_slice %391 {offsets = [2, 0], sizes = [1, 16], strides = [1, 1]} : vector<10x16xf32> to vector<1x16xf32>
    %405 = vector.broadcast %404 : vector<1x16xf32> to vector<8x16xf32>
    %406 = arith.addf %403, %405 : vector<8x16xf32>
    %407 = vector.extract_strided_slice %389 {offsets = [0, 0, 0], sizes = [1, 16, 16], strides = [1, 1, 1]} : vector<3x16x16xf32> to vector<1x16x16xf32>
    %408 = vector.shape_cast %407 : vector<1x16x16xf32> to vector<16x16xf32>
    %cst_130 = arith.constant 0.000000e+00 : f32
    %409 = vector.broadcast %cst_130 : f32 to vector<8x16xf32>
    %410 = vector.extract_strided_slice %398 {offsets = [0, 0], sizes = [8, 8], strides = [1, 1]} : vector<8x16xf32> to vector<8x8xf32>
    %411 = vector.extract_strided_slice %402 {offsets = [0, 0], sizes = [8, 8], strides = [1, 1]} : vector<8x16xf32> to vector<8x8xf32>
    %cst_131 = arith.constant dense<0.000000e+00> : vector<8x8xf32>
    %412 = tpu.matmul %410, %411, %cst_131 {dimension_numbers = #tpu.dot_dimension_numbers<[1], [1], [0], [0], [0, 0, 1, 0], [], []>} : vector<8x8xf32>, vector<8x8xf32>, vector<8x8xf32> -> vector<8x8xf32>
    %cst_132 = arith.constant dense<0xFF800000> : vector<8xf32>
    %413 = vector.multi_reduction <maximumf>, %412, %cst_132 [1] : vector<8x8xf32> to vector<8xf32>
    %414 = vector.shape_cast %413 : vector<8xf32> to vector<8x1xf32>
    %415 = vector.broadcast %414 : vector<8x1xf32> to vector<8x8xf32>
    %416 = arith.subf %412, %415 : vector<8x8xf32>
    %417 = math.exp %416 : vector<8x8xf32>
    %cst_133 = arith.constant dense<0.000000e+00> : vector<8xf32>
    %418 = vector.multi_reduction <add>, %417, %cst_133 [1] : vector<8x8xf32> to vector<8xf32>
    %419 = vector.shape_cast %418 : vector<8xf32> to vector<8x1xf32>
    %420 = tpu.reciprocal %419 {approx = true} : vector<8x1xf32> -> vector<8x1xf32>
    %421 = vector.broadcast %420 : vector<8x1xf32> to vector<8x8xf32>
    %422 = arith.mulf %417, %421 : vector<8x8xf32>
    %423 = vector.extract_strided_slice %406 {offsets = [0, 0], sizes = [8, 8], strides = [1, 1]} : vector<8x16xf32> to vector<8x8xf32>
    %cst_134 = arith.constant dense<0.000000e+00> : vector<8x8xf32>
    %424 = tpu.matmul %422, %423, %cst_134 {dimension_numbers = #tpu.dot_dimension_numbers<[1], [0], [0], [1], [0, 0, 1, 1], [], []>} : vector<8x8xf32>, vector<8x8xf32>, vector<8x8xf32> -> vector<8x8xf32>
    %425 = vector.extract_strided_slice %408 {offsets = [0, 0], sizes = [8, 16], strides = [1, 1]} : vector<16x16xf32> to vector<8x16xf32>
    %cst_135 = arith.constant dense<0.000000e+00> : vector<8x16xf32>
    %426 = tpu.matmul %424, %425, %cst_135 {dimension_numbers = #tpu.dot_dimension_numbers<[1], [0], [0], [1], [0, 0, 1, 1], [], []>} : vector<8x8xf32>, vector<8x16xf32>, vector<8x16xf32> -> vector<8x16xf32>
    %427 = arith.addf %409, %426 : vector<8x16xf32>
    %428 = vector.extract_strided_slice %398 {offsets = [0, 8], sizes = [8, 8], strides = [1, 1]} : vector<8x16xf32> to vector<8x8xf32>
    %429 = vector.extract_strided_slice %402 {offsets = [0, 8], sizes = [8, 8], strides = [1, 1]} : vector<8x16xf32> to vector<8x8xf32>
    %cst_136 = arith.constant dense<0.000000e+00> : vector<8x8xf32>
    %430 = tpu.matmul %428, %429, %cst_136 {dimension_numbers = #tpu.dot_dimension_numbers<[1], [1], [0], [0], [0, 0, 1, 0], [], []>} : vector<8x8xf32>, vector<8x8xf32>, vector<8x8xf32> -> vector<8x8xf32>
    %cst_137 = arith.constant dense<0xFF800000> : vector<8xf32>
    %431 = vector.multi_reduction <maximumf>, %430, %cst_137 [1] : vector<8x8xf32> to vector<8xf32>
    %432 = vector.shape_cast %431 : vector<8xf32> to vector<8x1xf32>
    %433 = vector.broadcast %432 : vector<8x1xf32> to vector<8x8xf32>
    %434 = arith.subf %430, %433 : vector<8x8xf32>
    %435 = math.exp %434 : vector<8x8xf32>
    %cst_138 = arith.constant dense<0.000000e+00> : vector<8xf32>
    %436 = vector.multi_reduction <add>, %435, %cst_138 [1] : vector<8x8xf32> to vector<8xf32>
    %437 = vector.shape_cast %436 : vector<8xf32> to vector<8x1xf32>
    %438 = tpu.reciprocal %437 {approx = true} : vector<8x1xf32> -> vector<8x1xf32>
    %439 = vector.broadcast %438 : vector<8x1xf32> to vector<8x8xf32>
    %440 = arith.mulf %435, %439 : vector<8x8xf32>
    %441 = vector.extract_strided_slice %406 {offsets = [0, 8], sizes = [8, 8], strides = [1, 1]} : vector<8x16xf32> to vector<8x8xf32>
    %cst_139 = arith.constant dense<0.000000e+00> : vector<8x8xf32>
    %442 = tpu.matmul %440, %441, %cst_139 {dimension_numbers = #tpu.dot_dimension_numbers<[1], [0], [0], [1], [0, 0, 1, 1], [], []>} : vector<8x8xf32>, vector<8x8xf32>, vector<8x8xf32> -> vector<8x8xf32>
    %443 = vector.extract_strided_slice %408 {offsets = [8, 0], sizes = [8, 16], strides = [1, 1]} : vector<16x16xf32> to vector<8x16xf32>
    %cst_140 = arith.constant dense<0.000000e+00> : vector<8x16xf32>
    %444 = tpu.matmul %442, %443, %cst_140 {dimension_numbers = #tpu.dot_dimension_numbers<[1], [0], [0], [1], [0, 0, 1, 1], [], []>} : vector<8x8xf32>, vector<8x16xf32>, vector<8x16xf32> -> vector<8x16xf32>
    %445 = arith.addf %427, %444 : vector<8x16xf32>
    %446 = vector.extract_strided_slice %391 {offsets = [3, 0], sizes = [1, 16], strides = [1, 1]} : vector<10x16xf32> to vector<1x16xf32>
    %447 = vector.broadcast %446 : vector<1x16xf32> to vector<8x16xf32>
    %448 = arith.addf %445, %447 : vector<8x16xf32>
    %449 = arith.addf %385, %448 : vector<8x16xf32>
    %450 = vector.extract_strided_slice %391 {offsets = [4, 0], sizes = [1, 16], strides = [1, 1]} : vector<10x16xf32> to vector<1x16xf32>
    %451 = vector.extract_strided_slice %391 {offsets = [5, 0], sizes = [1, 16], strides = [1, 1]} : vector<10x16xf32> to vector<1x16xf32>
    %cst_141 = arith.constant dense<0.000000e+00> : vector<8xf32>
    %452 = vector.multi_reduction <add>, %449, %cst_141 [1] : vector<8x16xf32> to vector<8xf32>
    %453 = vector.shape_cast %452 : vector<8xf32> to vector<8x1xf32>
    %cst_142 = arith.constant 1.600000e+01 : f32
    %454 = vector.broadcast %cst_142 : f32 to vector<8x1xf32>
    %455 = arith.divf %453, %454 : vector<8x1xf32>
    %456 = vector.broadcast %455 : vector<8x1xf32> to vector<8x16xf32>
    %457 = arith.subf %449, %456 : vector<8x16xf32>
    %458 = arith.mulf %457, %457 : vector<8x16xf32>
    %cst_143 = arith.constant dense<0.000000e+00> : vector<8xf32>
    %459 = vector.multi_reduction <add>, %458, %cst_143 [1] : vector<8x16xf32> to vector<8xf32>
    %460 = vector.shape_cast %459 : vector<8xf32> to vector<8x1xf32>
    %cst_144 = arith.constant 1.600000e+01 : f32
    %461 = vector.broadcast %cst_144 : f32 to vector<8x1xf32>
    %462 = arith.divf %460, %461 : vector<8x1xf32>
    %463 = vector.broadcast %455 : vector<8x1xf32> to vector<8x16xf32>
    %464 = arith.subf %449, %463 : vector<8x16xf32>
    %cst_145 = arith.constant 9.99999974E-6 : f32
    %465 = vector.broadcast %cst_145 : f32 to vector<8x1xf32>
    %466 = arith.addf %462, %465 : vector<8x1xf32>
    %467 = math.rsqrt %466 : vector<8x1xf32>
    %468 = vector.broadcast %467 : vector<8x1xf32> to vector<8x16xf32>
    %469 = arith.mulf %464, %468 : vector<8x16xf32>
    %470 = vector.broadcast %450 : vector<1x16xf32> to vector<8x16xf32>
    %471 = arith.mulf %469, %470 : vector<8x16xf32>
    %472 = vector.broadcast %451 : vector<1x16xf32> to vector<8x16xf32>
    %473 = arith.addf %471, %472 : vector<8x16xf32>
    %474 = vector.extract_strided_slice %389 {offsets = [1, 0, 0], sizes = [1, 16, 16], strides = [1, 1, 1]} : vector<3x16x16xf32> to vector<1x16x16xf32>
    %475 = vector.shape_cast %474 : vector<1x16x16xf32> to vector<16x16xf32>
    %cst_146 = arith.constant dense<0.000000e+00> : vector<8x16xf32>
    %476 = tpu.matmul %473, %475, %cst_146 {dimension_numbers = #tpu.dot_dimension_numbers<[1], [0], [0], [1], [0, 0, 1, 1], [], []>} : vector<8x16xf32>, vector<16x16xf32>, vector<8x16xf32> -> vector<8x16xf32>
    %477 = vector.extract_strided_slice %391 {offsets = [6, 0], sizes = [1, 16], strides = [1, 1]} : vector<10x16xf32> to vector<1x16xf32>
    %478 = vector.broadcast %477 : vector<1x16xf32> to vector<8x16xf32>
    %479 = arith.addf %476, %478 : vector<8x16xf32>
    %cst_147 = arith.constant 5.000000e-01 : f32
    %480 = vector.broadcast %cst_147 : f32 to vector<8x16xf32>
    %481 = arith.mulf %480, %479 : vector<8x16xf32>
    %cst_148 = arith.constant 0.707106769 : f32
    %482 = vector.broadcast %cst_148 : f32 to vector<8x16xf32>
    %483 = arith.mulf %479, %482 : vector<8x16xf32>
    %484 = math.erf %483 : vector<8x16xf32>
    %cst_149 = arith.constant 1.000000e+00 : f32
    %485 = vector.broadcast %cst_149 : f32 to vector<8x16xf32>
    %486 = arith.addf %485, %484 : vector<8x16xf32>
    %487 = arith.mulf %481, %486 : vector<8x16xf32>
    %488 = vector.extract_strided_slice %389 {offsets = [2, 0, 0], sizes = [1, 16, 16], strides = [1, 1, 1]} : vector<3x16x16xf32> to vector<1x16x16xf32>
    %489 = vector.shape_cast %488 : vector<1x16x16xf32> to vector<16x16xf32>
    %cst_150 = arith.constant dense<0.000000e+00> : vector<8x16xf32>
    %490 = tpu.matmul %487, %489, %cst_150 {dimension_numbers = #tpu.dot_dimension_numbers<[1], [0], [0], [1], [0, 0, 1, 1], [], []>} : vector<8x16xf32>, vector<16x16xf32>, vector<8x16xf32> -> vector<8x16xf32>
    %491 = vector.extract_strided_slice %391 {offsets = [7, 0], sizes = [1, 16], strides = [1, 1]} : vector<10x16xf32> to vector<1x16xf32>
    %492 = vector.broadcast %491 : vector<1x16xf32> to vector<8x16xf32>
    %493 = arith.addf %490, %492 : vector<8x16xf32>
    %494 = arith.addf %473, %493 : vector<8x16xf32>
    %495 = vector.extract_strided_slice %391 {offsets = [8, 0], sizes = [1, 16], strides = [1, 1]} : vector<10x16xf32> to vector<1x16xf32>
    %496 = vector.extract_strided_slice %391 {offsets = [9, 0], sizes = [1, 16], strides = [1, 1]} : vector<10x16xf32> to vector<1x16xf32>
    %cst_151 = arith.constant dense<0.000000e+00> : vector<8xf32>
    %497 = vector.multi_reduction <add>, %494, %cst_151 [1] : vector<8x16xf32> to vector<8xf32>
    %498 = vector.shape_cast %497 : vector<8xf32> to vector<8x1xf32>
    %cst_152 = arith.constant 1.600000e+01 : f32
    %499 = vector.broadcast %cst_152 : f32 to vector<8x1xf32>
    %500 = arith.divf %498, %499 : vector<8x1xf32>
    %501 = vector.broadcast %500 : vector<8x1xf32> to vector<8x16xf32>
    %502 = arith.subf %494, %501 : vector<8x16xf32>
    %503 = arith.mulf %502, %502 : vector<8x16xf32>
    %cst_153 = arith.constant dense<0.000000e+00> : vector<8xf32>
    %504 = vector.multi_reduction <add>, %503, %cst_153 [1] : vector<8x16xf32> to vector<8xf32>
    %505 = vector.shape_cast %504 : vector<8xf32> to vector<8x1xf32>
    %cst_154 = arith.constant 1.600000e+01 : f32
    %506 = vector.broadcast %cst_154 : f32 to vector<8x1xf32>
    %507 = arith.divf %505, %506 : vector<8x1xf32>
    %508 = vector.broadcast %500 : vector<8x1xf32> to vector<8x16xf32>
    %509 = arith.subf %494, %508 : vector<8x16xf32>
    %cst_155 = arith.constant 9.99999974E-6 : f32
    %510 = vector.broadcast %cst_155 : f32 to vector<8x1xf32>
    %511 = arith.addf %507, %510 : vector<8x1xf32>
    %512 = math.rsqrt %511 : vector<8x1xf32>
    %513 = vector.broadcast %512 : vector<8x1xf32> to vector<8x16xf32>
    %514 = arith.mulf %509, %513 : vector<8x16xf32>
    %515 = vector.broadcast %495 : vector<1x16xf32> to vector<8x16xf32>
    %516 = arith.mulf %514, %515 : vector<8x16xf32>
    %517 = vector.broadcast %496 : vector<1x16xf32> to vector<8x16xf32>
    %518 = arith.addf %516, %517 : vector<8x16xf32>
    %c1_156 = arith.constant 1 : index
    %c0_157 = arith.constant 0 : index
    %c0_158 = arith.constant 0 : index
    %519 = vector.load %arg11[%c1_156, %c0_157, %c0_158] : memref<2x16x48xf32, #tpu.memory_space<vmem>>, vector<1x16x48xf32>
    %520 = vector.shape_cast %519 : vector<1x16x48xf32> to vector<16x48xf32>
    %c1_159 = arith.constant 1 : index
    %c0_160 = arith.constant 0 : index
    %c0_161 = arith.constant 0 : index
    %c0_162 = arith.constant 0 : index
    %521 = vector.load %arg12[%c1_159, %c0_160, %c0_161, %c0_162] : memref<2x3x16x16xf32, #tpu.memory_space<vmem>>, vector<1x3x16x16xf32>
    %522 = vector.shape_cast %521 : vector<1x3x16x16xf32> to vector<3x16x16xf32>
    %c1_163 = arith.constant 1 : index
    %c0_164 = arith.constant 0 : index
    %c0_165 = arith.constant 0 : index
    %523 = vector.load %arg13[%c1_163, %c0_164, %c0_165] : memref<2x10x16xf32, #tpu.memory_space<vmem>>, vector<1x10x16xf32>
    %524 = vector.shape_cast %523 : vector<1x10x16xf32> to vector<10x16xf32>
    %cst_166 = arith.constant dense<0.000000e+00> : vector<8x48xf32>
    %525 = tpu.matmul %518, %520, %cst_166 {dimension_numbers = #tpu.dot_dimension_numbers<[1], [0], [0], [1], [0, 0, 1, 1], [], []>} : vector<8x16xf32>, vector<16x48xf32>, vector<8x48xf32> -> vector<8x48xf32>
    %526 = vector.extract_strided_slice %525 {offsets = [0, 0], sizes = [8, 16], strides = [1, 1]} : vector<8x48xf32> to vector<8x16xf32>
    %527 = vector.extract_strided_slice %524 {offsets = [0, 0], sizes = [1, 16], strides = [1, 1]} : vector<10x16xf32> to vector<1x16xf32>
    %528 = vector.broadcast %527 : vector<1x16xf32> to vector<8x16xf32>
    %529 = arith.addf %526, %528 : vector<8x16xf32>
    %cst_167 = arith.constant 0.353553385 : f32
    %530 = vector.broadcast %cst_167 : f32 to vector<8x16xf32>
    %531 = arith.mulf %529, %530 : vector<8x16xf32>
    %532 = vector.extract_strided_slice %525 {offsets = [0, 16], sizes = [8, 16], strides = [1, 1]} : vector<8x48xf32> to vector<8x16xf32>
    %533 = vector.extract_strided_slice %524 {offsets = [1, 0], sizes = [1, 16], strides = [1, 1]} : vector<10x16xf32> to vector<1x16xf32>
    %534 = vector.broadcast %533 : vector<1x16xf32> to vector<8x16xf32>
    %535 = arith.addf %532, %534 : vector<8x16xf32>
    %536 = vector.extract_strided_slice %525 {offsets = [0, 32], sizes = [8, 16], strides = [1, 1]} : vector<8x48xf32> to vector<8x16xf32>
    %537 = vector.extract_strided_slice %524 {offsets = [2, 0], sizes = [1, 16], strides = [1, 1]} : vector<10x16xf32> to vector<1x16xf32>
    %538 = vector.broadcast %537 : vector<1x16xf32> to vector<8x16xf32>
    %539 = arith.addf %536, %538 : vector<8x16xf32>
    %540 = vector.extract_strided_slice %522 {offsets = [0, 0, 0], sizes = [1, 16, 16], strides = [1, 1, 1]} : vector<3x16x16xf32> to vector<1x16x16xf32>
    %541 = vector.shape_cast %540 : vector<1x16x16xf32> to vector<16x16xf32>
    %cst_168 = arith.constant 0.000000e+00 : f32
    %542 = vector.broadcast %cst_168 : f32 to vector<8x16xf32>
    %543 = vector.extract_strided_slice %531 {offsets = [0, 0], sizes = [8, 8], strides = [1, 1]} : vector<8x16xf32> to vector<8x8xf32>
    %544 = vector.extract_strided_slice %535 {offsets = [0, 0], sizes = [8, 8], strides = [1, 1]} : vector<8x16xf32> to vector<8x8xf32>
    %cst_169 = arith.constant dense<0.000000e+00> : vector<8x8xf32>
    %545 = tpu.matmul %543, %544, %cst_169 {dimension_numbers = #tpu.dot_dimension_numbers<[1], [1], [0], [0], [0, 0, 1, 0], [], []>} : vector<8x8xf32>, vector<8x8xf32>, vector<8x8xf32> -> vector<8x8xf32>
    %cst_170 = arith.constant dense<0xFF800000> : vector<8xf32>
    %546 = vector.multi_reduction <maximumf>, %545, %cst_170 [1] : vector<8x8xf32> to vector<8xf32>
    %547 = vector.shape_cast %546 : vector<8xf32> to vector<8x1xf32>
    %548 = vector.broadcast %547 : vector<8x1xf32> to vector<8x8xf32>
    %549 = arith.subf %545, %548 : vector<8x8xf32>
    %550 = math.exp %549 : vector<8x8xf32>
    %cst_171 = arith.constant dense<0.000000e+00> : vector<8xf32>
    %551 = vector.multi_reduction <add>, %550, %cst_171 [1] : vector<8x8xf32> to vector<8xf32>
    %552 = vector.shape_cast %551 : vector<8xf32> to vector<8x1xf32>
    %553 = tpu.reciprocal %552 {approx = true} : vector<8x1xf32> -> vector<8x1xf32>
    %554 = vector.broadcast %553 : vector<8x1xf32> to vector<8x8xf32>
    %555 = arith.mulf %550, %554 : vector<8x8xf32>
    %556 = vector.extract_strided_slice %539 {offsets = [0, 0], sizes = [8, 8], strides = [1, 1]} : vector<8x16xf32> to vector<8x8xf32>
    %cst_172 = arith.constant dense<0.000000e+00> : vector<8x8xf32>
    %557 = tpu.matmul %555, %556, %cst_172 {dimension_numbers = #tpu.dot_dimension_numbers<[1], [0], [0], [1], [0, 0, 1, 1], [], []>} : vector<8x8xf32>, vector<8x8xf32>, vector<8x8xf32> -> vector<8x8xf32>
    %558 = vector.extract_strided_slice %541 {offsets = [0, 0], sizes = [8, 16], strides = [1, 1]} : vector<16x16xf32> to vector<8x16xf32>
    %cst_173 = arith.constant dense<0.000000e+00> : vector<8x16xf32>
    %559 = tpu.matmul %557, %558, %cst_173 {dimension_numbers = #tpu.dot_dimension_numbers<[1], [0], [0], [1], [0, 0, 1, 1], [], []>} : vector<8x8xf32>, vector<8x16xf32>, vector<8x16xf32> -> vector<8x16xf32>
    %560 = arith.addf %542, %559 : vector<8x16xf32>
    %561 = vector.extract_strided_slice %531 {offsets = [0, 8], sizes = [8, 8], strides = [1, 1]} : vector<8x16xf32> to vector<8x8xf32>
    %562 = vector.extract_strided_slice %535 {offsets = [0, 8], sizes = [8, 8], strides = [1, 1]} : vector<8x16xf32> to vector<8x8xf32>
    %cst_174 = arith.constant dense<0.000000e+00> : vector<8x8xf32>
    %563 = tpu.matmul %561, %562, %cst_174 {dimension_numbers = #tpu.dot_dimension_numbers<[1], [1], [0], [0], [0, 0, 1, 0], [], []>} : vector<8x8xf32>, vector<8x8xf32>, vector<8x8xf32> -> vector<8x8xf32>
    %cst_175 = arith.constant dense<0xFF800000> : vector<8xf32>
    %564 = vector.multi_reduction <maximumf>, %563, %cst_175 [1] : vector<8x8xf32> to vector<8xf32>
    %565 = vector.shape_cast %564 : vector<8xf32> to vector<8x1xf32>
    %566 = vector.broadcast %565 : vector<8x1xf32> to vector<8x8xf32>
    %567 = arith.subf %563, %566 : vector<8x8xf32>
    %568 = math.exp %567 : vector<8x8xf32>
    %cst_176 = arith.constant dense<0.000000e+00> : vector<8xf32>
    %569 = vector.multi_reduction <add>, %568, %cst_176 [1] : vector<8x8xf32> to vector<8xf32>
    %570 = vector.shape_cast %569 : vector<8xf32> to vector<8x1xf32>
    %571 = tpu.reciprocal %570 {approx = true} : vector<8x1xf32> -> vector<8x1xf32>
    %572 = vector.broadcast %571 : vector<8x1xf32> to vector<8x8xf32>
    %573 = arith.mulf %568, %572 : vector<8x8xf32>
    %574 = vector.extract_strided_slice %539 {offsets = [0, 8], sizes = [8, 8], strides = [1, 1]} : vector<8x16xf32> to vector<8x8xf32>
    %cst_177 = arith.constant dense<0.000000e+00> : vector<8x8xf32>
    %575 = tpu.matmul %573, %574, %cst_177 {dimension_numbers = #tpu.dot_dimension_numbers<[1], [0], [0], [1], [0, 0, 1, 1], [], []>} : vector<8x8xf32>, vector<8x8xf32>, vector<8x8xf32> -> vector<8x8xf32>
    %576 = vector.extract_strided_slice %541 {offsets = [8, 0], sizes = [8, 16], strides = [1, 1]} : vector<16x16xf32> to vector<8x16xf32>
    %cst_178 = arith.constant dense<0.000000e+00> : vector<8x16xf32>
    %577 = tpu.matmul %575, %576, %cst_178 {dimension_numbers = #tpu.dot_dimension_numbers<[1], [0], [0], [1], [0, 0, 1, 1], [], []>} : vector<8x8xf32>, vector<8x16xf32>, vector<8x16xf32> -> vector<8x16xf32>
    %578 = arith.addf %560, %577 : vector<8x16xf32>
    %579 = vector.extract_strided_slice %524 {offsets = [3, 0], sizes = [1, 16], strides = [1, 1]} : vector<10x16xf32> to vector<1x16xf32>
    %580 = vector.broadcast %579 : vector<1x16xf32> to vector<8x16xf32>
    %581 = arith.addf %578, %580 : vector<8x16xf32>
    %582 = arith.addf %518, %581 : vector<8x16xf32>
    %583 = vector.extract_strided_slice %524 {offsets = [4, 0], sizes = [1, 16], strides = [1, 1]} : vector<10x16xf32> to vector<1x16xf32>
    %584 = vector.extract_strided_slice %524 {offsets = [5, 0], sizes = [1, 16], strides = [1, 1]} : vector<10x16xf32> to vector<1x16xf32>
    %cst_179 = arith.constant dense<0.000000e+00> : vector<8xf32>
    %585 = vector.multi_reduction <add>, %582, %cst_179 [1] : vector<8x16xf32> to vector<8xf32>
    %586 = vector.shape_cast %585 : vector<8xf32> to vector<8x1xf32>
    %cst_180 = arith.constant 1.600000e+01 : f32
    %587 = vector.broadcast %cst_180 : f32 to vector<8x1xf32>
    %588 = arith.divf %586, %587 : vector<8x1xf32>
    %589 = vector.broadcast %588 : vector<8x1xf32> to vector<8x16xf32>
    %590 = arith.subf %582, %589 : vector<8x16xf32>
    %591 = arith.mulf %590, %590 : vector<8x16xf32>
    %cst_181 = arith.constant dense<0.000000e+00> : vector<8xf32>
    %592 = vector.multi_reduction <add>, %591, %cst_181 [1] : vector<8x16xf32> to vector<8xf32>
    %593 = vector.shape_cast %592 : vector<8xf32> to vector<8x1xf32>
    %cst_182 = arith.constant 1.600000e+01 : f32
    %594 = vector.broadcast %cst_182 : f32 to vector<8x1xf32>
    %595 = arith.divf %593, %594 : vector<8x1xf32>
    %596 = vector.broadcast %588 : vector<8x1xf32> to vector<8x16xf32>
    %597 = arith.subf %582, %596 : vector<8x16xf32>
    %cst_183 = arith.constant 9.99999974E-6 : f32
    %598 = vector.broadcast %cst_183 : f32 to vector<8x1xf32>
    %599 = arith.addf %595, %598 : vector<8x1xf32>
    %600 = math.rsqrt %599 : vector<8x1xf32>
    %601 = vector.broadcast %600 : vector<8x1xf32> to vector<8x16xf32>
    %602 = arith.mulf %597, %601 : vector<8x16xf32>
    %603 = vector.broadcast %583 : vector<1x16xf32> to vector<8x16xf32>
    %604 = arith.mulf %602, %603 : vector<8x16xf32>
    %605 = vector.broadcast %584 : vector<1x16xf32> to vector<8x16xf32>
    %606 = arith.addf %604, %605 : vector<8x16xf32>
    %607 = vector.extract_strided_slice %522 {offsets = [1, 0, 0], sizes = [1, 16, 16], strides = [1, 1, 1]} : vector<3x16x16xf32> to vector<1x16x16xf32>
    %608 = vector.shape_cast %607 : vector<1x16x16xf32> to vector<16x16xf32>
    %cst_184 = arith.constant dense<0.000000e+00> : vector<8x16xf32>
    %609 = tpu.matmul %606, %608, %cst_184 {dimension_numbers = #tpu.dot_dimension_numbers<[1], [0], [0], [1], [0, 0, 1, 1], [], []>} : vector<8x16xf32>, vector<16x16xf32>, vector<8x16xf32> -> vector<8x16xf32>
    %610 = vector.extract_strided_slice %524 {offsets = [6, 0], sizes = [1, 16], strides = [1, 1]} : vector<10x16xf32> to vector<1x16xf32>
    %611 = vector.broadcast %610 : vector<1x16xf32> to vector<8x16xf32>
    %612 = arith.addf %609, %611 : vector<8x16xf32>
    %cst_185 = arith.constant 5.000000e-01 : f32
    %613 = vector.broadcast %cst_185 : f32 to vector<8x16xf32>
    %614 = arith.mulf %613, %612 : vector<8x16xf32>
    %cst_186 = arith.constant 0.707106769 : f32
    %615 = vector.broadcast %cst_186 : f32 to vector<8x16xf32>
    %616 = arith.mulf %612, %615 : vector<8x16xf32>
    %617 = math.erf %616 : vector<8x16xf32>
    %cst_187 = arith.constant 1.000000e+00 : f32
    %618 = vector.broadcast %cst_187 : f32 to vector<8x16xf32>
    %619 = arith.addf %618, %617 : vector<8x16xf32>
    %620 = arith.mulf %614, %619 : vector<8x16xf32>
    %621 = vector.extract_strided_slice %522 {offsets = [2, 0, 0], sizes = [1, 16, 16], strides = [1, 1, 1]} : vector<3x16x16xf32> to vector<1x16x16xf32>
    %622 = vector.shape_cast %621 : vector<1x16x16xf32> to vector<16x16xf32>
    %cst_188 = arith.constant dense<0.000000e+00> : vector<8x16xf32>
    %623 = tpu.matmul %620, %622, %cst_188 {dimension_numbers = #tpu.dot_dimension_numbers<[1], [0], [0], [1], [0, 0, 1, 1], [], []>} : vector<8x16xf32>, vector<16x16xf32>, vector<8x16xf32> -> vector<8x16xf32>
    %624 = vector.extract_strided_slice %524 {offsets = [7, 0], sizes = [1, 16], strides = [1, 1]} : vector<10x16xf32> to vector<1x16xf32>
    %625 = vector.broadcast %624 : vector<1x16xf32> to vector<8x16xf32>
    %626 = arith.addf %623, %625 : vector<8x16xf32>
    %627 = arith.addf %606, %626 : vector<8x16xf32>
    %628 = vector.extract_strided_slice %524 {offsets = [8, 0], sizes = [1, 16], strides = [1, 1]} : vector<10x16xf32> to vector<1x16xf32>
    %629 = vector.extract_strided_slice %524 {offsets = [9, 0], sizes = [1, 16], strides = [1, 1]} : vector<10x16xf32> to vector<1x16xf32>
    %cst_189 = arith.constant dense<0.000000e+00> : vector<8xf32>
    %630 = vector.multi_reduction <add>, %627, %cst_189 [1] : vector<8x16xf32> to vector<8xf32>
    %631 = vector.shape_cast %630 : vector<8xf32> to vector<8x1xf32>
    %cst_190 = arith.constant 1.600000e+01 : f32
    %632 = vector.broadcast %cst_190 : f32 to vector<8x1xf32>
    %633 = arith.divf %631, %632 : vector<8x1xf32>
    %634 = vector.broadcast %633 : vector<8x1xf32> to vector<8x16xf32>
    %635 = arith.subf %627, %634 : vector<8x16xf32>
    %636 = arith.mulf %635, %635 : vector<8x16xf32>
    %cst_191 = arith.constant dense<0.000000e+00> : vector<8xf32>
    %637 = vector.multi_reduction <add>, %636, %cst_191 [1] : vector<8x16xf32> to vector<8xf32>
    %638 = vector.shape_cast %637 : vector<8xf32> to vector<8x1xf32>
    %cst_192 = arith.constant 1.600000e+01 : f32
    %639 = vector.broadcast %cst_192 : f32 to vector<8x1xf32>
    %640 = arith.divf %638, %639 : vector<8x1xf32>
    %641 = vector.broadcast %633 : vector<8x1xf32> to vector<8x16xf32>
    %642 = arith.subf %627, %641 : vector<8x16xf32>
    %cst_193 = arith.constant 9.99999974E-6 : f32
    %643 = vector.broadcast %cst_193 : f32 to vector<8x1xf32>
    %644 = arith.addf %640, %643 : vector<8x1xf32>
    %645 = math.rsqrt %644 : vector<8x1xf32>
    %646 = vector.broadcast %645 : vector<8x1xf32> to vector<8x16xf32>
    %647 = arith.mulf %642, %646 : vector<8x16xf32>
    %648 = vector.broadcast %628 : vector<1x16xf32> to vector<8x16xf32>
    %649 = arith.mulf %647, %648 : vector<8x16xf32>
    %650 = vector.broadcast %629 : vector<1x16xf32> to vector<8x16xf32>
    %651 = arith.addf %649, %650 : vector<8x16xf32>
    %652 = vector.extract_strided_slice %378 {offsets = [1, 0], sizes = [1, 16], strides = [1, 1]} : vector<3x16xf32> to vector<1x16xf32>
    %653 = vector.extract_strided_slice %378 {offsets = [2, 0], sizes = [1, 16], strides = [1, 1]} : vector<3x16xf32> to vector<1x16xf32>
    %cst_194 = arith.constant dense<0.000000e+00> : vector<8xf32>
    %654 = vector.multi_reduction <add>, %651, %cst_194 [1] : vector<8x16xf32> to vector<8xf32>
    %655 = vector.shape_cast %654 : vector<8xf32> to vector<8x1xf32>
    %cst_195 = arith.constant 1.600000e+01 : f32
    %656 = vector.broadcast %cst_195 : f32 to vector<8x1xf32>
    %657 = arith.divf %655, %656 : vector<8x1xf32>
    %658 = vector.broadcast %657 : vector<8x1xf32> to vector<8x16xf32>
    %659 = arith.subf %651, %658 : vector<8x16xf32>
    %660 = arith.mulf %659, %659 : vector<8x16xf32>
    %cst_196 = arith.constant dense<0.000000e+00> : vector<8xf32>
    %661 = vector.multi_reduction <add>, %660, %cst_196 [1] : vector<8x16xf32> to vector<8xf32>
    %662 = vector.shape_cast %661 : vector<8xf32> to vector<8x1xf32>
    %cst_197 = arith.constant 1.600000e+01 : f32
    %663 = vector.broadcast %cst_197 : f32 to vector<8x1xf32>
    %664 = arith.divf %662, %663 : vector<8x1xf32>
    %665 = vector.broadcast %657 : vector<8x1xf32> to vector<8x16xf32>
    %666 = arith.subf %651, %665 : vector<8x16xf32>
    %cst_198 = arith.constant 9.99999974E-6 : f32
    %667 = vector.broadcast %cst_198 : f32 to vector<8x1xf32>
    %668 = arith.addf %664, %667 : vector<8x1xf32>
    %669 = math.rsqrt %668 : vector<8x1xf32>
    %670 = vector.broadcast %669 : vector<8x1xf32> to vector<8x16xf32>
    %671 = arith.mulf %666, %670 : vector<8x16xf32>
    %672 = vector.broadcast %652 : vector<1x16xf32> to vector<8x16xf32>
    %673 = arith.mulf %671, %672 : vector<8x16xf32>
    %674 = vector.broadcast %653 : vector<1x16xf32> to vector<8x16xf32>
    %675 = arith.addf %673, %674 : vector<8x16xf32>
    %cst_199 = arith.constant dense<0.000000e+00> : vector<16xf32>
    %676 = vector.multi_reduction <add>, %675, %cst_199 [0] : vector<8x16xf32> to vector<16xf32>
    %677 = vector.shape_cast %676 : vector<16xf32> to vector<1x16xf32>
    %cst_200 = arith.constant 8.000000e+00 : f32
    %678 = vector.broadcast %cst_200 : f32 to vector<1x16xf32>
    %679 = arith.divf %677, %678 : vector<1x16xf32>
    %c0_201 = arith.constant 0 : index
    %c0_202 = arith.constant 0 : index
    %c0_203 = arith.constant 0 : index
    %680 = vector.load %arg3[%c0_201, %c0_202, %c0_203] : memref<1x8x4xf32, #tpu.memory_space<vmem>>, vector<1x8x4xf32>
    %681 = vector.shape_cast %680 : vector<1x8x4xf32> to vector<8x4xf32>
    %c0_204 = arith.constant 0 : index
    %c0_205 = arith.constant 0 : index
    %682 = vector.load %arg15[%c0_204, %c0_205] : memref<3x16xf32, #tpu.memory_space<vmem>>, vector<3x16xf32>
    %c0_206 = arith.constant 0 : index
    %c0_207 = arith.constant 0 : index
    %683 = vector.load %arg14[%c0_206, %c0_207] : memref<4x16xf32, #tpu.memory_space<vmem>>, vector<4x16xf32>
    %cst_208 = arith.constant dense<0.000000e+00> : vector<8x16xf32>
    %684 = tpu.matmul %681, %683, %cst_208 {dimension_numbers = #tpu.dot_dimension_numbers<[1], [0], [0], [1], [0, 0, 1, 1], [], []>} : vector<8x4xf32>, vector<4x16xf32>, vector<8x16xf32> -> vector<8x16xf32>
    %685 = vector.extract_strided_slice %682 {offsets = [0, 0], sizes = [1, 16], strides = [1, 1]} : vector<3x16xf32> to vector<1x16xf32>
    %686 = vector.broadcast %685 : vector<1x16xf32> to vector<8x16xf32>
    %687 = arith.addf %684, %686 : vector<8x16xf32>
    %cst_209 = arith.constant 0.000000e+00 : f32
    %688 = vector.broadcast %cst_209 : f32 to vector<8x16xf32>
    %689 = arith.maximumf %687, %688 : vector<8x16xf32>
    %c0_210 = arith.constant 0 : index
    %c0_211 = arith.constant 0 : index
    %c0_212 = arith.constant 0 : index
    %690 = vector.load %arg16[%c0_210, %c0_211, %c0_212] : memref<2x16x48xf32, #tpu.memory_space<vmem>>, vector<1x16x48xf32>
    %691 = vector.shape_cast %690 : vector<1x16x48xf32> to vector<16x48xf32>
    %c0_213 = arith.constant 0 : index
    %c0_214 = arith.constant 0 : index
    %c0_215 = arith.constant 0 : index
    %c0_216 = arith.constant 0 : index
    %692 = vector.load %arg17[%c0_213, %c0_214, %c0_215, %c0_216] : memref<2x3x16x16xf32, #tpu.memory_space<vmem>>, vector<1x3x16x16xf32>
    %693 = vector.shape_cast %692 : vector<1x3x16x16xf32> to vector<3x16x16xf32>
    %c0_217 = arith.constant 0 : index
    %c0_218 = arith.constant 0 : index
    %c0_219 = arith.constant 0 : index
    %694 = vector.load %arg18[%c0_217, %c0_218, %c0_219] : memref<2x10x16xf32, #tpu.memory_space<vmem>>, vector<1x10x16xf32>
    %695 = vector.shape_cast %694 : vector<1x10x16xf32> to vector<10x16xf32>
    %cst_220 = arith.constant dense<0.000000e+00> : vector<8x48xf32>
    %696 = tpu.matmul %689, %691, %cst_220 {dimension_numbers = #tpu.dot_dimension_numbers<[1], [0], [0], [1], [0, 0, 1, 1], [], []>} : vector<8x16xf32>, vector<16x48xf32>, vector<8x48xf32> -> vector<8x48xf32>
    %697 = vector.extract_strided_slice %696 {offsets = [0, 0], sizes = [8, 16], strides = [1, 1]} : vector<8x48xf32> to vector<8x16xf32>
    %698 = vector.extract_strided_slice %695 {offsets = [0, 0], sizes = [1, 16], strides = [1, 1]} : vector<10x16xf32> to vector<1x16xf32>
    %699 = vector.broadcast %698 : vector<1x16xf32> to vector<8x16xf32>
    %700 = arith.addf %697, %699 : vector<8x16xf32>
    %cst_221 = arith.constant 0.353553385 : f32
    %701 = vector.broadcast %cst_221 : f32 to vector<8x16xf32>
    %702 = arith.mulf %700, %701 : vector<8x16xf32>
    %703 = vector.extract_strided_slice %696 {offsets = [0, 16], sizes = [8, 16], strides = [1, 1]} : vector<8x48xf32> to vector<8x16xf32>
    %704 = vector.extract_strided_slice %695 {offsets = [1, 0], sizes = [1, 16], strides = [1, 1]} : vector<10x16xf32> to vector<1x16xf32>
    %705 = vector.broadcast %704 : vector<1x16xf32> to vector<8x16xf32>
    %706 = arith.addf %703, %705 : vector<8x16xf32>
    %707 = vector.extract_strided_slice %696 {offsets = [0, 32], sizes = [8, 16], strides = [1, 1]} : vector<8x48xf32> to vector<8x16xf32>
    %708 = vector.extract_strided_slice %695 {offsets = [2, 0], sizes = [1, 16], strides = [1, 1]} : vector<10x16xf32> to vector<1x16xf32>
    %709 = vector.broadcast %708 : vector<1x16xf32> to vector<8x16xf32>
    %710 = arith.addf %707, %709 : vector<8x16xf32>
    %711 = vector.extract_strided_slice %693 {offsets = [0, 0, 0], sizes = [1, 16, 16], strides = [1, 1, 1]} : vector<3x16x16xf32> to vector<1x16x16xf32>
    %712 = vector.shape_cast %711 : vector<1x16x16xf32> to vector<16x16xf32>
    %cst_222 = arith.constant 0.000000e+00 : f32
    %713 = vector.broadcast %cst_222 : f32 to vector<8x16xf32>
    %714 = vector.extract_strided_slice %702 {offsets = [0, 0], sizes = [8, 8], strides = [1, 1]} : vector<8x16xf32> to vector<8x8xf32>
    %715 = vector.extract_strided_slice %706 {offsets = [0, 0], sizes = [8, 8], strides = [1, 1]} : vector<8x16xf32> to vector<8x8xf32>
    %cst_223 = arith.constant dense<0.000000e+00> : vector<8x8xf32>
    %716 = tpu.matmul %714, %715, %cst_223 {dimension_numbers = #tpu.dot_dimension_numbers<[1], [1], [0], [0], [0, 0, 1, 0], [], []>} : vector<8x8xf32>, vector<8x8xf32>, vector<8x8xf32> -> vector<8x8xf32>
    %cst_224 = arith.constant dense<0xFF800000> : vector<8xf32>
    %717 = vector.multi_reduction <maximumf>, %716, %cst_224 [1] : vector<8x8xf32> to vector<8xf32>
    %718 = vector.shape_cast %717 : vector<8xf32> to vector<8x1xf32>
    %719 = vector.broadcast %718 : vector<8x1xf32> to vector<8x8xf32>
    %720 = arith.subf %716, %719 : vector<8x8xf32>
    %721 = math.exp %720 : vector<8x8xf32>
    %cst_225 = arith.constant dense<0.000000e+00> : vector<8xf32>
    %722 = vector.multi_reduction <add>, %721, %cst_225 [1] : vector<8x8xf32> to vector<8xf32>
    %723 = vector.shape_cast %722 : vector<8xf32> to vector<8x1xf32>
    %724 = tpu.reciprocal %723 {approx = true} : vector<8x1xf32> -> vector<8x1xf32>
    %725 = vector.broadcast %724 : vector<8x1xf32> to vector<8x8xf32>
    %726 = arith.mulf %721, %725 : vector<8x8xf32>
    %727 = vector.extract_strided_slice %710 {offsets = [0, 0], sizes = [8, 8], strides = [1, 1]} : vector<8x16xf32> to vector<8x8xf32>
    %cst_226 = arith.constant dense<0.000000e+00> : vector<8x8xf32>
    %728 = tpu.matmul %726, %727, %cst_226 {dimension_numbers = #tpu.dot_dimension_numbers<[1], [0], [0], [1], [0, 0, 1, 1], [], []>} : vector<8x8xf32>, vector<8x8xf32>, vector<8x8xf32> -> vector<8x8xf32>
    %729 = vector.extract_strided_slice %712 {offsets = [0, 0], sizes = [8, 16], strides = [1, 1]} : vector<16x16xf32> to vector<8x16xf32>
    %cst_227 = arith.constant dense<0.000000e+00> : vector<8x16xf32>
    %730 = tpu.matmul %728, %729, %cst_227 {dimension_numbers = #tpu.dot_dimension_numbers<[1], [0], [0], [1], [0, 0, 1, 1], [], []>} : vector<8x8xf32>, vector<8x16xf32>, vector<8x16xf32> -> vector<8x16xf32>
    %731 = arith.addf %713, %730 : vector<8x16xf32>
    %732 = vector.extract_strided_slice %702 {offsets = [0, 8], sizes = [8, 8], strides = [1, 1]} : vector<8x16xf32> to vector<8x8xf32>
    %733 = vector.extract_strided_slice %706 {offsets = [0, 8], sizes = [8, 8], strides = [1, 1]} : vector<8x16xf32> to vector<8x8xf32>
    %cst_228 = arith.constant dense<0.000000e+00> : vector<8x8xf32>
    %734 = tpu.matmul %732, %733, %cst_228 {dimension_numbers = #tpu.dot_dimension_numbers<[1], [1], [0], [0], [0, 0, 1, 0], [], []>} : vector<8x8xf32>, vector<8x8xf32>, vector<8x8xf32> -> vector<8x8xf32>
    %cst_229 = arith.constant dense<0xFF800000> : vector<8xf32>
    %735 = vector.multi_reduction <maximumf>, %734, %cst_229 [1] : vector<8x8xf32> to vector<8xf32>
    %736 = vector.shape_cast %735 : vector<8xf32> to vector<8x1xf32>
    %737 = vector.broadcast %736 : vector<8x1xf32> to vector<8x8xf32>
    %738 = arith.subf %734, %737 : vector<8x8xf32>
    %739 = math.exp %738 : vector<8x8xf32>
    %cst_230 = arith.constant dense<0.000000e+00> : vector<8xf32>
    %740 = vector.multi_reduction <add>, %739, %cst_230 [1] : vector<8x8xf32> to vector<8xf32>
    %741 = vector.shape_cast %740 : vector<8xf32> to vector<8x1xf32>
    %742 = tpu.reciprocal %741 {approx = true} : vector<8x1xf32> -> vector<8x1xf32>
    %743 = vector.broadcast %742 : vector<8x1xf32> to vector<8x8xf32>
    %744 = arith.mulf %739, %743 : vector<8x8xf32>
    %745 = vector.extract_strided_slice %710 {offsets = [0, 8], sizes = [8, 8], strides = [1, 1]} : vector<8x16xf32> to vector<8x8xf32>
    %cst_231 = arith.constant dense<0.000000e+00> : vector<8x8xf32>
    %746 = tpu.matmul %744, %745, %cst_231 {dimension_numbers = #tpu.dot_dimension_numbers<[1], [0], [0], [1], [0, 0, 1, 1], [], []>} : vector<8x8xf32>, vector<8x8xf32>, vector<8x8xf32> -> vector<8x8xf32>
    %747 = vector.extract_strided_slice %712 {offsets = [8, 0], sizes = [8, 16], strides = [1, 1]} : vector<16x16xf32> to vector<8x16xf32>
    %cst_232 = arith.constant dense<0.000000e+00> : vector<8x16xf32>
    %748 = tpu.matmul %746, %747, %cst_232 {dimension_numbers = #tpu.dot_dimension_numbers<[1], [0], [0], [1], [0, 0, 1, 1], [], []>} : vector<8x8xf32>, vector<8x16xf32>, vector<8x16xf32> -> vector<8x16xf32>
    %749 = arith.addf %731, %748 : vector<8x16xf32>
    %750 = vector.extract_strided_slice %695 {offsets = [3, 0], sizes = [1, 16], strides = [1, 1]} : vector<10x16xf32> to vector<1x16xf32>
    %751 = vector.broadcast %750 : vector<1x16xf32> to vector<8x16xf32>
    %752 = arith.addf %749, %751 : vector<8x16xf32>
    %753 = arith.addf %689, %752 : vector<8x16xf32>
    %754 = vector.extract_strided_slice %695 {offsets = [4, 0], sizes = [1, 16], strides = [1, 1]} : vector<10x16xf32> to vector<1x16xf32>
    %755 = vector.extract_strided_slice %695 {offsets = [5, 0], sizes = [1, 16], strides = [1, 1]} : vector<10x16xf32> to vector<1x16xf32>
    %cst_233 = arith.constant dense<0.000000e+00> : vector<8xf32>
    %756 = vector.multi_reduction <add>, %753, %cst_233 [1] : vector<8x16xf32> to vector<8xf32>
    %757 = vector.shape_cast %756 : vector<8xf32> to vector<8x1xf32>
    %cst_234 = arith.constant 1.600000e+01 : f32
    %758 = vector.broadcast %cst_234 : f32 to vector<8x1xf32>
    %759 = arith.divf %757, %758 : vector<8x1xf32>
    %760 = vector.broadcast %759 : vector<8x1xf32> to vector<8x16xf32>
    %761 = arith.subf %753, %760 : vector<8x16xf32>
    %762 = arith.mulf %761, %761 : vector<8x16xf32>
    %cst_235 = arith.constant dense<0.000000e+00> : vector<8xf32>
    %763 = vector.multi_reduction <add>, %762, %cst_235 [1] : vector<8x16xf32> to vector<8xf32>
    %764 = vector.shape_cast %763 : vector<8xf32> to vector<8x1xf32>
    %cst_236 = arith.constant 1.600000e+01 : f32
    %765 = vector.broadcast %cst_236 : f32 to vector<8x1xf32>
    %766 = arith.divf %764, %765 : vector<8x1xf32>
    %767 = vector.broadcast %759 : vector<8x1xf32> to vector<8x16xf32>
    %768 = arith.subf %753, %767 : vector<8x16xf32>
    %cst_237 = arith.constant 9.99999974E-6 : f32
    %769 = vector.broadcast %cst_237 : f32 to vector<8x1xf32>
    %770 = arith.addf %766, %769 : vector<8x1xf32>
    %771 = math.rsqrt %770 : vector<8x1xf32>
    %772 = vector.broadcast %771 : vector<8x1xf32> to vector<8x16xf32>
    %773 = arith.mulf %768, %772 : vector<8x16xf32>
    %774 = vector.broadcast %754 : vector<1x16xf32> to vector<8x16xf32>
    %775 = arith.mulf %773, %774 : vector<8x16xf32>
    %776 = vector.broadcast %755 : vector<1x16xf32> to vector<8x16xf32>
    %777 = arith.addf %775, %776 : vector<8x16xf32>
    %778 = vector.extract_strided_slice %693 {offsets = [1, 0, 0], sizes = [1, 16, 16], strides = [1, 1, 1]} : vector<3x16x16xf32> to vector<1x16x16xf32>
    %779 = vector.shape_cast %778 : vector<1x16x16xf32> to vector<16x16xf32>
    %cst_238 = arith.constant dense<0.000000e+00> : vector<8x16xf32>
    %780 = tpu.matmul %777, %779, %cst_238 {dimension_numbers = #tpu.dot_dimension_numbers<[1], [0], [0], [1], [0, 0, 1, 1], [], []>} : vector<8x16xf32>, vector<16x16xf32>, vector<8x16xf32> -> vector<8x16xf32>
    %781 = vector.extract_strided_slice %695 {offsets = [6, 0], sizes = [1, 16], strides = [1, 1]} : vector<10x16xf32> to vector<1x16xf32>
    %782 = vector.broadcast %781 : vector<1x16xf32> to vector<8x16xf32>
    %783 = arith.addf %780, %782 : vector<8x16xf32>
    %cst_239 = arith.constant 5.000000e-01 : f32
    %784 = vector.broadcast %cst_239 : f32 to vector<8x16xf32>
    %785 = arith.mulf %784, %783 : vector<8x16xf32>
    %cst_240 = arith.constant 0.707106769 : f32
    %786 = vector.broadcast %cst_240 : f32 to vector<8x16xf32>
    %787 = arith.mulf %783, %786 : vector<8x16xf32>
    %788 = math.erf %787 : vector<8x16xf32>
    %cst_241 = arith.constant 1.000000e+00 : f32
    %789 = vector.broadcast %cst_241 : f32 to vector<8x16xf32>
    %790 = arith.addf %789, %788 : vector<8x16xf32>
    %791 = arith.mulf %785, %790 : vector<8x16xf32>
    %792 = vector.extract_strided_slice %693 {offsets = [2, 0, 0], sizes = [1, 16, 16], strides = [1, 1, 1]} : vector<3x16x16xf32> to vector<1x16x16xf32>
    %793 = vector.shape_cast %792 : vector<1x16x16xf32> to vector<16x16xf32>
    %cst_242 = arith.constant dense<0.000000e+00> : vector<8x16xf32>
    %794 = tpu.matmul %791, %793, %cst_242 {dimension_numbers = #tpu.dot_dimension_numbers<[1], [0], [0], [1], [0, 0, 1, 1], [], []>} : vector<8x16xf32>, vector<16x16xf32>, vector<8x16xf32> -> vector<8x16xf32>
    %795 = vector.extract_strided_slice %695 {offsets = [7, 0], sizes = [1, 16], strides = [1, 1]} : vector<10x16xf32> to vector<1x16xf32>
    %796 = vector.broadcast %795 : vector<1x16xf32> to vector<8x16xf32>
    %797 = arith.addf %794, %796 : vector<8x16xf32>
    %798 = arith.addf %777, %797 : vector<8x16xf32>
    %799 = vector.extract_strided_slice %695 {offsets = [8, 0], sizes = [1, 16], strides = [1, 1]} : vector<10x16xf32> to vector<1x16xf32>
    %800 = vector.extract_strided_slice %695 {offsets = [9, 0], sizes = [1, 16], strides = [1, 1]} : vector<10x16xf32> to vector<1x16xf32>
    %cst_243 = arith.constant dense<0.000000e+00> : vector<8xf32>
    %801 = vector.multi_reduction <add>, %798, %cst_243 [1] : vector<8x16xf32> to vector<8xf32>
    %802 = vector.shape_cast %801 : vector<8xf32> to vector<8x1xf32>
    %cst_244 = arith.constant 1.600000e+01 : f32
    %803 = vector.broadcast %cst_244 : f32 to vector<8x1xf32>
    %804 = arith.divf %802, %803 : vector<8x1xf32>
    %805 = vector.broadcast %804 : vector<8x1xf32> to vector<8x16xf32>
    %806 = arith.subf %798, %805 : vector<8x16xf32>
    %807 = arith.mulf %806, %806 : vector<8x16xf32>
    %cst_245 = arith.constant dense<0.000000e+00> : vector<8xf32>
    %808 = vector.multi_reduction <add>, %807, %cst_245 [1] : vector<8x16xf32> to vector<8xf32>
    %809 = vector.shape_cast %808 : vector<8xf32> to vector<8x1xf32>
    %cst_246 = arith.constant 1.600000e+01 : f32
    %810 = vector.broadcast %cst_246 : f32 to vector<8x1xf32>
    %811 = arith.divf %809, %810 : vector<8x1xf32>
    %812 = vector.broadcast %804 : vector<8x1xf32> to vector<8x16xf32>
    %813 = arith.subf %798, %812 : vector<8x16xf32>
    %cst_247 = arith.constant 9.99999974E-6 : f32
    %814 = vector.broadcast %cst_247 : f32 to vector<8x1xf32>
    %815 = arith.addf %811, %814 : vector<8x1xf32>
    %816 = math.rsqrt %815 : vector<8x1xf32>
    %817 = vector.broadcast %816 : vector<8x1xf32> to vector<8x16xf32>
    %818 = arith.mulf %813, %817 : vector<8x16xf32>
    %819 = vector.broadcast %799 : vector<1x16xf32> to vector<8x16xf32>
    %820 = arith.mulf %818, %819 : vector<8x16xf32>
    %821 = vector.broadcast %800 : vector<1x16xf32> to vector<8x16xf32>
    %822 = arith.addf %820, %821 : vector<8x16xf32>
    %c1_248 = arith.constant 1 : index
    %c0_249 = arith.constant 0 : index
    %c0_250 = arith.constant 0 : index
    %823 = vector.load %arg16[%c1_248, %c0_249, %c0_250] : memref<2x16x48xf32, #tpu.memory_space<vmem>>, vector<1x16x48xf32>
    %824 = vector.shape_cast %823 : vector<1x16x48xf32> to vector<16x48xf32>
    %c1_251 = arith.constant 1 : index
    %c0_252 = arith.constant 0 : index
    %c0_253 = arith.constant 0 : index
    %c0_254 = arith.constant 0 : index
    %825 = vector.load %arg17[%c1_251, %c0_252, %c0_253, %c0_254] : memref<2x3x16x16xf32, #tpu.memory_space<vmem>>, vector<1x3x16x16xf32>
    %826 = vector.shape_cast %825 : vector<1x3x16x16xf32> to vector<3x16x16xf32>
    %c1_255 = arith.constant 1 : index
    %c0_256 = arith.constant 0 : index
    %c0_257 = arith.constant 0 : index
    %827 = vector.load %arg18[%c1_255, %c0_256, %c0_257] : memref<2x10x16xf32, #tpu.memory_space<vmem>>, vector<1x10x16xf32>
    %828 = vector.shape_cast %827 : vector<1x10x16xf32> to vector<10x16xf32>
    %cst_258 = arith.constant dense<0.000000e+00> : vector<8x48xf32>
    %829 = tpu.matmul %822, %824, %cst_258 {dimension_numbers = #tpu.dot_dimension_numbers<[1], [0], [0], [1], [0, 0, 1, 1], [], []>} : vector<8x16xf32>, vector<16x48xf32>, vector<8x48xf32> -> vector<8x48xf32>
    %830 = vector.extract_strided_slice %829 {offsets = [0, 0], sizes = [8, 16], strides = [1, 1]} : vector<8x48xf32> to vector<8x16xf32>
    %831 = vector.extract_strided_slice %828 {offsets = [0, 0], sizes = [1, 16], strides = [1, 1]} : vector<10x16xf32> to vector<1x16xf32>
    %832 = vector.broadcast %831 : vector<1x16xf32> to vector<8x16xf32>
    %833 = arith.addf %830, %832 : vector<8x16xf32>
    %cst_259 = arith.constant 0.353553385 : f32
    %834 = vector.broadcast %cst_259 : f32 to vector<8x16xf32>
    %835 = arith.mulf %833, %834 : vector<8x16xf32>
    %836 = vector.extract_strided_slice %829 {offsets = [0, 16], sizes = [8, 16], strides = [1, 1]} : vector<8x48xf32> to vector<8x16xf32>
    %837 = vector.extract_strided_slice %828 {offsets = [1, 0], sizes = [1, 16], strides = [1, 1]} : vector<10x16xf32> to vector<1x16xf32>
    %838 = vector.broadcast %837 : vector<1x16xf32> to vector<8x16xf32>
    %839 = arith.addf %836, %838 : vector<8x16xf32>
    %840 = vector.extract_strided_slice %829 {offsets = [0, 32], sizes = [8, 16], strides = [1, 1]} : vector<8x48xf32> to vector<8x16xf32>
    %841 = vector.extract_strided_slice %828 {offsets = [2, 0], sizes = [1, 16], strides = [1, 1]} : vector<10x16xf32> to vector<1x16xf32>
    %842 = vector.broadcast %841 : vector<1x16xf32> to vector<8x16xf32>
    %843 = arith.addf %840, %842 : vector<8x16xf32>
    %844 = vector.extract_strided_slice %826 {offsets = [0, 0, 0], sizes = [1, 16, 16], strides = [1, 1, 1]} : vector<3x16x16xf32> to vector<1x16x16xf32>
    %845 = vector.shape_cast %844 : vector<1x16x16xf32> to vector<16x16xf32>
    %cst_260 = arith.constant 0.000000e+00 : f32
    %846 = vector.broadcast %cst_260 : f32 to vector<8x16xf32>
    %847 = vector.extract_strided_slice %835 {offsets = [0, 0], sizes = [8, 8], strides = [1, 1]} : vector<8x16xf32> to vector<8x8xf32>
    %848 = vector.extract_strided_slice %839 {offsets = [0, 0], sizes = [8, 8], strides = [1, 1]} : vector<8x16xf32> to vector<8x8xf32>
    %cst_261 = arith.constant dense<0.000000e+00> : vector<8x8xf32>
    %849 = tpu.matmul %847, %848, %cst_261 {dimension_numbers = #tpu.dot_dimension_numbers<[1], [1], [0], [0], [0, 0, 1, 0], [], []>} : vector<8x8xf32>, vector<8x8xf32>, vector<8x8xf32> -> vector<8x8xf32>
    %cst_262 = arith.constant dense<0xFF800000> : vector<8xf32>
    %850 = vector.multi_reduction <maximumf>, %849, %cst_262 [1] : vector<8x8xf32> to vector<8xf32>
    %851 = vector.shape_cast %850 : vector<8xf32> to vector<8x1xf32>
    %852 = vector.broadcast %851 : vector<8x1xf32> to vector<8x8xf32>
    %853 = arith.subf %849, %852 : vector<8x8xf32>
    %854 = math.exp %853 : vector<8x8xf32>
    %cst_263 = arith.constant dense<0.000000e+00> : vector<8xf32>
    %855 = vector.multi_reduction <add>, %854, %cst_263 [1] : vector<8x8xf32> to vector<8xf32>
    %856 = vector.shape_cast %855 : vector<8xf32> to vector<8x1xf32>
    %857 = tpu.reciprocal %856 {approx = true} : vector<8x1xf32> -> vector<8x1xf32>
    %858 = vector.broadcast %857 : vector<8x1xf32> to vector<8x8xf32>
    %859 = arith.mulf %854, %858 : vector<8x8xf32>
    %860 = vector.extract_strided_slice %843 {offsets = [0, 0], sizes = [8, 8], strides = [1, 1]} : vector<8x16xf32> to vector<8x8xf32>
    %cst_264 = arith.constant dense<0.000000e+00> : vector<8x8xf32>
    %861 = tpu.matmul %859, %860, %cst_264 {dimension_numbers = #tpu.dot_dimension_numbers<[1], [0], [0], [1], [0, 0, 1, 1], [], []>} : vector<8x8xf32>, vector<8x8xf32>, vector<8x8xf32> -> vector<8x8xf32>
    %862 = vector.extract_strided_slice %845 {offsets = [0, 0], sizes = [8, 16], strides = [1, 1]} : vector<16x16xf32> to vector<8x16xf32>
    %cst_265 = arith.constant dense<0.000000e+00> : vector<8x16xf32>
    %863 = tpu.matmul %861, %862, %cst_265 {dimension_numbers = #tpu.dot_dimension_numbers<[1], [0], [0], [1], [0, 0, 1, 1], [], []>} : vector<8x8xf32>, vector<8x16xf32>, vector<8x16xf32> -> vector<8x16xf32>
    %864 = arith.addf %846, %863 : vector<8x16xf32>
    %865 = vector.extract_strided_slice %835 {offsets = [0, 8], sizes = [8, 8], strides = [1, 1]} : vector<8x16xf32> to vector<8x8xf32>
    %866 = vector.extract_strided_slice %839 {offsets = [0, 8], sizes = [8, 8], strides = [1, 1]} : vector<8x16xf32> to vector<8x8xf32>
    %cst_266 = arith.constant dense<0.000000e+00> : vector<8x8xf32>
    %867 = tpu.matmul %865, %866, %cst_266 {dimension_numbers = #tpu.dot_dimension_numbers<[1], [1], [0], [0], [0, 0, 1, 0], [], []>} : vector<8x8xf32>, vector<8x8xf32>, vector<8x8xf32> -> vector<8x8xf32>
    %cst_267 = arith.constant dense<0xFF800000> : vector<8xf32>
    %868 = vector.multi_reduction <maximumf>, %867, %cst_267 [1] : vector<8x8xf32> to vector<8xf32>
    %869 = vector.shape_cast %868 : vector<8xf32> to vector<8x1xf32>
    %870 = vector.broadcast %869 : vector<8x1xf32> to vector<8x8xf32>
    %871 = arith.subf %867, %870 : vector<8x8xf32>
    %872 = math.exp %871 : vector<8x8xf32>
    %cst_268 = arith.constant dense<0.000000e+00> : vector<8xf32>
    %873 = vector.multi_reduction <add>, %872, %cst_268 [1] : vector<8x8xf32> to vector<8xf32>
    %874 = vector.shape_cast %873 : vector<8xf32> to vector<8x1xf32>
    %875 = tpu.reciprocal %874 {approx = true} : vector<8x1xf32> -> vector<8x1xf32>
    %876 = vector.broadcast %875 : vector<8x1xf32> to vector<8x8xf32>
    %877 = arith.mulf %872, %876 : vector<8x8xf32>
    %878 = vector.extract_strided_slice %843 {offsets = [0, 8], sizes = [8, 8], strides = [1, 1]} : vector<8x16xf32> to vector<8x8xf32>
    %cst_269 = arith.constant dense<0.000000e+00> : vector<8x8xf32>
    %879 = tpu.matmul %877, %878, %cst_269 {dimension_numbers = #tpu.dot_dimension_numbers<[1], [0], [0], [1], [0, 0, 1, 1], [], []>} : vector<8x8xf32>, vector<8x8xf32>, vector<8x8xf32> -> vector<8x8xf32>
    %880 = vector.extract_strided_slice %845 {offsets = [8, 0], sizes = [8, 16], strides = [1, 1]} : vector<16x16xf32> to vector<8x16xf32>
    %cst_270 = arith.constant dense<0.000000e+00> : vector<8x16xf32>
    %881 = tpu.matmul %879, %880, %cst_270 {dimension_numbers = #tpu.dot_dimension_numbers<[1], [0], [0], [1], [0, 0, 1, 1], [], []>} : vector<8x8xf32>, vector<8x16xf32>, vector<8x16xf32> -> vector<8x16xf32>
    %882 = arith.addf %864, %881 : vector<8x16xf32>
    %883 = vector.extract_strided_slice %828 {offsets = [3, 0], sizes = [1, 16], strides = [1, 1]} : vector<10x16xf32> to vector<1x16xf32>
    %884 = vector.broadcast %883 : vector<1x16xf32> to vector<8x16xf32>
    %885 = arith.addf %882, %884 : vector<8x16xf32>
    %886 = arith.addf %822, %885 : vector<8x16xf32>
    %887 = vector.extract_strided_slice %828 {offsets = [4, 0], sizes = [1, 16], strides = [1, 1]} : vector<10x16xf32> to vector<1x16xf32>
    %888 = vector.extract_strided_slice %828 {offsets = [5, 0], sizes = [1, 16], strides = [1, 1]} : vector<10x16xf32> to vector<1x16xf32>
    %cst_271 = arith.constant dense<0.000000e+00> : vector<8xf32>
    %889 = vector.multi_reduction <add>, %886, %cst_271 [1] : vector<8x16xf32> to vector<8xf32>
    %890 = vector.shape_cast %889 : vector<8xf32> to vector<8x1xf32>
    %cst_272 = arith.constant 1.600000e+01 : f32
    %891 = vector.broadcast %cst_272 : f32 to vector<8x1xf32>
    %892 = arith.divf %890, %891 : vector<8x1xf32>
    %893 = vector.broadcast %892 : vector<8x1xf32> to vector<8x16xf32>
    %894 = arith.subf %886, %893 : vector<8x16xf32>
    %895 = arith.mulf %894, %894 : vector<8x16xf32>
    %cst_273 = arith.constant dense<0.000000e+00> : vector<8xf32>
    %896 = vector.multi_reduction <add>, %895, %cst_273 [1] : vector<8x16xf32> to vector<8xf32>
    %897 = vector.shape_cast %896 : vector<8xf32> to vector<8x1xf32>
    %cst_274 = arith.constant 1.600000e+01 : f32
    %898 = vector.broadcast %cst_274 : f32 to vector<8x1xf32>
    %899 = arith.divf %897, %898 : vector<8x1xf32>
    %900 = vector.broadcast %892 : vector<8x1xf32> to vector<8x16xf32>
    %901 = arith.subf %886, %900 : vector<8x16xf32>
    %cst_275 = arith.constant 9.99999974E-6 : f32
    %902 = vector.broadcast %cst_275 : f32 to vector<8x1xf32>
    %903 = arith.addf %899, %902 : vector<8x1xf32>
    %904 = math.rsqrt %903 : vector<8x1xf32>
    %905 = vector.broadcast %904 : vector<8x1xf32> to vector<8x16xf32>
    %906 = arith.mulf %901, %905 : vector<8x16xf32>
    %907 = vector.broadcast %887 : vector<1x16xf32> to vector<8x16xf32>
    %908 = arith.mulf %906, %907 : vector<8x16xf32>
    %909 = vector.broadcast %888 : vector<1x16xf32> to vector<8x16xf32>
    %910 = arith.addf %908, %909 : vector<8x16xf32>
    %911 = vector.extract_strided_slice %826 {offsets = [1, 0, 0], sizes = [1, 16, 16], strides = [1, 1, 1]} : vector<3x16x16xf32> to vector<1x16x16xf32>
    %912 = vector.shape_cast %911 : vector<1x16x16xf32> to vector<16x16xf32>
    %cst_276 = arith.constant dense<0.000000e+00> : vector<8x16xf32>
    %913 = tpu.matmul %910, %912, %cst_276 {dimension_numbers = #tpu.dot_dimension_numbers<[1], [0], [0], [1], [0, 0, 1, 1], [], []>} : vector<8x16xf32>, vector<16x16xf32>, vector<8x16xf32> -> vector<8x16xf32>
    %914 = vector.extract_strided_slice %828 {offsets = [6, 0], sizes = [1, 16], strides = [1, 1]} : vector<10x16xf32> to vector<1x16xf32>
    %915 = vector.broadcast %914 : vector<1x16xf32> to vector<8x16xf32>
    %916 = arith.addf %913, %915 : vector<8x16xf32>
    %cst_277 = arith.constant 5.000000e-01 : f32
    %917 = vector.broadcast %cst_277 : f32 to vector<8x16xf32>
    %918 = arith.mulf %917, %916 : vector<8x16xf32>
    %cst_278 = arith.constant 0.707106769 : f32
    %919 = vector.broadcast %cst_278 : f32 to vector<8x16xf32>
    %920 = arith.mulf %916, %919 : vector<8x16xf32>
    %921 = math.erf %920 : vector<8x16xf32>
    %cst_279 = arith.constant 1.000000e+00 : f32
    %922 = vector.broadcast %cst_279 : f32 to vector<8x16xf32>
    %923 = arith.addf %922, %921 : vector<8x16xf32>
    %924 = arith.mulf %918, %923 : vector<8x16xf32>
    %925 = vector.extract_strided_slice %826 {offsets = [2, 0, 0], sizes = [1, 16, 16], strides = [1, 1, 1]} : vector<3x16x16xf32> to vector<1x16x16xf32>
    %926 = vector.shape_cast %925 : vector<1x16x16xf32> to vector<16x16xf32>
    %cst_280 = arith.constant dense<0.000000e+00> : vector<8x16xf32>
    %927 = tpu.matmul %924, %926, %cst_280 {dimension_numbers = #tpu.dot_dimension_numbers<[1], [0], [0], [1], [0, 0, 1, 1], [], []>} : vector<8x16xf32>, vector<16x16xf32>, vector<8x16xf32> -> vector<8x16xf32>
    %928 = vector.extract_strided_slice %828 {offsets = [7, 0], sizes = [1, 16], strides = [1, 1]} : vector<10x16xf32> to vector<1x16xf32>
    %929 = vector.broadcast %928 : vector<1x16xf32> to vector<8x16xf32>
    %930 = arith.addf %927, %929 : vector<8x16xf32>
    %931 = arith.addf %910, %930 : vector<8x16xf32>
    %932 = vector.extract_strided_slice %828 {offsets = [8, 0], sizes = [1, 16], strides = [1, 1]} : vector<10x16xf32> to vector<1x16xf32>
    %933 = vector.extract_strided_slice %828 {offsets = [9, 0], sizes = [1, 16], strides = [1, 1]} : vector<10x16xf32> to vector<1x16xf32>
    %cst_281 = arith.constant dense<0.000000e+00> : vector<8xf32>
    %934 = vector.multi_reduction <add>, %931, %cst_281 [1] : vector<8x16xf32> to vector<8xf32>
    %935 = vector.shape_cast %934 : vector<8xf32> to vector<8x1xf32>
    %cst_282 = arith.constant 1.600000e+01 : f32
    %936 = vector.broadcast %cst_282 : f32 to vector<8x1xf32>
    %937 = arith.divf %935, %936 : vector<8x1xf32>
    %938 = vector.broadcast %937 : vector<8x1xf32> to vector<8x16xf32>
    %939 = arith.subf %931, %938 : vector<8x16xf32>
    %940 = arith.mulf %939, %939 : vector<8x16xf32>
    %cst_283 = arith.constant dense<0.000000e+00> : vector<8xf32>
    %941 = vector.multi_reduction <add>, %940, %cst_283 [1] : vector<8x16xf32> to vector<8xf32>
    %942 = vector.shape_cast %941 : vector<8xf32> to vector<8x1xf32>
    %cst_284 = arith.constant 1.600000e+01 : f32
    %943 = vector.broadcast %cst_284 : f32 to vector<8x1xf32>
    %944 = arith.divf %942, %943 : vector<8x1xf32>
    %945 = vector.broadcast %937 : vector<8x1xf32> to vector<8x16xf32>
    %946 = arith.subf %931, %945 : vector<8x16xf32>
    %cst_285 = arith.constant 9.99999974E-6 : f32
    %947 = vector.broadcast %cst_285 : f32 to vector<8x1xf32>
    %948 = arith.addf %944, %947 : vector<8x1xf32>
    %949 = math.rsqrt %948 : vector<8x1xf32>
    %950 = vector.broadcast %949 : vector<8x1xf32> to vector<8x16xf32>
    %951 = arith.mulf %946, %950 : vector<8x16xf32>
    %952 = vector.broadcast %932 : vector<1x16xf32> to vector<8x16xf32>
    %953 = arith.mulf %951, %952 : vector<8x16xf32>
    %954 = vector.broadcast %933 : vector<1x16xf32> to vector<8x16xf32>
    %955 = arith.addf %953, %954 : vector<8x16xf32>
    %956 = vector.extract_strided_slice %682 {offsets = [1, 0], sizes = [1, 16], strides = [1, 1]} : vector<3x16xf32> to vector<1x16xf32>
    %957 = vector.extract_strided_slice %682 {offsets = [2, 0], sizes = [1, 16], strides = [1, 1]} : vector<3x16xf32> to vector<1x16xf32>
    %cst_286 = arith.constant dense<0.000000e+00> : vector<8xf32>
    %958 = vector.multi_reduction <add>, %955, %cst_286 [1] : vector<8x16xf32> to vector<8xf32>
    %959 = vector.shape_cast %958 : vector<8xf32> to vector<8x1xf32>
    %cst_287 = arith.constant 1.600000e+01 : f32
    %960 = vector.broadcast %cst_287 : f32 to vector<8x1xf32>
    %961 = arith.divf %959, %960 : vector<8x1xf32>
    %962 = vector.broadcast %961 : vector<8x1xf32> to vector<8x16xf32>
    %963 = arith.subf %955, %962 : vector<8x16xf32>
    %964 = arith.mulf %963, %963 : vector<8x16xf32>
    %cst_288 = arith.constant dense<0.000000e+00> : vector<8xf32>
    %965 = vector.multi_reduction <add>, %964, %cst_288 [1] : vector<8x16xf32> to vector<8xf32>
    %966 = vector.shape_cast %965 : vector<8xf32> to vector<8x1xf32>
    %cst_289 = arith.constant 1.600000e+01 : f32
    %967 = vector.broadcast %cst_289 : f32 to vector<8x1xf32>
    %968 = arith.divf %966, %967 : vector<8x1xf32>
    %969 = vector.broadcast %961 : vector<8x1xf32> to vector<8x16xf32>
    %970 = arith.subf %955, %969 : vector<8x16xf32>
    %cst_290 = arith.constant 9.99999974E-6 : f32
    %971 = vector.broadcast %cst_290 : f32 to vector<8x1xf32>
    %972 = arith.addf %968, %971 : vector<8x1xf32>
    %973 = math.rsqrt %972 : vector<8x1xf32>
    %974 = vector.broadcast %973 : vector<8x1xf32> to vector<8x16xf32>
    %975 = arith.mulf %970, %974 : vector<8x16xf32>
    %976 = vector.broadcast %956 : vector<1x16xf32> to vector<8x16xf32>
    %977 = arith.mulf %975, %976 : vector<8x16xf32>
    %978 = vector.broadcast %957 : vector<1x16xf32> to vector<8x16xf32>
    %979 = arith.addf %977, %978 : vector<8x16xf32>
    %cst_291 = arith.constant dense<0.000000e+00> : vector<16xf32>
    %980 = vector.multi_reduction <add>, %979, %cst_291 [0] : vector<8x16xf32> to vector<16xf32>
    %981 = vector.shape_cast %980 : vector<16xf32> to vector<1x16xf32>
    %cst_292 = arith.constant 8.000000e+00 : f32
    %982 = vector.broadcast %cst_292 : f32 to vector<1x16xf32>
    %983 = arith.divf %981, %982 : vector<1x16xf32>
    %c0_293 = arith.constant 0 : index
    %c0_294 = arith.constant 0 : index
    %984 = vector.load %arg19[%c0_293, %c0_294] : memref<64x3xf32, #tpu.memory_space<vmem>>, vector<64x3xf32>
    %985 = vector.extract_strided_slice %984 {offsets = [0, 0], sizes = [32, 3], strides = [1, 1]} : vector<64x3xf32> to vector<32x3xf32>
    %cst_295 = arith.constant dense<0.000000e+00> : vector<1x3xf32>
    %986 = tpu.matmul %375, %985, %cst_295 {dimension_numbers = #tpu.dot_dimension_numbers<[1], [0], [0], [1], [0, 0, 1, 1], [], []>} : vector<1x32xf32>, vector<32x3xf32>, vector<1x3xf32> -> vector<1x3xf32>
    %987 = vector.extract_strided_slice %984 {offsets = [32, 0], sizes = [16, 3], strides = [1, 1]} : vector<64x3xf32> to vector<16x3xf32>
    %cst_296 = arith.constant dense<0.000000e+00> : vector<1x3xf32>
    %988 = tpu.matmul %679, %987, %cst_296 {dimension_numbers = #tpu.dot_dimension_numbers<[1], [0], [0], [1], [0, 0, 1, 1], [], []>} : vector<1x16xf32>, vector<16x3xf32>, vector<1x3xf32> -> vector<1x3xf32>
    %989 = arith.addf %986, %988 : vector<1x3xf32>
    %990 = vector.extract_strided_slice %984 {offsets = [48, 0], sizes = [16, 3], strides = [1, 1]} : vector<64x3xf32> to vector<16x3xf32>
    %cst_297 = arith.constant dense<0.000000e+00> : vector<1x3xf32>
    %991 = tpu.matmul %983, %990, %cst_297 {dimension_numbers = #tpu.dot_dimension_numbers<[1], [0], [0], [1], [0, 0, 1, 1], [], []>} : vector<1x16xf32>, vector<16x3xf32>, vector<1x3xf32> -> vector<1x3xf32>
    %992 = arith.addf %989, %991 : vector<1x3xf32>
    %c0_298 = arith.constant 0 : index
    %c0_299 = arith.constant 0 : index
    %993 = vector.load %arg20[%c0_298, %c0_299] : memref<1x3xf32, #tpu.memory_space<vmem>>, vector<1x3xf32>
    %994 = arith.addf %992, %993 : vector<1x3xf32>
    %995 = arith.negf %994 : vector<1x3xf32>
    %996 = math.exp %995 : vector<1x3xf32>
    %cst_300 = arith.constant 1.000000e+00 : f32
    %997 = vector.broadcast %cst_300 : f32 to vector<1x3xf32>
    %998 = arith.addf %997, %996 : vector<1x3xf32>
    %999 = arith.divf %997, %998 : vector<1x3xf32>
    %c0_301 = arith.constant 0 : index
    %c0_302 = arith.constant 0 : index
    %c0_303 = arith.constant 0 : index
    %1000 = vector.load %arg21[%c0_301, %c0_302, %c0_303] : memref<1x1x3xf32, #tpu.memory_space<vmem>>, vector<1x1x3xf32>
    %1001 = vector.shape_cast %1000 : vector<1x1x3xf32> to vector<1x3xf32>
    %1002 = vector.shape_cast %999 : vector<1x3xf32> to vector<1x1x3xf32>
    tpu.vector_store %arg21[%c0_301, %c0_302, %c0_303], %1002 {strides = array<i32>} : memref<1x1x3xf32, #tpu.memory_space<vmem>>, vector<1x1x3xf32>,
    return
  }
  func.func @transform_0(%arg0: i32) -> (i32, i32, i32) {
    %c0_i32 = arith.constant 0 : i32
    %c0_i32_0 = arith.constant 0 : i32
    %c0_i32_1 = arith.constant 0 : i32
    return %arg0, %c0_i32, %c0_i32_0 : i32, i32, i32
  }
  func.func @transform_1(%arg0: i32) -> (i32, i32, i32) {
    %c0_i32 = arith.constant 0 : i32
    %c0_i32_0 = arith.constant 0 : i32
    %c0_i32_1 = arith.constant 0 : i32
    return %arg0, %c0_i32, %c0_i32_0 : i32, i32, i32
  }
  func.func @transform_2(%arg0: i32) -> (i32, i32, i32) {
    %c0_i32 = arith.constant 0 : i32
    %c0_i32_0 = arith.constant 0 : i32
    %c0_i32_1 = arith.constant 0 : i32
    return %arg0, %c0_i32, %c0_i32_0 : i32, i32, i32
  }
  func.func @transform_3(%arg0: i32) -> (i32, i32) {
    %c0_i32 = arith.constant 0 : i32
    %c0_i32_0 = arith.constant 0 : i32
    %c0_i32_1 = arith.constant 0 : i32
    return %c0_i32, %c0_i32_0 : i32, i32
  }
  func.func @transform_4(%arg0: i32) -> (i32, i32) {
    %c0_i32 = arith.constant 0 : i32
    %c0_i32_0 = arith.constant 0 : i32
    %c0_i32_1 = arith.constant 0 : i32
    return %c0_i32, %c0_i32_0 : i32, i32
  }
  func.func @transform_5(%arg0: i32) -> (i32, i32, i32) {
    %c0_i32 = arith.constant 0 : i32
    %c0_i32_0 = arith.constant 0 : i32
    %c0_i32_1 = arith.constant 0 : i32
    %c0_i32_2 = arith.constant 0 : i32
    return %c0_i32, %c0_i32_0, %c0_i32_1 : i32, i32, i32
  }
  func.func @transform_6(%arg0: i32) -> (i32, i32, i32, i32) {
    %c0_i32 = arith.constant 0 : i32
    %c0_i32_0 = arith.constant 0 : i32
    %c0_i32_1 = arith.constant 0 : i32
    %c0_i32_2 = arith.constant 0 : i32
    %c0_i32_3 = arith.constant 0 : i32
    return %c0_i32, %c0_i32_0, %c0_i32_1, %c0_i32_2 : i32, i32, i32, i32
  }
  func.func @transform_7(%arg0: i32) -> (i32, i32, i32) {
    %c0_i32 = arith.constant 0 : i32
    %c0_i32_0 = arith.constant 0 : i32
    %c0_i32_1 = arith.constant 0 : i32
    %c0_i32_2 = arith.constant 0 : i32
    return %c0_i32, %c0_i32_0, %c0_i32_1 : i32, i32, i32
  }
  func.func @transform_8(%arg0: i32) -> (i32, i32) {
    %c0_i32 = arith.constant 0 : i32
    %c0_i32_0 = arith.constant 0 : i32
    %c0_i32_1 = arith.constant 0 : i32
    return %c0_i32, %c0_i32_0 : i32, i32
  }
  func.func @transform_9(%arg0: i32) -> (i32, i32) {
    %c0_i32 = arith.constant 0 : i32
    %c0_i32_0 = arith.constant 0 : i32
    %c0_i32_1 = arith.constant 0 : i32
    return %c0_i32, %c0_i32_0 : i32, i32
  }
  func.func @transform_10(%arg0: i32) -> (i32, i32, i32) {
    %c0_i32 = arith.constant 0 : i32
    %c0_i32_0 = arith.constant 0 : i32
    %c0_i32_1 = arith.constant 0 : i32
    %c0_i32_2 = arith.constant 0 : i32
    return %c0_i32, %c0_i32_0, %c0_i32_1 : i32, i32, i32
  }
  func.func @transform_11(%arg0: i32) -> (i32, i32, i32, i32) {
    %c0_i32 = arith.constant 0 : i32
    %c0_i32_0 = arith.constant 0 : i32
    %c0_i32_1 = arith.constant 0 : i32
    %c0_i32_2 = arith.constant 0 : i32
    %c0_i32_3 = arith.constant 0 : i32
    return %c0_i32, %c0_i32_0, %c0_i32_1, %c0_i32_2 : i32, i32, i32, i32
  }
  func.func @transform_12(%arg0: i32) -> (i32, i32, i32) {
    %c0_i32 = arith.constant 0 : i32
    %c0_i32_0 = arith.constant 0 : i32
    %c0_i32_1 = arith.constant 0 : i32
    %c0_i32_2 = arith.constant 0 : i32
    return %c0_i32, %c0_i32_0, %c0_i32_1 : i32, i32, i32
  }
  func.func @transform_13(%arg0: i32) -> (i32, i32) {
    %c0_i32 = arith.constant 0 : i32
    %c0_i32_0 = arith.constant 0 : i32
    %c0_i32_1 = arith.constant 0 : i32
    return %c0_i32, %c0_i32_0 : i32, i32
  }
  func.func @transform_14(%arg0: i32) -> (i32, i32) {
    %c0_i32 = arith.constant 0 : i32
    %c0_i32_0 = arith.constant 0 : i32
    %c0_i32_1 = arith.constant 0 : i32
    return %c0_i32, %c0_i32_0 : i32, i32
  }
  func.func @transform_15(%arg0: i32) -> (i32, i32, i32) {
    %c0_i32 = arith.constant 0 : i32
    %c0_i32_0 = arith.constant 0 : i32
    %c0_i32_1 = arith.constant 0 : i32
    %c0_i32_2 = arith.constant 0 : i32
    return %c0_i32, %c0_i32_0, %c0_i32_1 : i32, i32, i32
  }
  func.func @transform_16(%arg0: i32) -> (i32, i32, i32, i32) {
    %c0_i32 = arith.constant 0 : i32
    %c0_i32_0 = arith.constant 0 : i32
    %c0_i32_1 = arith.constant 0 : i32
    %c0_i32_2 = arith.constant 0 : i32
    %c0_i32_3 = arith.constant 0 : i32
    return %c0_i32, %c0_i32_0, %c0_i32_1, %c0_i32_2 : i32, i32, i32, i32
  }
  func.func @transform_17(%arg0: i32) -> (i32, i32, i32) {
    %c0_i32 = arith.constant 0 : i32
    %c0_i32_0 = arith.constant 0 : i32
    %c0_i32_1 = arith.constant 0 : i32
    %c0_i32_2 = arith.constant 0 : i32
    return %c0_i32, %c0_i32_0, %c0_i32_1 : i32, i32, i32
  }
  func.func @transform_18(%arg0: i32) -> (i32, i32) {
    %c0_i32 = arith.constant 0 : i32
    %c0_i32_0 = arith.constant 0 : i32
    %c0_i32_1 = arith.constant 0 : i32
    return %c0_i32, %c0_i32_0 : i32, i32
  }
  func.func @transform_19(%arg0: i32) -> (i32, i32) {
    %c0_i32 = arith.constant 0 : i32
    %c0_i32_0 = arith.constant 0 : i32
    %c0_i32_1 = arith.constant 0 : i32
    return %c0_i32, %c0_i32_0 : i32, i32
  }
  func.func @transform_20(%arg0: i32) -> (i32, i32, i32) {
    %c0_i32 = arith.constant 0 : i32
    %c0_i32_0 = arith.constant 0 : i32
    %c0_i32_1 = arith.constant 0 : i32
    return %arg0, %c0_i32, %c0_i32_0 : i32, i32, i32
  }
}

</mosaic_0001>

<llo_original>
// kernel: _lambda_.1
$region0: #{_lambda_.1}
  #allocation0 [shape = 'u32[]', space=smem, size = 0x4, offset = 0x4, fixed_abs, tag = 'smem constant byte address 0x4 - core index']
  #allocation1 [shape = 'u32[144,128]{1,0:T(1,128)}', space=vmem, size = 0x12000, scoped, tag = 'internal scratch']
  %s0 = inlined_call_operand.vmem [shape: f32[2,8,6], index: 0, kind: input, shape index: {}]
  %s1 = inlined_call_operand.vmem [shape: f32[2,8,15], index: 1, kind: input, shape index: {}]
  %s2 = inlined_call_operand.vmem [shape: f32[2,8,4], index: 2, kind: input, shape index: {}]
  %s3 = inlined_call_operand.vmem [shape: f32[6,32], index: 3, kind: input, shape index: {}]
  %s4 = inlined_call_operand.vmem [shape: f32[3,32], index: 4, kind: input, shape index: {}]
  %s5 = inlined_call_operand.vmem [shape: f32[2,32,96], index: 5, kind: input, shape index: {}]
  %s6 = inlined_call_operand.vmem [shape: f32[2,3,32,32], index: 6, kind: input, shape index: {}]
  %s7 = inlined_call_operand.hbm [shape: f32[2,10,32], index: 7, kind: input, shape index: {}]
  %s8 = inlined_call_operand.hbm [shape: f32[15,16], index: 8, kind: input, shape index: {}]
  %s9 = inlined_call_operand.hbm [shape: f32[3,16], index: 9, kind: input, shape index: {}]
  %s10 = inlined_call_operand.hbm [shape: f32[2,16,48], index: 10, kind: input, shape index: {}]
  %s11 = inlined_call_operand.hbm [shape: f32[2,3,16,16], index: 11, kind: input, shape index: {}]
  %s12 = inlined_call_operand.hbm [shape: f32[2,10,16], index: 12, kind: input, shape index: {}]
  %s13 = inlined_call_operand.hbm [shape: f32[4,16], index: 13, kind: input, shape index: {}]
  %s14 = inlined_call_operand.hbm [shape: f32[3,16], index: 14, kind: input, shape index: {}]
  %s15 = inlined_call_operand.hbm [shape: f32[2,16,48], index: 15, kind: input, shape index: {}]
  %s16 = inlined_call_operand.hbm [shape: f32[2,3,16,16], index: 16, kind: input, shape index: {}]
  %s17 = inlined_call_operand.hbm [shape: f32[2,10,16], index: 17, kind: input, shape index: {}]
  %s18 = inlined_call_operand.hbm [shape: f32[64,3], index: 18, kind: input, shape index: {}]
  %s19 = inlined_call_operand.vmem [shape: f32[1,3], index: 19, kind: input, shape index: {}]
  %s20 = inlined_call_operand.hbm [shape: f32[2,1,3], index: 20, kind: output, shape index: {}]
  %s21 = sld [smem:[#allocation0]]
  $region161: #{_lambda_.1} parent=0
    _
  %s23 = ssub.s32 1, %s21
  %s24 = scalar_select 0, %s23, %s21
  $region1: #{_lambda_.1} parent=0
    #allocation2 [shape = 'u8[16384]{0}', space=vmem, size = 0x4000, scoped, tag = 'input window, operand 7, single buffered']
    #allocation3 [shape = 's32[2]{0}', space=sflag, size = 0x8, scoped, tag = 'scoped memory for _lambda_.1']
    #allocation4 [shape = 's32[2]{0}', space=sflag, size = 0x8, scoped, tag = 'scoped memory for _lambda_.1']
    #allocation5 [shape = 'u8[8192]{0}', space=vmem, size = 0x2000, scoped, tag = 'input window, operand 8, single buffered']
    #allocation6 [shape = 's32[1]{0}', space=sflag, size = 0x4, scoped, tag = 'scoped memory for _lambda_.1']
    #allocation7 [shape = 'u8[2048]{0}', space=vmem, size = 0x800, scoped, tag = 'input window, operand 9, single buffered']
    #allocation8 [shape = 'u8[16384]{0}', space=vmem, size = 0x4000, scoped, tag = 'input window, operand 10, single buffered']
    #allocation9 [shape = 's32[1]{0}', space=sflag, size = 0x4, scoped, tag = 'scoped memory for _lambda_.1']
    #allocation10 [shape = 'u8[49152]{0}', space=vmem, size = 0xc000, scoped, tag = 'input window, operand 11, single buffered']
    #allocation11 [shape = 'u8[16384]{0}', space=vmem, size = 0x4000, scoped, tag = 'input window, operand 12, single buffered']
    #allocation12 [shape = 's32[1]{0}', space=sflag, size = 0x4, scoped, tag = 'scoped memory for _lambda_.1']
    #allocation13 [shape = 'u8[2048]{0}', space=vmem, size = 0x800, scoped, tag = 'input window, operand 13, single buffered']
    #allocation14 [shape = 'u8[2048]{0}', space=vmem, size = 0x800, scoped, tag = 'input window, operand 14, single buffered']
    #allocation15 [shape = 's32[1]{0}', space=sflag, size = 0x4, scoped, tag = 'scoped memory for _lambda_.1']
    #allocation16 [shape = 'u8[16384]{0}', space=vmem, size = 0x4000, scoped, tag = 'input window, operand 15, single buffered']
    #allocation17 [shape = 'u8[49152]{0}', space=vmem, size = 0xc000, scoped, tag = 'input window, operand 16, single buffered']
    #allocation18 [shape = 's32[1]{0}', space=sflag, size = 0x4, scoped, tag = 'scoped memory for _lambda_.1']
    #allocation19 [shape = 'u8[16384]{0}', space=vmem, size = 0x4000, scoped, tag = 'input window, operand 17, single buffered']
    #allocation20 [shape = 'u8[32768]{0}', space=vmem, size = 0x8000, scoped, tag = 'input window, operand 18, single buffered']
    #allocation21 [shape = 's32[1]{0}', space=sflag, size = 0x4, scoped, tag = 'scoped memory for _lambda_.1']
    #allocation22 [shape = 'u8[1024]{0}', space=vmem, size = 0x400, scoped, tag = 'output window, operand 0']
    %25 = vsyncpa [#allocation3], 0
    %26 = vsyncpa [#allocation6], 0
    %27 = vsyncpa [#allocation9], 0
    %28 = vsyncpa [#allocation12], 0
    %29 = vsyncpa [#allocation15], 0
    %30 = vsyncpa [#allocation18], 0
    %31 = vsyncpa [#allocation21], 0
    %32 = vsyncpa [#allocation4], 0
    %s33 = scalar_lea.sflag [#allocation4], 1
    %34 = vsyncpa %s33, 0
    loop: start=0, step=1, limit=4
    $region2: #{_lambda_.1} parent=1 // loop_pre_header
      _
    $region3: #{_lambda_.1} parent=1 // loop_header
      %s36 = sphi 0, %s40
      %p37 = scmp.ge.s32.totalorder %s36, 4
      %s46 = sphi 0, %s48
      %s49 = sphi 0, %s46
      %s50 = sphi 0, %s49
      %s66 = sphi 0, %s50
      %s72 = sphi 0, %s74
      %s75 = sphi 0, %s72
      %s76 = sphi 0, %s75
      %s92 = sphi 0, %s76
      %s98 = sphi 0, %s100
      %s101 = sphi 0, %s98
      %s102 = sphi 0, %s101
      %s118 = sphi 0, %s102
      %s122 = sphi 0, %s122
      %s124 = sphi 0, %s122
      %s125 = sphi 0, %s124
      %s139 = sphi 0, %s125
      %s143 = sphi 0, %s143
      %s145 = sphi 0, %s143
      %s146 = sphi 0, %s145
      %s160 = sphi 0, %s146
      %s164 = sphi 0, %s164
      %s166 = sphi 0, %s164
      %s167 = sphi 0, %s166
      %s181 = sphi 0, %s167
      %s185 = sphi 0, %s185
      %s187 = sphi 0, %s185
      %s188 = sphi 0, %s187
      %s202 = sphi 0, %s188
      %s206 = sphi 0, %s206
      %s208 = sphi 0, %s206
      %s209 = sphi 0, %s208
      %s223 = sphi 0, %s209
      %s227 = sphi 0, %s227
      %s229 = sphi 0, %s227
      %s230 = sphi 0, %s229
      %s244 = sphi 0, %s230
      %s248 = sphi 0, %s248
      %s250 = sphi 0, %s248
      %s251 = sphi 0, %s250
      %s265 = sphi 0, %s251
      %s269 = sphi 0, %s269
      %s271 = sphi 0, %s269
      %s272 = sphi 0, %s271
      %s286 = sphi 0, %s272
      %s290 = sphi 0, %s290
      %s292 = sphi 0, %s290
      %s293 = sphi 0, %s292
      %s307 = sphi 0, %s293
      %s311 = sphi 0, %s311
      %s313 = sphi 0, %s311
      %s314 = sphi 0, %s313
      %s328 = sphi 0, %s314
      %s332 = sphi 0, %s332
      %s334 = sphi 0, %s332
      %s335 = sphi 0, %s334
      %s349 = sphi 0, %s335
      %s353 = sphi 0, %s353
      %s355 = sphi 0, %s353
      %s356 = sphi 0, %s355
      %s370 = sphi 0, %s356
      %s374 = sphi 0, %s374
      %s376 = sphi 0, %s374
      %s377 = sphi 0, %s376
      %s391 = sphi 0, %s377
      %s395 = sphi 0, %s395
      %s397 = sphi 0, %s395
      %s398 = sphi 0, %s397
      %s412 = sphi 0, %s398
      %s416 = sphi 0, %s416
      %s418 = sphi 0, %s416
      %s419 = sphi 0, %s418
      %s433 = sphi 0, %s419
      %s437 = sphi 0, %s437
      %s439 = sphi 0, %s437
      %s440 = sphi 0, %s439
      %s454 = sphi 0, %s440
      %s458 = sphi 0, %s458
      %s460 = sphi 0, %s458
      %s461 = sphi 0, %s460
      %s475 = sphi 0, %s461
      %s481 = sphi 0, %s483
      %s484 = sphi 0, %s481
      %s485 = sphi 0, %s484
      %s501 = sphi 0, %s485
    $region4: #{_lambda_.1} parent=1 // loop_header_branch
      %39 = sbr.rel (%p37) target = $region8
    $region5: #{_lambda_.1} parent=1 // loop_body
      %s41 = ssub.s32 %s36, 1
      %s42 = ssub.s32 %s36, 2
      %s43 = sadd.s32 %s36, 1
      %s44 = ssub.s32 %s36, %s43
      %p45 = scmp.eq.s32.totalorder %s44, 0
      %s47 = sadd.s32 %s46, 1
      %s48 = scalar_select %p45, %s46, %s47
      %p51 = pneg %p45
      %p52 = scmp.eq.s32.totalorder %s36, 1
      %p53 = por %p51, %p52
      %p54 = scmp.ne.s32.totalorder %s46, %s49
      %p55 = scmp.eq.s32.totalorder %s36, 0
      %p56 = por %p54, %p55
      %p57 = scmp.ne.s32.totalorder %s46, %s49
      %p58 = scmp.eq.s32.totalorder %s41, 1
      %p59 = por %p57, %p58
      %p60 = scmp.ne.s32.totalorder %s49, %s50
      %p61 = scmp.eq.s32.totalorder %s41, 0
      %p62 = por %p60, %p61
      %p63 = scmp.ne.s32.totalorder %s49, %s50
      %p64 = scmp.eq.s32.totalorder %s42, 1
      %p65 = por %p63, %p64
      %p67 = scmp.ne.s32.totalorder %s50, %s66
      %p68 = scmp.eq.s32.totalorder %s42, 0
      %p69 = por %p67, %p68
      %s70 = ssub.s32 %s36, %s43
      %p71 = scmp.eq.s32.totalorder %s70, 0
      %s73 = sadd.s32 %s72, 1
      %s74 = scalar_select %p71, %s72, %s73
      %p77 = pneg %p71
      %p78 = scmp.eq.s32.totalorder %s36, 1
      %p79 = por %p77, %p78
      %p80 = scmp.ne.s32.totalorder %s72, %s75
      %p81 = scmp.eq.s32.totalorder %s36, 0
      %p82 = por %p80, %p81
      %p83 = scmp.ne.s32.totalorder %s72, %s75
      %p84 = scmp.eq.s32.totalorder %s41, 1
      %p85 = por %p83, %p84
      %p86 = scmp.ne.s32.totalorder %s75, %s76
      %p87 = scmp.eq.s32.totalorder %s41, 0
      %p88 = por %p86, %p87
      %p89 = scmp.ne.s32.totalorder %s75, %s76
      %p90 = scmp.eq.s32.totalorder %s42, 1
      %p91 = por %p89, %p90
      %p93 = scmp.ne.s32.totalorder %s76, %s92
      %p94 = scmp.eq.s32.totalorder %s42, 0
      %p95 = por %p93, %p94
      %s96 = ssub.s32 %s36, %s43
      %p97 = scmp.eq.s32.totalorder %s96, 0
      %s99 = sadd.s32 %s98, 1
      %s100 = scalar_select %p97, %s98, %s99
      %p103 = pneg %p97
      %p104 = scmp.eq.s32.totalorder %s36, 1
      %p105 = por %p103, %p104
      %p106 = scmp.ne.s32.totalorder %s98, %s101
      %p107 = scmp.eq.s32.totalorder %s36, 0
      %p108 = por %p106, %p107
      %p109 = scmp.ne.s32.totalorder %s98, %s101
      %p110 = scmp.eq.s32.totalorder %s41, 1
      %p111 = por %p109, %p110
      %p112 = scmp.ne.s32.totalorder %s101, %s102
      %p113 = scmp.eq.s32.totalorder %s41, 0
      %p114 = por %p112, %p113
      %p115 = scmp.ne.s32.totalorder %s101, %s102
      %p116 = scmp.eq.s32.totalorder %s42, 1
      %p117 = por %p115, %p116
      %p119 = scmp.ne.s32.totalorder %s102, %s118
      %p120 = scmp.eq.s32.totalorder %s42, 0
      %p121 = por %p119, %p120
      %s123 = sadd.s32 %s122, 1
      %p126 = scmp.eq.s32.totalorder %s36, 1
      %p127 = scmp.ne.s32.totalorder %s122, %s124
      %p128 = scmp.eq.s32.totalorder %s36, 0
      %p129 = por %p127, %p128
      %p130 = scmp.ne.s32.totalorder %s122, %s124
      %p131 = scmp.eq.s32.totalorder %s41, 1
      %p132 = por %p130, %p131
      %p133 = scmp.ne.s32.totalorder %s124, %s125
      %p134 = scmp.eq.s32.totalorder %s41, 0
      %p135 = por %p133, %p134
      %p136 = scmp.ne.s32.totalorder %s124, %s125
      %p137 = scmp.eq.s32.totalorder %s42, 1
      %p138 = por %p136, %p137
      %p140 = scmp.ne.s32.totalorder %s125, %s139
      %p141 = scmp.eq.s32.totalorder %s42, 0
      %p142 = por %p140, %p141
      %s144 = sadd.s32 %s143, 1
      %p147 = scmp.eq.s32.totalorder %s36, 1
      %p148 = scmp.ne.s32.totalorder %s143, %s145
      %p149 = scmp.eq.s32.totalorder %s36, 0
      %p150 = por %p148, %p149
      %p151 = scmp.ne.s32.totalorder %s143, %s145
      %p152 = scmp.eq.s32.totalorder %s41, 1
      %p153 = por %p151, %p152
      %p154 = scmp.ne.s32.totalorder %s145, %s146
      %p155 = scmp.eq.s32.totalorder %s41, 0
      %p156 = por %p154, %p155
      %p157 = scmp.ne.s32.totalorder %s145, %s146
      %p158 = scmp.eq.s32.totalorder %s42, 1
      %p159 = por %p157, %p158
      %p161 = scmp.ne.s32.totalorder %s146, %s160
      %p162 = scmp.eq.s32.totalorder %s42, 0
      %p163 = por %p161, %p162
      %s165 = sadd.s32 %s164, 1
      %p168 = scmp.eq.s32.totalorder %s36, 1
      %p169 = scmp.ne.s32.totalorder %s164, %s166
      %p170 = scmp.eq.s32.totalorder %s36, 0
      %p171 = por %p169, %p170
      %p172 = scmp.ne.s32.totalorder %s164, %s166
      %p173 = scmp.eq.s32.totalorder %s41, 1
      %p174 = por %p172, %p173
      %p175 = scmp.ne.s32.totalorder %s166, %s167
      %p176 = scmp.eq.s32.totalorder %s41, 0
      %p177 = por %p175, %p176
      %p178 = scmp.ne.s32.totalorder %s166, %s167
      %p179 = scmp.eq.s32.totalorder %s42, 1
      %p180 = por %p178, %p179
      %p182 = scmp.ne.s32.totalorder %s167, %s181
      %p183 = scmp.eq.s32.totalorder %s42, 0
      %p184 = por %p182, %p183
      %s186 = sadd.s32 %s185, 1
      %p189 = scmp.eq.s32.totalorder %s36, 1
      %p190 = scmp.ne.s32.totalorder %s185, %s187
      %p191 = scmp.eq.s32.totalorder %s36, 0
      %p192 = por %p190, %p191
      %p193 = scmp.ne.s32.totalorder %s185, %s187
      %p194 = scmp.eq.s32.totalorder %s41, 1
      %p195 = por %p193, %p194
      %p196 = scmp.ne.s32.totalorder %s187, %s188
      %p197 = scmp.eq.s32.totalorder %s41, 0
      %p198 = por %p196, %p197
      %p199 = scmp.ne.s32.totalorder %s187, %s188
      %p200 = scmp.eq.s32.totalorder %s42, 1
      %p201 = por %p199, %p200
      %p203 = scmp.ne.s32.totalorder %s188, %s202
      %p204 = scmp.eq.s32.totalorder %s42, 0
      %p205 = por %p203, %p204
      %s207 = sadd.s32 %s206, 1
      %p210 = scmp.eq.s32.totalorder %s36, 1
      %p211 = scmp.ne.s32.totalorder %s206, %s208
      %p212 = scmp.eq.s32.totalorder %s36, 0
      %p213 = por %p211, %p212
      %p214 = scmp.ne.s32.totalorder %s206, %s208
      %p215 = scmp.eq.s32.totalorder %s41, 1
      %p216 = por %p214, %p215
      %p217 = scmp.ne.s32.totalorder %s208, %s209
      %p218 = scmp.eq.s32.totalorder %s41, 0
      %p219 = por %p217, %p218
      %p220 = scmp.ne.s32.totalorder %s208, %s209
      %p221 = scmp.eq.s32.totalorder %s42, 1
      %p222 = por %p220, %p221
      %p224 = scmp.ne.s32.totalorder %s209, %s223
      %p225 = scmp.eq.s32.totalorder %s42, 0
      %p226 = por %p224, %p225
      %s228 = sadd.s32 %s227, 1
      %p231 = scmp.eq.s32.totalorder %s36, 1
      %p232 = scmp.ne.s32.totalorder %s227, %s229
      %p233 = scmp.eq.s32.totalorder %s36, 0
      %p234 = por %p232, %p233
      %p235 = scmp.ne.s32.totalorder %s227, %s229
      %p236 = scmp.eq.s32.totalorder %s41, 1
      %p237 = por %p235, %p236
      %p238 = scmp.ne.s32.totalorder %s229, %s230
      %p239 = scmp.eq.s32.totalorder %s41, 0
      %p240 = por %p238, %p239
      %p241 = scmp.ne.s32.totalorder %s229, %s230
      %p242 = scmp.eq.s32.totalorder %s42, 1
      %p243 = por %p241, %p242
      %p245 = scmp.ne.s32.totalorder %s230, %s244
      %p246 = scmp.eq.s32.totalorder %s42, 0
      %p247 = por %p245, %p246
      %s249 = sadd.s32 %s248, 1
      %p252 = scmp.eq.s32.totalorder %s36, 1
      %p253 = scmp.ne.s32.totalorder %s248, %s250
      %p254 = scmp.eq.s32.totalorder %s36, 0
      %p255 = por %p253, %p254
      %p256 = scmp.ne.s32.totalorder %s248, %s250
      %p257 = scmp.eq.s32.totalorder %s41, 1
      %p258 = por %p256, %p257
      %p259 = scmp.ne.s32.totalorder %s250, %s251
      %p260 = scmp.eq.s32.totalorder %s41, 0
      %p261 = por %p259, %p260
      %p262 = scmp.ne.s32.totalorder %s250, %s251
      %p263 = scmp.eq.s32.totalorder %s42, 1
      %p264 = por %p262, %p263
      %p266 = scmp.ne.s32.totalorder %s251, %s265
      %p267 = scmp.eq.s32.totalorder %s42, 0
      %p268 = por %p266, %p267
      %s270 = sadd.s32 %s269, 1
      %p273 = scmp.eq.s32.totalorder %s36, 1
      %p274 = scmp.ne.s32.totalorder %s269, %s271
      %p275 = scmp.eq.s32.totalorder %s36, 0
      %p276 = por %p274, %p275
      %p277 = scmp.ne.s32.totalorder %s269, %s271
      %p278 = scmp.eq.s32.totalorder %s41, 1
      %p279 = por %p277, %p278
      %p280 = scmp.ne.s32.totalorder %s271, %s272
      %p281 = scmp.eq.s32.totalorder %s41, 0
      %p282 = por %p280, %p281
      %p283 = scmp.ne.s32.totalorder %s271, %s272
      %p284 = scmp.eq.s32.totalorder %s42, 1
      %p285 = por %p283, %p284
      %p287 = scmp.ne.s32.totalorder %s272, %s286
      %p288 = scmp.eq.s32.totalorder %s42, 0
      %p289 = por %p287, %p288
      %s291 = sadd.s32 %s290, 1
      %p294 = scmp.eq.s32.totalorder %s36, 1
      %p295 = scmp.ne.s32.totalorder %s290, %s292
      %p296 = scmp.eq.s32.totalorder %s36, 0
      %p297 = por %p295, %p296
      %p298 = scmp.ne.s32.totalorder %s290, %s292
      %p299 = scmp.eq.s32.totalorder %s41, 1
      %p300 = por %p298, %p299
      %p301 = scmp.ne.s32.totalorder %s292, %s293
      %p302 = scmp.eq.s32.totalorder %s41, 0
      %p303 = por %p301, %p302
      %p304 = scmp.ne.s32.totalorder %s292, %s293
      %p305 = scmp.eq.s32.totalorder %s42, 1
      %p306 = por %p304, %p305
      %p308 = scmp.ne.s32.totalorder %s293, %s307
      %p309 = scmp.eq.s32.totalorder %s42, 0
      %p310 = por %p308, %p309
      %s312 = sadd.s32 %s311, 1
      %p315 = scmp.eq.s32.totalorder %s36, 1
      %p316 = scmp.ne.s32.totalorder %s311, %s313
      %p317 = scmp.eq.s32.totalorder %s36, 0
      %p318 = por %p316, %p317
      %p319 = scmp.ne.s32.totalorder %s311, %s313
      %p320 = scmp.eq.s32.totalorder %s41, 1
      %p321 = por %p319, %p320
      %p322 = scmp.ne.s32.totalorder %s313, %s314
      %p323 = scmp.eq.s32.totalorder %s41, 0
      %p324 = por %p322, %p323
      %p325 = scmp.ne.s32.totalorder %s313, %s314
      %p326 = scmp.eq.s32.totalorder %s42, 1
      %p327 = por %p325, %p326
      %p329 = scmp.ne.s32.totalorder %s314, %s328
      %p330 = scmp.eq.s32.totalorder %s42, 0
      %p331 = por %p329, %p330
      %s333 = sadd.s32 %s332, 1
      %p336 = scmp.eq.s32.totalorder %s36, 1
      %p337 = scmp.ne.s32.totalorder %s332, %s334
      %p338 = scmp.eq.s32.totalorder %s36, 0
      %p339 = por %p337, %p338
      %p340 = scmp.ne.s32.totalorder %s332, %s334
      %p341 = scmp.eq.s32.totalorder %s41, 1
      %p342 = por %p340, %p341
      %p343 = scmp.ne.s32.totalorder %s334, %s335
      %p344 = scmp.eq.s32.totalorder %s41, 0
      %p345 = por %p343, %p344
      %p346 = scmp.ne.s32.totalorder %s334, %s335
      %p347 = scmp.eq.s32.totalorder %s42, 1
      %p348 = por %p346, %p347
      %p350 = scmp.ne.s32.totalorder %s335, %s349
      %p351 = scmp.eq.s32.totalorder %s42, 0
      %p352 = por %p350, %p351
      %s354 = sadd.s32 %s353, 1
      %p357 = scmp.eq.s32.totalorder %s36, 1
      %p358 = scmp.ne.s32.totalorder %s353, %s355
      %p359 = scmp.eq.s32.totalorder %s36, 0
      %p360 = por %p358, %p359
      %p361 = scmp.ne.s32.totalorder %s353, %s355
      %p362 = scmp.eq.s32.totalorder %s41, 1
      %p363 = por %p361, %p362
      %p364 = scmp.ne.s32.totalorder %s355, %s356
      %p365 = scmp.eq.s32.totalorder %s41, 0
      %p366 = por %p364, %p365
      %p367 = scmp.ne.s32.totalorder %s355, %s356
      %p368 = scmp.eq.s32.totalorder %s42, 1
      %p369 = por %p367, %p368
      %p371 = scmp.ne.s32.totalorder %s356, %s370
      %p372 = scmp.eq.s32.totalorder %s42, 0
      %p373 = por %p371, %p372
      %s375 = sadd.s32 %s374, 1
      %p378 = scmp.eq.s32.totalorder %s36, 1
      %p379 = scmp.ne.s32.totalorder %s374, %s376
      %p380 = scmp.eq.s32.totalorder %s36, 0
      %p381 = por %p379, %p380
      %p382 = scmp.ne.s32.totalorder %s374, %s376
      %p383 = scmp.eq.s32.totalorder %s41, 1
      %p384 = por %p382, %p383
      %p385 = scmp.ne.s32.totalorder %s376, %s377
      %p386 = scmp.eq.s32.totalorder %s41, 0
      %p387 = por %p385, %p386
      %p388 = scmp.ne.s32.totalorder %s376, %s377
      %p389 = scmp.eq.s32.totalorder %s42, 1
      %p390 = por %p388, %p389
      %p392 = scmp.ne.s32.totalorder %s377, %s391
      %p393 = scmp.eq.s32.totalorder %s42, 0
      %p394 = por %p392, %p393
      %s396 = sadd.s32 %s395, 1
      %p399 = scmp.eq.s32.totalorder %s36, 1
      %p400 = scmp.ne.s32.totalorder %s395, %s397
      %p401 = scmp.eq.s32.totalorder %s36, 0
      %p402 = por %p400, %p401
      %p403 = scmp.ne.s32.totalorder %s395, %s397
      %p404 = scmp.eq.s32.totalorder %s41, 1
      %p405 = por %p403, %p404
      %p406 = scmp.ne.s32.totalorder %s397, %s398
      %p407 = scmp.eq.s32.totalorder %s41, 0
      %p408 = por %p406, %p407
      %p409 = scmp.ne.s32.totalorder %s397, %s398
      %p410 = scmp.eq.s32.totalorder %s42, 1
      %p411 = por %p409, %p410
      %p413 = scmp.ne.s32.totalorder %s398, %s412
      %p414 = scmp.eq.s32.totalorder %s42, 0
      %p415 = por %p413, %p414
      %s417 = sadd.s32 %s416, 1
      %p420 = scmp.eq.s32.totalorder %s36, 1
      %p421 = scmp.ne.s32.totalorder %s416, %s418
      %p422 = scmp.eq.s32.totalorder %s36, 0
      %p423 = por %p421, %p422
      %p424 = scmp.ne.s32.totalorder %s416, %s418
      %p425 = scmp.eq.s32.totalorder %s41, 1
      %p426 = por %p424, %p425
      %p427 = scmp.ne.s32.totalorder %s418, %s419
      %p428 = scmp.eq.s32.totalorder %s41, 0
      %p429 = por %p427, %p428
      %p430 = scmp.ne.s32.totalorder %s418, %s419
      %p431 = scmp.eq.s32.totalorder %s42, 1
      %p432 = por %p430, %p431
      %p434 = scmp.ne.s32.totalorder %s419, %s433
      %p435 = scmp.eq.s32.totalorder %s42, 0
      %p436 = por %p434, %p435
      %s438 = sadd.s32 %s437, 1
      %p441 = scmp.eq.s32.totalorder %s36, 1
      %p442 = scmp.ne.s32.totalorder %s437, %s439
      %p443 = scmp.eq.s32.totalorder %s36, 0
      %p444 = por %p442, %p443
      %p445 = scmp.ne.s32.totalorder %s437, %s439
      %p446 = scmp.eq.s32.totalorder %s41, 1
      %p447 = por %p445, %p446
      %p448 = scmp.ne.s32.totalorder %s439, %s440
      %p449 = scmp.eq.s32.totalorder %s41, 0
      %p450 = por %p448, %p449
      %p451 = scmp.ne.s32.totalorder %s439, %s440
      %p452 = scmp.eq.s32.totalorder %s42, 1
      %p453 = por %p451, %p452
      %p455 = scmp.ne.s32.totalorder %s440, %s454
      %p456 = scmp.eq.s32.totalorder %s42, 0
      %p457 = por %p455, %p456
      %s459 = sadd.s32 %s458, 1
      %p462 = scmp.eq.s32.totalorder %s36, 1
      %p463 = scmp.ne.s32.totalorder %s458, %s460
      %p464 = scmp.eq.s32.totalorder %s36, 0
      %p465 = por %p463, %p464
      %p466 = scmp.ne.s32.totalorder %s458, %s460
      %p467 = scmp.eq.s32.totalorder %s41, 1
      %p468 = por %p466, %p467
      %p469 = scmp.ne.s32.totalorder %s460, %s461
      %p470 = scmp.eq.s32.totalorder %s41, 0
      %p471 = por %p469, %p470
      %p472 = scmp.ne.s32.totalorder %s460, %s461
      %p473 = scmp.eq.s32.totalorder %s42, 1
      %p474 = por %p472, %p473
      %p476 = scmp.ne.s32.totalorder %s461, %s475
      %p477 = scmp.eq.s32.totalorder %s42, 0
      %p478 = por %p476, %p477
      %s479 = ssub.s32 %s36, %s43
      %p480 = scmp.eq.s32.totalorder %s479, 0
      %s482 = sadd.s32 %s481, 1
      %s483 = scalar_select %p480, %s481, %s482
      %p486 = pneg %p480
      %p487 = scmp.eq.s32.totalorder %s36, 1
      %p488 = por %p486, %p487
      %p489 = scmp.ne.s32.totalorder %s481, %s484
      %p490 = scmp.eq.s32.totalorder %s36, 0
      %p491 = por %p489, %p490
      %p492 = scmp.ne.s32.totalorder %s481, %s484
      %p493 = scmp.eq.s32.totalorder %s41, 1
      %p494 = por %p492, %p493
      %p495 = scmp.ne.s32.totalorder %s484, %s485
      %p496 = scmp.eq.s32.totalorder %s41, 0
      %p497 = por %p495, %p496
      %p498 = scmp.ne.s32.totalorder %s484, %s485
      %p499 = scmp.eq.s32.totalorder %s42, 1
      %p500 = por %p498, %p499
      %p502 = scmp.ne.s32.totalorder %s485, %s501
      %p503 = scmp.eq.s32.totalorder %s42, 0
      %p504 = por %p502, %p503
      %p505 = scmp.le.s32.totalorder 1, %s36
      %p506 = scmp.lt.s32.totalorder %s36, 3
      %p507 = pnand %p505, %p506
      %p508 = pneg %p507
      // Predicated region
      $region9: #{_lambda_.1} parent=5 // pred_check
        _
      $region10: #{_lambda_.1} parent=5 // pred_check_branch
        %510 = sbr.rel (%p507) target = $region12
      $region11: #{_lambda_.1} parent=5 // pred_region
        %s511 = ssub.s32 %s36, 1
        // Predicated region
        $region13: #{_lambda_.1} parent=11 // pred_check
          %p512 = pneg %p135
        $region14: #{_lambda_.1} parent=11 // pred_check_branch
          %514 = sbr.rel (%p512) target = $region16
        $region15: #{_lambda_.1} parent=11 // pred_region
          _
        $region16: #{_lambda_.1} parent=11 // pred_fallthru
          _
        // Predicated region
        $region17: #{_lambda_.1} parent=11 // pred_check
          %p515 = pneg %p156
        $region18: #{_lambda_.1} parent=11 // pred_check_branch
          %517 = sbr.rel (%p515) target = $region20
        $region19: #{_lambda_.1} parent=11 // pred_region
          _
        $region20: #{_lambda_.1} parent=11 // pred_fallthru
          _
        // Predicated region
        $region21: #{_lambda_.1} parent=11 // pred_check
          %p518 = pneg %p177
        $region22: #{_lambda_.1} parent=11 // pred_check_branch
          %520 = sbr.rel (%p518) target = $region24
        $region23: #{_lambda_.1} parent=11 // pred_region
          _
        $region24: #{_lambda_.1} parent=11 // pred_fallthru
          _
        // Predicated region
        $region25: #{_lambda_.1} parent=11 // pred_check
          %p521 = pneg %p198
        $region26: #{_lambda_.1} parent=11 // pred_check_branch
          %523 = sbr.rel (%p521) target = $region28
        $region27: #{_lambda_.1} parent=11 // pred_region
          _
        $region28: #{_lambda_.1} parent=11 // pred_fallthru
          _
        // Predicated region
        $region29: #{_lambda_.1} parent=11 // pred_check
          %p524 = pneg %p219
        $region30: #{_lambda_.1} parent=11 // pred_check_branch
          %526 = sbr.rel (%p524) target = $region32
        $region31: #{_lambda_.1} parent=11 // pred_region
          %s528 = ssub.s32 512, 512
          %529 = vsyncadd [#allocation3], %s528
          %s530 = sshll.u32 [#allocation2], 4
          %s531 = int_to_ptr.vmem [resolvable:$true] %s530
          %536 = dma.hbm_to_vmem [thread:$0]  %s7, 512, %s531, [#allocation3], 128, 128, 8
        $region32: #{_lambda_.1} parent=11 // pred_fallthru
          _
        // Predicated region
        $region33: #{_lambda_.1} parent=11 // pred_check
          %p537 = pneg %p240
        $region34: #{_lambda_.1} parent=11 // pred_check_branch
          %539 = sbr.rel (%p537) target = $region36
        $region35: #{_lambda_.1} parent=11 // pred_region
          %s541 = ssub.s32 256, 256
          %542 = vsyncadd [#allocation6], %s541
          %s543 = sshll.u32 [#allocation5], 4
          %s544 = int_to_ptr.vmem [resolvable:$true] %s543
          %549 = dma.hbm_to_vmem [thread:$0]  %s8, 256, %s544, [#allocation6], 128, 128, 8
        $region36: #{_lambda_.1} parent=11 // pred_fallthru
          _
        // Predicated region
        $region37: #{_lambda_.1} parent=11 // pred_check
          %p550 = pneg %p261
        $region38: #{_lambda_.1} parent=11 // pred_check_branch
          %552 = sbr.rel (%p550) target = $region40
        $region39: #{_lambda_.1} parent=11 // pred_region
          %s554 = ssub.s32 64, 64
          %555 = vsyncadd [#allocation6], %s554
          %s557 = sshll.u32 [#allocation7], 4
          %s558 = int_to_ptr.vmem [resolvable:$true] %s557
          %560 = dma.hbm_to_vmem [thread:$0]  %s9, 64, %s558, [#allocation6]
        $region40: #{_lambda_.1} parent=11 // pred_fallthru
          _
        // Predicated region
        $region41: #{_lambda_.1} parent=11 // pred_check
          %p561 = pneg %p282
        $region42: #{_lambda_.1} parent=11 // pred_check_branch
          %563 = sbr.rel (%p561) target = $region44
        $region43: #{_lambda_.1} parent=11 // pred_region
          %s565 = ssub.s32 512, 512
          %566 = vsyncadd [#allocation9], %s565
          %s567 = sshll.u32 [#allocation8], 4
          %s568 = int_to_ptr.vmem [resolvable:$true] %s567
          %573 = dma.hbm_to_vmem [thread:$0]  %s10, 512, %s568, [#allocation9], 128, 128, 8
        $region44: #{_lambda_.1} parent=11 // pred_fallthru
          _
        // Predicated region
        $region45: #{_lambda_.1} parent=11 // pred_check
          %p574 = pneg %p303
        $region46: #{_lambda_.1} parent=11 // pred_check_branch
          %576 = sbr.rel (%p574) target = $region48
        $region47: #{_lambda_.1} parent=11 // pred_region
          %s578 = ssub.s32 1536, 1536
          %579 = vsyncadd [#allocation9], %s578
          %s580 = sshll.u32 [#allocation10], 4
          %s581 = int_to_ptr.vmem [resolvable:$true] %s580
          %586 = dma.hbm_to_vmem [thread:$0]  %s11, 1536, %s581, [#allocation9], 128, 128, 8
        $region48: #{_lambda_.1} parent=11 // pred_fallthru
          _
        // Predicated region
        $region49: #{_lambda_.1} parent=11 // pred_check
          %p587 = pneg %p324
        $region50: #{_lambda_.1} parent=11 // pred_check_branch
          %589 = sbr.rel (%p587) target = $region52
        $region51: #{_lambda_.1} parent=11 // pred_region
          %s591 = ssub.s32 512, 512
          %592 = vsyncadd [#allocation12], %s591
          %s593 = sshll.u32 [#allocation11], 4
          %s594 = int_to_ptr.vmem [resolvable:$true] %s593
          %599 = dma.hbm_to_vmem [thread:$0]  %s12, 512, %s594, [#allocation12], 128, 128, 8
        $region52: #{_lambda_.1} parent=11 // pred_fallthru
          _
        // Predicated region
        $region53: #{_lambda_.1} parent=11 // pred_check
          %p600 = pneg %p345
        $region54: #{_lambda_.1} parent=11 // pred_check_branch
          %602 = sbr.rel (%p600) target = $region56
        $region55: #{_lambda_.1} parent=11 // pred_region
          %s604 = ssub.s32 64, 64
          %605 = vsyncadd [#allocation12], %s604
          %s607 = sshll.u32 [#allocation13], 4
          %s608 = int_to_ptr.vmem [resolvable:$true] %s607
          %610 = dma.hbm_to_vmem [thread:$0]  %s13, 64, %s608, [#allocation12]
        $region56: #{_lambda_.1} parent=11 // pred_fallthru
          _
        // Predicated region
        $region57: #{_lambda_.1} parent=11 // pred_check
          %p611 = pneg %p366
        $region58: #{_lambda_.1} parent=11 // pred_check_branch
          %613 = sbr.rel (%p611) target = $region60
        $region59: #{_lambda_.1} parent=11 // pred_region
          %s615 = ssub.s32 64, 64
          %616 = vsyncadd [#allocation15], %s615
          %s618 = sshll.u32 [#allocation14], 4
          %s619 = int_to_ptr.vmem [resolvable:$true] %s618
          %621 = dma.hbm_to_vmem [thread:$0]  %s14, 64, %s619, [#allocation15]
        $region60: #{_lambda_.1} parent=11 // pred_fallthru
          _
        // Predicated region
        $region61: #{_lambda_.1} parent=11 // pred_check
          %p622 = pneg %p387
        $region62: #{_lambda_.1} parent=11 // pred_check_branch
          %624 = sbr.rel (%p622) target = $region64
        $region63: #{_lambda_.1} parent=11 // pred_region
          %s626 = ssub.s32 512, 512
          %627 = vsyncadd [#allocation15], %s626
          %s628 = sshll.u32 [#allocation16], 4
          %s629 = int_to_ptr.vmem [resolvable:$true] %s628
          %634 = dma.hbm_to_vmem [thread:$0]  %s15, 512, %s629, [#allocation15], 128, 128, 8
        $region64: #{_lambda_.1} parent=11 // pred_fallthru
          _
        // Predicated region
        $region65: #{_lambda_.1} parent=11 // pred_check
          %p635 = pneg %p408
        $region66: #{_lambda_.1} parent=11 // pred_check_branch
          %637 = sbr.rel (%p635) target = $region68
        $region67: #{_lambda_.1} parent=11 // pred_region
          %s639 = ssub.s32 1536, 1536
          %640 = vsyncadd [#allocation18], %s639
          %s641 = sshll.u32 [#allocation17], 4
          %s642 = int_to_ptr.vmem [resolvable:$true] %s641
          %647 = dma.hbm_to_vmem [thread:$0]  %s16, 1536, %s642, [#allocation18], 128, 128, 8
        $region68: #{_lambda_.1} parent=11 // pred_fallthru
          _
        // Predicated region
        $region69: #{_lambda_.1} parent=11 // pred_check
          %p648 = pneg %p429
        $region70: #{_lambda_.1} parent=11 // pred_check_branch
          %650 = sbr.rel (%p648) target = $region72
        $region71: #{_lambda_.1} parent=11 // pred_region
          %s652 = ssub.s32 512, 512
          %653 = vsyncadd [#allocation18], %s652
          %s654 = sshll.u32 [#allocation19], 4
          %s655 = int_to_ptr.vmem [resolvable:$true] %s654
          %660 = dma.hbm_to_vmem [thread:$0]  %s17, 512, %s655, [#allocation18], 128, 128, 8
        $region72: #{_lambda_.1} parent=11 // pred_fallthru
          _
        // Predicated region
        $region73: #{_lambda_.1} parent=11 // pred_check
          %p661 = pneg %p450
        $region74: #{_lambda_.1} parent=11 // pred_check_branch
          %663 = sbr.rel (%p661) target = $region76
        $region75: #{_lambda_.1} parent=11 // pred_region
          %s665 = ssub.s32 1024, 1024
          %666 = vsyncadd [#allocation21], %s665
          %s667 = sshll.u32 [#allocation20], 4
          %s668 = int_to_ptr.vmem [resolvable:$true] %s667
          %673 = dma.hbm_to_vmem [thread:$0]  %s18, 1024, %s668, [#allocation21], 128, 128, 8
        $region76: #{_lambda_.1} parent=11 // pred_fallthru
          _
        // Predicated region
        $region77: #{_lambda_.1} parent=11 // pred_check
          %p674 = pneg %p471
        $region78: #{_lambda_.1} parent=11 // pred_check_branch
          %676 = sbr.rel (%p674) target = $region80
        $region79: #{_lambda_.1} parent=11 // pred_region
          _
        $region80: #{_lambda_.1} parent=11 // pred_fallthru
          _
      $region12: #{_lambda_.1} parent=5 // pred_fallthru
        _
      %p677 = scmp.lt.s32.totalorder %s36, 2
      // Predicated region
      $region81: #{_lambda_.1} parent=5 // pred_check
        %p678 = pneg %p677
      $region82: #{_lambda_.1} parent=5 // pred_check_branch
        %680 = sbr.rel (%p678) target = $region84
      $region83: #{_lambda_.1} parent=5 // pred_region
        // Predicated region
        $region85: #{_lambda_.1} parent=83 // pred_check
          %p681 = pneg %p56
        $region86: #{_lambda_.1} parent=83 // pred_check_branch
          %683 = sbr.rel (%p681) target = $region88
        $region87: #{_lambda_.1} parent=83 // pred_region
          %p684 = scmp.lt.s32.totalorder %s36, 1
          %s685 = scalar_select %p684, %s36, 1
          %s686 = smul.addr %s685, 8
          %s687 = scalar_lea.vmem %s0, %s686
        $region88: #{_lambda_.1} parent=83 // pred_fallthru
          _
        // Predicated region
        $region89: #{_lambda_.1} parent=83 // pred_check
          %p688 = pneg %p82
        $region90: #{_lambda_.1} parent=83 // pred_check_branch
          %690 = sbr.rel (%p688) target = $region92
        $region91: #{_lambda_.1} parent=83 // pred_region
          %p691 = scmp.lt.s32.totalorder %s36, 1
          %s692 = scalar_select %p691, %s36, 1
          %s693 = smul.addr %s692, 8
          %s694 = scalar_lea.vmem %s1, %s693
        $region92: #{_lambda_.1} parent=83 // pred_fallthru
          _
        // Predicated region
        $region93: #{_lambda_.1} parent=83 // pred_check
          %p695 = pneg %p108
        $region94: #{_lambda_.1} parent=83 // pred_check_branch
          %697 = sbr.rel (%p695) target = $region96
        $region95: #{_lambda_.1} parent=83 // pred_region
          %p698 = scmp.lt.s32.totalorder %s36, 1
          %s699 = scalar_select %p698, %s36, 1
          %s700 = smul.addr %s699, 8
          %s701 = scalar_lea.vmem %s2, %s700
        $region96: #{_lambda_.1} parent=83 // pred_fallthru
          _
      $region84: #{_lambda_.1} parent=5 // pred_fallthru
        _
      %p702 = scmp.le.s32.totalorder 1, %s36
      %p703 = scmp.lt.s32.totalorder %s36, 3
      %p704 = pnand %p702, %p703
      %p705 = pneg %p704
      // Predicated region
      $region97: #{_lambda_.1} parent=5 // pred_check
        _
      $region98: #{_lambda_.1} parent=5 // pred_check_branch
        %707 = sbr.rel (%p704) target = $region100
      $region99: #{_lambda_.1} parent=5 // pred_region
        %s708 = ssub.s32 %s36, 1
        // Predicated region
        $region101: #{_lambda_.1} parent=99 // pred_check
          %p709 = pneg %p219
        $region102: #{_lambda_.1} parent=99 // pred_check_branch
          %711 = sbr.rel (%p709) target = $region104
        $region103: #{_lambda_.1} parent=99 // pred_region
          %712 = dma.done [#allocation3], 512
        $region104: #{_lambda_.1} parent=99 // pred_fallthru
          _
        // Predicated region
        $region105: #{_lambda_.1} parent=99 // pred_check
          %p713 = pneg %p240
        $region106: #{_lambda_.1} parent=99 // pred_check_branch
          %715 = sbr.rel (%p713) target = $region108
        $region107: #{_lambda_.1} parent=99 // pred_region
          %716 = dma.done [#allocation6], 256
        $region108: #{_lambda_.1} parent=99 // pred_fallthru
          _
        // Predicated region
        $region109: #{_lambda_.1} parent=99 // pred_check
          %p717 = pneg %p261
        $region110: #{_lambda_.1} parent=99 // pred_check_branch
          %719 = sbr.rel (%p717) target = $region112
        $region111: #{_lambda_.1} parent=99 // pred_region
          %720 = dma.done [#allocation6], 64
        $region112: #{_lambda_.1} parent=99 // pred_fallthru
          _
        // Predicated region
        $region113: #{_lambda_.1} parent=99 // pred_check
          %p721 = pneg %p282
        $region114: #{_lambda_.1} parent=99 // pred_check_branch
          %723 = sbr.rel (%p721) target = $region116
        $region115: #{_lambda_.1} parent=99 // pred_region
          %724 = dma.done [#allocation9], 512
        $region116: #{_lambda_.1} parent=99 // pred_fallthru
          _
        // Predicated region
        $region117: #{_lambda_.1} parent=99 // pred_check
          %p725 = pneg %p303
        $region118: #{_lambda_.1} parent=99 // pred_check_branch
          %727 = sbr.rel (%p725) target = $region120
        $region119: #{_lambda_.1} parent=99 // pred_region
          %728 = dma.done [#allocation9], 1536
        $region120: #{_lambda_.1} parent=99 // pred_fallthru
          _
        // Predicated region
        $region121: #{_lambda_.1} parent=99 // pred_check
          %p729 = pneg %p324
        $region122: #{_lambda_.1} parent=99 // pred_check_branch
          %731 = sbr.rel (%p729) target = $region124
        $region123: #{_lambda_.1} parent=99 // pred_region
          %732 = dma.done [#allocation12], 512
        $region124: #{_lambda_.1} parent=99 // pred_fallthru
          _
        // Predicated region
        $region125: #{_lambda_.1} parent=99 // pred_check
          %p733 = pneg %p345
        $region126: #{_lambda_.1} parent=99 // pred_check_branch
          %735 = sbr.rel (%p733) target = $region128
        $region127: #{_lambda_.1} parent=99 // pred_region
          %736 = dma.done [#allocation12], 64
        $region128: #{_lambda_.1} parent=99 // pred_fallthru
          _
        // Predicated region
        $region129: #{_lambda_.1} parent=99 // pred_check
          %p737 = pneg %p366
        $region130: #{_lambda_.1} parent=99 // pred_check_branch
          %739 = sbr.rel (%p737) target = $region132
        $region131: #{_lambda_.1} parent=99 // pred_region
          %740 = dma.done [#allocation15], 64
        $region132: #{_lambda_.1} parent=99 // pred_fallthru
          _
        // Predicated region
        $region133: #{_lambda_.1} parent=99 // pred_check
          %p741 = pneg %p387
        $region134: #{_lambda_.1} parent=99 // pred_check_branch
          %743 = sbr.rel (%p741) target = $region136
        $region135: #{_lambda_.1} parent=99 // pred_region
          %744 = dma.done [#allocation15], 512
        $region136: #{_lambda_.1} parent=99 // pred_fallthru
          _
        // Predicated region
        $region137: #{_lambda_.1} parent=99 // pred_check
          %p745 = pneg %p408
        $region138: #{_lambda_.1} parent=99 // pred_check_branch
          %747 = sbr.rel (%p745) target = $region140
        $region139: #{_lambda_.1} parent=99 // pred_region
          %748 = dma.done [#allocation18], 1536
        $region140: #{_lambda_.1} parent=99 // pred_fallthru
          _
        // Predicated region
        $region141: #{_lambda_.1} parent=99 // pred_check
          %p749 = pneg %p429
        $region142: #{_lambda_.1} parent=99 // pred_check_branch
          %751 = sbr.rel (%p749) target = $region144
        $region143: #{_lambda_.1} parent=99 // pred_region
          %752 = dma.done [#allocation18], 512
        $region144: #{_lambda_.1} parent=99 // pred_fallthru
          _
        // Predicated region
        $region145: #{_lambda_.1} parent=99 // pred_check
          %p753 = pneg %p450
        $region146: #{_lambda_.1} parent=99 // pred_check_branch
          %755 = sbr.rel (%p753) target = $region148
        $region147: #{_lambda_.1} parent=99 // pred_region
          %756 = dma.done [#allocation21], 1024
        $region148: #{_lambda_.1} parent=99 // pred_fallthru
          _
        %p757 = scmp.lt.s32.totalorder %s41, 1
        %s758 = scalar_select %p757, %s41, 1
        %s759 = smul.addr %s758, 8
        %s760 = scalar_lea.vmem %s0, %s759
        %p761 = pneg %p62
        %p762 = pneg %p59
        %p763 = scmp.lt.s32.totalorder %s41, 1
        %s764 = scalar_select %p763, %s41, 1
        %s765 = smul.addr %s764, 8
        %s766 = scalar_lea.vmem %s1, %s765
        %p767 = pneg %p88
        %p768 = pneg %p85
        %p769 = scmp.lt.s32.totalorder %s41, 1
        %s770 = scalar_select %p769, %s41, 1
        %s771 = smul.addr %s770, 8
        %s772 = scalar_lea.vmem %s2, %s771
        %p773 = pneg %p114
        %p774 = pneg %p111
        %p775 = pneg %p135
        %p776 = pneg %p132
        %p777 = pneg %p156
        %p778 = pneg %p153
        %p779 = pneg %p177
        %p780 = pneg %p174
        %p781 = pneg %p198
        %p782 = pneg %p195
        %p783 = pneg %p219
        %p784 = pneg %p216
        %p785 = pneg %p240
        %p786 = pneg %p237
        %p787 = pneg %p261
        %p788 = pneg %p258
        %p789 = pneg %p282
        %p790 = pneg %p279
        %p791 = pneg %p303
        %p792 = pneg %p300
        %p793 = pneg %p324
        %p794 = pneg %p321
        %p795 = pneg %p345
        %p796 = pneg %p342
        %p797 = pneg %p366
        %p798 = pneg %p363
        %p799 = pneg %p387
        %p800 = pneg %p384
        %p801 = pneg %p408
        %p802 = pneg %p405
        %p803 = pneg %p429
        %p804 = pneg %p426
        %p805 = pneg %p450
        %p806 = pneg %p447
        %p807 = pneg %p471
        %p808 = pneg %p468
        %p809 = pneg %p497
        %p810 = pneg %p494
        %s811 = sand.u32 %s484, 1
        %s812 = scalar_lea.sflag [#allocation4], %s811
        %s813 = sand.u32 %s484, 1
        %s814 = scalar_lea.vmem [#allocation22], %s813
        %p815 = scmp.lt.s32.totalorder %s41, 1
        %s816 = scalar_select %p815, %s41, 1
        %s817 = smul.addr %s816, 8
        %s818 = scalar_lea.vmem %s0, %s817
        %p819 = scmp.lt.s32.totalorder %s41, 1
        %s820 = scalar_select %p819, %s41, 1
        %s821 = smul.addr %s820, 8
        %s822 = scalar_lea.vmem %s1, %s821
        %p823 = scmp.lt.s32.totalorder %s41, 1
        %s824 = scalar_select %p823, %s41, 1
        %s825 = smul.addr %s824, 8
        %s826 = scalar_lea.vmem %s2, %s825
        %v827 = vld [vmem:[%s818] sm:$0xff]
        %v828 = vld [vmem:[%s4] sm:$0x7]
        %v829 = vld [vmem:[%s3] sm:$0x3f]
        %v830 = vlaneseq
        %v831 = vshrl.u32 %v830, 7
        %v832 = vsub.s32 0, %v831
        %v833 = vrot.slane %v828, %v832
        %vm834 = vcmask 48128
        %v836 = vsel %vm834, %v827, 0
        %vm838 = vcmask 1045504
        %v840 = vsel %vm838, %v829, 0
        %842 = vmatprep.subr.mxu0 0.0
        %843 = vmatpush1.msra.mxu0 %v840
        %844 = vmatprep.subr.mxu0 0.0
        %845 = vmatpush1.msra.mxu0 0.0
        %846 = vmatprep.subr.mxu0 0.0
        %847 = vmatpush1.msra.mxu0 0.0
        %848 = vmatprep.subr.mxu0 0.0
        %849 = vmatpush1.msra.mxu0 0.0
        %850 = vmatprep.subr.mxu0 0.0
        %851 = vmatpush1.msra.mxu0 0.0
        %852 = vmatprep.subr.mxu0 0.0
        %853 = vmatpush1.msra.mxu0 0.0
        %854 = vmatprep.subr.mxu0 0.0
        %855 = vmatpush1.msra.mxu0 0.0
        %856 = vmatprep.subr.mxu0 0.0
        %857 = vmatpush1.msra.mxu0 0.0
        %858 = vmatprep.subr.mxu0 0.0
        %859 = vmatpush1.msra.mxu0 0.0
        %860 = vmatprep.subr.mxu0 0.0
        %861 = vmatpush1.msra.mxu0 0.0
        %862 = vmatprep.subr.mxu0 0.0
        %863 = vmatpush1.msra.mxu0 0.0
        %864 = vmatprep.subr.mxu0 0.0
        %865 = vmatpush1.msra.mxu0 0.0
        %866 = vmatprep.subr.mxu0 0.0
        %867 = vmatpush1.msra.mxu0 0.0
        %868 = vmatprep.subr.mxu0 0.0
        %869 = vmatpush1.msra.mxu0 0.0
        %870 = vmatprep.subr.mxu0 0.0
        %871 = vmatpush1.msra.mxu0 0.0
        %872 = vmatprep.subr.mxu0 0.0
        %873 = vmatpush1.msra.mxu0 0.0
        %874 = vmatprep.subr.mxu0 0.0
        %875 = vmatpush1.msra.mxu0 0.0
        %876 = vmatprep.subr.mxu0 0.0
        %877 = vmatpush1.msra.mxu0 0.0
        %878 = vmatprep.subr.mxu0 0.0
        %879 = vmatpush1.msra.mxu0 0.0
        %880 = vmatprep.subr.mxu0 0.0
        %881 = vmatpush1.msra.mxu0 0.0
        %882 = vmatprep.subr.mxu0 0.0
        %883 = vmatpush1.msra.mxu0 0.0
        %884 = vmatprep.subr.mxu0 0.0
        %885 = vmatpush1.msra.mxu0 0.0
        %886 = vmatprep.subr.mxu0 0.0
        %887 = vmatpush1.msra.mxu0 0.0
        %888 = vmatprep.subr.mxu0 0.0
        %889 = vmatpush1.msra.mxu0 0.0
        %890 = vmatprep.subr.mxu0 0.0
        %891 = vmatpush1.msra.mxu0 0.0
        %892 = vmatprep.subr.mxu0 0.0
        %893 = vmatpush1.msra.mxu0 0.0
        %894 = vmatprep.subr.mxu0 0.0
        %895 = vmatpush1.msra.mxu0 0.0
        %896 = vmatprep.subr.mxu0 0.0
        %897 = vmatpush1.msra.mxu0 0.0
        %898 = vmatprep.subr.mxu0 0.0
        %899 = vmatpush1.msra.mxu0 0.0
        %900 = vmatprep.subr.mxu0 0.0
        %901 = vmatpush1.msra.mxu0 0.0
        %902 = vmatprep.subr.mxu0 0.0
        %903 = vmatpush1.msra.mxu0 0.0
        %904 = vmatprep.subr.mxu0 0.0
        %905 = vmatpush1.msra.mxu0 0.0
        %906 = vmatprep.mubr.f32.mxu0 0.0
        %907 = vmatmul.mubr.f32.gmra.mrb[0].mxu0 %v836
        %v908 = vpop.f32.mrb[0].mxu0
        %v909 = vadd.f32 %v833, %v908
        %v910 = vpop.f32.mrb[0].mxu0
        %911 = vdwg.mxu0
        %v912 = vmax.f32 %v909, 0.0
        %v913 = vld [vmem:[%s5] sm:$0xff]
        %v914 = vld [vmem:[%s5 + $0x8] sm:$0xff]
        %v915 = vld [vmem:[%s5 + $0x10] sm:$0xff]
        %v916 = vld [vmem:[%s5 + $0x18] sm:$0xff]
        %v917 = vld [vmem:[%s6] sm:$0xff]
        %v918 = vld [vmem:[%s6 + $0x8] sm:$0xff]
        %v919 = vld [vmem:[%s6 + $0x10] sm:$0xff]
        %v920 = vld [vmem:[%s6 + $0x18] sm:$0xff]
        %v921 = vld [vmem:[%s6 + $0x20] sm:$0xff]
        %v922 = vld [vmem:[%s6 + $0x28] sm:$0xff]
        %v923 = vld [vmem:[%s6 + $0x30] sm:$0xff]
        %v924 = vld [vmem:[%s6 + $0x38] sm:$0xff]
        %v925 = vld [vmem:[%s6 + $0x40] sm:$0xff]
        %v926 = vld [vmem:[%s6 + $0x48] sm:$0xff]
        %v927 = vld [vmem:[%s6 + $0x50] sm:$0xff]
        %v928 = vld [vmem:[%s6 + $0x58] sm:$0xff]
        %v929 = vld [vmem:[#allocation2] sm:$0xff]
        %v930 = vld [vmem:[#allocation2 + $0x8] sm:$0x3]
        %vm931 = vcmask 261120
        %v933 = vsel %vm931, %v912, 0
        %935 = vmatprep.subr.mxu0 0.0
        %936 = vmatpush1.msra.mxu0 %v913
        %937 = vmatprep.subr.mxu0 0.0
        %938 = vmatpush1.msra.mxu0 %v914
        %939 = vmatprep.subr.mxu0 0.0
        %940 = vmatpush1.msra.mxu0 %v915
        %941 = vmatprep.subr.mxu0 0.0
        %942 = vmatpush1.msra.mxu0 %v916
        %943 = vmatprep.subr.mxu0 0.0
        %944 = vmatpush1.msra.mxu0 0.0
        %945 = vmatprep.subr.mxu0 0.0
        %946 = vmatpush1.msra.mxu0 0.0
        %947 = vmatprep.subr.mxu0 0.0
        %948 = vmatpush1.msra.mxu0 0.0
        %949 = vmatprep.subr.mxu0 0.0
        %950 = vmatpush1.msra.mxu0 0.0
        %951 = vmatprep.subr.mxu0 0.0
        %952 = vmatpush1.msra.mxu0 0.0
        %953 = vmatprep.subr.mxu0 0.0
        %954 = vmatpush1.msra.mxu0 0.0
        %955 = vmatprep.subr.mxu0 0.0
        %956 = vmatpush1.msra.mxu0 0.0
        %957 = vmatprep.subr.mxu0 0.0
        %958 = vmatpush1.msra.mxu0 0.0
        %959 = vmatprep.subr.mxu0 0.0
        %960 = vmatpush1.msra.mxu0 0.0
        %961 = vmatprep.subr.mxu0 0.0
        %962 = vmatpush1.msra.mxu0 0.0
        %963 = vmatprep.subr.mxu0 0.0
        %964 = vmatpush1.msra.mxu0 0.0
        %965 = vmatprep.subr.mxu0 0.0
        %966 = vmatpush1.msra.mxu0 0.0
        %967 = vmatprep.subr.mxu0 0.0
        %968 = vmatpush1.msra.mxu0 0.0
        %969 = vmatprep.subr.mxu0 0.0
        %970 = vmatpush1.msra.mxu0 0.0
        %971 = vmatprep.subr.mxu0 0.0
        %972 = vmatpush1.msra.mxu0 0.0
        %973 = vmatprep.subr.mxu0 0.0
        %974 = vmatpush1.msra.mxu0 0.0
        %975 = vmatprep.subr.mxu0 0.0
        %976 = vmatpush1.msra.mxu0 0.0
        %977 = vmatprep.subr.mxu0 0.0
        %978 = vmatpush1.msra.mxu0 0.0
        %979 = vmatprep.subr.mxu0 0.0
        %980 = vmatpush1.msra.mxu0 0.0
        %981 = vmatprep.subr.mxu0 0.0
        %982 = vmatpush1.msra.mxu0 0.0
        %983 = vmatprep.subr.mxu0 0.0
        %984 = vmatpush1.msra.mxu0 0.0
        %985 = vmatprep.subr.mxu0 0.0
        %986 = vmatpush1.msra.mxu0 0.0
        %987 = vmatprep.subr.mxu0 0.0
        %988 = vmatpush1.msra.mxu0 0.0
        %989 = vmatprep.subr.mxu0 0.0
        %990 = vmatpush1.msra.mxu0 0.0
        %991 = vmatprep.subr.mxu0 0.0
        %992 = vmatpush1.msra.mxu0 0.0
        %993 = vmatprep.subr.mxu0 0.0
        %994 = vmatpush1.msra.mxu0 0.0
        %995 = vmatprep.subr.mxu0 0.0
        %996 = vmatpush1.msra.mxu0 0.0
        %997 = vmatprep.subr.mxu0 0.0
        %998 = vmatpush1.msra.mxu0 0.0
        %999 = vmatprep.mubr.f32.mxu0 0.0
        %1000 = vmatmul.mubr.f32.gmra.mrb[0].mxu0 %v933
        %v1001 = vpop.f32.mrb[0].mxu0
        %v1002 = vadd.f32 0.0, %v1001
        %v1003 = vpop.f32.mrb[0].mxu0
        %1004 = vdwg.mxu0
        %v1005 = vlaneseq
        %v1006 = vshrl.u32 %v1005, 7
        %v1007 = vsub.s32 0, %v1006
        %v1008 = vrot.slane %v929, %v1007
        %v1009 = vadd.f32 %v1002, %v1008
        %v1010 = vmul.f32 %v1009, 0.35355338
        %v1011 = vlaneseq
        %v1012 = vshrl.u32 %v1011, 7
        %v1013 = vsub.s32 1, %v1012
        %v1014 = vrot.slane %v929, %v1013
        %1016 = vrot.lane.b32.xlu0 %v1014, 32
        %v1017 = vpop.permute.xlu0 %1016
        %v1019 = vadd.f32 %v1002, %v1017
        %v1020 = vlaneseq
        %v1021 = vshrl.u32 %v1020, 7
        %v1022 = vsub.s32 2, %v1021
        %v1023 = vrot.slane %v929, %v1022
        %1025 = vrot.lane.b32.xlu0 %v1023, 64
        %v1026 = vpop.permute.xlu0 %1025
        %v1028 = vadd.f32 %v1002, %v1026
        %1030 = vrot.lane.b32.xlu0 %v1019, 96
        %v1031 = vpop.permute.xlu0 %1030
        %vm1032 = vcmask 64512
        %v1034 = vsel %vm1032, %v1010, 0
        %v1036 = vsel %vm1032, %v1031, 0
        %1038 = vmatprep.subr.mxu0 0.0
        %1039 = vmatpush1.xpose.msra.mxu0 %v1036
        %1040 = vmatprep.subr.mxu0 0.0
        %1041 = vmatpush1.xpose.msra.mxu0 0.0
        %1042 = vmatprep.subr.mxu0 0.0
        %1043 = vmatpush1.xpose.msra.mxu0 0.0
        %1044 = vmatprep.subr.mxu0 0.0
        %1045 = vmatpush1.xpose.msra.mxu0 0.0
        %1046 = vmatprep.subr.mxu0 0.0
        %1047 = vmatpush1.xpose.msra.mxu0 0.0
        %1048 = vmatprep.subr.mxu0 0.0
        %1049 = vmatpush1.xpose.msra.mxu0 0.0
        %1050 = vmatprep.subr.mxu0 0.0
        %1051 = vmatpush1.xpose.msra.mxu0 0.0
        %1052 = vmatprep.subr.mxu0 0.0
        %1053 = vmatpush1.xpose.msra.mxu0 0.0
        %1054 = vmatprep.subr.mxu0 0.0
        %1055 = vmatpush1.xpose.msra.mxu0 0.0
        %1056 = vmatprep.subr.mxu0 0.0
        %1057 = vmatpush1.xpose.msra.mxu0 0.0
        %1058 = vmatprep.subr.mxu0 0.0
        %1059 = vmatpush1.xpose.msra.mxu0 0.0
        %1060 = vmatprep.subr.mxu0 0.0
        %1061 = vmatpush1.xpose.msra.mxu0 0.0
        %1062 = vmatprep.subr.mxu0 0.0
        %1063 = vmatpush1.xpose.msra.mxu0 0.0
        %1064 = vmatprep.subr.mxu0 0.0
        %1065 = vmatpush1.xpose.msra.mxu0 0.0
        %1066 = vmatprep.subr.mxu0 0.0
        %1067 = vmatpush1.xpose.msra.mxu0 0.0
        %1068 = vmatprep.subr.mxu0 0.0
        %1069 = vmatpush1.xpose.msra.mxu0 0.0
        %1070 = vmatprep.subr.mxu0 0.0
        %1071 = vmatpush1.xpose.msra.mxu0 0.0
        %1072 = vmatprep.subr.mxu0 0.0
        %1073 = vmatpush1.xpose.msra.mxu0 0.0
        %1074 = vmatprep.subr.mxu0 0.0
        %1075 = vmatpush1.xpose.msra.mxu0 0.0
        %1076 = vmatprep.subr.mxu0 0.0
        %1077 = vmatpush1.xpose.msra.mxu0 0.0
        %1078 = vmatprep.subr.mxu0 0.0
        %1079 = vmatpush1.xpose.msra.mxu0 0.0
        %1080 = vmatprep.subr.mxu0 0.0
        %1081 = vmatpush1.xpose.msra.mxu0 0.0
        %1082 = vmatprep.subr.mxu0 0.0
        %1083 = vmatpush1.xpose.msra.mxu0 0.0
        %1084 = vmatprep.subr.mxu0 0.0
        %1085 = vmatpush1.xpose.msra.mxu0 0.0
        %1086 = vmatprep.subr.mxu0 0.0
        %1087 = vmatpush1.xpose.msra.mxu0 0.0
        %1088 = vmatprep.subr.mxu0 0.0
        %1089 = vmatpush1.xpose.msra.mxu0 0.0
        %1090 = vmatprep.subr.mxu0 0.0
        %1091 = vmatpush1.xpose.msra.mxu0 0.0
        %1092 = vmatprep.subr.mxu0 0.0
        %1093 = vmatpush1.xpose.msra.mxu0 0.0
        %1094 = vmatprep.subr.mxu0 0.0
        %1095 = vmatpush1.xpose.msra.mxu0 0.0
        %1096 = vmatprep.subr.mxu0 0.0
        %1097 = vmatpush1.xpose.msra.mxu0 0.0
        %1098 = vmatprep.subr.mxu0 0.0
        %1099 = vmatpush1.xpose.msra.mxu0 0.0
        %1100 = vmatprep.subr.mxu0 0.0
        %1101 = vmatpush1.xpose.msra.mxu0 0.0
        %1102 = vmatprep.mubr.f32.mxu0 0.0
        %1103 = vmatmul.mubr.f32.gmra.mrb[0].mxu0 %v1034
        %v1104 = vpop.f32.mrb[0].mxu0
        %v1105 = vadd.f32 0.0, %v1104
        %v1106 = vpop.f32.mrb[0].mxu0
        %1107 = vdwg.mxu0
        %v1108 = vsel %vm1032, %v1105, -inf
        %1109 = vmax.xlane.f32.xlu0 %v1108
        %v1110 = vpop.xlane.xlu0 %1109
        %v1111 = vsub.f32 %v1105, %v1110
        %v1112 = vmul.f32 %v1111, 1.442695
        %v1113 = vpow.pop %v1112
        %v1114 = vsel %vm1032, %v1113, 0.0
        %1115 = vadd.xlane.f32.xlu0 %v1114
        %v1116 = vpop.xlane.xlu0 %1115
        %v1117 = vrcp.pop %v1116
        %v1118 = vmul.f32 %v1113, %v1117
        %1120 = vrot.lane.b32.xlu0 %v1028, 64
        %v1121 = vpop.permute.xlu0 %1120
        %v1124 = vsel %vm1032, %v1118, 0
        %1126 = vmatprep.subr.mxu0 0.0
        %1127 = vmatpush1.msra.mxu0 %v1121
        %1128 = vmatprep.subr.mxu0 0.0
        %1129 = vmatpush1.msra.mxu0 0.0
        %1130 = vmatprep.subr.mxu0 0.0
        %1131 = vmatpush1.msra.mxu0 0.0
        %1132 = vmatprep.subr.mxu0 0.0
        %1133 = vmatpush1.msra.mxu0 0.0
        %1134 = vmatprep.subr.mxu0 0.0
        %1135 = vmatpush1.msra.mxu0 0.0
        %1136 = vmatprep.subr.mxu0 0.0
        %1137 = vmatpush1.msra.mxu0 0.0
        %1138 = vmatprep.subr.mxu0 0.0
        %1139 = vmatpush1.msra.mxu0 0.0
        %1140 = vmatprep.subr.mxu0 0.0
        %1141 = vmatpush1.msra.mxu0 0.0
        %1142 = vmatprep.subr.mxu0 0.0
        %1143 = vmatpush1.msra.mxu0 0.0
        %1144 = vmatprep.subr.mxu0 0.0
        %1145 = vmatpush1.msra.mxu0 0.0
        %1146 = vmatprep.subr.mxu0 0.0
        %1147 = vmatpush1.msra.mxu0 0.0
        %1148 = vmatprep.subr.mxu0 0.0
        %1149 = vmatpush1.msra.mxu0 0.0
        %1150 = vmatprep.subr.mxu0 0.0
        %1151 = vmatpush1.msra.mxu0 0.0
        %1152 = vmatprep.subr.mxu0 0.0
        %1153 = vmatpush1.msra.mxu0 0.0
        %1154 = vmatprep.subr.mxu0 0.0
        %1155 = vmatpush1.msra.mxu0 0.0
        %1156 = vmatprep.subr.mxu0 0.0
        %1157 = vmatpush1.msra.mxu0 0.0
        %1158 = vmatprep.subr.mxu0 0.0
        %1159 = vmatpush1.msra.mxu0 0.0
        %1160 = vmatprep.subr.mxu0 0.0
        %1161 = vmatpush1.msra.mxu0 0.0
        %1162 = vmatprep.subr.mxu0 0.0
        %1163 = vmatpush1.msra.mxu0 0.0
        %1164 = vmatprep.subr.mxu0 0.0
        %1165 = vmatpush1.msra.mxu0 0.0
        %1166 = vmatprep.subr.mxu0 0.0
        %1167 = vmatpush1.msra.mxu0 0.0
        %1168 = vmatprep.subr.mxu0 0.0
        %1169 = vmatpush1.msra.mxu0 0.0
        %1170 = vmatprep.subr.mxu0 0.0
        %1171 = vmatpush1.msra.mxu0 0.0
        %1172 = vmatprep.subr.mxu0 0.0
        %1173 = vmatpush1.msra.mxu0 0.0
        %1174 = vmatprep.subr.mxu0 0.0
        %1175 = vmatpush1.msra.mxu0 0.0
        %1176 = vmatprep.subr.mxu0 0.0
        %1177 = vmatpush1.msra.mxu0 0.0
        %1178 = vmatprep.subr.mxu0 0.0
        %1179 = vmatpush1.msra.mxu0 0.0
        %1180 = vmatprep.subr.mxu0 0.0
        %1181 = vmatpush1.msra.mxu0 0.0
        %1182 = vmatprep.subr.mxu0 0.0
        %1183 = vmatpush1.msra.mxu0 0.0
        %1184 = vmatprep.subr.mxu0 0.0
        %1185 = vmatpush1.msra.mxu0 0.0
        %1186 = vmatprep.subr.mxu0 0.0
        %1187 = vmatpush1.msra.mxu0 0.0
        %1188 = vmatprep.subr.mxu0 0.0
        %1189 = vmatpush1.msra.mxu0 0.0
        %1190 = vmatprep.mubr.f32.mxu0 0.0
        %1191 = vmatmul.mubr.f32.gmra.mrb[0].mxu0 %v1124
        %v1192 = vpop.f32.mrb[0].mxu0
        %v1193 = vadd.f32 0.0, %v1192
        %v1194 = vpop.f32.mrb[0].mxu0
        %1195 = vdwg.mxu0
        %1196 = vrot.lane.b32.xlu0 %v1010, 120
        %v1197 = vpop.permute.xlu0 %1196
        %1198 = vrot.lane.b32.xlu0 %v1019, 88
        %v1199 = vpop.permute.xlu0 %1198
        %v1200 = vsel %vm1032, %v1197, 0
        %v1202 = vsel %vm1032, %v1199, 0
        %1204 = vmatprep.subr.mxu0 0.0
        %1205 = vmatpush1.xpose.msra.mxu0 %v1202
        %1206 = vmatprep.subr.mxu0 0.0
        %1207 = vmatpush1.xpose.msra.mxu0 0.0
        %1208 = vmatprep.subr.mxu0 0.0
        %1209 = vmatpush1.xpose.msra.mxu0 0.0
        %1210 = vmatprep.subr.mxu0 0.0
        %1211 = vmatpush1.xpose.msra.mxu0 0.0
        %1212 = vmatprep.subr.mxu0 0.0
        %1213 = vmatpush1.xpose.msra.mxu0 0.0
        %1214 = vmatprep.subr.mxu0 0.0
        %1215 = vmatpush1.xpose.msra.mxu0 0.0
        %1216 = vmatprep.subr.mxu0 0.0
        %1217 = vmatpush1.xpose.msra.mxu0 0.0
        %1218 = vmatprep.subr.mxu0 0.0
        %1219 = vmatpush1.xpose.msra.mxu0 0.0
        %1220 = vmatprep.subr.mxu0 0.0
        %1221 = vmatpush1.xpose.msra.mxu0 0.0
        %1222 = vmatprep.subr.mxu0 0.0
        %1223 = vmatpush1.xpose.msra.mxu0 0.0
        %1224 = vmatprep.subr.mxu0 0.0
        %1225 = vmatpush1.xpose.msra.mxu0 0.0
        %1226 = vmatprep.subr.mxu0 0.0
        %1227 = vmatpush1.xpose.msra.mxu0 0.0
        %1228 = vmatprep.subr.mxu0 0.0
        %1229 = vmatpush1.xpose.msra.mxu0 0.0
        %1230 = vmatprep.subr.mxu0 0.0
        %1231 = vmatpush1.xpose.msra.mxu0 0.0
        %1232 = vmatprep.subr.mxu0 0.0
        %1233 = vmatpush1.xpose.msra.mxu0 0.0
        %1234 = vmatprep.subr.mxu0 0.0
        %1235 = vmatpush1.xpose.msra.mxu0 0.0
        %1236 = vmatprep.subr.mxu0 0.0
        %1237 = vmatpush1.xpose.msra.mxu0 0.0
        %1238 = vmatprep.subr.mxu0 0.0
        %1239 = vmatpush1.xpose.msra.mxu0 0.0
        %1240 = vmatprep.subr.mxu0 0.0
        %1241 = vmatpush1.xpose.msra.mxu0 0.0
        %1242 = vmatprep.subr.mxu0 0.0
        %1243 = vmatpush1.xpose.msra.mxu0 0.0
        %1244 = vmatprep.subr.mxu0 0.0
        %1245 = vmatpush1.xpose.msra.mxu0 0.0
        %1246 = vmatprep.subr.mxu0 0.0
        %1247 = vmatpush1.xpose.msra.mxu0 0.0
        %1248 = vmatprep.subr.mxu0 0.0
        %1249 = vmatpush1.xpose.msra.mxu0 0.0
        %1250 = vmatprep.subr.mxu0 0.0
        %1251 = vmatpush1.xpose.msra.mxu0 0.0
        %1252 = vmatprep.subr.mxu0 0.0
        %1253 = vmatpush1.xpose.msra.mxu0 0.0
        %1254 = vmatprep.subr.mxu0 0.0
        %1255 = vmatpush1.xpose.msra.mxu0 0.0
        %1256 = vmatprep.subr.mxu0 0.0
        %1257 = vmatpush1.xpose.msra.mxu0 0.0
        %1258 = vmatprep.subr.mxu0 0.0
        %1259 = vmatpush1.xpose.msra.mxu0 0.0
        %1260 = vmatprep.subr.mxu0 0.0
        %1261 = vmatpush1.xpose.msra.mxu0 0.0
        %1262 = vmatprep.subr.mxu0 0.0
        %1263 = vmatpush1.xpose.msra.mxu0 0.0
        %1264 = vmatprep.subr.mxu0 0.0
        %1265 = vmatpush1.xpose.msra.mxu0 0.0
        %1266 = vmatprep.subr.mxu0 0.0
        %1267 = vmatpush1.xpose.msra.mxu0 0.0
        %1268 = vmatprep.mubr.f32.mxu0 0.0
        %1269 = vmatmul.mubr.f32.gmra.mrb[0].mxu0 %v1200
        %v1270 = vpop.f32.mrb[0].mxu0
        %v1271 = vadd.f32 0.0, %v1270
        %v1272 = vpop.f32.mrb[0].mxu0
        %1273 = vdwg.mxu0
        %v1274 = vsel %vm1032, %v1271, -inf
        %1275 = vmax.xlane.f32.xlu0 %v1274
        %v1276 = vpop.xlane.xlu0 %1275
        %v1277 = vsub.f32 %v1271, %v1276
        %v1278 = vmul.f32 %v1277, 1.442695
        %v1279 = vpow.pop %v1278
        %v1280 = vsel %vm1032, %v1279, 0.0
        %1281 = vadd.xlane.f32.xlu0 %v1280
        %v1282 = vpop.xlane.xlu0 %1281
        %v1283 = vrcp.pop %v1282
        %v1284 = vmul.f32 %v1279, %v1283
        %1285 = vrot.lane.b32.xlu0 %v1028, 56
        %v1286 = vpop.permute.xlu0 %1285
        %v1289 = vsel %vm1032, %v1284, 0
        %1291 = vmatprep.subr.mxu0 0.0
        %1292 = vmatpush1.msra.mxu0 %v1286
        %1293 = vmatprep.subr.mxu0 0.0
        %1294 = vmatpush1.msra.mxu0 0.0
        %1295 = vmatprep.subr.mxu0 0.0
        %1296 = vmatpush1.msra.mxu0 0.0
        %1297 = vmatprep.subr.mxu0 0.0
        %1298 = vmatpush1.msra.mxu0 0.0
        %1299 = vmatprep.subr.mxu0 0.0
        %1300 = vmatpush1.msra.mxu0 0.0
        %1301 = vmatprep.subr.mxu0 0.0
        %1302 = vmatpush1.msra.mxu0 0.0
        %1303 = vmatprep.subr.mxu0 0.0
        %1304 = vmatpush1.msra.mxu0 0.0
        %1305 = vmatprep.subr.mxu0 0.0
        %1306 = vmatpush1.msra.mxu0 0.0
        %1307 = vmatprep.subr.mxu0 0.0
        %1308 = vmatpush1.msra.mxu0 0.0
        %1309 = vmatprep.subr.mxu0 0.0
        %1310 = vmatpush1.msra.mxu0 0.0
        %1311 = vmatprep.subr.mxu0 0.0
        %1312 = vmatpush1.msra.mxu0 0.0
        %1313 = vmatprep.subr.mxu0 0.0
        %1314 = vmatpush1.msra.mxu0 0.0
        %1315 = vmatprep.subr.mxu0 0.0
        %1316 = vmatpush1.msra.mxu0 0.0
        %1317 = vmatprep.subr.mxu0 0.0
        %1318 = vmatpush1.msra.mxu0 0.0
        %1319 = vmatprep.subr.mxu0 0.0
        %1320 = vmatpush1.msra.mxu0 0.0
        %1321 = vmatprep.subr.mxu0 0.0
        %1322 = vmatpush1.msra.mxu0 0.0
        %1323 = vmatprep.subr.mxu0 0.0
        %1324 = vmatpush1.msra.mxu0 0.0
        %1325 = vmatprep.subr.mxu0 0.0
        %1326 = vmatpush1.msra.mxu0 0.0
        %1327 = vmatprep.subr.mxu0 0.0
        %1328 = vmatpush1.msra.mxu0 0.0
        %1329 = vmatprep.subr.mxu0 0.0
        %1330 = vmatpush1.msra.mxu0 0.0
        %1331 = vmatprep.subr.mxu0 0.0
        %1332 = vmatpush1.msra.mxu0 0.0
        %1333 = vmatprep.subr.mxu0 0.0
        %1334 = vmatpush1.msra.mxu0 0.0
        %1335 = vmatprep.subr.mxu0 0.0
        %1336 = vmatpush1.msra.mxu0 0.0
        %1337 = vmatprep.subr.mxu0 0.0
        %1338 = vmatpush1.msra.mxu0 0.0
        %1339 = vmatprep.subr.mxu0 0.0
        %1340 = vmatpush1.msra.mxu0 0.0
        %1341 = vmatprep.subr.mxu0 0.0
        %1342 = vmatpush1.msra.mxu0 0.0
        %1343 = vmatprep.subr.mxu0 0.0
        %1344 = vmatpush1.msra.mxu0 0.0
        %1345 = vmatprep.subr.mxu0 0.0
        %1346 = vmatpush1.msra.mxu0 0.0
        %1347 = vmatprep.subr.mxu0 0.0
        %1348 = vmatpush1.msra.mxu0 0.0
        %1349 = vmatprep.subr.mxu0 0.0
        %1350 = vmatpush1.msra.mxu0 0.0
        %1351 = vmatprep.subr.mxu0 0.0
        %1352 = vmatpush1.msra.mxu0 0.0
        %1353 = vmatprep.subr.mxu0 0.0
        %1354 = vmatpush1.msra.mxu0 0.0
        %1355 = vmatprep.mubr.f32.mxu0 0.0
        %1356 = vmatmul.mubr.f32.gmra.mrb[0].mxu0 %v1289
        %v1357 = vpop.f32.mrb[0].mxu0
        %v1358 = vadd.f32 0.0, %v1357
        %v1359 = vpop.f32.mrb[0].mxu0
        %1360 = vdwg.mxu0
        %v1362 = vsel %vm1032, %v1358, 0
        %1364 = vmatprep.subr.mxu0 0.0
        %1365 = vmatpush1.msra.mxu0 %v918
        %1366 = vmatprep.subr.mxu0 0.0
        %1367 = vmatpush1.msra.mxu0 0.0
        %1368 = vmatprep.subr.mxu0 0.0
        %1369 = vmatpush1.msra.mxu0 0.0
        %1370 = vmatprep.subr.mxu0 0.0
        %1371 = vmatpush1.msra.mxu0 0.0
        %1372 = vmatprep.subr.mxu0 0.0
        %1373 = vmatpush1.msra.mxu0 0.0
        %1374 = vmatprep.subr.mxu0 0.0
        %1375 = vmatpush1.msra.mxu0 0.0
        %1376 = vmatprep.subr.mxu0 0.0
        %1377 = vmatpush1.msra.mxu0 0.0
        %1378 = vmatprep.subr.mxu0 0.0
        %1379 = vmatpush1.msra.mxu0 0.0
        %1380 = vmatprep.subr.mxu0 0.0
        %1381 = vmatpush1.msra.mxu0 0.0
        %1382 = vmatprep.subr.mxu0 0.0
        %1383 = vmatpush1.msra.mxu0 0.0
        %1384 = vmatprep.subr.mxu0 0.0
        %1385 = vmatpush1.msra.mxu0 0.0
        %1386 = vmatprep.subr.mxu0 0.0
        %1387 = vmatpush1.msra.mxu0 0.0
        %1388 = vmatprep.subr.mxu0 0.0
        %1389 = vmatpush1.msra.mxu0 0.0
        %1390 = vmatprep.subr.mxu0 0.0
        %1391 = vmatpush1.msra.mxu0 0.0
        %1392 = vmatprep.subr.mxu0 0.0
        %1393 = vmatpush1.msra.mxu0 0.0
        %1394 = vmatprep.subr.mxu0 0.0
        %1395 = vmatpush1.msra.mxu0 0.0
        %1396 = vmatprep.subr.mxu0 0.0
        %1397 = vmatpush1.msra.mxu0 0.0
        %1398 = vmatprep.subr.mxu0 0.0
        %1399 = vmatpush1.msra.mxu0 0.0
        %1400 = vmatprep.subr.mxu0 0.0
        %1401 = vmatpush1.msra.mxu0 0.0
        %1402 = vmatprep.subr.mxu0 0.0
        %1403 = vmatpush1.msra.mxu0 0.0
        %1404 = vmatprep.subr.mxu0 0.0
        %1405 = vmatpush1.msra.mxu0 0.0
        %1406 = vmatprep.subr.mxu0 0.0
        %1407 = vmatpush1.msra.mxu0 0.0
        %1408 = vmatprep.subr.mxu0 0.0
        %1409 = vmatpush1.msra.mxu0 0.0
        %1410 = vmatprep.subr.mxu0 0.0
        %1411 = vmatpush1.msra.mxu0 0.0
        %1412 = vmatprep.subr.mxu0 0.0
        %1413 = vmatpush1.msra.mxu0 0.0
        %1414 = vmatprep.subr.mxu0 0.0
        %1415 = vmatpush1.msra.mxu0 0.0
        %1416 = vmatprep.subr.mxu0 0.0
        %1417 = vmatpush1.msra.mxu0 0.0
        %1418 = vmatprep.subr.mxu0 0.0
        %1419 = vmatpush1.msra.mxu0 0.0
        %1420 = vmatprep.subr.mxu0 0.0
        %1421 = vmatpush1.msra.mxu0 0.0
        %1422 = vmatprep.subr.mxu0 0.0
        %1423 = vmatpush1.msra.mxu0 0.0
        %1424 = vmatprep.subr.mxu0 0.0
        %1425 = vmatpush1.msra.mxu0 0.0
        %1426 = vmatprep.subr.mxu0 0.0
        %1427 = vmatpush1.msra.mxu0 0.0
        %1428 = vmatprep.mubr.f32.mxu0 0.0
        %1429 = vmatmul.mubr.f32.gmra.mrb[0].mxu0 %v1362
        %v1430 = vpop.f32.mrb[0].mxu0
        %v1431 = vadd.f32 0.0, %v1430
        %v1432 = vpop.f32.mrb[0].mxu0
        %1433 = vdwg.mxu0
        %v1435 = vsel %vm1032, %v1193, 0
        %1437 = vmatprep.subr.mxu0 0.0
        %1438 = vmatpush1.msra.mxu0 %v917
        %1439 = vmatprep.subr.mxu0 0.0
        %1440 = vmatpush1.msra.mxu0 0.0
        %1441 = vmatprep.subr.mxu0 0.0
        %1442 = vmatpush1.msra.mxu0 0.0
        %1443 = vmatprep.subr.mxu0 0.0
        %1444 = vmatpush1.msra.mxu0 0.0
        %1445 = vmatprep.subr.mxu0 0.0
        %1446 = vmatpush1.msra.mxu0 0.0
        %1447 = vmatprep.subr.mxu0 0.0
        %1448 = vmatpush1.msra.mxu0 0.0
        %1449 = vmatprep.subr.mxu0 0.0
        %1450 = vmatpush1.msra.mxu0 0.0
        %1451 = vmatprep.subr.mxu0 0.0
        %1452 = vmatpush1.msra.mxu0 0.0
        %1453 = vmatprep.subr.mxu0 0.0
        %1454 = vmatpush1.msra.mxu0 0.0
        %1455 = vmatprep.subr.mxu0 0.0
        %1456 = vmatpush1.msra.mxu0 0.0
        %1457 = vmatprep.subr.mxu0 0.0
        %1458 = vmatpush1.msra.mxu0 0.0
        %1459 = vmatprep.subr.mxu0 0.0
        %1460 = vmatpush1.msra.mxu0 0.0
        %1461 = vmatprep.subr.mxu0 0.0
        %1462 = vmatpush1.msra.mxu0 0.0
        %1463 = vmatprep.subr.mxu0 0.0
        %1464 = vmatpush1.msra.mxu0 0.0
        %1465 = vmatprep.subr.mxu0 0.0
        %1466 = vmatpush1.msra.mxu0 0.0
        %1467 = vmatprep.subr.mxu0 0.0
        %1468 = vmatpush1.msra.mxu0 0.0
        %1469 = vmatprep.subr.mxu0 0.0
        %1470 = vmatpush1.msra.mxu0 0.0
        %1471 = vmatprep.subr.mxu0 0.0
        %1472 = vmatpush1.msra.mxu0 0.0
        %1473 = vmatprep.subr.mxu0 0.0
        %1474 = vmatpush1.msra.mxu0 0.0
        %1475 = vmatprep.subr.mxu0 0.0
        %1476 = vmatpush1.msra.mxu0 0.0
        %1477 = vmatprep.subr.mxu0 0.0
        %1478 = vmatpush1.msra.mxu0 0.0
        %1479 = vmatprep.subr.mxu0 0.0
        %1480 = vmatpush1.msra.mxu0 0.0
        %1481 = vmatprep.subr.mxu0 0.0
        %1482 = vmatpush1.msra.mxu0 0.0
        %1483 = vmatprep.subr.mxu0 0.0
        %1484 = vmatpush1.msra.mxu0 0.0
        %1485 = vmatprep.subr.mxu0 0.0
        %1486 = vmatpush1.msra.mxu0 0.0
        %1487 = vmatprep.subr.mxu0 0.0
        %1488 = vmatpush1.msra.mxu0 0.0
        %1489 = vmatprep.subr.mxu0 0.0
        %1490 = vmatpush1.msra.mxu0 0.0
        %1491 = vmatprep.subr.mxu0 0.0
        %1492 = vmatpush1.msra.mxu0 0.0
        %1493 = vmatprep.subr.mxu0 0.0
        %1494 = vmatpush1.msra.mxu0 0.0
        %1495 = vmatprep.subr.mxu0 0.0
        %1496 = vmatpush1.msra.mxu0 0.0
        %1497 = vmatprep.subr.mxu0 0.0
        %1498 = vmatpush1.msra.mxu0 0.0
        %1499 = vmatprep.subr.mxu0 0.0
        %1500 = vmatpush1.msra.mxu0 0.0
        %1501 = vmatprep.mubr.f32.mxu0 0.0
        %1502 = vmatmul.mubr.f32.gmra.mrb[0].mxu0 %v1435
        %v1503 = vpop.f32.mrb[0].mxu0
        %v1504 = vadd.f32 %v1431, %v1503
        %v1505 = vpop.f32.mrb[0].mxu0
        %1506 = vdwg.mxu0
        %1507 = vrot.lane.b32.xlu0 %v1010, 112
        %v1508 = vpop.permute.xlu0 %1507
        %1509 = vrot.lane.b32.xlu0 %v1019, 80
        %v1510 = vpop.permute.xlu0 %1509
        %v1511 = vsel %vm1032, %v1508, 0
        %v1513 = vsel %vm1032, %v1510, 0
        %1515 = vmatprep.subr.mxu0 0.0
        %1516 = vmatpush1.xpose.msra.mxu0 %v1513
        %1517 = vmatprep.subr.mxu0 0.0
        %1518 = vmatpush1.xpose.msra.mxu0 0.0
        %1519 = vmatprep.subr.mxu0 0.0
        %1520 = vmatpush1.xpose.msra.mxu0 0.0
        %1521 = vmatprep.subr.mxu0 0.0
        %1522 = vmatpush1.xpose.msra.mxu0 0.0
        %1523 = vmatprep.subr.mxu0 0.0
        %1524 = vmatpush1.xpose.msra.mxu0 0.0
        %1525 = vmatprep.subr.mxu0 0.0
        %1526 = vmatpush1.xpose.msra.mxu0 0.0
        %1527 = vmatprep.subr.mxu0 0.0
        %1528 = vmatpush1.xpose.msra.mxu0 0.0
        %1529 = vmatprep.subr.mxu0 0.0
        %1530 = vmatpush1.xpose.msra.mxu0 0.0
        %1531 = vmatprep.subr.mxu0 0.0
        %1532 = vmatpush1.xpose.msra.mxu0 0.0
        %1533 = vmatprep.subr.mxu0 0.0
        %1534 = vmatpush1.xpose.msra.mxu0 0.0
        %1535 = vmatprep.subr.mxu0 0.0
        %1536 = vmatpush1.xpose.msra.mxu0 0.0
        %1537 = vmatprep.subr.mxu0 0.0
        %1538 = vmatpush1.xpose.msra.mxu0 0.0
        %1539 = vmatprep.subr.mxu0 0.0
        %1540 = vmatpush1.xpose.msra.mxu0 0.0
        %1541 = vmatprep.subr.mxu0 0.0
        %1542 = vmatpush1.xpose.msra.mxu0 0.0
        %1543 = vmatprep.subr.mxu0 0.0
        %1544 = vmatpush1.xpose.msra.mxu0 0.0
        %1545 = vmatprep.subr.mxu0 0.0
        %1546 = vmatpush1.xpose.msra.mxu0 0.0
        %1547 = vmatprep.subr.mxu0 0.0
        %1548 = vmatpush1.xpose.msra.mxu0 0.0
        %1549 = vmatprep.subr.mxu0 0.0
        %1550 = vmatpush1.xpose.msra.mxu0 0.0
        %1551 = vmatprep.subr.mxu0 0.0
        %1552 = vmatpush1.xpose.msra.mxu0 0.0
        %1553 = vmatprep.subr.mxu0 0.0
        %1554 = vmatpush1.xpose.msra.mxu0 0.0
        %1555 = vmatprep.subr.mxu0 0.0
        %1556 = vmatpush1.xpose.msra.mxu0 0.0
        %1557 = vmatprep.subr.mxu0 0.0
        %1558 = vmatpush1.xpose.msra.mxu0 0.0
        %1559 = vmatprep.subr.mxu0 0.0
        %1560 = vmatpush1.xpose.msra.mxu0 0.0
        %1561 = vmatprep.subr.mxu0 0.0
        %1562 = vmatpush1.xpose.msra.mxu0 0.0
        %1563 = vmatprep.subr.mxu0 0.0
        %1564 = vmatpush1.xpose.msra.mxu0 0.0
        %1565 = vmatprep.subr.mxu0 0.0
        %1566 = vmatpush1.xpose.msra.mxu0 0.0
        %1567 = vmatprep.subr.mxu0 0.0
        %1568 = vmatpush1.xpose.msra.mxu0 0.0
        %1569 = vmatprep.subr.mxu0 0.0
        %1570 = vmatpush1.xpose.msra.mxu0 0.0
        %1571 = vmatprep.subr.mxu0 0.0
        %1572 = vmatpush1.xpose.msra.mxu0 0.0
        %1573 = vmatprep.subr.mxu0 0.0
        %1574 = vmatpush1.xpose.msra.mxu0 0.0
        %1575 = vmatprep.subr.mxu0 0.0
        %1576 = vmatpush1.xpose.msra.mxu0 0.0
        %1577 = vmatprep.subr.mxu0 0.0
        %1578 = vmatpush1.xpose.msra.mxu0 0.0
        %1579 = vmatprep.mubr.f32.mxu0 0.0
        %1580 = vmatmul.mubr.f32.gmra.mrb[0].mxu0 %v1511
        %v1581 = vpop.f32.mrb[0].mxu0
        %v1582 = vadd.f32 0.0, %v1581
        %v1583 = vpop.f32.mrb[0].mxu0
        %1584 = vdwg.mxu0
        %v1585 = vsel %vm1032, %v1582, -inf
        %1586 = vmax.xlane.f32.xlu0 %v1585
        %v1587 = vpop.xlane.xlu0 %1586
        %v1588 = vsub.f32 %v1582, %v1587
        %v1589 = vmul.f32 %v1588, 1.442695
        %v1590 = vpow.pop %v1589
        %v1591 = vsel %vm1032, %v1590, 0.0
        %1592 = vadd.xlane.f32.xlu0 %v1591
        %v1593 = vpop.xlane.xlu0 %1592
        %v1594 = vrcp.pop %v1593
        %v1595 = vmul.f32 %v1590, %v1594
        %1596 = vrot.lane.b32.xlu0 %v1028, 48
        %v1597 = vpop.permute.xlu0 %1596
        %v1600 = vsel %vm1032, %v1595, 0
        %1602 = vmatprep.subr.mxu0 0.0
        %1603 = vmatpush1.msra.mxu0 %v1597
        %1604 = vmatprep.subr.mxu0 0.0
        %1605 = vmatpush1.msra.mxu0 0.0
        %1606 = vmatprep.subr.mxu0 0.0
        %1607 = vmatpush1.msra.mxu0 0.0
        %1608 = vmatprep.subr.mxu0 0.0
        %1609 = vmatpush1.msra.mxu0 0.0
        %1610 = vmatprep.subr.mxu0 0.0
        %1611 = vmatpush1.msra.mxu0 0.0
        %1612 = vmatprep.subr.mxu0 0.0
        %1613 = vmatpush1.msra.mxu0 0.0
        %1614 = vmatprep.subr.mxu0 0.0
        %1615 = vmatpush1.msra.mxu0 0.0
        %1616 = vmatprep.subr.mxu0 0.0
        %1617 = vmatpush1.msra.mxu0 0.0
        %1618 = vmatprep.subr.mxu0 0.0
        %1619 = vmatpush1.msra.mxu0 0.0
        %1620 = vmatprep.subr.mxu0 0.0
        %1621 = vmatpush1.msra.mxu0 0.0
        %1622 = vmatprep.subr.mxu0 0.0
        %1623 = vmatpush1.msra.mxu0 0.0
        %1624 = vmatprep.subr.mxu0 0.0
        %1625 = vmatpush1.msra.mxu0 0.0
        %1626 = vmatprep.subr.mxu0 0.0
        %1627 = vmatpush1.msra.mxu0 0.0
        %1628 = vmatprep.subr.mxu0 0.0
        %1629 = vmatpush1.msra.mxu0 0.0
        %1630 = vmatprep.subr.mxu0 0.0
        %1631 = vmatpush1.msra.mxu0 0.0
        %1632 = vmatprep.subr.mxu0 0.0
        %1633 = vmatpush1.msra.mxu0 0.0
        %1634 = vmatprep.subr.mxu0 0.0
        %1635 = vmatpush1.msra.mxu0 0.0
        %1636 = vmatprep.subr.mxu0 0.0
        %1637 = vmatpush1.msra.mxu0 0.0
        %1638 = vmatprep.subr.mxu0 0.0
        %1639 = vmatpush1.msra.mxu0 0.0
        %1640 = vmatprep.subr.mxu0 0.0
        %1641 = vmatpush1.msra.mxu0 0.0
        %1642 = vmatprep.subr.mxu0 0.0
        %1643 = vmatpush1.msra.mxu0 0.0
        %1644 = vmatprep.subr.mxu0 0.0
        %1645 = vmatpush1.msra.mxu0 0.0
        %1646 = vmatprep.subr.mxu0 0.0
        %1647 = vmatpush1.msra.mxu0 0.0
        %1648 = vmatprep.subr.mxu0 0.0
        %1649 = vmatpush1.msra.mxu0 0.0
        %1650 = vmatprep.subr.mxu0 0.0
        %1651 = vmatpush1.msra.mxu0 0.0
        %1652 = vmatprep.subr.mxu0 0.0
        %1653 = vmatpush1.msra.mxu0 0.0
        %1654 = vmatprep.subr.mxu0 0.0
        %1655 = vmatpush1.msra.mxu0 0.0
        %1656 = vmatprep.subr.mxu0 0.0
        %1657 = vmatpush1.msra.mxu0 0.0
        %1658 = vmatprep.subr.mxu0 0.0
        %1659 = vmatpush1.msra.mxu0 0.0
        %1660 = vmatprep.subr.mxu0 0.0
        %1661 = vmatpush1.msra.mxu0 0.0
        %1662 = vmatprep.subr.mxu0 0.0
        %1663 = vmatpush1.msra.mxu0 0.0
        %1664 = vmatprep.subr.mxu0 0.0
        %1665 = vmatpush1.msra.mxu0 0.0
        %1666 = vmatprep.mubr.f32.mxu0 0.0
        %1667 = vmatmul.mubr.f32.gmra.mrb[0].mxu0 %v1600
        %v1668 = vpop.f32.mrb[0].mxu0
        %v1669 = vadd.f32 0.0, %v1668
        %v1670 = vpop.f32.mrb[0].mxu0
        %1671 = vdwg.mxu0
        %v1673 = vsel %vm1032, %v1669, 0
        %1675 = vmatprep.subr.mxu0 0.0
        %1676 = vmatpush1.msra.mxu0 %v919
        %1677 = vmatprep.subr.mxu0 0.0
        %1678 = vmatpush1.msra.mxu0 0.0
        %1679 = vmatprep.subr.mxu0 0.0
        %1680 = vmatpush1.msra.mxu0 0.0
        %1681 = vmatprep.subr.mxu0 0.0
        %1682 = vmatpush1.msra.mxu0 0.0
        %1683 = vmatprep.subr.mxu0 0.0
        %1684 = vmatpush1.msra.mxu0 0.0
        %1685 = vmatprep.subr.mxu0 0.0
        %1686 = vmatpush1.msra.mxu0 0.0
        %1687 = vmatprep.subr.mxu0 0.0
        %1688 = vmatpush1.msra.mxu0 0.0
        %1689 = vmatprep.subr.mxu0 0.0
        %1690 = vmatpush1.msra.mxu0 0.0
        %1691 = vmatprep.subr.mxu0 0.0
        %1692 = vmatpush1.msra.mxu0 0.0
        %1693 = vmatprep.subr.mxu0 0.0
        %1694 = vmatpush1.msra.mxu0 0.0
        %1695 = vmatprep.subr.mxu0 0.0
        %1696 = vmatpush1.msra.mxu0 0.0
        %1697 = vmatprep.subr.mxu0 0.0
        %1698 = vmatpush1.msra.mxu0 0.0
        %1699 = vmatprep.subr.mxu0 0.0
        %1700 = vmatpush1.msra.mxu0 0.0
        %1701 = vmatprep.subr.mxu0 0.0
        %1702 = vmatpush1.msra.mxu0 0.0
        %1703 = vmatprep.subr.mxu0 0.0
        %1704 = vmatpush1.msra.mxu0 0.0
        %1705 = vmatprep.subr.mxu0 0.0
        %1706 = vmatpush1.msra.mxu0 0.0
        %1707 = vmatprep.subr.mxu0 0.0
        %1708 = vmatpush1.msra.mxu0 0.0
        %1709 = vmatprep.subr.mxu0 0.0
        %1710 = vmatpush1.msra.mxu0 0.0
        %1711 = vmatprep.subr.mxu0 0.0
        %1712 = vmatpush1.msra.mxu0 0.0
        %1713 = vmatprep.subr.mxu0 0.0
        %1714 = vmatpush1.msra.mxu0 0.0
        %1715 = vmatprep.subr.mxu0 0.0
        %1716 = vmatpush1.msra.mxu0 0.0
        %1717 = vmatprep.subr.mxu0 0.0
        %1718 = vmatpush1.msra.mxu0 0.0
        %1719 = vmatprep.subr.mxu0 0.0
        %1720 = vmatpush1.msra.mxu0 0.0
        %1721 = vmatprep.subr.mxu0 0.0
        %1722 = vmatpush1.msra.mxu0 0.0
        %1723 = vmatprep.subr.mxu0 0.0
        %1724 = vmatpush1.msra.mxu0 0.0
        %1725 = vmatprep.subr.mxu0 0.0
        %1726 = vmatpush1.msra.mxu0 0.0
        %1727 = vmatprep.subr.mxu0 0.0
        %1728 = vmatpush1.msra.mxu0 0.0
        %1729 = vmatprep.subr.mxu0 0.0
        %1730 = vmatpush1.msra.mxu0 0.0
        %1731 = vmatprep.subr.mxu0 0.0
        %1732 = vmatpush1.msra.mxu0 0.0
        %1733 = vmatprep.subr.mxu0 0.0
        %1734 = vmatpush1.msra.mxu0 0.0
        %1735 = vmatprep.subr.mxu0 0.0
        %1736 = vmatpush1.msra.mxu0 0.0
        %1737 = vmatprep.subr.mxu0 0.0
        %1738 = vmatpush1.msra.mxu0 0.0
        %1739 = vmatprep.mubr.f32.mxu0 0.0
        %1740 = vmatmul.mubr.f32.gmra.mrb[0].mxu0 %v1673
        %v1741 = vpop.f32.mrb[0].mxu0
        %v1742 = vadd.f32 0.0, %v1741
        %v1743 = vpop.f32.mrb[0].mxu0
        %1744 = vdwg.mxu0
        %v1745 = vadd.f32 %v1504, %v1742
        %1746 = vrot.lane.b32.xlu0 %v1010, 104
        %v1747 = vpop.permute.xlu0 %1746
        %1748 = vrot.lane.b32.xlu0 %v1019, 72
        %v1749 = vpop.permute.xlu0 %1748
        %v1750 = vsel %vm1032, %v1747, 0
        %v1752 = vsel %vm1032, %v1749, 0
        %1754 = vmatprep.subr.mxu0 0.0
        %1755 = vmatpush1.xpose.msra.mxu0 %v1752
        %1756 = vmatprep.subr.mxu0 0.0
        %1757 = vmatpush1.xpose.msra.mxu0 0.0
        %1758 = vmatprep.subr.mxu0 0.0
        %1759 = vmatpush1.xpose.msra.mxu0 0.0
        %1760 = vmatprep.subr.mxu0 0.0
        %1761 = vmatpush1.xpose.msra.mxu0 0.0
        %1762 = vmatprep.subr.mxu0 0.0
        %1763 = vmatpush1.xpose.msra.mxu0 0.0
        %1764 = vmatprep.subr.mxu0 0.0
        %1765 = vmatpush1.xpose.msra.mxu0 0.0
        %1766 = vmatprep.subr.mxu0 0.0
        %1767 = vmatpush1.xpose.msra.mxu0 0.0
        %1768 = vmatprep.subr.mxu0 0.0
        %1769 = vmatpush1.xpose.msra.mxu0 0.0
        %1770 = vmatprep.subr.mxu0 0.0
        %1771 = vmatpush1.xpose.msra.mxu0 0.0
        %1772 = vmatprep.subr.mxu0 0.0
        %1773 = vmatpush1.xpose.msra.mxu0 0.0
        %1774 = vmatprep.subr.mxu0 0.0
        %1775 = vmatpush1.xpose.msra.mxu0 0.0
        %1776 = vmatprep.subr.mxu0 0.0
        %1777 = vmatpush1.xpose.msra.mxu0 0.0
        %1778 = vmatprep.subr.mxu0 0.0
        %1779 = vmatpush1.xpose.msra.mxu0 0.0
        %1780 = vmatprep.subr.mxu0 0.0
        %1781 = vmatpush1.xpose.msra.mxu0 0.0
        %1782 = vmatprep.subr.mxu0 0.0
        %1783 = vmatpush1.xpose.msra.mxu0 0.0
        %1784 = vmatprep.subr.mxu0 0.0
        %1785 = vmatpush1.xpose.msra.mxu0 0.0
        %1786 = vmatprep.subr.mxu0 0.0
        %1787 = vmatpush1.xpose.msra.mxu0 0.0
        %1788 = vmatprep.subr.mxu0 0.0
        %1789 = vmatpush1.xpose.msra.mxu0 0.0
        %1790 = vmatprep.subr.mxu0 0.0
        %1791 = vmatpush1.xpose.msra.mxu0 0.0
        %1792 = vmatprep.subr.mxu0 0.0
        %1793 = vmatpush1.xpose.msra.mxu0 0.0
        %1794 = vmatprep.subr.mxu0 0.0
        %1795 = vmatpush1.xpose.msra.mxu0 0.0
        %1796 = vmatprep.subr.mxu0 0.0
        %1797 = vmatpush1.xpose.msra.mxu0 0.0
        %1798 = vmatprep.subr.mxu0 0.0
        %1799 = vmatpush1.xpose.msra.mxu0 0.0
        %1800 = vmatprep.subr.mxu0 0.0
        %1801 = vmatpush1.xpose.msra.mxu0 0.0
        %1802 = vmatprep.subr.mxu0 0.0
        %1803 = vmatpush1.xpose.msra.mxu0 0.0
        %1804 = vmatprep.subr.mxu0 0.0
        %1805 = vmatpush1.xpose.msra.mxu0 0.0
        %1806 = vmatprep.subr.mxu0 0.0
        %1807 = vmatpush1.xpose.msra.mxu0 0.0
        %1808 = vmatprep.subr.mxu0 0.0
        %1809 = vmatpush1.xpose.msra.mxu0 0.0
        %1810 = vmatprep.subr.mxu0 0.0
        %1811 = vmatpush1.xpose.msra.mxu0 0.0
        %1812 = vmatprep.subr.mxu0 0.0
        %1813 = vmatpush1.xpose.msra.mxu0 0.0
        %1814 = vmatprep.subr.mxu0 0.0
        %1815 = vmatpush1.xpose.msra.mxu0 0.0
        %1816 = vmatprep.subr.mxu0 0.0
        %1817 = vmatpush1.xpose.msra.mxu0 0.0
        %1818 = vmatprep.mubr.f32.mxu0 0.0
        %1819 = vmatmul.mubr.f32.gmra.mrb[0].mxu0 %v1750
        %v1820 = vpop.f32.mrb[0].mxu0
        %v1821 = vadd.f32 0.0, %v1820
        %v1822 = vpop.f32.mrb[0].mxu0
        %1823 = vdwg.mxu0
        %v1824 = vsel %vm1032, %v1821, -inf
        %1825 = vmax.xlane.f32.xlu0 %v1824
        %v1826 = vpop.xlane.xlu0 %1825
        %v1827 = vsub.f32 %v1821, %v1826
        %v1828 = vmul.f32 %v1827, 1.442695
        %v1829 = vpow.pop %v1828
        %v1830 = vsel %vm1032, %v1829, 0.0
        %1831 = vadd.xlane.f32.xlu0 %v1830
        %v1832 = vpop.xlane.xlu0 %1831
        %v1833 = vrcp.pop %v1832
        %v1834 = vmul.f32 %v1829, %v1833
        %1835 = vrot.lane.b32.xlu0 %v1028, 40
        %v1836 = vpop.permute.xlu0 %1835
        %v1839 = vsel %vm1032, %v1834, 0
        %1841 = vmatprep.subr.mxu0 0.0
        %1842 = vmatpush1.msra.mxu0 %v1836
        %1843 = vmatprep.subr.mxu0 0.0
        %1844 = vmatpush1.msra.mxu0 0.0
        %1845 = vmatprep.subr.mxu0 0.0
        %1846 = vmatpush1.msra.mxu0 0.0
        %1847 = vmatprep.subr.mxu0 0.0
        %1848 = vmatpush1.msra.mxu0 0.0
        %1849 = vmatprep.subr.mxu0 0.0
        %1850 = vmatpush1.msra.mxu0 0.0
        %1851 = vmatprep.subr.mxu0 0.0
        %1852 = vmatpush1.msra.mxu0 0.0
        %1853 = vmatprep.subr.mxu0 0.0
        %1854 = vmatpush1.msra.mxu0 0.0
        %1855 = vmatprep.subr.mxu0 0.0
        %1856 = vmatpush1.msra.mxu0 0.0
        %1857 = vmatprep.subr.mxu0 0.0
        %1858 = vmatpush1.msra.mxu0 0.0
        %1859 = vmatprep.subr.mxu0 0.0
        %1860 = vmatpush1.msra.mxu0 0.0
        %1861 = vmatprep.subr.mxu0 0.0
        %1862 = vmatpush1.msra.mxu0 0.0
        %1863 = vmatprep.subr.mxu0 0.0
        %1864 = vmatpush1.msra.mxu0 0.0
        %1865 = vmatprep.subr.mxu0 0.0
        %1866 = vmatpush1.msra.mxu0 0.0
        %1867 = vmatprep.subr.mxu0 0.0
        %1868 = vmatpush1.msra.mxu0 0.0
        %1869 = vmatprep.subr.mxu0 0.0
        %1870 = vmatpush1.msra.mxu0 0.0
        %1871 = vmatprep.subr.mxu0 0.0
        %1872 = vmatpush1.msra.mxu0 0.0
        %1873 = vmatprep.subr.mxu0 0.0
        %1874 = vmatpush1.msra.mxu0 0.0
        %1875 = vmatprep.subr.mxu0 0.0
        %1876 = vmatpush1.msra.mxu0 0.0
        %1877 = vmatprep.subr.mxu0 0.0
        %1878 = vmatpush1.msra.mxu0 0.0
        %1879 = vmatprep.subr.mxu0 0.0
        %1880 = vmatpush1.msra.mxu0 0.0
        %1881 = vmatprep.subr.mxu0 0.0
        %1882 = vmatpush1.msra.mxu0 0.0
        %1883 = vmatprep.subr.mxu0 0.0
        %1884 = vmatpush1.msra.mxu0 0.0
        %1885 = vmatprep.subr.mxu0 0.0
        %1886 = vmatpush1.msra.mxu0 0.0
        %1887 = vmatprep.subr.mxu0 0.0
        %1888 = vmatpush1.msra.mxu0 0.0
        %1889 = vmatprep.subr.mxu0 0.0
        %1890 = vmatpush1.msra.mxu0 0.0
        %1891 = vmatprep.subr.mxu0 0.0
        %1892 = vmatpush1.msra.mxu0 0.0
        %1893 = vmatprep.subr.mxu0 0.0
        %1894 = vmatpush1.msra.mxu0 0.0
        %1895 = vmatprep.subr.mxu0 0.0
        %1896 = vmatpush1.msra.mxu0 0.0
        %1897 = vmatprep.subr.mxu0 0.0
        %1898 = vmatpush1.msra.mxu0 0.0
        %1899 = vmatprep.subr.mxu0 0.0
        %1900 = vmatpush1.msra.mxu0 0.0
        %1901 = vmatprep.subr.mxu0 0.0
        %1902 = vmatpush1.msra.mxu0 0.0
        %1903 = vmatprep.subr.mxu0 0.0
        %1904 = vmatpush1.msra.mxu0 0.0
        %1905 = vmatprep.mubr.f32.mxu0 0.0
        %1906 = vmatmul.mubr.f32.gmra.mrb[0].mxu0 %v1839
        %v1907 = vpop.f32.mrb[0].mxu0
        %v1908 = vadd.f32 0.0, %v1907
        %v1909 = vpop.f32.mrb[0].mxu0
        %1910 = vdwg.mxu0
        %v1912 = vsel %vm1032, %v1908, 0
        %1914 = vmatprep.subr.mxu0 0.0
        %1915 = vmatpush1.msra.mxu0 %v920
        %1916 = vmatprep.subr.mxu0 0.0
        %1917 = vmatpush1.msra.mxu0 0.0
        %1918 = vmatprep.subr.mxu0 0.0
        %1919 = vmatpush1.msra.mxu0 0.0
        %1920 = vmatprep.subr.mxu0 0.0
        %1921 = vmatpush1.msra.mxu0 0.0
        %1922 = vmatprep.subr.mxu0 0.0
        %1923 = vmatpush1.msra.mxu0 0.0
        %1924 = vmatprep.subr.mxu0 0.0
        %1925 = vmatpush1.msra.mxu0 0.0
        %1926 = vmatprep.subr.mxu0 0.0
        %1927 = vmatpush1.msra.mxu0 0.0
        %1928 = vmatprep.subr.mxu0 0.0
        %1929 = vmatpush1.msra.mxu0 0.0
        %1930 = vmatprep.subr.mxu0 0.0
        %1931 = vmatpush1.msra.mxu0 0.0
        %1932 = vmatprep.subr.mxu0 0.0
        %1933 = vmatpush1.msra.mxu0 0.0
        %1934 = vmatprep.subr.mxu0 0.0
        %1935 = vmatpush1.msra.mxu0 0.0
        %1936 = vmatprep.subr.mxu0 0.0
        %1937 = vmatpush1.msra.mxu0 0.0
        %1938 = vmatprep.subr.mxu0 0.0
        %1939 = vmatpush1.msra.mxu0 0.0
        %1940 = vmatprep.subr.mxu0 0.0
        %1941 = vmatpush1.msra.mxu0 0.0
        %1942 = vmatprep.subr.mxu0 0.0
        %1943 = vmatpush1.msra.mxu0 0.0
        %1944 = vmatprep.subr.mxu0 0.0
        %1945 = vmatpush1.msra.mxu0 0.0
        %1946 = vmatprep.subr.mxu0 0.0
        %1947 = vmatpush1.msra.mxu0 0.0
        %1948 = vmatprep.subr.mxu0 0.0
        %1949 = vmatpush1.msra.mxu0 0.0
        %1950 = vmatprep.subr.mxu0 0.0
        %1951 = vmatpush1.msra.mxu0 0.0
        %1952 = vmatprep.subr.mxu0 0.0
        %1953 = vmatpush1.msra.mxu0 0.0
        %1954 = vmatprep.subr.mxu0 0.0
        %1955 = vmatpush1.msra.mxu0 0.0
        %1956 = vmatprep.subr.mxu0 0.0
        %1957 = vmatpush1.msra.mxu0 0.0
        %1958 = vmatprep.subr.mxu0 0.0
        %1959 = vmatpush1.msra.mxu0 0.0
        %1960 = vmatprep.subr.mxu0 0.0
        %1961 = vmatpush1.msra.mxu0 0.0
        %1962 = vmatprep.subr.mxu0 0.0
        %1963 = vmatpush1.msra.mxu0 0.0
        %1964 = vmatprep.subr.mxu0 0.0
        %1965 = vmatpush1.msra.mxu0 0.0
        %1966 = vmatprep.subr.mxu0 0.0
        %1967 = vmatpush1.msra.mxu0 0.0
        %1968 = vmatprep.subr.mxu0 0.0
        %1969 = vmatpush1.msra.mxu0 0.0
        %1970 = vmatprep.subr.mxu0 0.0
        %1971 = vmatpush1.msra.mxu0 0.0
        %1972 = vmatprep.subr.mxu0 0.0
        %1973 = vmatpush1.msra.mxu0 0.0
        %1974 = vmatprep.subr.mxu0 0.0
        %1975 = vmatpush1.msra.mxu0 0.0
        %1976 = vmatprep.subr.mxu0 0.0
        %1977 = vmatpush1.msra.mxu0 0.0
        %1978 = vmatprep.mubr.f32.mxu0 0.0
        %1979 = vmatmul.mubr.f32.gmra.mrb[0].mxu0 %v1912
        %v1980 = vpop.f32.mrb[0].mxu0
        %v1981 = vadd.f32 0.0, %v1980
        %v1982 = vpop.f32.mrb[0].mxu0
        %1983 = vdwg.mxu0
        %v1984 = vadd.f32 %v1745, %v1981
        %v1985 = vlaneseq
        %v1986 = vshrl.u32 %v1985, 7
        %v1987 = vsub.s32 3, %v1986
        %v1988 = vrot.slane %v929, %v1987
        %v1989 = vadd.f32 %v1984, %v1988
        %v1990 = vadd.f32 %v912, %v1989
        %v1991 = vsel %vm931, %v1990, 0.0
        %1992 = vadd.xlane.f32.xlu0 %v1991
        %v1993 = vpop.xlane.xlu0 %1992
        %v1994 = vrcp.pop 32.0
        %v1995 = vmul.f32 %v1993, %v1994
        %v1996 = vsub.f32 %v1990, %v1995
        %v1997 = vmul.f32 %v1996, %v1996
        %v1998 = vsel %vm931, %v1997, 0.0
        %1999 = vadd.xlane.f32.xlu0 %v1998
        %v2000 = vpop.xlane.xlu0 %1999
        %v2001 = vmul.f32 %v2000, %v1994
        %v2002 = vadd.f32 %v2001, 1e-05
        %v2003 = vrsqrt.pop %v2002
        %v2004 = vmul.f32 %v1996, %v2003
        %v2005 = vlaneseq
        %v2006 = vshrl.u32 %v2005, 7
        %v2007 = vsub.s32 4, %v2006
        %v2008 = vrot.slane %v929, %v2007
        %v2009 = vmul.f32 %v2004, %v2008
        %v2010 = vlaneseq
        %v2011 = vshrl.u32 %v2010, 7
        %v2012 = vsub.s32 5, %v2011
        %v2013 = vrot.slane %v929, %v2012
        %v2014 = vadd.f32 %v2009, %v2013
        %v2015 = vlaneseq
        %v2016 = vshrl.u32 %v2015, 7
        %v2017 = vsub.s32 6, %v2016
        %v2018 = vrot.slane %v929, %v2017
        %v2020 = vsel %vm931, %v2014, 0
        %2022 = vmatprep.subr.mxu0 0.0
        %2023 = vmatpush1.msra.mxu0 %v921
        %2024 = vmatprep.subr.mxu0 0.0
        %2025 = vmatpush1.msra.mxu0 %v922
        %2026 = vmatprep.subr.mxu0 0.0
        %2027 = vmatpush1.msra.mxu0 %v923
        %2028 = vmatprep.subr.mxu0 0.0
        %2029 = vmatpush1.msra.mxu0 %v924
        %2030 = vmatprep.subr.mxu0 0.0
        %2031 = vmatpush1.msra.mxu0 0.0
        %2032 = vmatprep.subr.mxu0 0.0
        %2033 = vmatpush1.msra.mxu0 0.0
        %2034 = vmatprep.subr.mxu0 0.0
        %2035 = vmatpush1.msra.mxu0 0.0
        %2036 = vmatprep.subr.mxu0 0.0
        %2037 = vmatpush1.msra.mxu0 0.0
        %2038 = vmatprep.subr.mxu0 0.0
        %2039 = vmatpush1.msra.mxu0 0.0
        %2040 = vmatprep.subr.mxu0 0.0
        %2041 = vmatpush1.msra.mxu0 0.0
        %2042 = vmatprep.subr.mxu0 0.0
        %2043 = vmatpush1.msra.mxu0 0.0
        %2044 = vmatprep.subr.mxu0 0.0
        %2045 = vmatpush1.msra.mxu0 0.0
        %2046 = vmatprep.subr.mxu0 0.0
        %2047 = vmatpush1.msra.mxu0 0.0
        %2048 = vmatprep.subr.mxu0 0.0
        %2049 = vmatpush1.msra.mxu0 0.0
        %2050 = vmatprep.subr.mxu0 0.0
        %2051 = vmatpush1.msra.mxu0 0.0
        %2052 = vmatprep.subr.mxu0 0.0
        %2053 = vmatpush1.msra.mxu0 0.0
        %2054 = vmatprep.subr.mxu0 0.0
        %2055 = vmatpush1.msra.mxu0 0.0
        %2056 = vmatprep.subr.mxu0 0.0
        %2057 = vmatpush1.msra.mxu0 0.0
        %2058 = vmatprep.subr.mxu0 0.0
        %2059 = vmatpush1.msra.mxu0 0.0
        %2060 = vmatprep.subr.mxu0 0.0
        %2061 = vmatpush1.msra.mxu0 0.0
        %2062 = vmatprep.subr.mxu0 0.0
        %2063 = vmatpush1.msra.mxu0 0.0
        %2064 = vmatprep.subr.mxu0 0.0
        %2065 = vmatpush1.msra.mxu0 0.0
        %2066 = vmatprep.subr.mxu0 0.0
        %2067 = vmatpush1.msra.mxu0 0.0
        %2068 = vmatprep.subr.mxu0 0.0
        %2069 = vmatpush1.msra.mxu0 0.0
        %2070 = vmatprep.subr.mxu0 0.0
        %2071 = vmatpush1.msra.mxu0 0.0
        %2072 = vmatprep.subr.mxu0 0.0
        %2073 = vmatpush1.msra.mxu0 0.0
        %2074 = vmatprep.subr.mxu0 0.0
        %2075 = vmatpush1.msra.mxu0 0.0
        %2076 = vmatprep.subr.mxu0 0.0
        %2077 = vmatpush1.msra.mxu0 0.0
        %2078 = vmatprep.subr.mxu0 0.0
        %2079 = vmatpush1.msra.mxu0 0.0
        %2080 = vmatprep.subr.mxu0 0.0
        %2081 = vmatpush1.msra.mxu0 0.0
        %2082 = vmatprep.subr.mxu0 0.0
        %2083 = vmatpush1.msra.mxu0 0.0
        %2084 = vmatprep.subr.mxu0 0.0
        %2085 = vmatpush1.msra.mxu0 0.0
        %2086 = vmatprep.mubr.f32.mxu0 0.0
        %2087 = vmatmul.mubr.f32.gmra.mrb[0].mxu0 %v2020
        %v2088 = vpop.f32.mrb[0].mxu0
        %v2089 = vadd.f32 %v2018, %v2088
        %v2090 = vpop.f32.mrb[0].mxu0
        %2091 = vdwg.mxu0
        %v2092 = vmul.f32 %v2089, 0.5
        %v2093 = vmul.f32 %v2089, 0.70710677
        %v2094 = verf.f32.pop %v2093
        %v2095 = vadd.f32 %v2094, 1.0
        %v2096 = vmul.f32 %v2092, %v2095
        %v2097 = vlaneseq
        %v2098 = vshrl.u32 %v2097, 7
        %v2099 = vsub.s32 7, %v2098
        %v2100 = vrot.slane %v929, %v2099
        %v2102 = vsel %vm931, %v2096, 0
        %2104 = vmatprep.subr.mxu0 0.0
        %2105 = vmatpush1.msra.mxu0 %v925
        %2106 = vmatprep.subr.mxu0 0.0
        %2107 = vmatpush1.msra.mxu0 %v926
        %2108 = vmatprep.subr.mxu0 0.0
        %2109 = vmatpush1.msra.mxu0 %v927
        %2110 = vmatprep.subr.mxu0 0.0
        %2111 = vmatpush1.msra.mxu0 %v928
        %2112 = vmatprep.subr.mxu0 0.0
        %2113 = vmatpush1.msra.mxu0 0.0
        %2114 = vmatprep.subr.mxu0 0.0
        %2115 = vmatpush1.msra.mxu0 0.0
        %2116 = vmatprep.subr.mxu0 0.0
        %2117 = vmatpush1.msra.mxu0 0.0
        %2118 = vmatprep.subr.mxu0 0.0
        %2119 = vmatpush1.msra.mxu0 0.0
        %2120 = vmatprep.subr.mxu0 0.0
        %2121 = vmatpush1.msra.mxu0 0.0
        %2122 = vmatprep.subr.mxu0 0.0
        %2123 = vmatpush1.msra.mxu0 0.0
        %2124 = vmatprep.subr.mxu0 0.0
        %2125 = vmatpush1.msra.mxu0 0.0
        %2126 = vmatprep.subr.mxu0 0.0
        %2127 = vmatpush1.msra.mxu0 0.0
        %2128 = vmatprep.subr.mxu0 0.0
        %2129 = vmatpush1.msra.mxu0 0.0
        %2130 = vmatprep.subr.mxu0 0.0
        %2131 = vmatpush1.msra.mxu0 0.0
        %2132 = vmatprep.subr.mxu0 0.0
        %2133 = vmatpush1.msra.mxu0 0.0
        %2134 = vmatprep.subr.mxu0 0.0
        %2135 = vmatpush1.msra.mxu0 0.0
        %2136 = vmatprep.subr.mxu0 0.0
        %2137 = vmatpush1.msra.mxu0 0.0
        %2138 = vmatprep.subr.mxu0 0.0
        %2139 = vmatpush1.msra.mxu0 0.0
        %2140 = vmatprep.subr.mxu0 0.0
        %2141 = vmatpush1.msra.mxu0 0.0
        %2142 = vmatprep.subr.mxu0 0.0
        %2143 = vmatpush1.msra.mxu0 0.0
        %2144 = vmatprep.subr.mxu0 0.0
        %2145 = vmatpush1.msra.mxu0 0.0
        %2146 = vmatprep.subr.mxu0 0.0
        %2147 = vmatpush1.msra.mxu0 0.0
        %2148 = vmatprep.subr.mxu0 0.0
        %2149 = vmatpush1.msra.mxu0 0.0
        %2150 = vmatprep.subr.mxu0 0.0
        %2151 = vmatpush1.msra.mxu0 0.0
        %2152 = vmatprep.subr.mxu0 0.0
        %2153 = vmatpush1.msra.mxu0 0.0
        %2154 = vmatprep.subr.mxu0 0.0
        %2155 = vmatpush1.msra.mxu0 0.0
        %2156 = vmatprep.subr.mxu0 0.0
        %2157 = vmatpush1.msra.mxu0 0.0
        %2158 = vmatprep.subr.mxu0 0.0
        %2159 = vmatpush1.msra.mxu0 0.0
        %2160 = vmatprep.subr.mxu0 0.0
        %2161 = vmatpush1.msra.mxu0 0.0
        %2162 = vmatprep.subr.mxu0 0.0
        %2163 = vmatpush1.msra.mxu0 0.0
        %2164 = vmatprep.subr.mxu0 0.0
        %2165 = vmatpush1.msra.mxu0 0.0
        %2166 = vmatprep.subr.mxu0 0.0
        %2167 = vmatpush1.msra.mxu0 0.0
        %2168 = vmatprep.mubr.f32.mxu0 0.0
        %2169 = vmatmul.mubr.f32.gmra.mrb[0].mxu0 %v2102
        %v2170 = vpop.f32.mrb[0].mxu0
        %v2171 = vadd.f32 %v2100, %v2170
        %v2172 = vpop.f32.mrb[0].mxu0
        %2173 = vdwg.mxu0
        %v2174 = vadd.f32 %v2014, %v2171
        %v2175 = vsel %vm931, %v2174, 0.0
        %2176 = vadd.xlane.f32.xlu0 %v2175
        %v2177 = vpop.xlane.xlu0 %2176
        %v2178 = vmul.f32 %v2177, %v1994
        %v2179 = vsub.f32 %v2174, %v2178
        %v2180 = vmul.f32 %v2179, %v2179
        %v2181 = vsel %vm931, %v2180, 0.0
        %2182 = vadd.xlane.f32.xlu0 %v2181
        %v2183 = vpop.xlane.xlu0 %2182
        %v2184 = vmul.f32 %v2183, %v1994
        %v2185 = vadd.f32 %v2184, 1e-05
        %v2186 = vrsqrt.pop %v2185
        %v2187 = vmul.f32 %v2179, %v2186
        %v2188 = vlaneseq
        %v2189 = vshrl.u32 %v2188, 7
        %v2190 = vsub.s32 0, %v2189
        %v2191 = vrot.slane %v930, %v2190
        %v2192 = vmul.f32 %v2187, %v2191
        %v2193 = vlaneseq
        %v2194 = vshrl.u32 %v2193, 7
        %v2195 = vsub.s32 1, %v2194
        %v2196 = vrot.slane %v930, %v2195
        %v2197 = vadd.f32 %v2192, %v2196
        %s2198 = scalar_lea.vmem %s5, 32
        %v2199 = vld [vmem:[%s2198] sm:$0xff]
        %v2200 = vld [vmem:[%s2198 + $0x8] sm:$0xff]
        %v2201 = vld [vmem:[%s2198 + $0x10] sm:$0xff]
        %v2202 = vld [vmem:[%s2198 + $0x18] sm:$0xff]
        %s2203 = scalar_lea.vmem %s6, 96
        %v2204 = vld [vmem:[%s2203] sm:$0xff]
        %v2205 = vld [vmem:[%s2203 + $0x8] sm:$0xff]
        %v2206 = vld [vmem:[%s2203 + $0x10] sm:$0xff]
        %v2207 = vld [vmem:[%s2203 + $0x18] sm:$0xff]
        %v2208 = vld [vmem:[%s2203 + $0x20] sm:$0xff]
        %v2209 = vld [vmem:[%s2203 + $0x28] sm:$0xff]
        %v2210 = vld [vmem:[%s2203 + $0x30] sm:$0xff]
        %v2211 = vld [vmem:[%s2203 + $0x38] sm:$0xff]
        %v2212 = vld [vmem:[%s2203 + $0x40] sm:$0xff]
        %v2213 = vld [vmem:[%s2203 + $0x48] sm:$0xff]
        %v2214 = vld [vmem:[%s2203 + $0x50] sm:$0xff]
        %v2215 = vld [vmem:[%s2203 + $0x58] sm:$0xff]
        %s2216 = scalar_lea.vmem [#allocation2], 16
        %v2217 = vld [vmem:[%s2216] sm:$0xff]
        %v2218 = vld [vmem:[%s2216 + $0x8] sm:$0x3]
        %v2220 = vsel %vm931, %v2197, 0
        %2222 = vmatprep.subr.mxu0 0.0
        %2223 = vmatpush1.msra.mxu0 %v2199
        %2224 = vmatprep.subr.mxu0 0.0
        %2225 = vmatpush1.msra.mxu0 %v2200
        %2226 = vmatprep.subr.mxu0 0.0
        %2227 = vmatpush1.msra.mxu0 %v2201
        %2228 = vmatprep.subr.mxu0 0.0
        %2229 = vmatpush1.msra.mxu0 %v2202
        %2230 = vmatprep.subr.mxu0 0.0
        %2231 = vmatpush1.msra.mxu0 0.0
        %2232 = vmatprep.subr.mxu0 0.0
        %2233 = vmatpush1.msra.mxu0 0.0
        %2234 = vmatprep.subr.mxu0 0.0
        %2235 = vmatpush1.msra.mxu0 0.0
        %2236 = vmatprep.subr.mxu0 0.0
        %2237 = vmatpush1.msra.mxu0 0.0
        %2238 = vmatprep.subr.mxu0 0.0
        %2239 = vmatpush1.msra.mxu0 0.0
        %2240 = vmatprep.subr.mxu0 0.0
        %2241 = vmatpush1.msra.mxu0 0.0
        %2242 = vmatprep.subr.mxu0 0.0
        %2243 = vmatpush1.msra.mxu0 0.0
        %2244 = vmatprep.subr.mxu0 0.0
        %2245 = vmatpush1.msra.mxu0 0.0
        %2246 = vmatprep.subr.mxu0 0.0
        %2247 = vmatpush1.msra.mxu0 0.0
        %2248 = vmatprep.subr.mxu0 0.0
        %2249 = vmatpush1.msra.mxu0 0.0
        %2250 = vmatprep.subr.mxu0 0.0
        %2251 = vmatpush1.msra.mxu0 0.0
        %2252 = vmatprep.subr.mxu0 0.0
        %2253 = vmatpush1.msra.mxu0 0.0
        %2254 = vmatprep.subr.mxu0 0.0
        %2255 = vmatpush1.msra.mxu0 0.0
        %2256 = vmatprep.subr.mxu0 0.0
        %2257 = vmatpush1.msra.mxu0 0.0
        %2258 = vmatprep.subr.mxu0 0.0
        %2259 = vmatpush1.msra.mxu0 0.0
        %2260 = vmatprep.subr.mxu0 0.0
        %2261 = vmatpush1.msra.mxu0 0.0
        %2262 = vmatprep.subr.mxu0 0.0
        %2263 = vmatpush1.msra.mxu0 0.0
        %2264 = vmatprep.subr.mxu0 0.0
        %2265 = vmatpush1.msra.mxu0 0.0
        %2266 = vmatprep.subr.mxu0 0.0
        %2267 = vmatpush1.msra.mxu0 0.0
        %2268 = vmatprep.subr.mxu0 0.0
        %2269 = vmatpush1.msra.mxu0 0.0
        %2270 = vmatprep.subr.mxu0 0.0
        %2271 = vmatpush1.msra.mxu0 0.0
        %2272 = vmatprep.subr.mxu0 0.0
        %2273 = vmatpush1.msra.mxu0 0.0
        %2274 = vmatprep.subr.mxu0 0.0
        %2275 = vmatpush1.msra.mxu0 0.0
        %2276 = vmatprep.subr.mxu0 0.0
        %2277 = vmatpush1.msra.mxu0 0.0
        %2278 = vmatprep.subr.mxu0 0.0
        %2279 = vmatpush1.msra.mxu0 0.0
        %2280 = vmatprep.subr.mxu0 0.0
        %2281 = vmatpush1.msra.mxu0 0.0
        %2282 = vmatprep.subr.mxu0 0.0
        %2283 = vmatpush1.msra.mxu0 0.0
        %2284 = vmatprep.subr.mxu0 0.0
        %2285 = vmatpush1.msra.mxu0 0.0
        %2286 = vmatprep.mubr.f32.mxu0 0.0
        %2287 = vmatmul.mubr.f32.gmra.mrb[0].mxu0 %v2220
        %v2288 = vpop.f32.mrb[0].mxu0
        %v2289 = vadd.f32 0.0, %v2288
        %v2290 = vpop.f32.mrb[0].mxu0
        %2291 = vdwg.mxu0
        %v2292 = vlaneseq
        %v2293 = vshrl.u32 %v2292, 7
        %v2294 = vsub.s32 0, %v2293
        %v2295 = vrot.slane %v2217, %v2294
        %v2296 = vadd.f32 %v2289, %v2295
        %v2297 = vmul.f32 %v2296, 0.35355338
        %v2298 = vlaneseq
        %v2299 = vshrl.u32 %v2298, 7
        %v2300 = vsub.s32 1, %v2299
        %v2301 = vrot.slane %v2217, %v2300
        %2303 = vrot.lane.b32.xlu0 %v2301, 32
        %v2304 = vpop.permute.xlu0 %2303
        %v2306 = vadd.f32 %v2289, %v2304
        %v2307 = vlaneseq
        %v2308 = vshrl.u32 %v2307, 7
        %v2309 = vsub.s32 2, %v2308
        %v2310 = vrot.slane %v2217, %v2309
        %2312 = vrot.lane.b32.xlu0 %v2310, 64
        %v2313 = vpop.permute.xlu0 %2312
        %v2315 = vadd.f32 %v2289, %v2313
        %2317 = vrot.lane.b32.xlu0 %v2306, 96
        %v2318 = vpop.permute.xlu0 %2317
        %v2320 = vsel %vm1032, %v2297, 0
        %v2322 = vsel %vm1032, %v2318, 0
        %2324 = vmatprep.subr.mxu0 0.0
        %2325 = vmatpush1.xpose.msra.mxu0 %v2322
        %2326 = vmatprep.subr.mxu0 0.0
        %2327 = vmatpush1.xpose.msra.mxu0 0.0
        %2328 = vmatprep.subr.mxu0 0.0
        %2329 = vmatpush1.xpose.msra.mxu0 0.0
        %2330 = vmatprep.subr.mxu0 0.0
        %2331 = vmatpush1.xpose.msra.mxu0 0.0
        %2332 = vmatprep.subr.mxu0 0.0
        %2333 = vmatpush1.xpose.msra.mxu0 0.0
        %2334 = vmatprep.subr.mxu0 0.0
        %2335 = vmatpush1.xpose.msra.mxu0 0.0
        %2336 = vmatprep.subr.mxu0 0.0
        %2337 = vmatpush1.xpose.msra.mxu0 0.0
        %2338 = vmatprep.subr.mxu0 0.0
        %2339 = vmatpush1.xpose.msra.mxu0 0.0
        %2340 = vmatprep.subr.mxu0 0.0
        %2341 = vmatpush1.xpose.msra.mxu0 0.0
        %2342 = vmatprep.subr.mxu0 0.0
        %2343 = vmatpush1.xpose.msra.mxu0 0.0
        %2344 = vmatprep.subr.mxu0 0.0
        %2345 = vmatpush1.xpose.msra.mxu0 0.0
        %2346 = vmatprep.subr.mxu0 0.0
        %2347 = vmatpush1.xpose.msra.mxu0 0.0
        %2348 = vmatprep.subr.mxu0 0.0
        %2349 = vmatpush1.xpose.msra.mxu0 0.0
        %2350 = vmatprep.subr.mxu0 0.0
        %2351 = vmatpush1.xpose.msra.mxu0 0.0
        %2352 = vmatprep.subr.mxu0 0.0
        %2353 = vmatpush1.xpose.msra.mxu0 0.0
        %2354 = vmatprep.subr.mxu0 0.0
        %2355 = vmatpush1.xpose.msra.mxu0 0.0
        %2356 = vmatprep.subr.mxu0 0.0
        %2357 = vmatpush1.xpose.msra.mxu0 0.0
        %2358 = vmatprep.subr.mxu0 0.0
        %2359 = vmatpush1.xpose.msra.mxu0 0.0
        %2360 = vmatprep.subr.mxu0 0.0
        %2361 = vmatpush1.xpose.msra.mxu0 0.0
        %2362 = vmatprep.subr.mxu0 0.0
        %2363 = vmatpush1.xpose.msra.mxu0 0.0
        %2364 = vmatprep.subr.mxu0 0.0
        %2365 = vmatpush1.xpose.msra.mxu0 0.0
        %2366 = vmatprep.subr.mxu0 0.0
        %2367 = vmatpush1.xpose.msra.mxu0 0.0
        %2368 = vmatprep.subr.mxu0 0.0
        %2369 = vmatpush1.xpose.msra.mxu0 0.0
        %2370 = vmatprep.subr.mxu0 0.0
        %2371 = vmatpush1.xpose.msra.mxu0 0.0
        %2372 = vmatprep.subr.mxu0 0.0
        %2373 = vmatpush1.xpose.msra.mxu0 0.0
        %2374 = vmatprep.subr.mxu0 0.0
        %2375 = vmatpush1.xpose.msra.mxu0 0.0
        %2376 = vmatprep.subr.mxu0 0.0
        %2377 = vmatpush1.xpose.msra.mxu0 0.0
        %2378 = vmatprep.subr.mxu0 0.0
        %2379 = vmatpush1.xpose.msra.mxu0 0.0
        %2380 = vmatprep.subr.mxu0 0.0
        %2381 = vmatpush1.xpose.msra.mxu0 0.0
        %2382 = vmatprep.subr.mxu0 0.0
        %2383 = vmatpush1.xpose.msra.mxu0 0.0
        %2384 = vmatprep.subr.mxu0 0.0
        %2385 = vmatpush1.xpose.msra.mxu0 0.0
        %2386 = vmatprep.subr.mxu0 0.0
        %2387 = vmatpush1.xpose.msra.mxu0 0.0
        %2388 = vmatprep.mubr.f32.mxu0 0.0
        %2389 = vmatmul.mubr.f32.gmra.mrb[0].mxu0 %v2320
        %v2390 = vpop.f32.mrb[0].mxu0
        %v2391 = vadd.f32 0.0, %v2390
        %v2392 = vpop.f32.mrb[0].mxu0
        %2393 = vdwg.mxu0
        %v2394 = vsel %vm1032, %v2391, -inf
        %2395 = vmax.xlane.f32.xlu0 %v2394
        %v2396 = vpop.xlane.xlu0 %2395
        %v2397 = vsub.f32 %v2391, %v2396
        %v2398 = vmul.f32 %v2397, 1.442695
        %v2399 = vpow.pop %v2398
        %v2400 = vsel %vm1032, %v2399, 0.0
        %2401 = vadd.xlane.f32.xlu0 %v2400
        %v2402 = vpop.xlane.xlu0 %2401
        %v2403 = vrcp.pop %v2402
        %v2404 = vmul.f32 %v2399, %v2403
        %2406 = vrot.lane.b32.xlu0 %v2315, 64
        %v2407 = vpop.permute.xlu0 %2406
        %v2410 = vsel %vm1032, %v2404, 0
        %2412 = vmatprep.subr.mxu0 0.0
        %2413 = vmatpush1.msra.mxu0 %v2407
        %2414 = vmatprep.subr.mxu0 0.0
        %2415 = vmatpush1.msra.mxu0 0.0
        %2416 = vmatprep.subr.mxu0 0.0
        %2417 = vmatpush1.msra.mxu0 0.0
        %2418 = vmatprep.subr.mxu0 0.0
        %2419 = vmatpush1.msra.mxu0 0.0
        %2420 = vmatprep.subr.mxu0 0.0
        %2421 = vmatpush1.msra.mxu0 0.0
        %2422 = vmatprep.subr.mxu0 0.0
        %2423 = vmatpush1.msra.mxu0 0.0
        %2424 = vmatprep.subr.mxu0 0.0
        %2425 = vmatpush1.msra.mxu0 0.0
        %2426 = vmatprep.subr.mxu0 0.0
        %2427 = vmatpush1.msra.mxu0 0.0
        %2428 = vmatprep.subr.mxu0 0.0
        %2429 = vmatpush1.msra.mxu0 0.0
        %2430 = vmatprep.subr.mxu0 0.0
        %2431 = vmatpush1.msra.mxu0 0.0
        %2432 = vmatprep.subr.mxu0 0.0
        %2433 = vmatpush1.msra.mxu0 0.0
        %2434 = vmatprep.subr.mxu0 0.0
        %2435 = vmatpush1.msra.mxu0 0.0
        %2436 = vmatprep.subr.mxu0 0.0
        %2437 = vmatpush1.msra.mxu0 0.0
        %2438 = vmatprep.subr.mxu0 0.0
        %2439 = vmatpush1.msra.mxu0 0.0
        %2440 = vmatprep.subr.mxu0 0.0
        %2441 = vmatpush1.msra.mxu0 0.0
        %2442 = vmatprep.subr.mxu0 0.0
        %2443 = vmatpush1.msra.mxu0 0.0
        %2444 = vmatprep.subr.mxu0 0.0
        %2445 = vmatpush1.msra.mxu0 0.0
        %2446 = vmatprep.subr.mxu0 0.0
        %2447 = vmatpush1.msra.mxu0 0.0
        %2448 = vmatprep.subr.mxu0 0.0
        %2449 = vmatpush1.msra.mxu0 0.0
        %2450 = vmatprep.subr.mxu0 0.0
        %2451 = vmatpush1.msra.mxu0 0.0
        %2452 = vmatprep.subr.mxu0 0.0
        %2453 = vmatpush1.msra.mxu0 0.0
        %2454 = vmatprep.subr.mxu0 0.0
        %2455 = vmatpush1.msra.mxu0 0.0
        %2456 = vmatprep.subr.mxu0 0.0
        %2457 = vmatpush1.msra.mxu0 0.0
        %2458 = vmatprep.subr.mxu0 0.0
        %2459 = vmatpush1.msra.mxu0 0.0
        %2460 = vmatprep.subr.mxu0 0.0
        %2461 = vmatpush1.msra.mxu0 0.0
        %2462 = vmatprep.subr.mxu0 0.0
        %2463 = vmatpush1.msra.mxu0 0.0
        %2464 = vmatprep.subr.mxu0 0.0
        %2465 = vmatpush1.msra.mxu0 0.0
        %2466 = vmatprep.subr.mxu0 0.0
        %2467 = vmatpush1.msra.mxu0 0.0
        %2468 = vmatprep.subr.mxu0 0.0
        %2469 = vmatpush1.msra.mxu0 0.0
        %2470 = vmatprep.subr.mxu0 0.0
        %2471 = vmatpush1.msra.mxu0 0.0
        %2472 = vmatprep.subr.mxu0 0.0
        %2473 = vmatpush1.msra.mxu0 0.0
        %2474 = vmatprep.subr.mxu0 0.0
        %2475 = vmatpush1.msra.mxu0 0.0
        %2476 = vmatprep.mubr.f32.mxu0 0.0
        %2477 = vmatmul.mubr.f32.gmra.mrb[0].mxu0 %v2410
        %v2478 = vpop.f32.mrb[0].mxu0
        %v2479 = vadd.f32 0.0, %v2478
        %v2480 = vpop.f32.mrb[0].mxu0
        %2481 = vdwg.mxu0
        %2482 = vrot.lane.b32.xlu0 %v2297, 120
        %v2483 = vpop.permute.xlu0 %2482
        %2484 = vrot.lane.b32.xlu0 %v2306, 88
        %v2485 = vpop.permute.xlu0 %2484
        %v2486 = vsel %vm1032, %v2483, 0
        %v2488 = vsel %vm1032, %v2485, 0
        %2490 = vmatprep.subr.mxu0 0.0
        %2491 = vmatpush1.xpose.msra.mxu0 %v2488
        %2492 = vmatprep.subr.mxu0 0.0
        %2493 = vmatpush1.xpose.msra.mxu0 0.0
        %2494 = vmatprep.subr.mxu0 0.0
        %2495 = vmatpush1.xpose.msra.mxu0 0.0
        %2496 = vmatprep.subr.mxu0 0.0
        %2497 = vmatpush1.xpose.msra.mxu0 0.0
        %2498 = vmatprep.subr.mxu0 0.0
        %2499 = vmatpush1.xpose.msra.mxu0 0.0
        %2500 = vmatprep.subr.mxu0 0.0
        %2501 = vmatpush1.xpose.msra.mxu0 0.0
        %2502 = vmatprep.subr.mxu0 0.0
        %2503 = vmatpush1.xpose.msra.mxu0 0.0
        %2504 = vmatprep.subr.mxu0 0.0
        %2505 = vmatpush1.xpose.msra.mxu0 0.0
        %2506 = vmatprep.subr.mxu0 0.0
        %2507 = vmatpush1.xpose.msra.mxu0 0.0
        %2508 = vmatprep.subr.mxu0 0.0
        %2509 = vmatpush1.xpose.msra.mxu0 0.0
        %2510 = vmatprep.subr.mxu0 0.0
        %2511 = vmatpush1.xpose.msra.mxu0 0.0
        %2512 = vmatprep.subr.mxu0 0.0
        %2513 = vmatpush1.xpose.msra.mxu0 0.0
        %2514 = vmatprep.subr.mxu0 0.0
        %2515 = vmatpush1.xpose.msra.mxu0 0.0
        %2516 = vmatprep.subr.mxu0 0.0
        %2517 = vmatpush1.xpose.msra.mxu0 0.0
        %2518 = vmatprep.subr.mxu0 0.0
        %2519 = vmatpush1.xpose.msra.mxu0 0.0
        %2520 = vmatprep.subr.mxu0 0.0
        %2521 = vmatpush1.xpose.msra.mxu0 0.0
        %2522 = vmatprep.subr.mxu0 0.0
        %2523 = vmatpush1.xpose.msra.mxu0 0.0
        %2524 = vmatprep.subr.mxu0 0.0
        %2525 = vmatpush1.xpose.msra.mxu0 0.0
        %2526 = vmatprep.subr.mxu0 0.0
        %2527 = vmatpush1.xpose.msra.mxu0 0.0
        %2528 = vmatprep.subr.mxu0 0.0
        %2529 = vmatpush1.xpose.msra.mxu0 0.0
        %2530 = vmatprep.subr.mxu0 0.0
        %2531 = vmatpush1.xpose.msra.mxu0 0.0
        %2532 = vmatprep.subr.mxu0 0.0
        %2533 = vmatpush1.xpose.msra.mxu0 0.0
        %2534 = vmatprep.subr.mxu0 0.0
        %2535 = vmatpush1.xpose.msra.mxu0 0.0
        %2536 = vmatprep.subr.mxu0 0.0
        %2537 = vmatpush1.xpose.msra.mxu0 0.0
        %2538 = vmatprep.subr.mxu0 0.0
        %2539 = vmatpush1.xpose.msra.mxu0 0.0
        %2540 = vmatprep.subr.mxu0 0.0
        %2541 = vmatpush1.xpose.msra.mxu0 0.0
        %2542 = vmatprep.subr.mxu0 0.0
        %2543 = vmatpush1.xpose.msra.mxu0 0.0
        %2544 = vmatprep.subr.mxu0 0.0
        %2545 = vmatpush1.xpose.msra.mxu0 0.0
        %2546 = vmatprep.subr.mxu0 0.0
        %2547 = vmatpush1.xpose.msra.mxu0 0.0
        %2548 = vmatprep.subr.mxu0 0.0
        %2549 = vmatpush1.xpose.msra.mxu0 0.0
        %2550 = vmatprep.subr.mxu0 0.0
        %2551 = vmatpush1.xpose.msra.mxu0 0.0
        %2552 = vmatprep.subr.mxu0 0.0
        %2553 = vmatpush1.xpose.msra.mxu0 0.0
        %2554 = vmatprep.mubr.f32.mxu0 0.0
        %2555 = vmatmul.mubr.f32.gmra.mrb[0].mxu0 %v2486
        %v2556 = vpop.f32.mrb[0].mxu0
        %v2557 = vadd.f32 0.0, %v2556
        %v2558 = vpop.f32.mrb[0].mxu0
        %2559 = vdwg.mxu0
        %v2560 = vsel %vm1032, %v2557, -inf
        %2561 = vmax.xlane.f32.xlu0 %v2560
        %v2562 = vpop.xlane.xlu0 %2561
        %v2563 = vsub.f32 %v2557, %v2562
        %v2564 = vmul.f32 %v2563, 1.442695
        %v2565 = vpow.pop %v2564
        %v2566 = vsel %vm1032, %v2565, 0.0
        %2567 = vadd.xlane.f32.xlu0 %v2566
        %v2568 = vpop.xlane.xlu0 %2567
        %v2569 = vrcp.pop %v2568
        %v2570 = vmul.f32 %v2565, %v2569
        %2571 = vrot.lane.b32.xlu0 %v2315, 56
        %v2572 = vpop.permute.xlu0 %2571
        %v2575 = vsel %vm1032, %v2570, 0
        %2577 = vmatprep.subr.mxu0 0.0
        %2578 = vmatpush1.msra.mxu0 %v2572
        %2579 = vmatprep.subr.mxu0 0.0
        %2580 = vmatpush1.msra.mxu0 0.0
        %2581 = vmatprep.subr.mxu0 0.0
        %2582 = vmatpush1.msra.mxu0 0.0
        %2583 = vmatprep.subr.mxu0 0.0
        %2584 = vmatpush1.msra.mxu0 0.0
        %2585 = vmatprep.subr.mxu0 0.0
        %2586 = vmatpush1.msra.mxu0 0.0
        %2587 = vmatprep.subr.mxu0 0.0
        %2588 = vmatpush1.msra.mxu0 0.0
        %2589 = vmatprep.subr.mxu0 0.0
        %2590 = vmatpush1.msra.mxu0 0.0
        %2591 = vmatprep.subr.mxu0 0.0
        %2592 = vmatpush1.msra.mxu0 0.0
        %2593 = vmatprep.subr.mxu0 0.0
        %2594 = vmatpush1.msra.mxu0 0.0
        %2595 = vmatprep.subr.mxu0 0.0
        %2596 = vmatpush1.msra.mxu0 0.0
        %2597 = vmatprep.subr.mxu0 0.0
        %2598 = vmatpush1.msra.mxu0 0.0
        %2599 = vmatprep.subr.mxu0 0.0
        %2600 = vmatpush1.msra.mxu0 0.0
        %2601 = vmatprep.subr.mxu0 0.0
        %2602 = vmatpush1.msra.mxu0 0.0
        %2603 = vmatprep.subr.mxu0 0.0
        %2604 = vmatpush1.msra.mxu0 0.0
        %2605 = vmatprep.subr.mxu0 0.0
        %2606 = vmatpush1.msra.mxu0 0.0
        %2607 = vmatprep.subr.mxu0 0.0
        %2608 = vmatpush1.msra.mxu0 0.0
        %2609 = vmatprep.subr.mxu0 0.0
        %2610 = vmatpush1.msra.mxu0 0.0
        %2611 = vmatprep.subr.mxu0 0.0
        %2612 = vmatpush1.msra.mxu0 0.0
        %2613 = vmatprep.subr.mxu0 0.0
        %2614 = vmatpush1.msra.mxu0 0.0
        %2615 = vmatprep.subr.mxu0 0.0
        %2616 = vmatpush1.msra.mxu0 0.0
        %2617 = vmatprep.subr.mxu0 0.0
        %2618 = vmatpush1.msra.mxu0 0.0
        %2619 = vmatprep.subr.mxu0 0.0
        %2620 = vmatpush1.msra.mxu0 0.0
        %2621 = vmatprep.subr.mxu0 0.0
        %2622 = vmatpush1.msra.mxu0 0.0
        %2623 = vmatprep.subr.mxu0 0.0
        %2624 = vmatpush1.msra.mxu0 0.0
        %2625 = vmatprep.subr.mxu0 0.0
        %2626 = vmatpush1.msra.mxu0 0.0
        %2627 = vmatprep.subr.mxu0 0.0
        %2628 = vmatpush1.msra.mxu0 0.0
        %2629 = vmatprep.subr.mxu0 0.0
        %2630 = vmatpush1.msra.mxu0 0.0
        %2631 = vmatprep.subr.mxu0 0.0
        %2632 = vmatpush1.msra.mxu0 0.0
        %2633 = vmatprep.subr.mxu0 0.0
        %2634 = vmatpush1.msra.mxu0 0.0
        %2635 = vmatprep.subr.mxu0 0.0
        %2636 = vmatpush1.msra.mxu0 0.0
        %2637 = vmatprep.subr.mxu0 0.0
        %2638 = vmatpush1.msra.mxu0 0.0
        %2639 = vmatprep.subr.mxu0 0.0
        %2640 = vmatpush1.msra.mxu0 0.0
        %2641 = vmatprep.mubr.f32.mxu0 0.0
        %2642 = vmatmul.mubr.f32.gmra.mrb[0].mxu0 %v2575
        %v2643 = vpop.f32.mrb[0].mxu0
        %v2644 = vadd.f32 0.0, %v2643
        %v2645 = vpop.f32.mrb[0].mxu0
        %2646 = vdwg.mxu0
        %v2648 = vsel %vm1032, %v2644, 0
        %2650 = vmatprep.subr.mxu0 0.0
        %2651 = vmatpush1.msra.mxu0 %v2205
        %2652 = vmatprep.subr.mxu0 0.0
        %2653 = vmatpush1.msra.mxu0 0.0
        %2654 = vmatprep.subr.mxu0 0.0
        %2655 = vmatpush1.msra.mxu0 0.0
        %2656 = vmatprep.subr.mxu0 0.0
        %2657 = vmatpush1.msra.mxu0 0.0
        %2658 = vmatprep.subr.mxu0 0.0
        %2659 = vmatpush1.msra.mxu0 0.0
        %2660 = vmatprep.subr.mxu0 0.0
        %2661 = vmatpush1.msra.mxu0 0.0
        %2662 = vmatprep.subr.mxu0 0.0
        %2663 = vmatpush1.msra.mxu0 0.0
        %2664 = vmatprep.subr.mxu0 0.0
        %2665 = vmatpush1.msra.mxu0 0.0
        %2666 = vmatprep.subr.mxu0 0.0
        %2667 = vmatpush1.msra.mxu0 0.0
        %2668 = vmatprep.subr.mxu0 0.0
        %2669 = vmatpush1.msra.mxu0 0.0
        %2670 = vmatprep.subr.mxu0 0.0
        %2671 = vmatpush1.msra.mxu0 0.0
        %2672 = vmatprep.subr.mxu0 0.0
        %2673 = vmatpush1.msra.mxu0 0.0
        %2674 = vmatprep.subr.mxu0 0.0
        %2675 = vmatpush1.msra.mxu0 0.0
        %2676 = vmatprep.subr.mxu0 0.0
        %2677 = vmatpush1.msra.mxu0 0.0
        %2678 = vmatprep.subr.mxu0 0.0
        %2679 = vmatpush1.msra.mxu0 0.0
        %2680 = vmatprep.subr.mxu0 0.0
        %2681 = vmatpush1.msra.mxu0 0.0
        %2682 = vmatprep.subr.mxu0 0.0
        %2683 = vmatpush1.msra.mxu0 0.0
        %2684 = vmatprep.subr.mxu0 0.0
        %2685 = vmatpush1.msra.mxu0 0.0
        %2686 = vmatprep.subr.mxu0 0.0
        %2687 = vmatpush1.msra.mxu0 0.0
        %2688 = vmatprep.subr.mxu0 0.0
        %2689 = vmatpush1.msra.mxu0 0.0
        %2690 = vmatprep.subr.mxu0 0.0
        %2691 = vmatpush1.msra.mxu0 0.0
        %2692 = vmatprep.subr.mxu0 0.0
        %2693 = vmatpush1.msra.mxu0 0.0
        %2694 = vmatprep.subr.mxu0 0.0
        %2695 = vmatpush1.msra.mxu0 0.0
        %2696 = vmatprep.subr.mxu0 0.0
        %2697 = vmatpush1.msra.mxu0 0.0
        %2698 = vmatprep.subr.mxu0 0.0
        %2699 = vmatpush1.msra.mxu0 0.0
        %2700 = vmatprep.subr.mxu0 0.0
        %2701 = vmatpush1.msra.mxu0 0.0
        %2702 = vmatprep.subr.mxu0 0.0
        %2703 = vmatpush1.msra.mxu0 0.0
        %2704 = vmatprep.subr.mxu0 0.0
        %2705 = vmatpush1.msra.mxu0 0.0
        %2706 = vmatprep.subr.mxu0 0.0
        %2707 = vmatpush1.msra.mxu0 0.0
        %2708 = vmatprep.subr.mxu0 0.0
        %2709 = vmatpush1.msra.mxu0 0.0
        %2710 = vmatprep.subr.mxu0 0.0
        %2711 = vmatpush1.msra.mxu0 0.0
        %2712 = vmatprep.subr.mxu0 0.0
        %2713 = vmatpush1.msra.mxu0 0.0
        %2714 = vmatprep.mubr.f32.mxu0 0.0
        %2715 = vmatmul.mubr.f32.gmra.mrb[0].mxu0 %v2648
        %v2716 = vpop.f32.mrb[0].mxu0
        %v2717 = vadd.f32 0.0, %v2716
        %v2718 = vpop.f32.mrb[0].mxu0
        %2719 = vdwg.mxu0
        %v2721 = vsel %vm1032, %v2479, 0
        %2723 = vmatprep.subr.mxu0 0.0
        %2724 = vmatpush1.msra.mxu0 %v2204
        %2725 = vmatprep.subr.mxu0 0.0
        %2726 = vmatpush1.msra.mxu0 0.0
        %2727 = vmatprep.subr.mxu0 0.0
        %2728 = vmatpush1.msra.mxu0 0.0
        %2729 = vmatprep.subr.mxu0 0.0
        %2730 = vmatpush1.msra.mxu0 0.0
        %2731 = vmatprep.subr.mxu0 0.0
        %2732 = vmatpush1.msra.mxu0 0.0
        %2733 = vmatprep.subr.mxu0 0.0
        %2734 = vmatpush1.msra.mxu0 0.0
        %2735 = vmatprep.subr.mxu0 0.0
        %2736 = vmatpush1.msra.mxu0 0.0
        %2737 = vmatprep.subr.mxu0 0.0
        %2738 = vmatpush1.msra.mxu0 0.0
        %2739 = vmatprep.subr.mxu0 0.0
        %2740 = vmatpush1.msra.mxu0 0.0
        %2741 = vmatprep.subr.mxu0 0.0
        %2742 = vmatpush1.msra.mxu0 0.0
        %2743 = vmatprep.subr.mxu0 0.0
        %2744 = vmatpush1.msra.mxu0 0.0
        %2745 = vmatprep.subr.mxu0 0.0
        %2746 = vmatpush1.msra.mxu0 0.0
        %2747 = vmatprep.subr.mxu0 0.0
        %2748 = vmatpush1.msra.mxu0 0.0
        %2749 = vmatprep.subr.mxu0 0.0
        %2750 = vmatpush1.msra.mxu0 0.0
        %2751 = vmatprep.subr.mxu0 0.0
        %2752 = vmatpush1.msra.mxu0 0.0
        %2753 = vmatprep.subr.mxu0 0.0
        %2754 = vmatpush1.msra.mxu0 0.0
        %2755 = vmatprep.subr.mxu0 0.0
        %2756 = vmatpush1.msra.mxu0 0.0
        %2757 = vmatprep.subr.mxu0 0.0
        %2758 = vmatpush1.msra.mxu0 0.0
        %2759 = vmatprep.subr.mxu0 0.0
        %2760 = vmatpush1.msra.mxu0 0.0
        %2761 = vmatprep.subr.mxu0 0.0
        %2762 = vmatpush1.msra.mxu0 0.0
        %2763 = vmatprep.subr.mxu0 0.0
        %2764 = vmatpush1.msra.mxu0 0.0
        %2765 = vmatprep.subr.mxu0 0.0
        %2766 = vmatpush1.msra.mxu0 0.0
        %2767 = vmatprep.subr.mxu0 0.0
        %2768 = vmatpush1.msra.mxu0 0.0
        %2769 = vmatprep.subr.mxu0 0.0
        %2770 = vmatpush1.msra.mxu0 0.0
        %2771 = vmatprep.subr.mxu0 0.0
        %2772 = vmatpush1.msra.mxu0 0.0
        %2773 = vmatprep.subr.mxu0 0.0
        %2774 = vmatpush1.msra.mxu0 0.0
        %2775 = vmatprep.subr.mxu0 0.0
        %2776 = vmatpush1.msra.mxu0 0.0
        %2777 = vmatprep.subr.mxu0 0.0
        %2778 = vmatpush1.msra.mxu0 0.0
        %2779 = vmatprep.subr.mxu0 0.0
        %2780 = vmatpush1.msra.mxu0 0.0
        %2781 = vmatprep.subr.mxu0 0.0
        %2782 = vmatpush1.msra.mxu0 0.0
        %2783 = vmatprep.subr.mxu0 0.0
        %2784 = vmatpush1.msra.mxu0 0.0
        %2785 = vmatprep.subr.mxu0 0.0
        %2786 = vmatpush1.msra.mxu0 0.0
        %2787 = vmatprep.mubr.f32.mxu0 0.0
        %2788 = vmatmul.mubr.f32.gmra.mrb[0].mxu0 %v2721
        %v2789 = vpop.f32.mrb[0].mxu0
        %v2790 = vadd.f32 %v2717, %v2789
        %v2791 = vpop.f32.mrb[0].mxu0
        %2792 = vdwg.mxu0
        %2793 = vrot.lane.b32.xlu0 %v2297, 112
        %v2794 = vpop.permute.xlu0 %2793
        %2795 = vrot.lane.b32.xlu0 %v2306, 80
        %v2796 = vpop.permute.xlu0 %2795
        %v2797 = vsel %vm1032, %v2794, 0
        %v2799 = vsel %vm1032, %v2796, 0
        %2801 = vmatprep.subr.mxu0 0.0
        %2802 = vmatpush1.xpose.msra.mxu0 %v2799
        %2803 = vmatprep.subr.mxu0 0.0
        %2804 = vmatpush1.xpose.msra.mxu0 0.0
        %2805 = vmatprep.subr.mxu0 0.0
        %2806 = vmatpush1.xpose.msra.mxu0 0.0
        %2807 = vmatprep.subr.mxu0 0.0
        %2808 = vmatpush1.xpose.msra.mxu0 0.0
        %2809 = vmatprep.subr.mxu0 0.0
        %2810 = vmatpush1.xpose.msra.mxu0 0.0
        %2811 = vmatprep.subr.mxu0 0.0
        %2812 = vmatpush1.xpose.msra.mxu0 0.0
        %2813 = vmatprep.subr.mxu0 0.0
        %2814 = vmatpush1.xpose.msra.mxu0 0.0
        %2815 = vmatprep.subr.mxu0 0.0
        %2816 = vmatpush1.xpose.msra.mxu0 0.0
        %2817 = vmatprep.subr.mxu0 0.0
        %2818 = vmatpush1.xpose.msra.mxu0 0.0
        %2819 = vmatprep.subr.mxu0 0.0
        %2820 = vmatpush1.xpose.msra.mxu0 0.0
        %2821 = vmatprep.subr.mxu0 0.0
        %2822 = vmatpush1.xpose.msra.mxu0 0.0
        %2823 = vmatprep.subr.mxu0 0.0
        %2824 = vmatpush1.xpose.msra.mxu0 0.0
        %2825 = vmatprep.subr.mxu0 0.0
        %2826 = vmatpush1.xpose.msra.mxu0 0.0
        %2827 = vmatprep.subr.mxu0 0.0
        %2828 = vmatpush1.xpose.msra.mxu0 0.0
        %2829 = vmatprep.subr.mxu0 0.0
        %2830 = vmatpush1.xpose.msra.mxu0 0.0
        %2831 = vmatprep.subr.mxu0 0.0
        %2832 = vmatpush1.xpose.msra.mxu0 0.0
        %2833 = vmatprep.subr.mxu0 0.0
        %2834 = vmatpush1.xpose.msra.mxu0 0.0
        %2835 = vmatprep.subr.mxu0 0.0
        %2836 = vmatpush1.xpose.msra.mxu0 0.0
        %2837 = vmatprep.subr.mxu0 0.0
        %2838 = vmatpush1.xpose.msra.mxu0 0.0
        %2839 = vmatprep.subr.mxu0 0.0
        %2840 = vmatpush1.xpose.msra.mxu0 0.0
        %2841 = vmatprep.subr.mxu0 0.0
        %2842 = vmatpush1.xpose.msra.mxu0 0.0
        %2843 = vmatprep.subr.mxu0 0.0
        %2844 = vmatpush1.xpose.msra.mxu0 0.0
        %2845 = vmatprep.subr.mxu0 0.0
        %2846 = vmatpush1.xpose.msra.mxu0 0.0
        %2847 = vmatprep.subr.mxu0 0.0
        %2848 = vmatpush1.xpose.msra.mxu0 0.0
        %2849 = vmatprep.subr.mxu0 0.0
        %2850 = vmatpush1.xpose.msra.mxu0 0.0
        %2851 = vmatprep.subr.mxu0 0.0
        %2852 = vmatpush1.xpose.msra.mxu0 0.0
        %2853 = vmatprep.subr.mxu0 0.0
        %2854 = vmatpush1.xpose.msra.mxu0 0.0
        %2855 = vmatprep.subr.mxu0 0.0
        %2856 = vmatpush1.xpose.msra.mxu0 0.0
        %2857 = vmatprep.subr.mxu0 0.0
        %2858 = vmatpush1.xpose.msra.mxu0 0.0
        %2859 = vmatprep.subr.mxu0 0.0
        %2860 = vmatpush1.xpose.msra.mxu0 0.0
        %2861 = vmatprep.subr.mxu0 0.0
        %2862 = vmatpush1.xpose.msra.mxu0 0.0
        %2863 = vmatprep.subr.mxu0 0.0
        %2864 = vmatpush1.xpose.msra.mxu0 0.0
        %2865 = vmatprep.mubr.f32.mxu0 0.0
        %2866 = vmatmul.mubr.f32.gmra.mrb[0].mxu0 %v2797
        %v2867 = vpop.f32.mrb[0].mxu0
        %v2868 = vadd.f32 0.0, %v2867
        %v2869 = vpop.f32.mrb[0].mxu0
        %2870 = vdwg.mxu0
        %v2871 = vsel %vm1032, %v2868, -inf
        %2872 = vmax.xlane.f32.xlu0 %v2871
        %v2873 = vpop.xlane.xlu0 %2872
        %v2874 = vsub.f32 %v2868, %v2873
        %v2875 = vmul.f32 %v2874, 1.442695
        %v2876 = vpow.pop %v2875
        %v2877 = vsel %vm1032, %v2876, 0.0
        %2878 = vadd.xlane.f32.xlu0 %v2877
        %v2879 = vpop.xlane.xlu0 %2878
        %v2880 = vrcp.pop %v2879
        %v2881 = vmul.f32 %v2876, %v2880
        %2882 = vrot.lane.b32.xlu0 %v2315, 48
        %v2883 = vpop.permute.xlu0 %2882
        %v2886 = vsel %vm1032, %v2881, 0
        %2888 = vmatprep.subr.mxu0 0.0
        %2889 = vmatpush1.msra.mxu0 %v2883
        %2890 = vmatprep.subr.mxu0 0.0
        %2891 = vmatpush1.msra.mxu0 0.0
        %2892 = vmatprep.subr.mxu0 0.0
        %2893 = vmatpush1.msra.mxu0 0.0
        %2894 = vmatprep.subr.mxu0 0.0
        %2895 = vmatpush1.msra.mxu0 0.0
        %2896 = vmatprep.subr.mxu0 0.0
        %2897 = vmatpush1.msra.mxu0 0.0
        %2898 = vmatprep.subr.mxu0 0.0
        %2899 = vmatpush1.msra.mxu0 0.0
        %2900 = vmatprep.subr.mxu0 0.0
        %2901 = vmatpush1.msra.mxu0 0.0
        %2902 = vmatprep.subr.mxu0 0.0
        %2903 = vmatpush1.msra.mxu0 0.0
        %2904 = vmatprep.subr.mxu0 0.0
        %2905 = vmatpush1.msra.mxu0 0.0
        %2906 = vmatprep.subr.mxu0 0.0
        %2907 = vmatpush1.msra.mxu0 0.0
        %2908 = vmatprep.subr.mxu0 0.0
        %2909 = vmatpush1.msra.mxu0 0.0
        %2910 = vmatprep.subr.mxu0 0.0
        %2911 = vmatpush1.msra.mxu0 0.0
        %2912 = vmatprep.subr.mxu0 0.0
        %2913 = vmatpush1.msra.mxu0 0.0
        %2914 = vmatprep.subr.mxu0 0.0
        %2915 = vmatpush1.msra.mxu0 0.0
        %2916 = vmatprep.subr.mxu0 0.0
        %2917 = vmatpush1.msra.mxu0 0.0
        %2918 = vmatprep.subr.mxu0 0.0
        %2919 = vmatpush1.msra.mxu0 0.0
        %2920 = vmatprep.subr.mxu0 0.0
        %2921 = vmatpush1.msra.mxu0 0.0
        %2922 = vmatprep.subr.mxu0 0.0
        %2923 = vmatpush1.msra.mxu0 0.0
        %2924 = vmatprep.subr.mxu0 0.0
        %2925 = vmatpush1.msra.mxu0 0.0
        %2926 = vmatprep.subr.mxu0 0.0
        %2927 = vmatpush1.msra.mxu0 0.0
        %2928 = vmatprep.subr.mxu0 0.0
        %2929 = vmatpush1.msra.mxu0 0.0
        %2930 = vmatprep.subr.mxu0 0.0
        %2931 = vmatpush1.msra.mxu0 0.0
        %2932 = vmatprep.subr.mxu0 0.0
        %2933 = vmatpush1.msra.mxu0 0.0
        %2934 = vmatprep.subr.mxu0 0.0
        %2935 = vmatpush1.msra.mxu0 0.0
        %2936 = vmatprep.subr.mxu0 0.0
        %2937 = vmatpush1.msra.mxu0 0.0
        %2938 = vmatprep.subr.mxu0 0.0
        %2939 = vmatpush1.msra.mxu0 0.0
        %2940 = vmatprep.subr.mxu0 0.0
        %2941 = vmatpush1.msra.mxu0 0.0
        %2942 = vmatprep.subr.mxu0 0.0
        %2943 = vmatpush1.msra.mxu0 0.0
        %2944 = vmatprep.subr.mxu0 0.0
        %2945 = vmatpush1.msra.mxu0 0.0
        %2946 = vmatprep.subr.mxu0 0.0
        %2947 = vmatpush1.msra.mxu0 0.0
        %2948 = vmatprep.subr.mxu0 0.0
        %2949 = vmatpush1.msra.mxu0 0.0
        %2950 = vmatprep.subr.mxu0 0.0
        %2951 = vmatpush1.msra.mxu0 0.0
        %2952 = vmatprep.mubr.f32.mxu0 0.0
        %2953 = vmatmul.mubr.f32.gmra.mrb[0].mxu0 %v2886
        %v2954 = vpop.f32.mrb[0].mxu0
        %v2955 = vadd.f32 0.0, %v2954
        %v2956 = vpop.f32.mrb[0].mxu0
        %2957 = vdwg.mxu0
        %v2959 = vsel %vm1032, %v2955, 0
        %2961 = vmatprep.subr.mxu0 0.0
        %2962 = vmatpush1.msra.mxu0 %v2206
        %2963 = vmatprep.subr.mxu0 0.0
        %2964 = vmatpush1.msra.mxu0 0.0
        %2965 = vmatprep.subr.mxu0 0.0
        %2966 = vmatpush1.msra.mxu0 0.0
        %2967 = vmatprep.subr.mxu0 0.0
        %2968 = vmatpush1.msra.mxu0 0.0
        %2969 = vmatprep.subr.mxu0 0.0
        %2970 = vmatpush1.msra.mxu0 0.0
        %2971 = vmatprep.subr.mxu0 0.0
        %2972 = vmatpush1.msra.mxu0 0.0
        %2973 = vmatprep.subr.mxu0 0.0
        %2974 = vmatpush1.msra.mxu0 0.0
        %2975 = vmatprep.subr.mxu0 0.0
        %2976 = vmatpush1.msra.mxu0 0.0
        %2977 = vmatprep.subr.mxu0 0.0
        %2978 = vmatpush1.msra.mxu0 0.0
        %2979 = vmatprep.subr.mxu0 0.0
        %2980 = vmatpush1.msra.mxu0 0.0
        %2981 = vmatprep.subr.mxu0 0.0
        %2982 = vmatpush1.msra.mxu0 0.0
        %2983 = vmatprep.subr.mxu0 0.0
        %2984 = vmatpush1.msra.mxu0 0.0
        %2985 = vmatprep.subr.mxu0 0.0
        %2986 = vmatpush1.msra.mxu0 0.0
        %2987 = vmatprep.subr.mxu0 0.0
        %2988 = vmatpush1.msra.mxu0 0.0
        %2989 = vmatprep.subr.mxu0 0.0
        %2990 = vmatpush1.msra.mxu0 0.0
        %2991 = vmatprep.subr.mxu0 0.0
        %2992 = vmatpush1.msra.mxu0 0.0
        %2993 = vmatprep.subr.mxu0 0.0
        %2994 = vmatpush1.msra.mxu0 0.0
        %2995 = vmatprep.subr.mxu0 0.0
        %2996 = vmatpush1.msra.mxu0 0.0
        %2997 = vmatprep.subr.mxu0 0.0
        %2998 = vmatpush1.msra.mxu0 0.0
        %2999 = vmatprep.subr.mxu0 0.0
        %3000 = vmatpush1.msra.mxu0 0.0
        %3001 = vmatprep.subr.mxu0 0.0
        %3002 = vmatpush1.msra.mxu0 0.0
        %3003 = vmatprep.subr.mxu0 0.0
        %3004 = vmatpush1.msra.mxu0 0.0
        %3005 = vmatprep.subr.mxu0 0.0
        %3006 = vmatpush1.msra.mxu0 0.0
        %3007 = vmatprep.subr.mxu0 0.0
        %3008 = vmatpush1.msra.mxu0 0.0
        %3009 = vmatprep.subr.mxu0 0.0
        %3010 = vmatpush1.msra.mxu0 0.0
        %3011 = vmatprep.subr.mxu0 0.0
        %3012 = vmatpush1.msra.mxu0 0.0
        %3013 = vmatprep.subr.mxu0 0.0
        %3014 = vmatpush1.msra.mxu0 0.0
        %3015 = vmatprep.subr.mxu0 0.0
        %3016 = vmatpush1.msra.mxu0 0.0
        %3017 = vmatprep.subr.mxu0 0.0
        %3018 = vmatpush1.msra.mxu0 0.0
        %3019 = vmatprep.subr.mxu0 0.0
        %3020 = vmatpush1.msra.mxu0 0.0
        %3021 = vmatprep.subr.mxu0 0.0
        %3022 = vmatpush1.msra.mxu0 0.0
        %3023 = vmatprep.subr.mxu0 0.0
        %3024 = vmatpush1.msra.mxu0 0.0
        %3025 = vmatprep.mubr.f32.mxu0 0.0
        %3026 = vmatmul.mubr.f32.gmra.mrb[0].mxu0 %v2959
        %v3027 = vpop.f32.mrb[0].mxu0
        %v3028 = vadd.f32 0.0, %v3027
        %v3029 = vpop.f32.mrb[0].mxu0
        %3030 = vdwg.mxu0
        %v3031 = vadd.f32 %v2790, %v3028
        %3032 = vrot.lane.b32.xlu0 %v2297, 104
        %v3033 = vpop.permute.xlu0 %3032
        %3034 = vrot.lane.b32.xlu0 %v2306, 72
        %v3035 = vpop.permute.xlu0 %3034
        %v3036 = vsel %vm1032, %v3033, 0
        %v3038 = vsel %vm1032, %v3035, 0
        %3040 = vmatprep.subr.mxu0 0.0
        %3041 = vmatpush1.xpose.msra.mxu0 %v3038
        %3042 = vmatprep.subr.mxu0 0.0
        %3043 = vmatpush1.xpose.msra.mxu0 0.0
        %3044 = vmatprep.subr.mxu0 0.0
        %3045 = vmatpush1.xpose.msra.mxu0 0.0
        %3046 = vmatprep.subr.mxu0 0.0
        %3047 = vmatpush1.xpose.msra.mxu0 0.0
        %3048 = vmatprep.subr.mxu0 0.0
        %3049 = vmatpush1.xpose.msra.mxu0 0.0
        %3050 = vmatprep.subr.mxu0 0.0
        %3051 = vmatpush1.xpose.msra.mxu0 0.0
        %3052 = vmatprep.subr.mxu0 0.0
        %3053 = vmatpush1.xpose.msra.mxu0 0.0
        %3054 = vmatprep.subr.mxu0 0.0
        %3055 = vmatpush1.xpose.msra.mxu0 0.0
        %3056 = vmatprep.subr.mxu0 0.0
        %3057 = vmatpush1.xpose.msra.mxu0 0.0
        %3058 = vmatprep.subr.mxu0 0.0
        %3059 = vmatpush1.xpose.msra.mxu0 0.0
        %3060 = vmatprep.subr.mxu0 0.0
        %3061 = vmatpush1.xpose.msra.mxu0 0.0
        %3062 = vmatprep.subr.mxu0 0.0
        %3063 = vmatpush1.xpose.msra.mxu0 0.0
        %3064 = vmatprep.subr.mxu0 0.0
        %3065 = vmatpush1.xpose.msra.mxu0 0.0
        %3066 = vmatprep.subr.mxu0 0.0
        %3067 = vmatpush1.xpose.msra.mxu0 0.0
        %3068 = vmatprep.subr.mxu0 0.0
        %3069 = vmatpush1.xpose.msra.mxu0 0.0
        %3070 = vmatprep.subr.mxu0 0.0
        %3071 = vmatpush1.xpose.msra.mxu0 0.0
        %3072 = vmatprep.subr.mxu0 0.0
        %3073 = vmatpush1.xpose.msra.mxu0 0.0
        %3074 = vmatprep.subr.mxu0 0.0
        %3075 = vmatpush1.xpose.msra.mxu0 0.0
        %3076 = vmatprep.subr.mxu0 0.0
        %3077 = vmatpush1.xpose.msra.mxu0 0.0
        %3078 = vmatprep.subr.mxu0 0.0
        %3079 = vmatpush1.xpose.msra.mxu0 0.0
        %3080 = vmatprep.subr.mxu0 0.0
        %3081 = vmatpush1.xpose.msra.mxu0 0.0
        %3082 = vmatprep.subr.mxu0 0.0
        %3083 = vmatpush1.xpose.msra.mxu0 0.0
        %3084 = vmatprep.subr.mxu0 0.0
        %3085 = vmatpush1.xpose.msra.mxu0 0.0
        %3086 = vmatprep.subr.mxu0 0.0
        %3087 = vmatpush1.xpose.msra.mxu0 0.0
        %3088 = vmatprep.subr.mxu0 0.0
        %3089 = vmatpush1.xpose.msra.mxu0 0.0
        %3090 = vmatprep.subr.mxu0 0.0
        %3091 = vmatpush1.xpose.msra.mxu0 0.0
        %3092 = vmatprep.subr.mxu0 0.0
        %3093 = vmatpush1.xpose.msra.mxu0 0.0
        %3094 = vmatprep.subr.mxu0 0.0
        %3095 = vmatpush1.xpose.msra.mxu0 0.0
        %3096 = vmatprep.subr.mxu0 0.0
        %3097 = vmatpush1.xpose.msra.mxu0 0.0
        %3098 = vmatprep.subr.mxu0 0.0
        %3099 = vmatpush1.xpose.msra.mxu0 0.0
        %3100 = vmatprep.subr.mxu0 0.0
        %3101 = vmatpush1.xpose.msra.mxu0 0.0
        %3102 = vmatprep.subr.mxu0 0.0
        %3103 = vmatpush1.xpose.msra.mxu0 0.0
        %3104 = vmatprep.mubr.f32.mxu0 0.0
        %3105 = vmatmul.mubr.f32.gmra.mrb[0].mxu0 %v3036
        %v3106 = vpop.f32.mrb[0].mxu0
        %v3107 = vadd.f32 0.0, %v3106
        %v3108 = vpop.f32.mrb[0].mxu0
        %3109 = vdwg.mxu0
        %v3110 = vsel %vm1032, %v3107, -inf
        %3111 = vmax.xlane.f32.xlu0 %v3110
        %v3112 = vpop.xlane.xlu0 %3111
        %v3113 = vsub.f32 %v3107, %v3112
        %v3114 = vmul.f32 %v3113, 1.442695
        %v3115 = vpow.pop %v3114
        %v3116 = vsel %vm1032, %v3115, 0.0
        %3117 = vadd.xlane.f32.xlu0 %v3116
        %v3118 = vpop.xlane.xlu0 %3117
        %v3119 = vrcp.pop %v3118
        %v3120 = vmul.f32 %v3115, %v3119
        %3121 = vrot.lane.b32.xlu0 %v2315, 40
        %v3122 = vpop.permute.xlu0 %3121
        %v3125 = vsel %vm1032, %v3120, 0
        %3127 = vmatprep.subr.mxu0 0.0
        %3128 = vmatpush1.msra.mxu0 %v3122
        %3129 = vmatprep.subr.mxu0 0.0
        %3130 = vmatpush1.msra.mxu0 0.0
        %3131 = vmatprep.subr.mxu0 0.0
        %3132 = vmatpush1.msra.mxu0 0.0
        %3133 = vmatprep.subr.mxu0 0.0
        %3134 = vmatpush1.msra.mxu0 0.0
        %3135 = vmatprep.subr.mxu0 0.0
        %3136 = vmatpush1.msra.mxu0 0.0
        %3137 = vmatprep.subr.mxu0 0.0
        %3138 = vmatpush1.msra.mxu0 0.0
        %3139 = vmatprep.subr.mxu0 0.0
        %3140 = vmatpush1.msra.mxu0 0.0
        %3141 = vmatprep.subr.mxu0 0.0
        %3142 = vmatpush1.msra.mxu0 0.0
        %3143 = vmatprep.subr.mxu0 0.0
        %3144 = vmatpush1.msra.mxu0 0.0
        %3145 = vmatprep.subr.mxu0 0.0
        %3146 = vmatpush1.msra.mxu0 0.0
        %3147 = vmatprep.subr.mxu0 0.0
        %3148 = vmatpush1.msra.mxu0 0.0
        %3149 = vmatprep.subr.mxu0 0.0
        %3150 = vmatpush1.msra.mxu0 0.0
        %3151 = vmatprep.subr.mxu0 0.0
        %3152 = vmatpush1.msra.mxu0 0.0
        %3153 = vmatprep.subr.mxu0 0.0
        %3154 = vmatpush1.msra.mxu0 0.0
        %3155 = vmatprep.subr.mxu0 0.0
        %3156 = vmatpush1.msra.mxu0 0.0
        %3157 = vmatprep.subr.mxu0 0.0
        %3158 = vmatpush1.msra.mxu0 0.0
        %3159 = vmatprep.subr.mxu0 0.0
        %3160 = vmatpush1.msra.mxu0 0.0
        %3161 = vmatprep.subr.mxu0 0.0
        %3162 = vmatpush1.msra.mxu0 0.0
        %3163 = vmatprep.subr.mxu0 0.0
        %3164 = vmatpush1.msra.mxu0 0.0
        %3165 = vmatprep.subr.mxu0 0.0
        %3166 = vmatpush1.msra.mxu0 0.0
        %3167 = vmatprep.subr.mxu0 0.0
        %3168 = vmatpush1.msra.mxu0 0.0
        %3169 = vmatprep.subr.mxu0 0.0
        %3170 = vmatpush1.msra.mxu0 0.0
        %3171 = vmatprep.subr.mxu0 0.0
        %3172 = vmatpush1.msra.mxu0 0.0
        %3173 = vmatprep.subr.mxu0 0.0
        %3174 = vmatpush1.msra.mxu0 0.0
        %3175 = vmatprep.subr.mxu0 0.0
        %3176 = vmatpush1.msra.mxu0 0.0
        %3177 = vmatprep.subr.mxu0 0.0
        %3178 = vmatpush1.msra.mxu0 0.0
        %3179 = vmatprep.subr.mxu0 0.0
        %3180 = vmatpush1.msra.mxu0 0.0
        %3181 = vmatprep.subr.mxu0 0.0
        %3182 = vmatpush1.msra.mxu0 0.0
        %3183 = vmatprep.subr.mxu0 0.0
        %3184 = vmatpush1.msra.mxu0 0.0
        %3185 = vmatprep.subr.mxu0 0.0
        %3186 = vmatpush1.msra.mxu0 0.0
        %3187 = vmatprep.subr.mxu0 0.0
        %3188 = vmatpush1.msra.mxu0 0.0
        %3189 = vmatprep.subr.mxu0 0.0
        %3190 = vmatpush1.msra.mxu0 0.0
        %3191 = vmatprep.mubr.f32.mxu0 0.0
        %3192 = vmatmul.mubr.f32.gmra.mrb[0].mxu0 %v3125
        %v3193 = vpop.f32.mrb[0].mxu0
        %v3194 = vadd.f32 0.0, %v3193
        %v3195 = vpop.f32.mrb[0].mxu0
        %3196 = vdwg.mxu0
        %v3198 = vsel %vm1032, %v3194, 0
        %3200 = vmatprep.subr.mxu0 0.0
        %3201 = vmatpush1.msra.mxu0 %v2207
        %3202 = vmatprep.subr.mxu0 0.0
        %3203 = vmatpush1.msra.mxu0 0.0
        %3204 = vmatprep.subr.mxu0 0.0
        %3205 = vmatpush1.msra.mxu0 0.0
        %3206 = vmatprep.subr.mxu0 0.0
        %3207 = vmatpush1.msra.mxu0 0.0
        %3208 = vmatprep.subr.mxu0 0.0
        %3209 = vmatpush1.msra.mxu0 0.0
        %3210 = vmatprep.subr.mxu0 0.0
        %3211 = vmatpush1.msra.mxu0 0.0
        %3212 = vmatprep.subr.mxu0 0.0
        %3213 = vmatpush1.msra.mxu0 0.0
        %3214 = vmatprep.subr.mxu0 0.0
        %3215 = vmatpush1.msra.mxu0 0.0
        %3216 = vmatprep.subr.mxu0 0.0
        %3217 = vmatpush1.msra.mxu0 0.0
        %3218 = vmatprep.subr.mxu0 0.0
        %3219 = vmatpush1.msra.mxu0 0.0
        %3220 = vmatprep.subr.mxu0 0.0
        %3221 = vmatpush1.msra.mxu0 0.0
        %3222 = vmatprep.subr.mxu0 0.0
        %3223 = vmatpush1.msra.mxu0 0.0
        %3224 = vmatprep.subr.mxu0 0.0
        %3225 = vmatpush1.msra.mxu0 0.0
        %3226 = vmatprep.subr.mxu0 0.0
        %3227 = vmatpush1.msra.mxu0 0.0
        %3228 = vmatprep.subr.mxu0 0.0
        %3229 = vmatpush1.msra.mxu0 0.0
        %3230 = vmatprep.subr.mxu0 0.0
        %3231 = vmatpush1.msra.mxu0 0.0
        %3232 = vmatprep.subr.mxu0 0.0
        %3233 = vmatpush1.msra.mxu0 0.0
        %3234 = vmatprep.subr.mxu0 0.0
        %3235 = vmatpush1.msra.mxu0 0.0
        %3236 = vmatprep.subr.mxu0 0.0
        %3237 = vmatpush1.msra.mxu0 0.0
        %3238 = vmatprep.subr.mxu0 0.0
        %3239 = vmatpush1.msra.mxu0 0.0
        %3240 = vmatprep.subr.mxu0 0.0
        %3241 = vmatpush1.msra.mxu0 0.0
        %3242 = vmatprep.subr.mxu0 0.0
        %3243 = vmatpush1.msra.mxu0 0.0
        %3244 = vmatprep.subr.mxu0 0.0
        %3245 = vmatpush1.msra.mxu0 0.0
        %3246 = vmatprep.subr.mxu0 0.0
        %3247 = vmatpush1.msra.mxu0 0.0
        %3248 = vmatprep.subr.mxu0 0.0
        %3249 = vmatpush1.msra.mxu0 0.0
        %3250 = vmatprep.subr.mxu0 0.0
        %3251 = vmatpush1.msra.mxu0 0.0
        %3252 = vmatprep.subr.mxu0 0.0
        %3253 = vmatpush1.msra.mxu0 0.0
        %3254 = vmatprep.subr.mxu0 0.0
        %3255 = vmatpush1.msra.mxu0 0.0
        %3256 = vmatprep.subr.mxu0 0.0
        %3257 = vmatpush1.msra.mxu0 0.0
        %3258 = vmatprep.subr.mxu0 0.0
        %3259 = vmatpush1.msra.mxu0 0.0
        %3260 = vmatprep.subr.mxu0 0.0
        %3261 = vmatpush1.msra.mxu0 0.0
        %3262 = vmatprep.subr.mxu0 0.0
        %3263 = vmatpush1.msra.mxu0 0.0
        %3264 = vmatprep.mubr.f32.mxu0 0.0
        %3265 = vmatmul.mubr.f32.gmra.mrb[0].mxu0 %v3198
        %v3266 = vpop.f32.mrb[0].mxu0
        %v3267 = vadd.f32 0.0, %v3266
        %v3268 = vpop.f32.mrb[0].mxu0
        %3269 = vdwg.mxu0
        %v3270 = vadd.f32 %v3031, %v3267
        %v3271 = vlaneseq
        %v3272 = vshrl.u32 %v3271, 7
        %v3273 = vsub.s32 3, %v3272
        %v3274 = vrot.slane %v2217, %v3273
        %v3275 = vadd.f32 %v3270, %v3274
        %v3276 = vadd.f32 %v2197, %v3275
        %v3277 = vsel %vm931, %v3276, 0.0
        %3278 = vadd.xlane.f32.xlu0 %v3277
        %v3279 = vpop.xlane.xlu0 %3278
        %v3280 = vmul.f32 %v3279, %v1994
        %v3281 = vsub.f32 %v3276, %v3280
        %v3282 = vmul.f32 %v3281, %v3281
        %v3283 = vsel %vm931, %v3282, 0.0
        %3284 = vadd.xlane.f32.xlu0 %v3283
        %v3285 = vpop.xlane.xlu0 %3284
        %v3286 = vmul.f32 %v3285, %v1994
        %v3287 = vadd.f32 %v3286, 1e-05
        %v3288 = vrsqrt.pop %v3287
        %v3289 = vmul.f32 %v3281, %v3288
        %v3290 = vlaneseq
        %v3291 = vshrl.u32 %v3290, 7
        %v3292 = vsub.s32 4, %v3291
        %v3293 = vrot.slane %v2217, %v3292
        %v3294 = vmul.f32 %v3289, %v3293
        %v3295 = vlaneseq
        %v3296 = vshrl.u32 %v3295, 7
        %v3297 = vsub.s32 5, %v3296
        %v3298 = vrot.slane %v2217, %v3297
        %v3299 = vadd.f32 %v3294, %v3298
        %v3300 = vlaneseq
        %v3301 = vshrl.u32 %v3300, 7
        %v3302 = vsub.s32 6, %v3301
        %v3303 = vrot.slane %v2217, %v3302
        %v3305 = vsel %vm931, %v3299, 0
        %3307 = vmatprep.subr.mxu0 0.0
        %3308 = vmatpush1.msra.mxu0 %v2208
        %3309 = vmatprep.subr.mxu0 0.0
        %3310 = vmatpush1.msra.mxu0 %v2209
        %3311 = vmatprep.subr.mxu0 0.0
        %3312 = vmatpush1.msra.mxu0 %v2210
        %3313 = vmatprep.subr.mxu0 0.0
        %3314 = vmatpush1.msra.mxu0 %v2211
        %3315 = vmatprep.subr.mxu0 0.0
        %3316 = vmatpush1.msra.mxu0 0.0
        %3317 = vmatprep.subr.mxu0 0.0
        %3318 = vmatpush1.msra.mxu0 0.0
        %3319 = vmatprep.subr.mxu0 0.0
        %3320 = vmatpush1.msra.mxu0 0.0
        %3321 = vmatprep.subr.mxu0 0.0
        %3322 = vmatpush1.msra.mxu0 0.0
        %3323 = vmatprep.subr.mxu0 0.0
        %3324 = vmatpush1.msra.mxu0 0.0
        %3325 = vmatprep.subr.mxu0 0.0
        %3326 = vmatpush1.msra.mxu0 0.0
        %3327 = vmatprep.subr.mxu0 0.0
        %3328 = vmatpush1.msra.mxu0 0.0
        %3329 = vmatprep.subr.mxu0 0.0
        %3330 = vmatpush1.msra.mxu0 0.0
        %3331 = vmatprep.subr.mxu0 0.0
        %3332 = vmatpush1.msra.mxu0 0.0
        %3333 = vmatprep.subr.mxu0 0.0
        %3334 = vmatpush1.msra.mxu0 0.0
        %3335 = vmatprep.subr.mxu0 0.0
        %3336 = vmatpush1.msra.mxu0 0.0
        %3337 = vmatprep.subr.mxu0 0.0
        %3338 = vmatpush1.msra.mxu0 0.0
        %3339 = vmatprep.subr.mxu0 0.0
        %3340 = vmatpush1.msra.mxu0 0.0
        %3341 = vmatprep.subr.mxu0 0.0
        %3342 = vmatpush1.msra.mxu0 0.0
        %3343 = vmatprep.subr.mxu0 0.0
        %3344 = vmatpush1.msra.mxu0 0.0
        %3345 = vmatprep.subr.mxu0 0.0
        %3346 = vmatpush1.msra.mxu0 0.0
        %3347 = vmatprep.subr.mxu0 0.0
        %3348 = vmatpush1.msra.mxu0 0.0
        %3349 = vmatprep.subr.mxu0 0.0
        %3350 = vmatpush1.msra.mxu0 0.0
        %3351 = vmatprep.subr.mxu0 0.0
        %3352 = vmatpush1.msra.mxu0 0.0
        %3353 = vmatprep.subr.mxu0 0.0
        %3354 = vmatpush1.msra.mxu0 0.0
        %3355 = vmatprep.subr.mxu0 0.0
        %3356 = vmatpush1.msra.mxu0 0.0
        %3357 = vmatprep.subr.mxu0 0.0
        %3358 = vmatpush1.msra.mxu0 0.0
        %3359 = vmatprep.subr.mxu0 0.0
        %3360 = vmatpush1.msra.mxu0 0.0
        %3361 = vmatprep.subr.mxu0 0.0
        %3362 = vmatpush1.msra.mxu0 0.0
        %3363 = vmatprep.subr.mxu0 0.0
        %3364 = vmatpush1.msra.mxu0 0.0
        %3365 = vmatprep.subr.mxu0 0.0
        %3366 = vmatpush1.msra.mxu0 0.0
        %3367 = vmatprep.subr.mxu0 0.0
        %3368 = vmatpush1.msra.mxu0 0.0
        %3369 = vmatprep.subr.mxu0 0.0
        %3370 = vmatpush1.msra.mxu0 0.0
        %3371 = vmatprep.mubr.f32.mxu0 0.0
        %3372 = vmatmul.mubr.f32.gmra.mrb[0].mxu0 %v3305
        %v3373 = vpop.f32.mrb[0].mxu0
        %v3374 = vadd.f32 %v3303, %v3373
        %v3375 = vpop.f32.mrb[0].mxu0
        %3376 = vdwg.mxu0
        %v3377 = vmul.f32 %v3374, 0.5
        %v3378 = vmul.f32 %v3374, 0.70710677
        %v3379 = verf.f32.pop %v3378
        %v3380 = vadd.f32 %v3379, 1.0
        %v3381 = vmul.f32 %v3377, %v3380
        %v3382 = vlaneseq
        %v3383 = vshrl.u32 %v3382, 7
        %v3384 = vsub.s32 7, %v3383
        %v3385 = vrot.slane %v2217, %v3384
        %v3387 = vsel %vm931, %v3381, 0
        %3389 = vmatprep.subr.mxu0 0.0
        %3390 = vmatpush1.msra.mxu0 %v2212
        %3391 = vmatprep.subr.mxu0 0.0
        %3392 = vmatpush1.msra.mxu0 %v2213
        %3393 = vmatprep.subr.mxu0 0.0
        %3394 = vmatpush1.msra.mxu0 %v2214
        %3395 = vmatprep.subr.mxu0 0.0
        %3396 = vmatpush1.msra.mxu0 %v2215
        %3397 = vmatprep.subr.mxu0 0.0
        %3398 = vmatpush1.msra.mxu0 0.0
        %3399 = vmatprep.subr.mxu0 0.0
        %3400 = vmatpush1.msra.mxu0 0.0
        %3401 = vmatprep.subr.mxu0 0.0
        %3402 = vmatpush1.msra.mxu0 0.0
        %3403 = vmatprep.subr.mxu0 0.0
        %3404 = vmatpush1.msra.mxu0 0.0
        %3405 = vmatprep.subr.mxu0 0.0
        %3406 = vmatpush1.msra.mxu0 0.0
        %3407 = vmatprep.subr.mxu0 0.0
        %3408 = vmatpush1.msra.mxu0 0.0
        %3409 = vmatprep.subr.mxu0 0.0
        %3410 = vmatpush1.msra.mxu0 0.0
        %3411 = vmatprep.subr.mxu0 0.0
        %3412 = vmatpush1.msra.mxu0 0.0
        %3413 = vmatprep.subr.mxu0 0.0
        %3414 = vmatpush1.msra.mxu0 0.0
        %3415 = vmatprep.subr.mxu0 0.0
        %3416 = vmatpush1.msra.mxu0 0.0
        %3417 = vmatprep.subr.mxu0 0.0
        %3418 = vmatpush1.msra.mxu0 0.0
        %3419 = vmatprep.subr.mxu0 0.0
        %3420 = vmatpush1.msra.mxu0 0.0
        %3421 = vmatprep.subr.mxu0 0.0
        %3422 = vmatpush1.msra.mxu0 0.0
        %3423 = vmatprep.subr.mxu0 0.0
        %3424 = vmatpush1.msra.mxu0 0.0
        %3425 = vmatprep.subr.mxu0 0.0
        %3426 = vmatpush1.msra.mxu0 0.0
        %3427 = vmatprep.subr.mxu0 0.0
        %3428 = vmatpush1.msra.mxu0 0.0
        %3429 = vmatprep.subr.mxu0 0.0
        %3430 = vmatpush1.msra.mxu0 0.0
        %3431 = vmatprep.subr.mxu0 0.0
        %3432 = vmatpush1.msra.mxu0 0.0
        %3433 = vmatprep.subr.mxu0 0.0
        %3434 = vmatpush1.msra.mxu0 0.0
        %3435 = vmatprep.subr.mxu0 0.0
        %3436 = vmatpush1.msra.mxu0 0.0
        %3437 = vmatprep.subr.mxu0 0.0
        %3438 = vmatpush1.msra.mxu0 0.0
        %3439 = vmatprep.subr.mxu0 0.0
        %3440 = vmatpush1.msra.mxu0 0.0
        %3441 = vmatprep.subr.mxu0 0.0
        %3442 = vmatpush1.msra.mxu0 0.0
        %3443 = vmatprep.subr.mxu0 0.0
        %3444 = vmatpush1.msra.mxu0 0.0
        %3445 = vmatprep.subr.mxu0 0.0
        %3446 = vmatpush1.msra.mxu0 0.0
        %3447 = vmatprep.subr.mxu0 0.0
        %3448 = vmatpush1.msra.mxu0 0.0
        %3449 = vmatprep.subr.mxu0 0.0
        %3450 = vmatpush1.msra.mxu0 0.0
        %3451 = vmatprep.subr.mxu0 0.0
        %3452 = vmatpush1.msra.mxu0 0.0
        %3453 = vmatprep.mubr.f32.mxu0 0.0
        %3454 = vmatmul.mubr.f32.gmra.mrb[0].mxu0 %v3387
        %v3455 = vpop.f32.mrb[0].mxu0
        %v3456 = vadd.f32 %v3385, %v3455
        %v3457 = vpop.f32.mrb[0].mxu0
        %3458 = vdwg.mxu0
        %v3459 = vadd.f32 %v3299, %v3456
        %v3460 = vsel %vm931, %v3459, 0.0
        %3461 = vadd.xlane.f32.xlu0 %v3460
        %v3462 = vpop.xlane.xlu0 %3461
        %v3463 = vmul.f32 %v3462, %v1994
        %v3464 = vsub.f32 %v3459, %v3463
        %v3465 = vmul.f32 %v3464, %v3464
        %v3466 = vsel %vm931, %v3465, 0.0
        %3467 = vadd.xlane.f32.xlu0 %v3466
        %v3468 = vpop.xlane.xlu0 %3467
        %v3469 = vmul.f32 %v3468, %v1994
        %v3470 = vadd.f32 %v3469, 1e-05
        %v3471 = vrsqrt.pop %v3470
        %v3472 = vmul.f32 %v3464, %v3471
        %v3473 = vlaneseq
        %v3474 = vshrl.u32 %v3473, 7
        %v3475 = vsub.s32 0, %v3474
        %v3476 = vrot.slane %v2218, %v3475
        %v3477 = vmul.f32 %v3472, %v3476
        %v3478 = vlaneseq
        %v3479 = vshrl.u32 %v3478, 7
        %v3480 = vsub.s32 1, %v3479
        %v3481 = vrot.slane %v2218, %v3480
        %v3482 = vadd.f32 %v3477, %v3481
        %v3483 = vsel %vm931, %v3482, 0.0
        %3484 = vadd.xlane.f32.xlu0 %v3483
        %v3485 = vpop.xlane.xlu0 %3484
        %v3486 = vmul.f32 %v3485, %v1994
        %v3487 = vsub.f32 %v3482, %v3486
        %v3488 = vmul.f32 %v3487, %v3487
        %v3489 = vsel %vm931, %v3488, 0.0
        %3490 = vadd.xlane.f32.xlu0 %v3489
        %v3491 = vpop.xlane.xlu0 %3490
        %v3492 = vmul.f32 %v3491, %v1994
        %v3493 = vadd.f32 %v3492, 1e-05
        %v3494 = vrsqrt.pop %v3493
        %v3495 = vmul.f32 %v3487, %v3494
        %v3496 = vlaneseq
        %v3497 = vshrl.u32 %v3496, 7
        %v3498 = vsub.s32 1, %v3497
        %v3499 = vrot.slane %v828, %v3498
        %v3500 = vmul.f32 %v3495, %v3499
        %v3501 = vlaneseq
        %v3502 = vshrl.u32 %v3501, 7
        %v3503 = vsub.s32 2, %v3502
        %v3504 = vrot.slane %v828, %v3503
        %v3505 = vadd.f32 %v3500, %v3504
        %v3506 = vsel %vm931, %v3505, 0.0
        %v3507 = vrot.slane %v3506, 4
        %v3508 = vadd.f32 %v3506, %v3507
        %v3509 = vrot.slane %v3508, 2
        %v3510 = vadd.f32 %v3508, %v3509
        %v3511 = vrot.slane %v3510, 1
        %v3512 = vadd.f32 %v3510, %v3511
        %v3513 = vrcp.pop 8.0
        %v3514 = vmul.f32 %v3512, %v3513
        %v3515 = vld [vmem:[%s822] sm:$0xff]
        %v3516 = vld [vmem:[#allocation7] sm:$0x7]
        %v3517 = vld [vmem:[#allocation5] sm:$0xff]
        %v3518 = vld [vmem:[#allocation5 + $0x8] sm:$0x7f]
        %v3519 = vlaneseq
        %v3520 = vshrl.u32 %v3519, 7
        %v3521 = vsub.s32 0, %v3520
        %v3522 = vrot.slane %v3516, %v3521
        %vm3523 = vcmask 121856
        %v3525 = vsel %vm3523, %v3515, 0
        %vm3527 = vcmask 1046528
        %v3529 = vsel %vm3527, %v3518, 0
        %3531 = vmatprep.subr.mxu0 0.0
        %3532 = vmatpush1.msra.mxu0 %v3517
        %3533 = vmatprep.subr.mxu0 0.0
        %3534 = vmatpush1.msra.mxu0 %v3529
        %3535 = vmatprep.subr.mxu0 0.0
        %3536 = vmatpush1.msra.mxu0 0.0
        %3537 = vmatprep.subr.mxu0 0.0
        %3538 = vmatpush1.msra.mxu0 0.0
        %3539 = vmatprep.subr.mxu0 0.0
        %3540 = vmatpush1.msra.mxu0 0.0
        %3541 = vmatprep.subr.mxu0 0.0
        %3542 = vmatpush1.msra.mxu0 0.0
        %3543 = vmatprep.subr.mxu0 0.0
        %3544 = vmatpush1.msra.mxu0 0.0
        %3545 = vmatprep.subr.mxu0 0.0
        %3546 = vmatpush1.msra.mxu0 0.0
        %3547 = vmatprep.subr.mxu0 0.0
        %3548 = vmatpush1.msra.mxu0 0.0
        %3549 = vmatprep.subr.mxu0 0.0
        %3550 = vmatpush1.msra.mxu0 0.0
        %3551 = vmatprep.subr.mxu0 0.0
        %3552 = vmatpush1.msra.mxu0 0.0
        %3553 = vmatprep.subr.mxu0 0.0
        %3554 = vmatpush1.msra.mxu0 0.0
        %3555 = vmatprep.subr.mxu0 0.0
        %3556 = vmatpush1.msra.mxu0 0.0
        %3557 = vmatprep.subr.mxu0 0.0
        %3558 = vmatpush1.msra.mxu0 0.0
        %3559 = vmatprep.subr.mxu0 0.0
        %3560 = vmatpush1.msra.mxu0 0.0
        %3561 = vmatprep.subr.mxu0 0.0
        %3562 = vmatpush1.msra.mxu0 0.0
        %3563 = vmatprep.subr.mxu0 0.0
        %3564 = vmatpush1.msra.mxu0 0.0
        %3565 = vmatprep.subr.mxu0 0.0
        %3566 = vmatpush1.msra.mxu0 0.0
        %3567 = vmatprep.subr.mxu0 0.0
        %3568 = vmatpush1.msra.mxu0 0.0
        %3569 = vmatprep.subr.mxu0 0.0
        %3570 = vmatpush1.msra.mxu0 0.0
        %3571 = vmatprep.subr.mxu0 0.0
        %3572 = vmatpush1.msra.mxu0 0.0
        %3573 = vmatprep.subr.mxu0 0.0
        %3574 = vmatpush1.msra.mxu0 0.0
        %3575 = vmatprep.subr.mxu0 0.0
        %3576 = vmatpush1.msra.mxu0 0.0
        %3577 = vmatprep.subr.mxu0 0.0
        %3578 = vmatpush1.msra.mxu0 0.0
        %3579 = vmatprep.subr.mxu0 0.0
        %3580 = vmatpush1.msra.mxu0 0.0
        %3581 = vmatprep.subr.mxu0 0.0
        %3582 = vmatpush1.msra.mxu0 0.0
        %3583 = vmatprep.subr.mxu0 0.0
        %3584 = vmatpush1.msra.mxu0 0.0
        %3585 = vmatprep.subr.mxu0 0.0
        %3586 = vmatpush1.msra.mxu0 0.0
        %3587 = vmatprep.subr.mxu0 0.0
        %3588 = vmatpush1.msra.mxu0 0.0
        %3589 = vmatprep.subr.mxu0 0.0
        %3590 = vmatpush1.msra.mxu0 0.0
        %3591 = vmatprep.subr.mxu0 0.0
        %3592 = vmatpush1.msra.mxu0 0.0
        %3593 = vmatprep.subr.mxu0 0.0
        %3594 = vmatpush1.msra.mxu0 0.0
        %3595 = vmatprep.mubr.f32.mxu0 0.0
        %3596 = vmatmul.mubr.f32.gmra.mrb[0].mxu0 %v3525
        %v3597 = vpop.f32.mrb[0].mxu0
        %v3598 = vadd.f32 %v3522, %v3597
        %v3599 = vpop.f32.mrb[0].mxu0
        %3600 = vdwg.mxu0
        %v3601 = vmax.f32 %v3598, 0.0
        %v3602 = vld [vmem:[#allocation8] sm:$0xff]
        %v3603 = vld [vmem:[#allocation8 + $0x8] sm:$0xff]
        %v3604 = vld [vmem:[#allocation10] sm:$0xff]
        %v3605 = vld [vmem:[#allocation10 + $0x8] sm:$0xff]
        %v3606 = vld [vmem:[#allocation10 + $0x10] sm:$0xff]
        %v3607 = vld [vmem:[#allocation10 + $0x18] sm:$0xff]
        %v3608 = vld [vmem:[#allocation10 + $0x20] sm:$0xff]
        %v3609 = vld [vmem:[#allocation10 + $0x28] sm:$0xff]
        %v3610 = vld [vmem:[#allocation11] sm:$0xff]
        %v3611 = vld [vmem:[#allocation11 + $0x8] sm:$0x3]
        %vm3612 = vcmask 130048
        %v3614 = vsel %vm3612, %v3601, 0
        %3616 = vmatprep.subr.mxu0 0.0
        %3617 = vmatpush1.msra.mxu0 %v3602
        %3618 = vmatprep.subr.mxu0 0.0
        %3619 = vmatpush1.msra.mxu0 %v3603
        %3620 = vmatprep.subr.mxu0 0.0
        %3621 = vmatpush1.msra.mxu0 0.0
        %3622 = vmatprep.subr.mxu0 0.0
        %3623 = vmatpush1.msra.mxu0 0.0
        %3624 = vmatprep.subr.mxu0 0.0
        %3625 = vmatpush1.msra.mxu0 0.0
        %3626 = vmatprep.subr.mxu0 0.0
        %3627 = vmatpush1.msra.mxu0 0.0
        %3628 = vmatprep.subr.mxu0 0.0
        %3629 = vmatpush1.msra.mxu0 0.0
        %3630 = vmatprep.subr.mxu0 0.0
        %3631 = vmatpush1.msra.mxu0 0.0
        %3632 = vmatprep.subr.mxu0 0.0
        %3633 = vmatpush1.msra.mxu0 0.0
        %3634 = vmatprep.subr.mxu0 0.0
        %3635 = vmatpush1.msra.mxu0 0.0
        %3636 = vmatprep.subr.mxu0 0.0
        %3637 = vmatpush1.msra.mxu0 0.0
        %3638 = vmatprep.subr.mxu0 0.0
        %3639 = vmatpush1.msra.mxu0 0.0
        %3640 = vmatprep.subr.mxu0 0.0
        %3641 = vmatpush1.msra.mxu0 0.0
        %3642 = vmatprep.subr.mxu0 0.0
        %3643 = vmatpush1.msra.mxu0 0.0
        %3644 = vmatprep.subr.mxu0 0.0
        %3645 = vmatpush1.msra.mxu0 0.0
        %3646 = vmatprep.subr.mxu0 0.0
        %3647 = vmatpush1.msra.mxu0 0.0
        %3648 = vmatprep.subr.mxu0 0.0
        %3649 = vmatpush1.msra.mxu0 0.0
        %3650 = vmatprep.subr.mxu0 0.0
        %3651 = vmatpush1.msra.mxu0 0.0
        %3652 = vmatprep.subr.mxu0 0.0
        %3653 = vmatpush1.msra.mxu0 0.0
        %3654 = vmatprep.subr.mxu0 0.0
        %3655 = vmatpush1.msra.mxu0 0.0
        %3656 = vmatprep.subr.mxu0 0.0
        %3657 = vmatpush1.msra.mxu0 0.0
        %3658 = vmatprep.subr.mxu0 0.0
        %3659 = vmatpush1.msra.mxu0 0.0
        %3660 = vmatprep.subr.mxu0 0.0
        %3661 = vmatpush1.msra.mxu0 0.0
        %3662 = vmatprep.subr.mxu0 0.0
        %3663 = vmatpush1.msra.mxu0 0.0
        %3664 = vmatprep.subr.mxu0 0.0
        %3665 = vmatpush1.msra.mxu0 0.0
        %3666 = vmatprep.subr.mxu0 0.0
        %3667 = vmatpush1.msra.mxu0 0.0
        %3668 = vmatprep.subr.mxu0 0.0
        %3669 = vmatpush1.msra.mxu0 0.0
        %3670 = vmatprep.subr.mxu0 0.0
        %3671 = vmatpush1.msra.mxu0 0.0
        %3672 = vmatprep.subr.mxu0 0.0
        %3673 = vmatpush1.msra.mxu0 0.0
        %3674 = vmatprep.subr.mxu0 0.0
        %3675 = vmatpush1.msra.mxu0 0.0
        %3676 = vmatprep.subr.mxu0 0.0
        %3677 = vmatpush1.msra.mxu0 0.0
        %3678 = vmatprep.subr.mxu0 0.0
        %3679 = vmatpush1.msra.mxu0 0.0
        %3680 = vmatprep.mubr.f32.mxu0 0.0
        %3681 = vmatmul.mubr.f32.gmra.mrb[0].mxu0 %v3614
        %v3682 = vpop.f32.mrb[0].mxu0
        %v3683 = vadd.f32 0.0, %v3682
        %v3684 = vpop.f32.mrb[0].mxu0
        %3685 = vdwg.mxu0
        %v3686 = vlaneseq
        %v3687 = vshrl.u32 %v3686, 7
        %v3688 = vsub.s32 0, %v3687
        %v3689 = vrot.slane %v3610, %v3688
        %v3690 = vadd.f32 %v3683, %v3689
        %v3691 = vmul.f32 %v3690, 0.35355338
        %v3692 = vlaneseq
        %v3693 = vshrl.u32 %v3692, 7
        %v3694 = vsub.s32 1, %v3693
        %v3695 = vrot.slane %v3610, %v3694
        %3697 = vrot.lane.b32.xlu0 %v3695, 16
        %v3698 = vpop.permute.xlu0 %3697
        %v3700 = vadd.f32 %v3683, %v3698
        %v3701 = vlaneseq
        %v3702 = vshrl.u32 %v3701, 7
        %v3703 = vsub.s32 2, %v3702
        %v3704 = vrot.slane %v3610, %v3703
        %3706 = vrot.lane.b32.xlu0 %v3704, 32
        %v3707 = vpop.permute.xlu0 %3706
        %v3709 = vadd.f32 %v3683, %v3707
        %3711 = vrot.lane.b32.xlu0 %v3700, 112
        %v3712 = vpop.permute.xlu0 %3711
        %v3714 = vsel %vm1032, %v3691, 0
        %v3716 = vsel %vm1032, %v3712, 0
        %3718 = vmatprep.subr.mxu0 0.0
        %3719 = vmatpush1.xpose.msra.mxu0 %v3716
        %3720 = vmatprep.subr.mxu0 0.0
        %3721 = vmatpush1.xpose.msra.mxu0 0.0
        %3722 = vmatprep.subr.mxu0 0.0
        %3723 = vmatpush1.xpose.msra.mxu0 0.0
        %3724 = vmatprep.subr.mxu0 0.0
        %3725 = vmatpush1.xpose.msra.mxu0 0.0
        %3726 = vmatprep.subr.mxu0 0.0
        %3727 = vmatpush1.xpose.msra.mxu0 0.0
        %3728 = vmatprep.subr.mxu0 0.0
        %3729 = vmatpush1.xpose.msra.mxu0 0.0
        %3730 = vmatprep.subr.mxu0 0.0
        %3731 = vmatpush1.xpose.msra.mxu0 0.0
        %3732 = vmatprep.subr.mxu0 0.0
        %3733 = vmatpush1.xpose.msra.mxu0 0.0
        %3734 = vmatprep.subr.mxu0 0.0
        %3735 = vmatpush1.xpose.msra.mxu0 0.0
        %3736 = vmatprep.subr.mxu0 0.0
        %3737 = vmatpush1.xpose.msra.mxu0 0.0
        %3738 = vmatprep.subr.mxu0 0.0
        %3739 = vmatpush1.xpose.msra.mxu0 0.0
        %3740 = vmatprep.subr.mxu0 0.0
        %3741 = vmatpush1.xpose.msra.mxu0 0.0
        %3742 = vmatprep.subr.mxu0 0.0
        %3743 = vmatpush1.xpose.msra.mxu0 0.0
        %3744 = vmatprep.subr.mxu0 0.0
        %3745 = vmatpush1.xpose.msra.mxu0 0.0
        %3746 = vmatprep.subr.mxu0 0.0
        %3747 = vmatpush1.xpose.msra.mxu0 0.0
        %3748 = vmatprep.subr.mxu0 0.0
        %3749 = vmatpush1.xpose.msra.mxu0 0.0
        %3750 = vmatprep.subr.mxu0 0.0
        %3751 = vmatpush1.xpose.msra.mxu0 0.0
        %3752 = vmatprep.subr.mxu0 0.0
        %3753 = vmatpush1.xpose.msra.mxu0 0.0
        %3754 = vmatprep.subr.mxu0 0.0
        %3755 = vmatpush1.xpose.msra.mxu0 0.0
        %3756 = vmatprep.subr.mxu0 0.0
        %3757 = vmatpush1.xpose.msra.mxu0 0.0
        %3758 = vmatprep.subr.mxu0 0.0
        %3759 = vmatpush1.xpose.msra.mxu0 0.0
        %3760 = vmatprep.subr.mxu0 0.0
        %3761 = vmatpush1.xpose.msra.mxu0 0.0
        %3762 = vmatprep.subr.mxu0 0.0
        %3763 = vmatpush1.xpose.msra.mxu0 0.0
        %3764 = vmatprep.subr.mxu0 0.0
        %3765 = vmatpush1.xpose.msra.mxu0 0.0
        %3766 = vmatprep.subr.mxu0 0.0
        %3767 = vmatpush1.xpose.msra.mxu0 0.0
        %3768 = vmatprep.subr.mxu0 0.0
        %3769 = vmatpush1.xpose.msra.mxu0 0.0
        %3770 = vmatprep.subr.mxu0 0.0
        %3771 = vmatpush1.xpose.msra.mxu0 0.0
        %3772 = vmatprep.subr.mxu0 0.0
        %3773 = vmatpush1.xpose.msra.mxu0 0.0
        %3774 = vmatprep.subr.mxu0 0.0
        %3775 = vmatpush1.xpose.msra.mxu0 0.0
        %3776 = vmatprep.subr.mxu0 0.0
        %3777 = vmatpush1.xpose.msra.mxu0 0.0
        %3778 = vmatprep.subr.mxu0 0.0
        %3779 = vmatpush1.xpose.msra.mxu0 0.0
        %3780 = vmatprep.subr.mxu0 0.0
        %3781 = vmatpush1.xpose.msra.mxu0 0.0
        %3782 = vmatprep.mubr.f32.mxu0 0.0
        %3783 = vmatmul.mubr.f32.gmra.mrb[0].mxu0 %v3714
        %v3784 = vpop.f32.mrb[0].mxu0
        %v3785 = vadd.f32 0.0, %v3784
        %v3786 = vpop.f32.mrb[0].mxu0
        %3787 = vdwg.mxu0
        %v3788 = vsel %vm1032, %v3785, -inf
        %3789 = vmax.xlane.f32.xlu0 %v3788
        %v3790 = vpop.xlane.xlu0 %3789
        %v3791 = vsub.f32 %v3785, %v3790
        %v3792 = vmul.f32 %v3791, 1.442695
        %v3793 = vpow.pop %v3792
        %v3794 = vsel %vm1032, %v3793, 0.0
        %3795 = vadd.xlane.f32.xlu0 %v3794
        %v3796 = vpop.xlane.xlu0 %3795
        %v3797 = vrcp.pop %v3796
        %v3798 = vmul.f32 %v3793, %v3797
        %3800 = vrot.lane.b32.xlu0 %v3709, 96
        %v3801 = vpop.permute.xlu0 %3800
        %v3804 = vsel %vm1032, %v3798, 0
        %3806 = vmatprep.subr.mxu0 0.0
        %3807 = vmatpush1.msra.mxu0 %v3801
        %3808 = vmatprep.subr.mxu0 0.0
        %3809 = vmatpush1.msra.mxu0 0.0
        %3810 = vmatprep.subr.mxu0 0.0
        %3811 = vmatpush1.msra.mxu0 0.0
        %3812 = vmatprep.subr.mxu0 0.0
        %3813 = vmatpush1.msra.mxu0 0.0
        %3814 = vmatprep.subr.mxu0 0.0
        %3815 = vmatpush1.msra.mxu0 0.0
        %3816 = vmatprep.subr.mxu0 0.0
        %3817 = vmatpush1.msra.mxu0 0.0
        %3818 = vmatprep.subr.mxu0 0.0
        %3819 = vmatpush1.msra.mxu0 0.0
        %3820 = vmatprep.subr.mxu0 0.0
        %3821 = vmatpush1.msra.mxu0 0.0
        %3822 = vmatprep.subr.mxu0 0.0
        %3823 = vmatpush1.msra.mxu0 0.0
        %3824 = vmatprep.subr.mxu0 0.0
        %3825 = vmatpush1.msra.mxu0 0.0
        %3826 = vmatprep.subr.mxu0 0.0
        %3827 = vmatpush1.msra.mxu0 0.0
        %3828 = vmatprep.subr.mxu0 0.0
        %3829 = vmatpush1.msra.mxu0 0.0
        %3830 = vmatprep.subr.mxu0 0.0
        %3831 = vmatpush1.msra.mxu0 0.0
        %3832 = vmatprep.subr.mxu0 0.0
        %3833 = vmatpush1.msra.mxu0 0.0
        %3834 = vmatprep.subr.mxu0 0.0
        %3835 = vmatpush1.msra.mxu0 0.0
        %3836 = vmatprep.subr.mxu0 0.0
        %3837 = vmatpush1.msra.mxu0 0.0
        %3838 = vmatprep.subr.mxu0 0.0
        %3839 = vmatpush1.msra.mxu0 0.0
        %3840 = vmatprep.subr.mxu0 0.0
        %3841 = vmatpush1.msra.mxu0 0.0
        %3842 = vmatprep.subr.mxu0 0.0
        %3843 = vmatpush1.msra.mxu0 0.0
        %3844 = vmatprep.subr.mxu0 0.0
        %3845 = vmatpush1.msra.mxu0 0.0
        %3846 = vmatprep.subr.mxu0 0.0
        %3847 = vmatpush1.msra.mxu0 0.0
        %3848 = vmatprep.subr.mxu0 0.0
        %3849 = vmatpush1.msra.mxu0 0.0
        %3850 = vmatprep.subr.mxu0 0.0
        %3851 = vmatpush1.msra.mxu0 0.0
        %3852 = vmatprep.subr.mxu0 0.0
        %3853 = vmatpush1.msra.mxu0 0.0
        %3854 = vmatprep.subr.mxu0 0.0
        %3855 = vmatpush1.msra.mxu0 0.0
        %3856 = vmatprep.subr.mxu0 0.0
        %3857 = vmatpush1.msra.mxu0 0.0
        %3858 = vmatprep.subr.mxu0 0.0
        %3859 = vmatpush1.msra.mxu0 0.0
        %3860 = vmatprep.subr.mxu0 0.0
        %3861 = vmatpush1.msra.mxu0 0.0
        %3862 = vmatprep.subr.mxu0 0.0
        %3863 = vmatpush1.msra.mxu0 0.0
        %3864 = vmatprep.subr.mxu0 0.0
        %3865 = vmatpush1.msra.mxu0 0.0
        %3866 = vmatprep.subr.mxu0 0.0
        %3867 = vmatpush1.msra.mxu0 0.0
        %3868 = vmatprep.subr.mxu0 0.0
        %3869 = vmatpush1.msra.mxu0 0.0
        %3870 = vmatprep.mubr.f32.mxu0 0.0
        %3871 = vmatmul.mubr.f32.gmra.mrb[0].mxu0 %v3804
        %v3872 = vpop.f32.mrb[0].mxu0
        %v3873 = vadd.f32 0.0, %v3872
        %v3874 = vpop.f32.mrb[0].mxu0
        %3875 = vdwg.mxu0
        %3876 = vrot.lane.b32.xlu0 %v3691, 120
        %v3877 = vpop.permute.xlu0 %3876
        %3878 = vrot.lane.b32.xlu0 %v3700, 104
        %v3879 = vpop.permute.xlu0 %3878
        %v3880 = vsel %vm1032, %v3877, 0
        %v3882 = vsel %vm1032, %v3879, 0
        %3884 = vmatprep.subr.mxu0 0.0
        %3885 = vmatpush1.xpose.msra.mxu0 %v3882
        %3886 = vmatprep.subr.mxu0 0.0
        %3887 = vmatpush1.xpose.msra.mxu0 0.0
        %3888 = vmatprep.subr.mxu0 0.0
        %3889 = vmatpush1.xpose.msra.mxu0 0.0
        %3890 = vmatprep.subr.mxu0 0.0
        %3891 = vmatpush1.xpose.msra.mxu0 0.0
        %3892 = vmatprep.subr.mxu0 0.0
        %3893 = vmatpush1.xpose.msra.mxu0 0.0
        %3894 = vmatprep.subr.mxu0 0.0
        %3895 = vmatpush1.xpose.msra.mxu0 0.0
        %3896 = vmatprep.subr.mxu0 0.0
        %3897 = vmatpush1.xpose.msra.mxu0 0.0
        %3898 = vmatprep.subr.mxu0 0.0
        %3899 = vmatpush1.xpose.msra.mxu0 0.0
        %3900 = vmatprep.subr.mxu0 0.0
        %3901 = vmatpush1.xpose.msra.mxu0 0.0
        %3902 = vmatprep.subr.mxu0 0.0
        %3903 = vmatpush1.xpose.msra.mxu0 0.0
        %3904 = vmatprep.subr.mxu0 0.0
        %3905 = vmatpush1.xpose.msra.mxu0 0.0
        %3906 = vmatprep.subr.mxu0 0.0
        %3907 = vmatpush1.xpose.msra.mxu0 0.0
        %3908 = vmatprep.subr.mxu0 0.0
        %3909 = vmatpush1.xpose.msra.mxu0 0.0
        %3910 = vmatprep.subr.mxu0 0.0
        %3911 = vmatpush1.xpose.msra.mxu0 0.0
        %3912 = vmatprep.subr.mxu0 0.0
        %3913 = vmatpush1.xpose.msra.mxu0 0.0
        %3914 = vmatprep.subr.mxu0 0.0
        %3915 = vmatpush1.xpose.msra.mxu0 0.0
        %3916 = vmatprep.subr.mxu0 0.0
        %3917 = vmatpush1.xpose.msra.mxu0 0.0
        %3918 = vmatprep.subr.mxu0 0.0
        %3919 = vmatpush1.xpose.msra.mxu0 0.0
        %3920 = vmatprep.subr.mxu0 0.0
        %3921 = vmatpush1.xpose.msra.mxu0 0.0
        %3922 = vmatprep.subr.mxu0 0.0
        %3923 = vmatpush1.xpose.msra.mxu0 0.0
        %3924 = vmatprep.subr.mxu0 0.0
        %3925 = vmatpush1.xpose.msra.mxu0 0.0
        %3926 = vmatprep.subr.mxu0 0.0
        %3927 = vmatpush1.xpose.msra.mxu0 0.0
        %3928 = vmatprep.subr.mxu0 0.0
        %3929 = vmatpush1.xpose.msra.mxu0 0.0
        %3930 = vmatprep.subr.mxu0 0.0
        %3931 = vmatpush1.xpose.msra.mxu0 0.0
        %3932 = vmatprep.subr.mxu0 0.0
        %3933 = vmatpush1.xpose.msra.mxu0 0.0
        %3934 = vmatprep.subr.mxu0 0.0
        %3935 = vmatpush1.xpose.msra.mxu0 0.0
        %3936 = vmatprep.subr.mxu0 0.0
        %3937 = vmatpush1.xpose.msra.mxu0 0.0
        %3938 = vmatprep.subr.mxu0 0.0
        %3939 = vmatpush1.xpose.msra.mxu0 0.0
        %3940 = vmatprep.subr.mxu0 0.0
        %3941 = vmatpush1.xpose.msra.mxu0 0.0
        %3942 = vmatprep.subr.mxu0 0.0
        %3943 = vmatpush1.xpose.msra.mxu0 0.0
        %3944 = vmatprep.subr.mxu0 0.0
        %3945 = vmatpush1.xpose.msra.mxu0 0.0
        %3946 = vmatprep.subr.mxu0 0.0
        %3947 = vmatpush1.xpose.msra.mxu0 0.0
        %3948 = vmatprep.mubr.f32.mxu0 0.0
        %3949 = vmatmul.mubr.f32.gmra.mrb[0].mxu0 %v3880
        %v3950 = vpop.f32.mrb[0].mxu0
        %v3951 = vadd.f32 0.0, %v3950
        %v3952 = vpop.f32.mrb[0].mxu0
        %3953 = vdwg.mxu0
        %v3954 = vsel %vm1032, %v3951, -inf
        %3955 = vmax.xlane.f32.xlu0 %v3954
        %v3956 = vpop.xlane.xlu0 %3955
        %v3957 = vsub.f32 %v3951, %v3956
        %v3958 = vmul.f32 %v3957, 1.442695
        %v3959 = vpow.pop %v3958
        %v3960 = vsel %vm1032, %v3959, 0.0
        %3961 = vadd.xlane.f32.xlu0 %v3960
        %v3962 = vpop.xlane.xlu0 %3961
        %v3963 = vrcp.pop %v3962
        %v3964 = vmul.f32 %v3959, %v3963
        %3965 = vrot.lane.b32.xlu0 %v3709, 88
        %v3966 = vpop.permute.xlu0 %3965
        %v3969 = vsel %vm1032, %v3964, 0
        %3971 = vmatprep.subr.mxu0 0.0
        %3972 = vmatpush1.msra.mxu0 %v3966
        %3973 = vmatprep.subr.mxu0 0.0
        %3974 = vmatpush1.msra.mxu0 0.0
        %3975 = vmatprep.subr.mxu0 0.0
        %3976 = vmatpush1.msra.mxu0 0.0
        %3977 = vmatprep.subr.mxu0 0.0
        %3978 = vmatpush1.msra.mxu0 0.0
        %3979 = vmatprep.subr.mxu0 0.0
        %3980 = vmatpush1.msra.mxu0 0.0
        %3981 = vmatprep.subr.mxu0 0.0
        %3982 = vmatpush1.msra.mxu0 0.0
        %3983 = vmatprep.subr.mxu0 0.0
        %3984 = vmatpush1.msra.mxu0 0.0
        %3985 = vmatprep.subr.mxu0 0.0
        %3986 = vmatpush1.msra.mxu0 0.0
        %3987 = vmatprep.subr.mxu0 0.0
        %3988 = vmatpush1.msra.mxu0 0.0
        %3989 = vmatprep.subr.mxu0 0.0
        %3990 = vmatpush1.msra.mxu0 0.0
        %3991 = vmatprep.subr.mxu0 0.0
        %3992 = vmatpush1.msra.mxu0 0.0
        %3993 = vmatprep.subr.mxu0 0.0
        %3994 = vmatpush1.msra.mxu0 0.0
        %3995 = vmatprep.subr.mxu0 0.0
        %3996 = vmatpush1.msra.mxu0 0.0
        %3997 = vmatprep.subr.mxu0 0.0
        %3998 = vmatpush1.msra.mxu0 0.0
        %3999 = vmatprep.subr.mxu0 0.0
        %4000 = vmatpush1.msra.mxu0 0.0
        %4001 = vmatprep.subr.mxu0 0.0
        %4002 = vmatpush1.msra.mxu0 0.0
        %4003 = vmatprep.subr.mxu0 0.0
        %4004 = vmatpush1.msra.mxu0 0.0
        %4005 = vmatprep.subr.mxu0 0.0
        %4006 = vmatpush1.msra.mxu0 0.0
        %4007 = vmatprep.subr.mxu0 0.0
        %4008 = vmatpush1.msra.mxu0 0.0
        %4009 = vmatprep.subr.mxu0 0.0
        %4010 = vmatpush1.msra.mxu0 0.0
        %4011 = vmatprep.subr.mxu0 0.0
        %4012 = vmatpush1.msra.mxu0 0.0
        %4013 = vmatprep.subr.mxu0 0.0
        %4014 = vmatpush1.msra.mxu0 0.0
        %4015 = vmatprep.subr.mxu0 0.0
        %4016 = vmatpush1.msra.mxu0 0.0
        %4017 = vmatprep.subr.mxu0 0.0
        %4018 = vmatpush1.msra.mxu0 0.0
        %4019 = vmatprep.subr.mxu0 0.0
        %4020 = vmatpush1.msra.mxu0 0.0
        %4021 = vmatprep.subr.mxu0 0.0
        %4022 = vmatpush1.msra.mxu0 0.0
        %4023 = vmatprep.subr.mxu0 0.0
        %4024 = vmatpush1.msra.mxu0 0.0
        %4025 = vmatprep.subr.mxu0 0.0
        %4026 = vmatpush1.msra.mxu0 0.0
        %4027 = vmatprep.subr.mxu0 0.0
        %4028 = vmatpush1.msra.mxu0 0.0
        %4029 = vmatprep.subr.mxu0 0.0
        %4030 = vmatpush1.msra.mxu0 0.0
        %4031 = vmatprep.subr.mxu0 0.0
        %4032 = vmatpush1.msra.mxu0 0.0
        %4033 = vmatprep.subr.mxu0 0.0
        %4034 = vmatpush1.msra.mxu0 0.0
        %4035 = vmatprep.mubr.f32.mxu0 0.0
        %4036 = vmatmul.mubr.f32.gmra.mrb[0].mxu0 %v3969
        %v4037 = vpop.f32.mrb[0].mxu0
        %v4038 = vadd.f32 0.0, %v4037
        %v4039 = vpop.f32.mrb[0].mxu0
        %4040 = vdwg.mxu0
        %v4042 = vsel %vm1032, %v4038, 0
        %4044 = vmatprep.subr.mxu0 0.0
        %4045 = vmatpush1.msra.mxu0 %v3605
        %4046 = vmatprep.subr.mxu0 0.0
        %4047 = vmatpush1.msra.mxu0 0.0
        %4048 = vmatprep.subr.mxu0 0.0
        %4049 = vmatpush1.msra.mxu0 0.0
        %4050 = vmatprep.subr.mxu0 0.0
        %4051 = vmatpush1.msra.mxu0 0.0
        %4052 = vmatprep.subr.mxu0 0.0
        %4053 = vmatpush1.msra.mxu0 0.0
        %4054 = vmatprep.subr.mxu0 0.0
        %4055 = vmatpush1.msra.mxu0 0.0
        %4056 = vmatprep.subr.mxu0 0.0
        %4057 = vmatpush1.msra.mxu0 0.0
        %4058 = vmatprep.subr.mxu0 0.0
        %4059 = vmatpush1.msra.mxu0 0.0
        %4060 = vmatprep.subr.mxu0 0.0
        %4061 = vmatpush1.msra.mxu0 0.0
        %4062 = vmatprep.subr.mxu0 0.0
        %4063 = vmatpush1.msra.mxu0 0.0
        %4064 = vmatprep.subr.mxu0 0.0
        %4065 = vmatpush1.msra.mxu0 0.0
        %4066 = vmatprep.subr.mxu0 0.0
        %4067 = vmatpush1.msra.mxu0 0.0
        %4068 = vmatprep.subr.mxu0 0.0
        %4069 = vmatpush1.msra.mxu0 0.0
        %4070 = vmatprep.subr.mxu0 0.0
        %4071 = vmatpush1.msra.mxu0 0.0
        %4072 = vmatprep.subr.mxu0 0.0
        %4073 = vmatpush1.msra.mxu0 0.0
        %4074 = vmatprep.subr.mxu0 0.0
        %4075 = vmatpush1.msra.mxu0 0.0
        %4076 = vmatprep.subr.mxu0 0.0
        %4077 = vmatpush1.msra.mxu0 0.0
        %4078 = vmatprep.subr.mxu0 0.0
        %4079 = vmatpush1.msra.mxu0 0.0
        %4080 = vmatprep.subr.mxu0 0.0
        %4081 = vmatpush1.msra.mxu0 0.0
        %4082 = vmatprep.subr.mxu0 0.0
        %4083 = vmatpush1.msra.mxu0 0.0
        %4084 = vmatprep.subr.mxu0 0.0
        %4085 = vmatpush1.msra.mxu0 0.0
        %4086 = vmatprep.subr.mxu0 0.0
        %4087 = vmatpush1.msra.mxu0 0.0
        %4088 = vmatprep.subr.mxu0 0.0
        %4089 = vmatpush1.msra.mxu0 0.0
        %4090 = vmatprep.subr.mxu0 0.0
        %4091 = vmatpush1.msra.mxu0 0.0
        %4092 = vmatprep.subr.mxu0 0.0
        %4093 = vmatpush1.msra.mxu0 0.0
        %4094 = vmatprep.subr.mxu0 0.0
        %4095 = vmatpush1.msra.mxu0 0.0
        %4096 = vmatprep.subr.mxu0 0.0
        %4097 = vmatpush1.msra.mxu0 0.0
        %4098 = vmatprep.subr.mxu0 0.0
        %4099 = vmatpush1.msra.mxu0 0.0
        %4100 = vmatprep.subr.mxu0 0.0
        %4101 = vmatpush1.msra.mxu0 0.0
        %4102 = vmatprep.subr.mxu0 0.0
        %4103 = vmatpush1.msra.mxu0 0.0
        %4104 = vmatprep.subr.mxu0 0.0
        %4105 = vmatpush1.msra.mxu0 0.0
        %4106 = vmatprep.subr.mxu0 0.0
        %4107 = vmatpush1.msra.mxu0 0.0
        %4108 = vmatprep.mubr.f32.mxu0 0.0
        %4109 = vmatmul.mubr.f32.gmra.mrb[0].mxu0 %v4042
        %v4110 = vpop.f32.mrb[0].mxu0
        %v4111 = vadd.f32 0.0, %v4110
        %v4112 = vpop.f32.mrb[0].mxu0
        %4113 = vdwg.mxu0
        %v4115 = vsel %vm1032, %v3873, 0
        %4117 = vmatprep.subr.mxu0 0.0
        %4118 = vmatpush1.msra.mxu0 %v3604
        %4119 = vmatprep.subr.mxu0 0.0
        %4120 = vmatpush1.msra.mxu0 0.0
        %4121 = vmatprep.subr.mxu0 0.0
        %4122 = vmatpush1.msra.mxu0 0.0
        %4123 = vmatprep.subr.mxu0 0.0
        %4124 = vmatpush1.msra.mxu0 0.0
        %4125 = vmatprep.subr.mxu0 0.0
        %4126 = vmatpush1.msra.mxu0 0.0
        %4127 = vmatprep.subr.mxu0 0.0
        %4128 = vmatpush1.msra.mxu0 0.0
        %4129 = vmatprep.subr.mxu0 0.0
        %4130 = vmatpush1.msra.mxu0 0.0
        %4131 = vmatprep.subr.mxu0 0.0
        %4132 = vmatpush1.msra.mxu0 0.0
        %4133 = vmatprep.subr.mxu0 0.0
        %4134 = vmatpush1.msra.mxu0 0.0
        %4135 = vmatprep.subr.mxu0 0.0
        %4136 = vmatpush1.msra.mxu0 0.0
        %4137 = vmatprep.subr.mxu0 0.0
        %4138 = vmatpush1.msra.mxu0 0.0
        %4139 = vmatprep.subr.mxu0 0.0
        %4140 = vmatpush1.msra.mxu0 0.0
        %4141 = vmatprep.subr.mxu0 0.0
        %4142 = vmatpush1.msra.mxu0 0.0
        %4143 = vmatprep.subr.mxu0 0.0
        %4144 = vmatpush1.msra.mxu0 0.0
        %4145 = vmatprep.subr.mxu0 0.0
        %4146 = vmatpush1.msra.mxu0 0.0
        %4147 = vmatprep.subr.mxu0 0.0
        %4148 = vmatpush1.msra.mxu0 0.0
        %4149 = vmatprep.subr.mxu0 0.0
        %4150 = vmatpush1.msra.mxu0 0.0
        %4151 = vmatprep.subr.mxu0 0.0
        %4152 = vmatpush1.msra.mxu0 0.0
        %4153 = vmatprep.subr.mxu0 0.0
        %4154 = vmatpush1.msra.mxu0 0.0
        %4155 = vmatprep.subr.mxu0 0.0
        %4156 = vmatpush1.msra.mxu0 0.0
        %4157 = vmatprep.subr.mxu0 0.0
        %4158 = vmatpush1.msra.mxu0 0.0
        %4159 = vmatprep.subr.mxu0 0.0
        %4160 = vmatpush1.msra.mxu0 0.0
        %4161 = vmatprep.subr.mxu0 0.0
        %4162 = vmatpush1.msra.mxu0 0.0
        %4163 = vmatprep.subr.mxu0 0.0
        %4164 = vmatpush1.msra.mxu0 0.0
        %4165 = vmatprep.subr.mxu0 0.0
        %4166 = vmatpush1.msra.mxu0 0.0
        %4167 = vmatprep.subr.mxu0 0.0
        %4168 = vmatpush1.msra.mxu0 0.0
        %4169 = vmatprep.subr.mxu0 0.0
        %4170 = vmatpush1.msra.mxu0 0.0
        %4171 = vmatprep.subr.mxu0 0.0
        %4172 = vmatpush1.msra.mxu0 0.0
        %4173 = vmatprep.subr.mxu0 0.0
        %4174 = vmatpush1.msra.mxu0 0.0
        %4175 = vmatprep.subr.mxu0 0.0
        %4176 = vmatpush1.msra.mxu0 0.0
        %4177 = vmatprep.subr.mxu0 0.0
        %4178 = vmatpush1.msra.mxu0 0.0
        %4179 = vmatprep.subr.mxu0 0.0
        %4180 = vmatpush1.msra.mxu0 0.0
        %4181 = vmatprep.mubr.f32.mxu0 0.0
        %4182 = vmatmul.mubr.f32.gmra.mrb[0].mxu0 %v4115
        %v4183 = vpop.f32.mrb[0].mxu0
        %v4184 = vadd.f32 %v4111, %v4183
        %v4185 = vpop.f32.mrb[0].mxu0
        %4186 = vdwg.mxu0
        %v4187 = vlaneseq
        %v4188 = vshrl.u32 %v4187, 7
        %v4189 = vsub.s32 3, %v4188
        %v4190 = vrot.slane %v3610, %v4189
        %v4191 = vadd.f32 %v4184, %v4190
        %v4192 = vadd.f32 %v3601, %v4191
        %v4193 = vsel %vm3612, %v4192, 0.0
        %4194 = vadd.xlane.f32.xlu0 %v4193
        %v4195 = vpop.xlane.xlu0 %4194
        %v4196 = vrcp.pop 16.0
        %v4197 = vmul.f32 %v4195, %v4196
        %v4198 = vsub.f32 %v4192, %v4197
        %v4199 = vmul.f32 %v4198, %v4198
        %v4200 = vsel %vm3612, %v4199, 0.0
        %4201 = vadd.xlane.f32.xlu0 %v4200
        %v4202 = vpop.xlane.xlu0 %4201
        %v4203 = vmul.f32 %v4202, %v4196
        %v4204 = vadd.f32 %v4203, 1e-05
        %v4205 = vrsqrt.pop %v4204
        %v4206 = vmul.f32 %v4198, %v4205
        %v4207 = vlaneseq
        %v4208 = vshrl.u32 %v4207, 7
        %v4209 = vsub.s32 4, %v4208
        %v4210 = vrot.slane %v3610, %v4209
        %v4211 = vmul.f32 %v4206, %v4210
        %v4212 = vlaneseq
        %v4213 = vshrl.u32 %v4212, 7
        %v4214 = vsub.s32 5, %v4213
        %v4215 = vrot.slane %v3610, %v4214
        %v4216 = vadd.f32 %v4211, %v4215
        %v4217 = vlaneseq
        %v4218 = vshrl.u32 %v4217, 7
        %v4219 = vsub.s32 6, %v4218
        %v4220 = vrot.slane %v3610, %v4219
        %v4222 = vsel %vm3612, %v4216, 0
        %4224 = vmatprep.subr.mxu0 0.0
        %4225 = vmatpush1.msra.mxu0 %v3606
        %4226 = vmatprep.subr.mxu0 0.0
        %4227 = vmatpush1.msra.mxu0 %v3607
        %4228 = vmatprep.subr.mxu0 0.0
        %4229 = vmatpush1.msra.mxu0 0.0
        %4230 = vmatprep.subr.mxu0 0.0
        %4231 = vmatpush1.msra.mxu0 0.0
        %4232 = vmatprep.subr.mxu0 0.0
        %4233 = vmatpush1.msra.mxu0 0.0
        %4234 = vmatprep.subr.mxu0 0.0
        %4235 = vmatpush1.msra.mxu0 0.0
        %4236 = vmatprep.subr.mxu0 0.0
        %4237 = vmatpush1.msra.mxu0 0.0
        %4238 = vmatprep.subr.mxu0 0.0
        %4239 = vmatpush1.msra.mxu0 0.0
        %4240 = vmatprep.subr.mxu0 0.0
        %4241 = vmatpush1.msra.mxu0 0.0
        %4242 = vmatprep.subr.mxu0 0.0
        %4243 = vmatpush1.msra.mxu0 0.0
        %4244 = vmatprep.subr.mxu0 0.0
        %4245 = vmatpush1.msra.mxu0 0.0
        %4246 = vmatprep.subr.mxu0 0.0
        %4247 = vmatpush1.msra.mxu0 0.0
        %4248 = vmatprep.subr.mxu0 0.0
        %4249 = vmatpush1.msra.mxu0 0.0
        %4250 = vmatprep.subr.mxu0 0.0
        %4251 = vmatpush1.msra.mxu0 0.0
        %4252 = vmatprep.subr.mxu0 0.0
        %4253 = vmatpush1.msra.mxu0 0.0
        %4254 = vmatprep.subr.mxu0 0.0
        %4255 = vmatpush1.msra.mxu0 0.0
        %4256 = vmatprep.subr.mxu0 0.0
        %4257 = vmatpush1.msra.mxu0 0.0
        %4258 = vmatprep.subr.mxu0 0.0
        %4259 = vmatpush1.msra.mxu0 0.0
        %4260 = vmatprep.subr.mxu0 0.0
        %4261 = vmatpush1.msra.mxu0 0.0
        %4262 = vmatprep.subr.mxu0 0.0
        %4263 = vmatpush1.msra.mxu0 0.0
        %4264 = vmatprep.subr.mxu0 0.0
        %4265 = vmatpush1.msra.mxu0 0.0
        %4266 = vmatprep.subr.mxu0 0.0
        %4267 = vmatpush1.msra.mxu0 0.0
        %4268 = vmatprep.subr.mxu0 0.0
        %4269 = vmatpush1.msra.mxu0 0.0
        %4270 = vmatprep.subr.mxu0 0.0
        %4271 = vmatpush1.msra.mxu0 0.0
        %4272 = vmatprep.subr.mxu0 0.0
        %4273 = vmatpush1.msra.mxu0 0.0
        %4274 = vmatprep.subr.mxu0 0.0
        %4275 = vmatpush1.msra.mxu0 0.0
        %4276 = vmatprep.subr.mxu0 0.0
        %4277 = vmatpush1.msra.mxu0 0.0
        %4278 = vmatprep.subr.mxu0 0.0
        %4279 = vmatpush1.msra.mxu0 0.0
        %4280 = vmatprep.subr.mxu0 0.0
        %4281 = vmatpush1.msra.mxu0 0.0
        %4282 = vmatprep.subr.mxu0 0.0
        %4283 = vmatpush1.msra.mxu0 0.0
        %4284 = vmatprep.subr.mxu0 0.0
        %4285 = vmatpush1.msra.mxu0 0.0
        %4286 = vmatprep.subr.mxu0 0.0
        %4287 = vmatpush1.msra.mxu0 0.0
        %4288 = vmatprep.mubr.f32.mxu0 0.0
        %4289 = vmatmul.mubr.f32.gmra.mrb[0].mxu0 %v4222
        %v4290 = vpop.f32.mrb[0].mxu0
        %v4291 = vadd.f32 %v4220, %v4290
        %v4292 = vpop.f32.mrb[0].mxu0
        %4293 = vdwg.mxu0
        %v4294 = vmul.f32 %v4291, 0.5
        %v4295 = vmul.f32 %v4291, 0.70710677
        %v4296 = verf.f32.pop %v4295
        %v4297 = vadd.f32 %v4296, 1.0
        %v4298 = vmul.f32 %v4294, %v4297
        %v4299 = vlaneseq
        %v4300 = vshrl.u32 %v4299, 7
        %v4301 = vsub.s32 7, %v4300
        %v4302 = vrot.slane %v3610, %v4301
        %v4304 = vsel %vm3612, %v4298, 0
        %4306 = vmatprep.subr.mxu0 0.0
        %4307 = vmatpush1.msra.mxu0 %v3608
        %4308 = vmatprep.subr.mxu0 0.0
        %4309 = vmatpush1.msra.mxu0 %v3609
        %4310 = vmatprep.subr.mxu0 0.0
        %4311 = vmatpush1.msra.mxu0 0.0
        %4312 = vmatprep.subr.mxu0 0.0
        %4313 = vmatpush1.msra.mxu0 0.0
        %4314 = vmatprep.subr.mxu0 0.0
        %4315 = vmatpush1.msra.mxu0 0.0
        %4316 = vmatprep.subr.mxu0 0.0
        %4317 = vmatpush1.msra.mxu0 0.0
        %4318 = vmatprep.subr.mxu0 0.0
        %4319 = vmatpush1.msra.mxu0 0.0
        %4320 = vmatprep.subr.mxu0 0.0
        %4321 = vmatpush1.msra.mxu0 0.0
        %4322 = vmatprep.subr.mxu0 0.0
        %4323 = vmatpush1.msra.mxu0 0.0
        %4324 = vmatprep.subr.mxu0 0.0
        %4325 = vmatpush1.msra.mxu0 0.0
        %4326 = vmatprep.subr.mxu0 0.0
        %4327 = vmatpush1.msra.mxu0 0.0
        %4328 = vmatprep.subr.mxu0 0.0
        %4329 = vmatpush1.msra.mxu0 0.0
        %4330 = vmatprep.subr.mxu0 0.0
        %4331 = vmatpush1.msra.mxu0 0.0
        %4332 = vmatprep.subr.mxu0 0.0
        %4333 = vmatpush1.msra.mxu0 0.0
        %4334 = vmatprep.subr.mxu0 0.0
        %4335 = vmatpush1.msra.mxu0 0.0
        %4336 = vmatprep.subr.mxu0 0.0
        %4337 = vmatpush1.msra.mxu0 0.0
        %4338 = vmatprep.subr.mxu0 0.0
        %4339 = vmatpush1.msra.mxu0 0.0
        %4340 = vmatprep.subr.mxu0 0.0
        %4341 = vmatpush1.msra.mxu0 0.0
        %4342 = vmatprep.subr.mxu0 0.0
        %4343 = vmatpush1.msra.mxu0 0.0
        %4344 = vmatprep.subr.mxu0 0.0
        %4345 = vmatpush1.msra.mxu0 0.0
        %4346 = vmatprep.subr.mxu0 0.0
        %4347 = vmatpush1.msra.mxu0 0.0
        %4348 = vmatprep.subr.mxu0 0.0
        %4349 = vmatpush1.msra.mxu0 0.0
        %4350 = vmatprep.subr.mxu0 0.0
        %4351 = vmatpush1.msra.mxu0 0.0
        %4352 = vmatprep.subr.mxu0 0.0
        %4353 = vmatpush1.msra.mxu0 0.0
        %4354 = vmatprep.subr.mxu0 0.0
        %4355 = vmatpush1.msra.mxu0 0.0
        %4356 = vmatprep.subr.mxu0 0.0
        %4357 = vmatpush1.msra.mxu0 0.0
        %4358 = vmatprep.subr.mxu0 0.0
        %4359 = vmatpush1.msra.mxu0 0.0
        %4360 = vmatprep.subr.mxu0 0.0
        %4361 = vmatpush1.msra.mxu0 0.0
        %4362 = vmatprep.subr.mxu0 0.0
        %4363 = vmatpush1.msra.mxu0 0.0
        %4364 = vmatprep.subr.mxu0 0.0
        %4365 = vmatpush1.msra.mxu0 0.0
        %4366 = vmatprep.subr.mxu0 0.0
        %4367 = vmatpush1.msra.mxu0 0.0
        %4368 = vmatprep.subr.mxu0 0.0
        %4369 = vmatpush1.msra.mxu0 0.0
        %4370 = vmatprep.mubr.f32.mxu0 0.0
        %4371 = vmatmul.mubr.f32.gmra.mrb[0].mxu0 %v4304
        %v4372 = vpop.f32.mrb[0].mxu0
        %v4373 = vadd.f32 %v4302, %v4372
        %v4374 = vpop.f32.mrb[0].mxu0
        %4375 = vdwg.mxu0
        %v4376 = vadd.f32 %v4216, %v4373
        %v4377 = vsel %vm3612, %v4376, 0.0
        %4378 = vadd.xlane.f32.xlu0 %v4377
        %v4379 = vpop.xlane.xlu0 %4378
        %v4380 = vmul.f32 %v4379, %v4196
        %v4381 = vsub.f32 %v4376, %v4380
        %v4382 = vmul.f32 %v4381, %v4381
        %v4383 = vsel %vm3612, %v4382, 0.0
        %4384 = vadd.xlane.f32.xlu0 %v4383
        %v4385 = vpop.xlane.xlu0 %4384
        %v4386 = vmul.f32 %v4385, %v4196
        %v4387 = vadd.f32 %v4386, 1e-05
        %v4388 = vrsqrt.pop %v4387
        %v4389 = vmul.f32 %v4381, %v4388
        %v4390 = vlaneseq
        %v4391 = vshrl.u32 %v4390, 7
        %v4392 = vsub.s32 0, %v4391
        %v4393 = vrot.slane %v3611, %v4392
        %v4394 = vmul.f32 %v4389, %v4393
        %v4395 = vlaneseq
        %v4396 = vshrl.u32 %v4395, 7
        %v4397 = vsub.s32 1, %v4396
        %v4398 = vrot.slane %v3611, %v4397
        %v4399 = vadd.f32 %v4394, %v4398
        %s4400 = scalar_lea.vmem [#allocation8], 16
        %v4401 = vld [vmem:[%s4400] sm:$0xff]
        %v4402 = vld [vmem:[%s4400 + $0x8] sm:$0xff]
        %s4403 = scalar_lea.vmem [#allocation10], 48
        %v4404 = vld [vmem:[%s4403] sm:$0xff]
        %v4405 = vld [vmem:[%s4403 + $0x8] sm:$0xff]
        %v4406 = vld [vmem:[%s4403 + $0x10] sm:$0xff]
        %v4407 = vld [vmem:[%s4403 + $0x18] sm:$0xff]
        %v4408 = vld [vmem:[%s4403 + $0x20] sm:$0xff]
        %v4409 = vld [vmem:[%s4403 + $0x28] sm:$0xff]
        %s4410 = scalar_lea.vmem [#allocation11], 16
        %v4411 = vld [vmem:[%s4410] sm:$0xff]
        %v4412 = vld [vmem:[%s4410 + $0x8] sm:$0x3]
        %v4414 = vsel %vm3612, %v4399, 0
        %4416 = vmatprep.subr.mxu0 0.0
        %4417 = vmatpush1.msra.mxu0 %v4401
        %4418 = vmatprep.subr.mxu0 0.0
        %4419 = vmatpush1.msra.mxu0 %v4402
        %4420 = vmatprep.subr.mxu0 0.0
        %4421 = vmatpush1.msra.mxu0 0.0
        %4422 = vmatprep.subr.mxu0 0.0
        %4423 = vmatpush1.msra.mxu0 0.0
        %4424 = vmatprep.subr.mxu0 0.0
        %4425 = vmatpush1.msra.mxu0 0.0
        %4426 = vmatprep.subr.mxu0 0.0
        %4427 = vmatpush1.msra.mxu0 0.0
        %4428 = vmatprep.subr.mxu0 0.0
        %4429 = vmatpush1.msra.mxu0 0.0
        %4430 = vmatprep.subr.mxu0 0.0
        %4431 = vmatpush1.msra.mxu0 0.0
        %4432 = vmatprep.subr.mxu0 0.0
        %4433 = vmatpush1.msra.mxu0 0.0
        %4434 = vmatprep.subr.mxu0 0.0
        %4435 = vmatpush1.msra.mxu0 0.0
        %4436 = vmatprep.subr.mxu0 0.0
        %4437 = vmatpush1.msra.mxu0 0.0
        %4438 = vmatprep.subr.mxu0 0.0
        %4439 = vmatpush1.msra.mxu0 0.0
        %4440 = vmatprep.subr.mxu0 0.0
        %4441 = vmatpush1.msra.mxu0 0.0
        %4442 = vmatprep.subr.mxu0 0.0
        %4443 = vmatpush1.msra.mxu0 0.0
        %4444 = vmatprep.subr.mxu0 0.0
        %4445 = vmatpush1.msra.mxu0 0.0
        %4446 = vmatprep.subr.mxu0 0.0
        %4447 = vmatpush1.msra.mxu0 0.0
        %4448 = vmatprep.subr.mxu0 0.0
        %4449 = vmatpush1.msra.mxu0 0.0
        %4450 = vmatprep.subr.mxu0 0.0
        %4451 = vmatpush1.msra.mxu0 0.0
        %4452 = vmatprep.subr.mxu0 0.0
        %4453 = vmatpush1.msra.mxu0 0.0
        %4454 = vmatprep.subr.mxu0 0.0
        %4455 = vmatpush1.msra.mxu0 0.0
        %4456 = vmatprep.subr.mxu0 0.0
        %4457 = vmatpush1.msra.mxu0 0.0
        %4458 = vmatprep.subr.mxu0 0.0
        %4459 = vmatpush1.msra.mxu0 0.0
        %4460 = vmatprep.subr.mxu0 0.0
        %4461 = vmatpush1.msra.mxu0 0.0
        %4462 = vmatprep.subr.mxu0 0.0
        %4463 = vmatpush1.msra.mxu0 0.0
        %4464 = vmatprep.subr.mxu0 0.0
        %4465 = vmatpush1.msra.mxu0 0.0
        %4466 = vmatprep.subr.mxu0 0.0
        %4467 = vmatpush1.msra.mxu0 0.0
        %4468 = vmatprep.subr.mxu0 0.0
        %4469 = vmatpush1.msra.mxu0 0.0
        %4470 = vmatprep.subr.mxu0 0.0
        %4471 = vmatpush1.msra.mxu0 0.0
        %4472 = vmatprep.subr.mxu0 0.0
        %4473 = vmatpush1.msra.mxu0 0.0
        %4474 = vmatprep.subr.mxu0 0.0
        %4475 = vmatpush1.msra.mxu0 0.0
        %4476 = vmatprep.subr.mxu0 0.0
        %4477 = vmatpush1.msra.mxu0 0.0
        %4478 = vmatprep.subr.mxu0 0.0
        %4479 = vmatpush1.msra.mxu0 0.0
        %4480 = vmatprep.mubr.f32.mxu0 0.0
        %4481 = vmatmul.mubr.f32.gmra.mrb[0].mxu0 %v4414
        %v4482 = vpop.f32.mrb[0].mxu0
        %v4483 = vadd.f32 0.0, %v4482
        %v4484 = vpop.f32.mrb[0].mxu0
        %4485 = vdwg.mxu0
        %v4486 = vlaneseq
        %v4487 = vshrl.u32 %v4486, 7
        %v4488 = vsub.s32 0, %v4487
        %v4489 = vrot.slane %v4411, %v4488
        %v4490 = vadd.f32 %v4483, %v4489
        %v4491 = vmul.f32 %v4490, 0.35355338
        %v4492 = vlaneseq
        %v4493 = vshrl.u32 %v4492, 7
        %v4494 = vsub.s32 1, %v4493
        %v4495 = vrot.slane %v4411, %v4494
        %4497 = vrot.lane.b32.xlu0 %v4495, 16
        %v4498 = vpop.permute.xlu0 %4497
        %v4500 = vadd.f32 %v4483, %v4498
        %v4501 = vlaneseq
        %v4502 = vshrl.u32 %v4501, 7
        %v4503 = vsub.s32 2, %v4502
        %v4504 = vrot.slane %v4411, %v4503
        %4506 = vrot.lane.b32.xlu0 %v4504, 32
        %v4507 = vpop.permute.xlu0 %4506
        %v4509 = vadd.f32 %v4483, %v4507
        %4511 = vrot.lane.b32.xlu0 %v4500, 112
        %v4512 = vpop.permute.xlu0 %4511
        %v4514 = vsel %vm1032, %v4491, 0
        %v4516 = vsel %vm1032, %v4512, 0
        %4518 = vmatprep.subr.mxu0 0.0
        %4519 = vmatpush1.xpose.msra.mxu0 %v4516
        %4520 = vmatprep.subr.mxu0 0.0
        %4521 = vmatpush1.xpose.msra.mxu0 0.0
        %4522 = vmatprep.subr.mxu0 0.0
        %4523 = vmatpush1.xpose.msra.mxu0 0.0
        %4524 = vmatprep.subr.mxu0 0.0
        %4525 = vmatpush1.xpose.msra.mxu0 0.0
        %4526 = vmatprep.subr.mxu0 0.0
        %4527 = vmatpush1.xpose.msra.mxu0 0.0
        %4528 = vmatprep.subr.mxu0 0.0
        %4529 = vmatpush1.xpose.msra.mxu0 0.0
        %4530 = vmatprep.subr.mxu0 0.0
        %4531 = vmatpush1.xpose.msra.mxu0 0.0
        %4532 = vmatprep.subr.mxu0 0.0
        %4533 = vmatpush1.xpose.msra.mxu0 0.0
        %4534 = vmatprep.subr.mxu0 0.0
        %4535 = vmatpush1.xpose.msra.mxu0 0.0
        %4536 = vmatprep.subr.mxu0 0.0
        %4537 = vmatpush1.xpose.msra.mxu0 0.0
        %4538 = vmatprep.subr.mxu0 0.0
        %4539 = vmatpush1.xpose.msra.mxu0 0.0
        %4540 = vmatprep.subr.mxu0 0.0
        %4541 = vmatpush1.xpose.msra.mxu0 0.0
        %4542 = vmatprep.subr.mxu0 0.0
        %4543 = vmatpush1.xpose.msra.mxu0 0.0
        %4544 = vmatprep.subr.mxu0 0.0
        %4545 = vmatpush1.xpose.msra.mxu0 0.0
        %4546 = vmatprep.subr.mxu0 0.0
        %4547 = vmatpush1.xpose.msra.mxu0 0.0
        %4548 = vmatprep.subr.mxu0 0.0
        %4549 = vmatpush1.xpose.msra.mxu0 0.0
        %4550 = vmatprep.subr.mxu0 0.0
        %4551 = vmatpush1.xpose.msra.mxu0 0.0
        %4552 = vmatprep.subr.mxu0 0.0
        %4553 = vmatpush1.xpose.msra.mxu0 0.0
        %4554 = vmatprep.subr.mxu0 0.0
        %4555 = vmatpush1.xpose.msra.mxu0 0.0
        %4556 = vmatprep.subr.mxu0 0.0
        %4557 = vmatpush1.xpose.msra.mxu0 0.0
        %4558 = vmatprep.subr.mxu0 0.0
        %4559 = vmatpush1.xpose.msra.mxu0 0.0
        %4560 = vmatprep.subr.mxu0 0.0
        %4561 = vmatpush1.xpose.msra.mxu0 0.0
        %4562 = vmatprep.subr.mxu0 0.0
        %4563 = vmatpush1.xpose.msra.mxu0 0.0
        %4564 = vmatprep.subr.mxu0 0.0
        %4565 = vmatpush1.xpose.msra.mxu0 0.0
        %4566 = vmatprep.subr.mxu0 0.0
        %4567 = vmatpush1.xpose.msra.mxu0 0.0
        %4568 = vmatprep.subr.mxu0 0.0
        %4569 = vmatpush1.xpose.msra.mxu0 0.0
        %4570 = vmatprep.subr.mxu0 0.0
        %4571 = vmatpush1.xpose.msra.mxu0 0.0
        %4572 = vmatprep.subr.mxu0 0.0
        %4573 = vmatpush1.xpose.msra.mxu0 0.0
        %4574 = vmatprep.subr.mxu0 0.0
        %4575 = vmatpush1.xpose.msra.mxu0 0.0
        %4576 = vmatprep.subr.mxu0 0.0
        %4577 = vmatpush1.xpose.msra.mxu0 0.0
        %4578 = vmatprep.subr.mxu0 0.0
        %4579 = vmatpush1.xpose.msra.mxu0 0.0
        %4580 = vmatprep.subr.mxu0 0.0
        %4581 = vmatpush1.xpose.msra.mxu0 0.0
        %4582 = vmatprep.mubr.f32.mxu0 0.0
        %4583 = vmatmul.mubr.f32.gmra.mrb[0].mxu0 %v4514
        %v4584 = vpop.f32.mrb[0].mxu0
        %v4585 = vadd.f32 0.0, %v4584
        %v4586 = vpop.f32.mrb[0].mxu0
        %4587 = vdwg.mxu0
        %v4588 = vsel %vm1032, %v4585, -inf
        %4589 = vmax.xlane.f32.xlu0 %v4588
        %v4590 = vpop.xlane.xlu0 %4589
        %v4591 = vsub.f32 %v4585, %v4590
        %v4592 = vmul.f32 %v4591, 1.442695
        %v4593 = vpow.pop %v4592
        %v4594 = vsel %vm1032, %v4593, 0.0
        %4595 = vadd.xlane.f32.xlu0 %v4594
        %v4596 = vpop.xlane.xlu0 %4595
        %v4597 = vrcp.pop %v4596
        %v4598 = vmul.f32 %v4593, %v4597
        %4600 = vrot.lane.b32.xlu0 %v4509, 96
        %v4601 = vpop.permute.xlu0 %4600
        %v4604 = vsel %vm1032, %v4598, 0
        %4606 = vmatprep.subr.mxu0 0.0
        %4607 = vmatpush1.msra.mxu0 %v4601
        %4608 = vmatprep.subr.mxu0 0.0
        %4609 = vmatpush1.msra.mxu0 0.0
        %4610 = vmatprep.subr.mxu0 0.0
        %4611 = vmatpush1.msra.mxu0 0.0
        %4612 = vmatprep.subr.mxu0 0.0
        %4613 = vmatpush1.msra.mxu0 0.0
        %4614 = vmatprep.subr.mxu0 0.0
        %4615 = vmatpush1.msra.mxu0 0.0
        %4616 = vmatprep.subr.mxu0 0.0
        %4617 = vmatpush1.msra.mxu0 0.0
        %4618 = vmatprep.subr.mxu0 0.0
        %4619 = vmatpush1.msra.mxu0 0.0
        %4620 = vmatprep.subr.mxu0 0.0
        %4621 = vmatpush1.msra.mxu0 0.0
        %4622 = vmatprep.subr.mxu0 0.0
        %4623 = vmatpush1.msra.mxu0 0.0
        %4624 = vmatprep.subr.mxu0 0.0
        %4625 = vmatpush1.msra.mxu0 0.0
        %4626 = vmatprep.subr.mxu0 0.0
        %4627 = vmatpush1.msra.mxu0 0.0
        %4628 = vmatprep.subr.mxu0 0.0
        %4629 = vmatpush1.msra.mxu0 0.0
        %4630 = vmatprep.subr.mxu0 0.0
        %4631 = vmatpush1.msra.mxu0 0.0
        %4632 = vmatprep.subr.mxu0 0.0
        %4633 = vmatpush1.msra.mxu0 0.0
        %4634 = vmatprep.subr.mxu0 0.0
        %4635 = vmatpush1.msra.mxu0 0.0
        %4636 = vmatprep.subr.mxu0 0.0
        %4637 = vmatpush1.msra.mxu0 0.0
        %4638 = vmatprep.subr.mxu0 0.0
        %4639 = vmatpush1.msra.mxu0 0.0
        %4640 = vmatprep.subr.mxu0 0.0
        %4641 = vmatpush1.msra.mxu0 0.0
        %4642 = vmatprep.subr.mxu0 0.0
        %4643 = vmatpush1.msra.mxu0 0.0
        %4644 = vmatprep.subr.mxu0 0.0
        %4645 = vmatpush1.msra.mxu0 0.0
        %4646 = vmatprep.subr.mxu0 0.0
        %4647 = vmatpush1.msra.mxu0 0.0
        %4648 = vmatprep.subr.mxu0 0.0
        %4649 = vmatpush1.msra.mxu0 0.0
        %4650 = vmatprep.subr.mxu0 0.0
        %4651 = vmatpush1.msra.mxu0 0.0
        %4652 = vmatprep.subr.mxu0 0.0
        %4653 = vmatpush1.msra.mxu0 0.0
        %4654 = vmatprep.subr.mxu0 0.0
        %4655 = vmatpush1.msra.mxu0 0.0
        %4656 = vmatprep.subr.mxu0 0.0
        %4657 = vmatpush1.msra.mxu0 0.0
        %4658 = vmatprep.subr.mxu0 0.0
        %4659 = vmatpush1.msra.mxu0 0.0
        %4660 = vmatprep.subr.mxu0 0.0
        %4661 = vmatpush1.msra.mxu0 0.0
        %4662 = vmatprep.subr.mxu0 0.0
        %4663 = vmatpush1.msra.mxu0 0.0
        %4664 = vmatprep.subr.mxu0 0.0
        %4665 = vmatpush1.msra.mxu0 0.0
        %4666 = vmatprep.subr.mxu0 0.0
        %4667 = vmatpush1.msra.mxu0 0.0
        %4668 = vmatprep.subr.mxu0 0.0
        %4669 = vmatpush1.msra.mxu0 0.0
        %4670 = vmatprep.mubr.f32.mxu0 0.0
        %4671 = vmatmul.mubr.f32.gmra.mrb[0].mxu0 %v4604
        %v4672 = vpop.f32.mrb[0].mxu0
        %v4673 = vadd.f32 0.0, %v4672
        %v4674 = vpop.f32.mrb[0].mxu0
        %4675 = vdwg.mxu0
        %4676 = vrot.lane.b32.xlu0 %v4491, 120
        %v4677 = vpop.permute.xlu0 %4676
        %4678 = vrot.lane.b32.xlu0 %v4500, 104
        %v4679 = vpop.permute.xlu0 %4678
        %v4680 = vsel %vm1032, %v4677, 0
        %v4682 = vsel %vm1032, %v4679, 0
        %4684 = vmatprep.subr.mxu0 0.0
        %4685 = vmatpush1.xpose.msra.mxu0 %v4682
        %4686 = vmatprep.subr.mxu0 0.0
        %4687 = vmatpush1.xpose.msra.mxu0 0.0
        %4688 = vmatprep.subr.mxu0 0.0
        %4689 = vmatpush1.xpose.msra.mxu0 0.0
        %4690 = vmatprep.subr.mxu0 0.0
        %4691 = vmatpush1.xpose.msra.mxu0 0.0
        %4692 = vmatprep.subr.mxu0 0.0
        %4693 = vmatpush1.xpose.msra.mxu0 0.0
        %4694 = vmatprep.subr.mxu0 0.0
        %4695 = vmatpush1.xpose.msra.mxu0 0.0
        %4696 = vmatprep.subr.mxu0 0.0
        %4697 = vmatpush1.xpose.msra.mxu0 0.0
        %4698 = vmatprep.subr.mxu0 0.0
        %4699 = vmatpush1.xpose.msra.mxu0 0.0
        %4700 = vmatprep.subr.mxu0 0.0
        %4701 = vmatpush1.xpose.msra.mxu0 0.0
        %4702 = vmatprep.subr.mxu0 0.0
        %4703 = vmatpush1.xpose.msra.mxu0 0.0
        %4704 = vmatprep.subr.mxu0 0.0
        %4705 = vmatpush1.xpose.msra.mxu0 0.0
        %4706 = vmatprep.subr.mxu0 0.0
        %4707 = vmatpush1.xpose.msra.mxu0 0.0
        %4708 = vmatprep.subr.mxu0 0.0
        %4709 = vmatpush1.xpose.msra.mxu0 0.0
        %4710 = vmatprep.subr.mxu0 0.0
        %4711 = vmatpush1.xpose.msra.mxu0 0.0
        %4712 = vmatprep.subr.mxu0 0.0
        %4713 = vmatpush1.xpose.msra.mxu0 0.0
        %4714 = vmatprep.subr.mxu0 0.0
        %4715 = vmatpush1.xpose.msra.mxu0 0.0
        %4716 = vmatprep.subr.mxu0 0.0
        %4717 = vmatpush1.xpose.msra.mxu0 0.0
        %4718 = vmatprep.subr.mxu0 0.0
        %4719 = vmatpush1.xpose.msra.mxu0 0.0
        %4720 = vmatprep.subr.mxu0 0.0
        %4721 = vmatpush1.xpose.msra.mxu0 0.0
        %4722 = vmatprep.subr.mxu0 0.0
        %4723 = vmatpush1.xpose.msra.mxu0 0.0
        %4724 = vmatprep.subr.mxu0 0.0
        %4725 = vmatpush1.xpose.msra.mxu0 0.0
        %4726 = vmatprep.subr.mxu0 0.0
        %4727 = vmatpush1.xpose.msra.mxu0 0.0
        %4728 = vmatprep.subr.mxu0 0.0
        %4729 = vmatpush1.xpose.msra.mxu0 0.0
        %4730 = vmatprep.subr.mxu0 0.0
        %4731 = vmatpush1.xpose.msra.mxu0 0.0
        %4732 = vmatprep.subr.mxu0 0.0
        %4733 = vmatpush1.xpose.msra.mxu0 0.0
        %4734 = vmatprep.subr.mxu0 0.0
        %4735 = vmatpush1.xpose.msra.mxu0 0.0
        %4736 = vmatprep.subr.mxu0 0.0
        %4737 = vmatpush1.xpose.msra.mxu0 0.0
        %4738 = vmatprep.subr.mxu0 0.0
        %4739 = vmatpush1.xpose.msra.mxu0 0.0
        %4740 = vmatprep.subr.mxu0 0.0
        %4741 = vmatpush1.xpose.msra.mxu0 0.0
        %4742 = vmatprep.subr.mxu0 0.0
        %4743 = vmatpush1.xpose.msra.mxu0 0.0
        %4744 = vmatprep.subr.mxu0 0.0
        %4745 = vmatpush1.xpose.msra.mxu0 0.0
        %4746 = vmatprep.subr.mxu0 0.0
        %4747 = vmatpush1.xpose.msra.mxu0 0.0
        %4748 = vmatprep.mubr.f32.mxu0 0.0
        %4749 = vmatmul.mubr.f32.gmra.mrb[0].mxu0 %v4680
        %v4750 = vpop.f32.mrb[0].mxu0
        %v4751 = vadd.f32 0.0, %v4750
        %v4752 = vpop.f32.mrb[0].mxu0
        %4753 = vdwg.mxu0
        %v4754 = vsel %vm1032, %v4751, -inf
        %4755 = vmax.xlane.f32.xlu0 %v4754
        %v4756 = vpop.xlane.xlu0 %4755
        %v4757 = vsub.f32 %v4751, %v4756
        %v4758 = vmul.f32 %v4757, 1.442695
        %v4759 = vpow.pop %v4758
        %v4760 = vsel %vm1032, %v4759, 0.0
        %4761 = vadd.xlane.f32.xlu0 %v4760
        %v4762 = vpop.xlane.xlu0 %4761
        %v4763 = vrcp.pop %v4762
        %v4764 = vmul.f32 %v4759, %v4763
        %4765 = vrot.lane.b32.xlu0 %v4509, 88
        %v4766 = vpop.permute.xlu0 %4765
        %v4769 = vsel %vm1032, %v4764, 0
        %4771 = vmatprep.subr.mxu0 0.0
        %4772 = vmatpush1.msra.mxu0 %v4766
        %4773 = vmatprep.subr.mxu0 0.0
        %4774 = vmatpush1.msra.mxu0 0.0
        %4775 = vmatprep.subr.mxu0 0.0
        %4776 = vmatpush1.msra.mxu0 0.0
        %4777 = vmatprep.subr.mxu0 0.0
        %4778 = vmatpush1.msra.mxu0 0.0
        %4779 = vmatprep.subr.mxu0 0.0
        %4780 = vmatpush1.msra.mxu0 0.0
        %4781 = vmatprep.subr.mxu0 0.0
        %4782 = vmatpush1.msra.mxu0 0.0
        %4783 = vmatprep.subr.mxu0 0.0
        %4784 = vmatpush1.msra.mxu0 0.0
        %4785 = vmatprep.subr.mxu0 0.0
        %4786 = vmatpush1.msra.mxu0 0.0
        %4787 = vmatprep.subr.mxu0 0.0
        %4788 = vmatpush1.msra.mxu0 0.0
        %4789 = vmatprep.subr.mxu0 0.0
        %4790 = vmatpush1.msra.mxu0 0.0
        %4791 = vmatprep.subr.mxu0 0.0
        %4792 = vmatpush1.msra.mxu0 0.0
        %4793 = vmatprep.subr.mxu0 0.0
        %4794 = vmatpush1.msra.mxu0 0.0
        %4795 = vmatprep.subr.mxu0 0.0
        %4796 = vmatpush1.msra.mxu0 0.0
        %4797 = vmatprep.subr.mxu0 0.0
        %4798 = vmatpush1.msra.mxu0 0.0
        %4799 = vmatprep.subr.mxu0 0.0
        %4800 = vmatpush1.msra.mxu0 0.0
        %4801 = vmatprep.subr.mxu0 0.0
        %4802 = vmatpush1.msra.mxu0 0.0
        %4803 = vmatprep.subr.mxu0 0.0
        %4804 = vmatpush1.msra.mxu0 0.0
        %4805 = vmatprep.subr.mxu0 0.0
        %4806 = vmatpush1.msra.mxu0 0.0
        %4807 = vmatprep.subr.mxu0 0.0
        %4808 = vmatpush1.msra.mxu0 0.0
        %4809 = vmatprep.subr.mxu0 0.0
        %4810 = vmatpush1.msra.mxu0 0.0
        %4811 = vmatprep.subr.mxu0 0.0
        %4812 = vmatpush1.msra.mxu0 0.0
        %4813 = vmatprep.subr.mxu0 0.0
        %4814 = vmatpush1.msra.mxu0 0.0
        %4815 = vmatprep.subr.mxu0 0.0
        %4816 = vmatpush1.msra.mxu0 0.0
        %4817 = vmatprep.subr.mxu0 0.0
        %4818 = vmatpush1.msra.mxu0 0.0
        %4819 = vmatprep.subr.mxu0 0.0
        %4820 = vmatpush1.msra.mxu0 0.0
        %4821 = vmatprep.subr.mxu0 0.0
        %4822 = vmatpush1.msra.mxu0 0.0
        %4823 = vmatprep.subr.mxu0 0.0
        %4824 = vmatpush1.msra.mxu0 0.0
        %4825 = vmatprep.subr.mxu0 0.0
        %4826 = vmatpush1.msra.mxu0 0.0
        %4827 = vmatprep.subr.mxu0 0.0
        %4828 = vmatpush1.msra.mxu0 0.0
        %4829 = vmatprep.subr.mxu0 0.0
        %4830 = vmatpush1.msra.mxu0 0.0
        %4831 = vmatprep.subr.mxu0 0.0
        %4832 = vmatpush1.msra.mxu0 0.0
        %4833 = vmatprep.subr.mxu0 0.0
        %4834 = vmatpush1.msra.mxu0 0.0
        %4835 = vmatprep.mubr.f32.mxu0 0.0
        %4836 = vmatmul.mubr.f32.gmra.mrb[0].mxu0 %v4769
        %v4837 = vpop.f32.mrb[0].mxu0
        %v4838 = vadd.f32 0.0, %v4837
        %v4839 = vpop.f32.mrb[0].mxu0
        %4840 = vdwg.mxu0
        %v4842 = vsel %vm1032, %v4838, 0
        %4844 = vmatprep.subr.mxu0 0.0
        %4845 = vmatpush1.msra.mxu0 %v4405
        %4846 = vmatprep.subr.mxu0 0.0
        %4847 = vmatpush1.msra.mxu0 0.0
        %4848 = vmatprep.subr.mxu0 0.0
        %4849 = vmatpush1.msra.mxu0 0.0
        %4850 = vmatprep.subr.mxu0 0.0
        %4851 = vmatpush1.msra.mxu0 0.0
        %4852 = vmatprep.subr.mxu0 0.0
        %4853 = vmatpush1.msra.mxu0 0.0
        %4854 = vmatprep.subr.mxu0 0.0
        %4855 = vmatpush1.msra.mxu0 0.0
        %4856 = vmatprep.subr.mxu0 0.0
        %4857 = vmatpush1.msra.mxu0 0.0
        %4858 = vmatprep.subr.mxu0 0.0
        %4859 = vmatpush1.msra.mxu0 0.0
        %4860 = vmatprep.subr.mxu0 0.0
        %4861 = vmatpush1.msra.mxu0 0.0
        %4862 = vmatprep.subr.mxu0 0.0
        %4863 = vmatpush1.msra.mxu0 0.0
        %4864 = vmatprep.subr.mxu0 0.0
        %4865 = vmatpush1.msra.mxu0 0.0
        %4866 = vmatprep.subr.mxu0 0.0
        %4867 = vmatpush1.msra.mxu0 0.0
        %4868 = vmatprep.subr.mxu0 0.0
        %4869 = vmatpush1.msra.mxu0 0.0
        %4870 = vmatprep.subr.mxu0 0.0
        %4871 = vmatpush1.msra.mxu0 0.0
        %4872 = vmatprep.subr.mxu0 0.0
        %4873 = vmatpush1.msra.mxu0 0.0
        %4874 = vmatprep.subr.mxu0 0.0
        %4875 = vmatpush1.msra.mxu0 0.0
        %4876 = vmatprep.subr.mxu0 0.0
        %4877 = vmatpush1.msra.mxu0 0.0
        %4878 = vmatprep.subr.mxu0 0.0
        %4879 = vmatpush1.msra.mxu0 0.0
        %4880 = vmatprep.subr.mxu0 0.0
        %4881 = vmatpush1.msra.mxu0 0.0
        %4882 = vmatprep.subr.mxu0 0.0
        %4883 = vmatpush1.msra.mxu0 0.0
        %4884 = vmatprep.subr.mxu0 0.0
        %4885 = vmatpush1.msra.mxu0 0.0
        %4886 = vmatprep.subr.mxu0 0.0
        %4887 = vmatpush1.msra.mxu0 0.0
        %4888 = vmatprep.subr.mxu0 0.0
        %4889 = vmatpush1.msra.mxu0 0.0
        %4890 = vmatprep.subr.mxu0 0.0
        %4891 = vmatpush1.msra.mxu0 0.0
        %4892 = vmatprep.subr.mxu0 0.0
        %4893 = vmatpush1.msra.mxu0 0.0
        %4894 = vmatprep.subr.mxu0 0.0
        %4895 = vmatpush1.msra.mxu0 0.0
        %4896 = vmatprep.subr.mxu0 0.0
        %4897 = vmatpush1.msra.mxu0 0.0
        %4898 = vmatprep.subr.mxu0 0.0
        %4899 = vmatpush1.msra.mxu0 0.0
        %4900 = vmatprep.subr.mxu0 0.0
        %4901 = vmatpush1.msra.mxu0 0.0
        %4902 = vmatprep.subr.mxu0 0.0
        %4903 = vmatpush1.msra.mxu0 0.0
        %4904 = vmatprep.subr.mxu0 0.0
        %4905 = vmatpush1.msra.mxu0 0.0
        %4906 = vmatprep.subr.mxu0 0.0
        %4907 = vmatpush1.msra.mxu0 0.0
        %4908 = vmatprep.mubr.f32.mxu0 0.0
        %4909 = vmatmul.mubr.f32.gmra.mrb[0].mxu0 %v4842
        %v4910 = vpop.f32.mrb[0].mxu0
        %v4911 = vadd.f32 0.0, %v4910
        %v4912 = vpop.f32.mrb[0].mxu0
        %4913 = vdwg.mxu0
        %v4915 = vsel %vm1032, %v4673, 0
        %4917 = vmatprep.subr.mxu0 0.0
        %4918 = vmatpush1.msra.mxu0 %v4404
        %4919 = vmatprep.subr.mxu0 0.0
        %4920 = vmatpush1.msra.mxu0 0.0
        %4921 = vmatprep.subr.mxu0 0.0
        %4922 = vmatpush1.msra.mxu0 0.0
        %4923 = vmatprep.subr.mxu0 0.0
        %4924 = vmatpush1.msra.mxu0 0.0
        %4925 = vmatprep.subr.mxu0 0.0
        %4926 = vmatpush1.msra.mxu0 0.0
        %4927 = vmatprep.subr.mxu0 0.0
        %4928 = vmatpush1.msra.mxu0 0.0
        %4929 = vmatprep.subr.mxu0 0.0
        %4930 = vmatpush1.msra.mxu0 0.0
        %4931 = vmatprep.subr.mxu0 0.0
        %4932 = vmatpush1.msra.mxu0 0.0
        %4933 = vmatprep.subr.mxu0 0.0
        %4934 = vmatpush1.msra.mxu0 0.0
        %4935 = vmatprep.subr.mxu0 0.0
        %4936 = vmatpush1.msra.mxu0 0.0
        %4937 = vmatprep.subr.mxu0 0.0
        %4938 = vmatpush1.msra.mxu0 0.0
        %4939 = vmatprep.subr.mxu0 0.0
        %4940 = vmatpush1.msra.mxu0 0.0
        %4941 = vmatprep.subr.mxu0 0.0
        %4942 = vmatpush1.msra.mxu0 0.0
        %4943 = vmatprep.subr.mxu0 0.0
        %4944 = vmatpush1.msra.mxu0 0.0
        %4945 = vmatprep.subr.mxu0 0.0
        %4946 = vmatpush1.msra.mxu0 0.0
        %4947 = vmatprep.subr.mxu0 0.0
        %4948 = vmatpush1.msra.mxu0 0.0
        %4949 = vmatprep.subr.mxu0 0.0
        %4950 = vmatpush1.msra.mxu0 0.0
        %4951 = vmatprep.subr.mxu0 0.0
        %4952 = vmatpush1.msra.mxu0 0.0
        %4953 = vmatprep.subr.mxu0 0.0
        %4954 = vmatpush1.msra.mxu0 0.0
        %4955 = vmatprep.subr.mxu0 0.0
        %4956 = vmatpush1.msra.mxu0 0.0
        %4957 = vmatprep.subr.mxu0 0.0
        %4958 = vmatpush1.msra.mxu0 0.0
        %4959 = vmatprep.subr.mxu0 0.0
        %4960 = vmatpush1.msra.mxu0 0.0
        %4961 = vmatprep.subr.mxu0 0.0
        %4962 = vmatpush1.msra.mxu0 0.0
        %4963 = vmatprep.subr.mxu0 0.0
        %4964 = vmatpush1.msra.mxu0 0.0
        %4965 = vmatprep.subr.mxu0 0.0
        %4966 = vmatpush1.msra.mxu0 0.0
        %4967 = vmatprep.subr.mxu0 0.0
        %4968 = vmatpush1.msra.mxu0 0.0
        %4969 = vmatprep.subr.mxu0 0.0
        %4970 = vmatpush1.msra.mxu0 0.0
        %4971 = vmatprep.subr.mxu0 0.0
        %4972 = vmatpush1.msra.mxu0 0.0
        %4973 = vmatprep.subr.mxu0 0.0
        %4974 = vmatpush1.msra.mxu0 0.0
        %4975 = vmatprep.subr.mxu0 0.0
        %4976 = vmatpush1.msra.mxu0 0.0
        %4977 = vmatprep.subr.mxu0 0.0
        %4978 = vmatpush1.msra.mxu0 0.0
        %4979 = vmatprep.subr.mxu0 0.0
        %4980 = vmatpush1.msra.mxu0 0.0
        %4981 = vmatprep.mubr.f32.mxu0 0.0
        %4982 = vmatmul.mubr.f32.gmra.mrb[0].mxu0 %v4915
        %v4983 = vpop.f32.mrb[0].mxu0
        %v4984 = vadd.f32 %v4911, %v4983
        %v4985 = vpop.f32.mrb[0].mxu0
        %4986 = vdwg.mxu0
        %v4987 = vlaneseq
        %v4988 = vshrl.u32 %v4987, 7
        %v4989 = vsub.s32 3, %v4988
        %v4990 = vrot.slane %v4411, %v4989
        %v4991 = vadd.f32 %v4984, %v4990
        %v4992 = vadd.f32 %v4399, %v4991
        %v4993 = vsel %vm3612, %v4992, 0.0
        %4994 = vadd.xlane.f32.xlu0 %v4993
        %v4995 = vpop.xlane.xlu0 %4994
        %v4996 = vmul.f32 %v4995, %v4196
        %v4997 = vsub.f32 %v4992, %v4996
        %v4998 = vmul.f32 %v4997, %v4997
        %v4999 = vsel %vm3612, %v4998, 0.0
        %5000 = vadd.xlane.f32.xlu0 %v4999
        %v5001 = vpop.xlane.xlu0 %5000
        %v5002 = vmul.f32 %v5001, %v4196
        %v5003 = vadd.f32 %v5002, 1e-05
        %v5004 = vrsqrt.pop %v5003
        %v5005 = vmul.f32 %v4997, %v5004
        %v5006 = vlaneseq
        %v5007 = vshrl.u32 %v5006, 7
        %v5008 = vsub.s32 4, %v5007
        %v5009 = vrot.slane %v4411, %v5008
        %v5010 = vmul.f32 %v5005, %v5009
        %v5011 = vlaneseq
        %v5012 = vshrl.u32 %v5011, 7
        %v5013 = vsub.s32 5, %v5012
        %v5014 = vrot.slane %v4411, %v5013
        %v5015 = vadd.f32 %v5010, %v5014
        %v5016 = vlaneseq
        %v5017 = vshrl.u32 %v5016, 7
        %v5018 = vsub.s32 6, %v5017
        %v5019 = vrot.slane %v4411, %v5018
        %v5021 = vsel %vm3612, %v5015, 0
        %5023 = vmatprep.subr.mxu0 0.0
        %5024 = vmatpush1.msra.mxu0 %v4406
        %5025 = vmatprep.subr.mxu0 0.0
        %5026 = vmatpush1.msra.mxu0 %v4407
        %5027 = vmatprep.subr.mxu0 0.0
        %5028 = vmatpush1.msra.mxu0 0.0
        %5029 = vmatprep.subr.mxu0 0.0
        %5030 = vmatpush1.msra.mxu0 0.0
        %5031 = vmatprep.subr.mxu0 0.0
        %5032 = vmatpush1.msra.mxu0 0.0
        %5033 = vmatprep.subr.mxu0 0.0
        %5034 = vmatpush1.msra.mxu0 0.0
        %5035 = vmatprep.subr.mxu0 0.0
        %5036 = vmatpush1.msra.mxu0 0.0
        %5037 = vmatprep.subr.mxu0 0.0
        %5038 = vmatpush1.msra.mxu0 0.0
        %5039 = vmatprep.subr.mxu0 0.0
        %5040 = vmatpush1.msra.mxu0 0.0
        %5041 = vmatprep.subr.mxu0 0.0
        %5042 = vmatpush1.msra.mxu0 0.0
        %5043 = vmatprep.subr.mxu0 0.0
        %5044 = vmatpush1.msra.mxu0 0.0
        %5045 = vmatprep.subr.mxu0 0.0
        %5046 = vmatpush1.msra.mxu0 0.0
        %5047 = vmatprep.subr.mxu0 0.0
        %5048 = vmatpush1.msra.mxu0 0.0
        %5049 = vmatprep.subr.mxu0 0.0
        %5050 = vmatpush1.msra.mxu0 0.0
        %5051 = vmatprep.subr.mxu0 0.0
        %5052 = vmatpush1.msra.mxu0 0.0
        %5053 = vmatprep.subr.mxu0 0.0
        %5054 = vmatpush1.msra.mxu0 0.0
        %5055 = vmatprep.subr.mxu0 0.0
        %5056 = vmatpush1.msra.mxu0 0.0
        %5057 = vmatprep.subr.mxu0 0.0
        %5058 = vmatpush1.msra.mxu0 0.0
        %5059 = vmatprep.subr.mxu0 0.0
        %5060 = vmatpush1.msra.mxu0 0.0
        %5061 = vmatprep.subr.mxu0 0.0
        %5062 = vmatpush1.msra.mxu0 0.0
        %5063 = vmatprep.subr.mxu0 0.0
        %5064 = vmatpush1.msra.mxu0 0.0
        %5065 = vmatprep.subr.mxu0 0.0
        %5066 = vmatpush1.msra.mxu0 0.0
        %5067 = vmatprep.subr.mxu0 0.0
        %5068 = vmatpush1.msra.mxu0 0.0
        %5069 = vmatprep.subr.mxu0 0.0
        %5070 = vmatpush1.msra.mxu0 0.0
        %5071 = vmatprep.subr.mxu0 0.0
        %5072 = vmatpush1.msra.mxu0 0.0
        %5073 = vmatprep.subr.mxu0 0.0
        %5074 = vmatpush1.msra.mxu0 0.0
        %5075 = vmatprep.subr.mxu0 0.0
        %5076 = vmatpush1.msra.mxu0 0.0
        %5077 = vmatprep.subr.mxu0 0.0
        %5078 = vmatpush1.msra.mxu0 0.0
        %5079 = vmatprep.subr.mxu0 0.0
        %5080 = vmatpush1.msra.mxu0 0.0
        %5081 = vmatprep.subr.mxu0 0.0
        %5082 = vmatpush1.msra.mxu0 0.0
        %5083 = vmatprep.subr.mxu0 0.0
        %5084 = vmatpush1.msra.mxu0 0.0
        %5085 = vmatprep.subr.mxu0 0.0
        %5086 = vmatpush1.msra.mxu0 0.0
        %5087 = vmatprep.mubr.f32.mxu0 0.0
        %5088 = vmatmul.mubr.f32.gmra.mrb[0].mxu0 %v5021
        %v5089 = vpop.f32.mrb[0].mxu0
        %v5090 = vadd.f32 %v5019, %v5089
        %v5091 = vpop.f32.mrb[0].mxu0
        %5092 = vdwg.mxu0
        %v5093 = vmul.f32 %v5090, 0.5
        %v5094 = vmul.f32 %v5090, 0.70710677
        %v5095 = verf.f32.pop %v5094
        %v5096 = vadd.f32 %v5095, 1.0
        %v5097 = vmul.f32 %v5093, %v5096
        %v5098 = vlaneseq
        %v5099 = vshrl.u32 %v5098, 7
        %v5100 = vsub.s32 7, %v5099
        %v5101 = vrot.slane %v4411, %v5100
        %v5103 = vsel %vm3612, %v5097, 0
        %5105 = vmatprep.subr.mxu0 0.0
        %5106 = vmatpush1.msra.mxu0 %v4408
        %5107 = vmatprep.subr.mxu0 0.0
        %5108 = vmatpush1.msra.mxu0 %v4409
        %5109 = vmatprep.subr.mxu0 0.0
        %5110 = vmatpush1.msra.mxu0 0.0
        %5111 = vmatprep.subr.mxu0 0.0
        %5112 = vmatpush1.msra.mxu0 0.0
        %5113 = vmatprep.subr.mxu0 0.0
        %5114 = vmatpush1.msra.mxu0 0.0
        %5115 = vmatprep.subr.mxu0 0.0
        %5116 = vmatpush1.msra.mxu0 0.0
        %5117 = vmatprep.subr.mxu0 0.0
        %5118 = vmatpush1.msra.mxu0 0.0
        %5119 = vmatprep.subr.mxu0 0.0
        %5120 = vmatpush1.msra.mxu0 0.0
        %5121 = vmatprep.subr.mxu0 0.0
        %5122 = vmatpush1.msra.mxu0 0.0
        %5123 = vmatprep.subr.mxu0 0.0
        %5124 = vmatpush1.msra.mxu0 0.0
        %5125 = vmatprep.subr.mxu0 0.0
        %5126 = vmatpush1.msra.mxu0 0.0
        %5127 = vmatprep.subr.mxu0 0.0
        %5128 = vmatpush1.msra.mxu0 0.0
        %5129 = vmatprep.subr.mxu0 0.0
        %5130 = vmatpush1.msra.mxu0 0.0
        %5131 = vmatprep.subr.mxu0 0.0
        %5132 = vmatpush1.msra.mxu0 0.0
        %5133 = vmatprep.subr.mxu0 0.0
        %5134 = vmatpush1.msra.mxu0 0.0
        %5135 = vmatprep.subr.mxu0 0.0
        %5136 = vmatpush1.msra.mxu0 0.0
        %5137 = vmatprep.subr.mxu0 0.0
        %5138 = vmatpush1.msra.mxu0 0.0
        %5139 = vmatprep.subr.mxu0 0.0
        %5140 = vmatpush1.msra.mxu0 0.0
        %5141 = vmatprep.subr.mxu0 0.0
        %5142 = vmatpush1.msra.mxu0 0.0
        %5143 = vmatprep.subr.mxu0 0.0
        %5144 = vmatpush1.msra.mxu0 0.0
        %5145 = vmatprep.subr.mxu0 0.0
        %5146 = vmatpush1.msra.mxu0 0.0
        %5147 = vmatprep.subr.mxu0 0.0
        %5148 = vmatpush1.msra.mxu0 0.0
        %5149 = vmatprep.subr.mxu0 0.0
        %5150 = vmatpush1.msra.mxu0 0.0
        %5151 = vmatprep.subr.mxu0 0.0
        %5152 = vmatpush1.msra.mxu0 0.0
        %5153 = vmatprep.subr.mxu0 0.0
        %5154 = vmatpush1.msra.mxu0 0.0
        %5155 = vmatprep.subr.mxu0 0.0
        %5156 = vmatpush1.msra.mxu0 0.0
        %5157 = vmatprep.subr.mxu0 0.0
        %5158 = vmatpush1.msra.mxu0 0.0
        %5159 = vmatprep.subr.mxu0 0.0
        %5160 = vmatpush1.msra.mxu0 0.0
        %5161 = vmatprep.subr.mxu0 0.0
        %5162 = vmatpush1.msra.mxu0 0.0
        %5163 = vmatprep.subr.mxu0 0.0
        %5164 = vmatpush1.msra.mxu0 0.0
        %5165 = vmatprep.subr.mxu0 0.0
        %5166 = vmatpush1.msra.mxu0 0.0
        %5167 = vmatprep.subr.mxu0 0.0
        %5168 = vmatpush1.msra.mxu0 0.0
        %5169 = vmatprep.mubr.f32.mxu0 0.0
        %5170 = vmatmul.mubr.f32.gmra.mrb[0].mxu0 %v5103
        %v5171 = vpop.f32.mrb[0].mxu0
        %v5172 = vadd.f32 %v5101, %v5171
        %v5173 = vpop.f32.mrb[0].mxu0
        %5174 = vdwg.mxu0
        %v5175 = vadd.f32 %v5015, %v5172
        %v5176 = vsel %vm3612, %v5175, 0.0
        %5177 = vadd.xlane.f32.xlu0 %v5176
        %v5178 = vpop.xlane.xlu0 %5177
        %v5179 = vmul.f32 %v5178, %v4196
        %v5180 = vsub.f32 %v5175, %v5179
        %v5181 = vmul.f32 %v5180, %v5180
        %v5182 = vsel %vm3612, %v5181, 0.0
        %5183 = vadd.xlane.f32.xlu0 %v5182
        %v5184 = vpop.xlane.xlu0 %5183
        %v5185 = vmul.f32 %v5184, %v4196
        %v5186 = vadd.f32 %v5185, 1e-05
        %v5187 = vrsqrt.pop %v5186
        %v5188 = vmul.f32 %v5180, %v5187
        %v5189 = vlaneseq
        %v5190 = vshrl.u32 %v5189, 7
        %v5191 = vsub.s32 0, %v5190
        %v5192 = vrot.slane %v4412, %v5191
        %v5193 = vmul.f32 %v5188, %v5192
        %v5194 = vlaneseq
        %v5195 = vshrl.u32 %v5194, 7
        %v5196 = vsub.s32 1, %v5195
        %v5197 = vrot.slane %v4412, %v5196
        %v5198 = vadd.f32 %v5193, %v5197
        %v5199 = vsel %vm3612, %v5198, 0.0
        %5200 = vadd.xlane.f32.xlu0 %v5199
        %v5201 = vpop.xlane.xlu0 %5200
        %v5202 = vmul.f32 %v5201, %v4196
        %v5203 = vsub.f32 %v5198, %v5202
        %v5204 = vmul.f32 %v5203, %v5203
        %v5205 = vsel %vm3612, %v5204, 0.0
        %5206 = vadd.xlane.f32.xlu0 %v5205
        %v5207 = vpop.xlane.xlu0 %5206
        %v5208 = vmul.f32 %v5207, %v4196
        %v5209 = vadd.f32 %v5208, 1e-05
        %v5210 = vrsqrt.pop %v5209
        %v5211 = vmul.f32 %v5203, %v5210
        %v5212 = vlaneseq
        %v5213 = vshrl.u32 %v5212, 7
        %v5214 = vsub.s32 1, %v5213
        %v5215 = vrot.slane %v3516, %v5214
        %v5216 = vmul.f32 %v5211, %v5215
        %v5217 = vlaneseq
        %v5218 = vshrl.u32 %v5217, 7
        %v5219 = vsub.s32 2, %v5218
        %v5220 = vrot.slane %v3516, %v5219
        %v5221 = vadd.f32 %v5216, %v5220
        %v5222 = vsel %vm3612, %v5221, 0.0
        %v5223 = vrot.slane %v5222, 4
        %v5224 = vadd.f32 %v5222, %v5223
        %v5225 = vrot.slane %v5224, 2
        %v5226 = vadd.f32 %v5224, %v5225
        %v5227 = vrot.slane %v5226, 1
        %v5228 = vadd.f32 %v5226, %v5227
        %v5229 = vmul.f32 %v5228, %v3513
        %v5230 = vld [vmem:[%s826] sm:$0xff]
        %v5231 = vld [vmem:[#allocation14] sm:$0x7]
        %v5232 = vld [vmem:[#allocation13] sm:$0xf]
        %v5233 = vlaneseq
        %v5234 = vshrl.u32 %v5233, 7
        %v5235 = vsub.s32 0, %v5234
        %v5236 = vrot.slane %v5231, %v5235
        %vm5237 = vcmask 31744
        %v5239 = vsel %vm5237, %v5230, 0
        %vm5241 = vcmask 1043456
        %v5243 = vsel %vm5241, %v5232, 0
        %5245 = vmatprep.subr.mxu0 0.0
        %5246 = vmatpush1.msra.mxu0 %v5243
        %5247 = vmatprep.subr.mxu0 0.0
        %5248 = vmatpush1.msra.mxu0 0.0
        %5249 = vmatprep.subr.mxu0 0.0
        %5250 = vmatpush1.msra.mxu0 0.0
        %5251 = vmatprep.subr.mxu0 0.0
        %5252 = vmatpush1.msra.mxu0 0.0
        %5253 = vmatprep.subr.mxu0 0.0
        %5254 = vmatpush1.msra.mxu0 0.0
        %5255 = vmatprep.subr.mxu0 0.0
        %5256 = vmatpush1.msra.mxu0 0.0
        %5257 = vmatprep.subr.mxu0 0.0
        %5258 = vmatpush1.msra.mxu0 0.0
        %5259 = vmatprep.subr.mxu0 0.0
        %5260 = vmatpush1.msra.mxu0 0.0
        %5261 = vmatprep.subr.mxu0 0.0
        %5262 = vmatpush1.msra.mxu0 0.0
        %5263 = vmatprep.subr.mxu0 0.0
        %5264 = vmatpush1.msra.mxu0 0.0
        %5265 = vmatprep.subr.mxu0 0.0
        %5266 = vmatpush1.msra.mxu0 0.0
        %5267 = vmatprep.subr.mxu0 0.0
        %5268 = vmatpush1.msra.mxu0 0.0
        %5269 = vmatprep.subr.mxu0 0.0
        %5270 = vmatpush1.msra.mxu0 0.0
        %5271 = vmatprep.subr.mxu0 0.0
        %5272 = vmatpush1.msra.mxu0 0.0
        %5273 = vmatprep.subr.mxu0 0.0
        %5274 = vmatpush1.msra.mxu0 0.0
        %5275 = vmatprep.subr.mxu0 0.0
        %5276 = vmatpush1.msra.mxu0 0.0
        %5277 = vmatprep.subr.mxu0 0.0
        %5278 = vmatpush1.msra.mxu0 0.0
        %5279 = vmatprep.subr.mxu0 0.0
        %5280 = vmatpush1.msra.mxu0 0.0
        %5281 = vmatprep.subr.mxu0 0.0
        %5282 = vmatpush1.msra.mxu0 0.0
        %5283 = vmatprep.subr.mxu0 0.0
        %5284 = vmatpush1.msra.mxu0 0.0
        %5285 = vmatprep.subr.mxu0 0.0
        %5286 = vmatpush1.msra.mxu0 0.0
        %5287 = vmatprep.subr.mxu0 0.0
        %5288 = vmatpush1.msra.mxu0 0.0
        %5289 = vmatprep.subr.mxu0 0.0
        %5290 = vmatpush1.msra.mxu0 0.0
        %5291 = vmatprep.subr.mxu0 0.0
        %5292 = vmatpush1.msra.mxu0 0.0
        %5293 = vmatprep.subr.mxu0 0.0
        %5294 = vmatpush1.msra.mxu0 0.0
        %5295 = vmatprep.subr.mxu0 0.0
        %5296 = vmatpush1.msra.mxu0 0.0
        %5297 = vmatprep.subr.mxu0 0.0
        %5298 = vmatpush1.msra.mxu0 0.0
        %5299 = vmatprep.subr.mxu0 0.0
        %5300 = vmatpush1.msra.mxu0 0.0
        %5301 = vmatprep.subr.mxu0 0.0
        %5302 = vmatpush1.msra.mxu0 0.0
        %5303 = vmatprep.subr.mxu0 0.0
        %5304 = vmatpush1.msra.mxu0 0.0
        %5305 = vmatprep.subr.mxu0 0.0
        %5306 = vmatpush1.msra.mxu0 0.0
        %5307 = vmatprep.subr.mxu0 0.0
        %5308 = vmatpush1.msra.mxu0 0.0
        %5309 = vmatprep.mubr.f32.mxu0 0.0
        %5310 = vmatmul.mubr.f32.gmra.mrb[0].mxu0 %v5239
        %v5311 = vpop.f32.mrb[0].mxu0
        %v5312 = vadd.f32 %v5236, %v5311
        %v5313 = vpop.f32.mrb[0].mxu0
        %5314 = vdwg.mxu0
        %v5315 = vmax.f32 %v5312, 0.0
        %v5316 = vld [vmem:[#allocation16] sm:$0xff]
        %v5317 = vld [vmem:[#allocation16 + $0x8] sm:$0xff]
        %v5318 = vld [vmem:[#allocation17] sm:$0xff]
        %v5319 = vld [vmem:[#allocation17 + $0x8] sm:$0xff]
        %v5320 = vld [vmem:[#allocation17 + $0x10] sm:$0xff]
        %v5321 = vld [vmem:[#allocation17 + $0x18] sm:$0xff]
        %v5322 = vld [vmem:[#allocation17 + $0x20] sm:$0xff]
        %v5323 = vld [vmem:[#allocation17 + $0x28] sm:$0xff]
        %v5324 = vld [vmem:[#allocation19] sm:$0xff]
        %v5325 = vld [vmem:[#allocation19 + $0x8] sm:$0x3]
        %v5327 = vsel %vm3612, %v5315, 0
        %5329 = vmatprep.subr.mxu0 0.0
        %5330 = vmatpush1.msra.mxu0 %v5316
        %5331 = vmatprep.subr.mxu0 0.0
        %5332 = vmatpush1.msra.mxu0 %v5317
        %5333 = vmatprep.subr.mxu0 0.0
        %5334 = vmatpush1.msra.mxu0 0.0
        %5335 = vmatprep.subr.mxu0 0.0
        %5336 = vmatpush1.msra.mxu0 0.0
        %5337 = vmatprep.subr.mxu0 0.0
        %5338 = vmatpush1.msra.mxu0 0.0
        %5339 = vmatprep.subr.mxu0 0.0
        %5340 = vmatpush1.msra.mxu0 0.0
        %5341 = vmatprep.subr.mxu0 0.0
        %5342 = vmatpush1.msra.mxu0 0.0
        %5343 = vmatprep.subr.mxu0 0.0
        %5344 = vmatpush1.msra.mxu0 0.0
        %5345 = vmatprep.subr.mxu0 0.0
        %5346 = vmatpush1.msra.mxu0 0.0
        %5347 = vmatprep.subr.mxu0 0.0
        %5348 = vmatpush1.msra.mxu0 0.0
        %5349 = vmatprep.subr.mxu0 0.0
        %5350 = vmatpush1.msra.mxu0 0.0
        %5351 = vmatprep.subr.mxu0 0.0
        %5352 = vmatpush1.msra.mxu0 0.0
        %5353 = vmatprep.subr.mxu0 0.0
        %5354 = vmatpush1.msra.mxu0 0.0
        %5355 = vmatprep.subr.mxu0 0.0
        %5356 = vmatpush1.msra.mxu0 0.0
        %5357 = vmatprep.subr.mxu0 0.0
        %5358 = vmatpush1.msra.mxu0 0.0
        %5359 = vmatprep.subr.mxu0 0.0
        %5360 = vmatpush1.msra.mxu0 0.0
        %5361 = vmatprep.subr.mxu0 0.0
        %5362 = vmatpush1.msra.mxu0 0.0
        %5363 = vmatprep.subr.mxu0 0.0
        %5364 = vmatpush1.msra.mxu0 0.0
        %5365 = vmatprep.subr.mxu0 0.0
        %5366 = vmatpush1.msra.mxu0 0.0
        %5367 = vmatprep.subr.mxu0 0.0
        %5368 = vmatpush1.msra.mxu0 0.0
        %5369 = vmatprep.subr.mxu0 0.0
        %5370 = vmatpush1.msra.mxu0 0.0
        %5371 = vmatprep.subr.mxu0 0.0
        %5372 = vmatpush1.msra.mxu0 0.0
        %5373 = vmatprep.subr.mxu0 0.0
        %5374 = vmatpush1.msra.mxu0 0.0
        %5375 = vmatprep.subr.mxu0 0.0
        %5376 = vmatpush1.msra.mxu0 0.0
        %5377 = vmatprep.subr.mxu0 0.0
        %5378 = vmatpush1.msra.mxu0 0.0
        %5379 = vmatprep.subr.mxu0 0.0
        %5380 = vmatpush1.msra.mxu0 0.0
        %5381 = vmatprep.subr.mxu0 0.0
        %5382 = vmatpush1.msra.mxu0 0.0
        %5383 = vmatprep.subr.mxu0 0.0
        %5384 = vmatpush1.msra.mxu0 0.0
        %5385 = vmatprep.subr.mxu0 0.0
        %5386 = vmatpush1.msra.mxu0 0.0
        %5387 = vmatprep.subr.mxu0 0.0
        %5388 = vmatpush1.msra.mxu0 0.0
        %5389 = vmatprep.subr.mxu0 0.0
        %5390 = vmatpush1.msra.mxu0 0.0
        %5391 = vmatprep.subr.mxu0 0.0
        %5392 = vmatpush1.msra.mxu0 0.0
        %5393 = vmatprep.mubr.f32.mxu0 0.0
        %5394 = vmatmul.mubr.f32.gmra.mrb[0].mxu0 %v5327
        %v5395 = vpop.f32.mrb[0].mxu0
        %v5396 = vadd.f32 0.0, %v5395
        %v5397 = vpop.f32.mrb[0].mxu0
        %5398 = vdwg.mxu0
        %v5399 = vlaneseq
        %v5400 = vshrl.u32 %v5399, 7
        %v5401 = vsub.s32 0, %v5400
        %v5402 = vrot.slane %v5324, %v5401
        %v5403 = vadd.f32 %v5396, %v5402
        %v5404 = vmul.f32 %v5403, 0.35355338
        %v5405 = vlaneseq
        %v5406 = vshrl.u32 %v5405, 7
        %v5407 = vsub.s32 1, %v5406
        %v5408 = vrot.slane %v5324, %v5407
        %5410 = vrot.lane.b32.xlu0 %v5408, 16
        %v5411 = vpop.permute.xlu0 %5410
        %v5413 = vadd.f32 %v5396, %v5411
        %v5414 = vlaneseq
        %v5415 = vshrl.u32 %v5414, 7
        %v5416 = vsub.s32 2, %v5415
        %v5417 = vrot.slane %v5324, %v5416
        %5419 = vrot.lane.b32.xlu0 %v5417, 32
        %v5420 = vpop.permute.xlu0 %5419
        %v5422 = vadd.f32 %v5396, %v5420
        %5424 = vrot.lane.b32.xlu0 %v5413, 112
        %v5425 = vpop.permute.xlu0 %5424
        %v5427 = vsel %vm1032, %v5404, 0
        %v5429 = vsel %vm1032, %v5425, 0
        %5431 = vmatprep.subr.mxu0 0.0
        %5432 = vmatpush1.xpose.msra.mxu0 %v5429
        %5433 = vmatprep.subr.mxu0 0.0
        %5434 = vmatpush1.xpose.msra.mxu0 0.0
        %5435 = vmatprep.subr.mxu0 0.0
        %5436 = vmatpush1.xpose.msra.mxu0 0.0
        %5437 = vmatprep.subr.mxu0 0.0
        %5438 = vmatpush1.xpose.msra.mxu0 0.0
        %5439 = vmatprep.subr.mxu0 0.0
        %5440 = vmatpush1.xpose.msra.mxu0 0.0
        %5441 = vmatprep.subr.mxu0 0.0
        %5442 = vmatpush1.xpose.msra.mxu0 0.0
        %5443 = vmatprep.subr.mxu0 0.0
        %5444 = vmatpush1.xpose.msra.mxu0 0.0
        %5445 = vmatprep.subr.mxu0 0.0
        %5446 = vmatpush1.xpose.msra.mxu0 0.0
        %5447 = vmatprep.subr.mxu0 0.0
        %5448 = vmatpush1.xpose.msra.mxu0 0.0
        %5449 = vmatprep.subr.mxu0 0.0
        %5450 = vmatpush1.xpose.msra.mxu0 0.0
        %5451 = vmatprep.subr.mxu0 0.0
        %5452 = vmatpush1.xpose.msra.mxu0 0.0
        %5453 = vmatprep.subr.mxu0 0.0
        %5454 = vmatpush1.xpose.msra.mxu0 0.0
        %5455 = vmatprep.subr.mxu0 0.0
        %5456 = vmatpush1.xpose.msra.mxu0 0.0
        %5457 = vmatprep.subr.mxu0 0.0
        %5458 = vmatpush1.xpose.msra.mxu0 0.0
        %5459 = vmatprep.subr.mxu0 0.0
        %5460 = vmatpush1.xpose.msra.mxu0 0.0
        %5461 = vmatprep.subr.mxu0 0.0
        %5462 = vmatpush1.xpose.msra.mxu0 0.0
        %5463 = vmatprep.subr.mxu0 0.0
        %5464 = vmatpush1.xpose.msra.mxu0 0.0
        %5465 = vmatprep.subr.mxu0 0.0
        %5466 = vmatpush1.xpose.msra.mxu0 0.0
        %5467 = vmatprep.subr.mxu0 0.0
        %5468 = vmatpush1.xpose.msra.mxu0 0.0
        %5469 = vmatprep.subr.mxu0 0.0
        %5470 = vmatpush1.xpose.msra.mxu0 0.0
        %5471 = vmatprep.subr.mxu0 0.0
        %5472 = vmatpush1.xpose.msra.mxu0 0.0
        %5473 = vmatprep.subr.mxu0 0.0
        %5474 = vmatpush1.xpose.msra.mxu0 0.0
        %5475 = vmatprep.subr.mxu0 0.0
        %5476 = vmatpush1.xpose.msra.mxu0 0.0
        %5477 = vmatprep.subr.mxu0 0.0
        %5478 = vmatpush1.xpose.msra.mxu0 0.0
        %5479 = vmatprep.subr.mxu0 0.0
        %5480 = vmatpush1.xpose.msra.mxu0 0.0
        %5481 = vmatprep.subr.mxu0 0.0
        %5482 = vmatpush1.xpose.msra.mxu0 0.0
        %5483 = vmatprep.subr.mxu0 0.0
        %5484 = vmatpush1.xpose.msra.mxu0 0.0
        %5485 = vmatprep.subr.mxu0 0.0
        %5486 = vmatpush1.xpose.msra.mxu0 0.0
        %5487 = vmatprep.subr.mxu0 0.0
        %5488 = vmatpush1.xpose.msra.mxu0 0.0
        %5489 = vmatprep.subr.mxu0 0.0
        %5490 = vmatpush1.xpose.msra.mxu0 0.0
        %5491 = vmatprep.subr.mxu0 0.0
        %5492 = vmatpush1.xpose.msra.mxu0 0.0
        %5493 = vmatprep.subr.mxu0 0.0
        %5494 = vmatpush1.xpose.msra.mxu0 0.0
        %5495 = vmatprep.mubr.f32.mxu0 0.0
        %5496 = vmatmul.mubr.f32.gmra.mrb[0].mxu0 %v5427
        %v5497 = vpop.f32.mrb[0].mxu0
        %v5498 = vadd.f32 0.0, %v5497
        %v5499 = vpop.f32.mrb[0].mxu0
        %5500 = vdwg.mxu0
        %v5501 = vsel %vm1032, %v5498, -inf
        %5502 = vmax.xlane.f32.xlu0 %v5501
        %v5503 = vpop.xlane.xlu0 %5502
        %v5504 = vsub.f32 %v5498, %v5503
        %v5505 = vmul.f32 %v5504, 1.442695
        %v5506 = vpow.pop %v5505
        %v5507 = vsel %vm1032, %v5506, 0.0
        %5508 = vadd.xlane.f32.xlu0 %v5507
        %v5509 = vpop.xlane.xlu0 %5508
        %v5510 = vrcp.pop %v5509
        %v5511 = vmul.f32 %v5506, %v5510
        %5513 = vrot.lane.b32.xlu0 %v5422, 96
        %v5514 = vpop.permute.xlu0 %5513
        %v5517 = vsel %vm1032, %v5511, 0
        %5519 = vmatprep.subr.mxu0 0.0
        %5520 = vmatpush1.msra.mxu0 %v5514
        %5521 = vmatprep.subr.mxu0 0.0
        %5522 = vmatpush1.msra.mxu0 0.0
        %5523 = vmatprep.subr.mxu0 0.0
        %5524 = vmatpush1.msra.mxu0 0.0
        %5525 = vmatprep.subr.mxu0 0.0
        %5526 = vmatpush1.msra.mxu0 0.0
        %5527 = vmatprep.subr.mxu0 0.0
        %5528 = vmatpush1.msra.mxu0 0.0
        %5529 = vmatprep.subr.mxu0 0.0
        %5530 = vmatpush1.msra.mxu0 0.0
        %5531 = vmatprep.subr.mxu0 0.0
        %5532 = vmatpush1.msra.mxu0 0.0
        %5533 = vmatprep.subr.mxu0 0.0
        %5534 = vmatpush1.msra.mxu0 0.0
        %5535 = vmatprep.subr.mxu0 0.0
        %5536 = vmatpush1.msra.mxu0 0.0
        %5537 = vmatprep.subr.mxu0 0.0
        %5538 = vmatpush1.msra.mxu0 0.0
        %5539 = vmatprep.subr.mxu0 0.0
        %5540 = vmatpush1.msra.mxu0 0.0
        %5541 = vmatprep.subr.mxu0 0.0
        %5542 = vmatpush1.msra.mxu0 0.0
        %5543 = vmatprep.subr.mxu0 0.0
        %5544 = vmatpush1.msra.mxu0 0.0
        %5545 = vmatprep.subr.mxu0 0.0
        %5546 = vmatpush1.msra.mxu0 0.0
        %5547 = vmatprep.subr.mxu0 0.0
        %5548 = vmatpush1.msra.mxu0 0.0
        %5549 = vmatprep.subr.mxu0 0.0
        %5550 = vmatpush1.msra.mxu0 0.0
        %5551 = vmatprep.subr.mxu0 0.0
        %5552 = vmatpush1.msra.mxu0 0.0
        %5553 = vmatprep.subr.mxu0 0.0
        %5554 = vmatpush1.msra.mxu0 0.0
        %5555 = vmatprep.subr.mxu0 0.0
        %5556 = vmatpush1.msra.mxu0 0.0
        %5557 = vmatprep.subr.mxu0 0.0
        %5558 = vmatpush1.msra.mxu0 0.0
        %5559 = vmatprep.subr.mxu0 0.0
        %5560 = vmatpush1.msra.mxu0 0.0
        %5561 = vmatprep.subr.mxu0 0.0
        %5562 = vmatpush1.msra.mxu0 0.0
        %5563 = vmatprep.subr.mxu0 0.0
        %5564 = vmatpush1.msra.mxu0 0.0
        %5565 = vmatprep.subr.mxu0 0.0
        %5566 = vmatpush1.msra.mxu0 0.0
        %5567 = vmatprep.subr.mxu0 0.0
        %5568 = vmatpush1.msra.mxu0 0.0
        %5569 = vmatprep.subr.mxu0 0.0
        %5570 = vmatpush1.msra.mxu0 0.0
        %5571 = vmatprep.subr.mxu0 0.0
        %5572 = vmatpush1.msra.mxu0 0.0
        %5573 = vmatprep.subr.mxu0 0.0
        %5574 = vmatpush1.msra.mxu0 0.0
        %5575 = vmatprep.subr.mxu0 0.0
        %5576 = vmatpush1.msra.mxu0 0.0
        %5577 = vmatprep.subr.mxu0 0.0
        %5578 = vmatpush1.msra.mxu0 0.0
        %5579 = vmatprep.subr.mxu0 0.0
        %5580 = vmatpush1.msra.mxu0 0.0
        %5581 = vmatprep.subr.mxu0 0.0
        %5582 = vmatpush1.msra.mxu0 0.0
        %5583 = vmatprep.mubr.f32.mxu0 0.0
        %5584 = vmatmul.mubr.f32.gmra.mrb[0].mxu0 %v5517
        %v5585 = vpop.f32.mrb[0].mxu0
        %v5586 = vadd.f32 0.0, %v5585
        %v5587 = vpop.f32.mrb[0].mxu0
        %5588 = vdwg.mxu0
        %5589 = vrot.lane.b32.xlu0 %v5404, 120
        %v5590 = vpop.permute.xlu0 %5589
        %5591 = vrot.lane.b32.xlu0 %v5413, 104
        %v5592 = vpop.permute.xlu0 %5591
        %v5593 = vsel %vm1032, %v5590, 0
        %v5595 = vsel %vm1032, %v5592, 0
        %5597 = vmatprep.subr.mxu0 0.0
        %5598 = vmatpush1.xpose.msra.mxu0 %v5595
        %5599 = vmatprep.subr.mxu0 0.0
        %5600 = vmatpush1.xpose.msra.mxu0 0.0
        %5601 = vmatprep.subr.mxu0 0.0
        %5602 = vmatpush1.xpose.msra.mxu0 0.0
        %5603 = vmatprep.subr.mxu0 0.0
        %5604 = vmatpush1.xpose.msra.mxu0 0.0
        %5605 = vmatprep.subr.mxu0 0.0
        %5606 = vmatpush1.xpose.msra.mxu0 0.0
        %5607 = vmatprep.subr.mxu0 0.0
        %5608 = vmatpush1.xpose.msra.mxu0 0.0
        %5609 = vmatprep.subr.mxu0 0.0
        %5610 = vmatpush1.xpose.msra.mxu0 0.0
        %5611 = vmatprep.subr.mxu0 0.0
        %5612 = vmatpush1.xpose.msra.mxu0 0.0
        %5613 = vmatprep.subr.mxu0 0.0
        %5614 = vmatpush1.xpose.msra.mxu0 0.0
        %5615 = vmatprep.subr.mxu0 0.0
        %5616 = vmatpush1.xpose.msra.mxu0 0.0
        %5617 = vmatprep.subr.mxu0 0.0
        %5618 = vmatpush1.xpose.msra.mxu0 0.0
        %5619 = vmatprep.subr.mxu0 0.0
        %5620 = vmatpush1.xpose.msra.mxu0 0.0
        %5621 = vmatprep.subr.mxu0 0.0
        %5622 = vmatpush1.xpose.msra.mxu0 0.0
        %5623 = vmatprep.subr.mxu0 0.0
        %5624 = vmatpush1.xpose.msra.mxu0 0.0
        %5625 = vmatprep.subr.mxu0 0.0
        %5626 = vmatpush1.xpose.msra.mxu0 0.0
        %5627 = vmatprep.subr.mxu0 0.0
        %5628 = vmatpush1.xpose.msra.mxu0 0.0
        %5629 = vmatprep.subr.mxu0 0.0
        %5630 = vmatpush1.xpose.msra.mxu0 0.0
        %5631 = vmatprep.subr.mxu0 0.0
        %5632 = vmatpush1.xpose.msra.mxu0 0.0
        %5633 = vmatprep.subr.mxu0 0.0
        %5634 = vmatpush1.xpose.msra.mxu0 0.0
        %5635 = vmatprep.subr.mxu0 0.0
        %5636 = vmatpush1.xpose.msra.mxu0 0.0
        %5637 = vmatprep.subr.mxu0 0.0
        %5638 = vmatpush1.xpose.msra.mxu0 0.0
        %5639 = vmatprep.subr.mxu0 0.0
        %5640 = vmatpush1.xpose.msra.mxu0 0.0
        %5641 = vmatprep.subr.mxu0 0.0
        %5642 = vmatpush1.xpose.msra.mxu0 0.0
        %5643 = vmatprep.subr.mxu0 0.0
        %5644 = vmatpush1.xpose.msra.mxu0 0.0
        %5645 = vmatprep.subr.mxu0 0.0
        %5646 = vmatpush1.xpose.msra.mxu0 0.0
        %5647 = vmatprep.subr.mxu0 0.0
        %5648 = vmatpush1.xpose.msra.mxu0 0.0
        %5649 = vmatprep.subr.mxu0 0.0
        %5650 = vmatpush1.xpose.msra.mxu0 0.0
        %5651 = vmatprep.subr.mxu0 0.0
        %5652 = vmatpush1.xpose.msra.mxu0 0.0
        %5653 = vmatprep.subr.mxu0 0.0
        %5654 = vmatpush1.xpose.msra.mxu0 0.0
        %5655 = vmatprep.subr.mxu0 0.0
        %5656 = vmatpush1.xpose.msra.mxu0 0.0
        %5657 = vmatprep.subr.mxu0 0.0
        %5658 = vmatpush1.xpose.msra.mxu0 0.0
        %5659 = vmatprep.subr.mxu0 0.0
        %5660 = vmatpush1.xpose.msra.mxu0 0.0
        %5661 = vmatprep.mubr.f32.mxu0 0.0
        %5662 = vmatmul.mubr.f32.gmra.mrb[0].mxu0 %v5593
        %v5663 = vpop.f32.mrb[0].mxu0
        %v5664 = vadd.f32 0.0, %v5663
        %v5665 = vpop.f32.mrb[0].mxu0
        %5666 = vdwg.mxu0
        %v5667 = vsel %vm1032, %v5664, -inf
        %5668 = vmax.xlane.f32.xlu0 %v5667
        %v5669 = vpop.xlane.xlu0 %5668
        %v5670 = vsub.f32 %v5664, %v5669
        %v5671 = vmul.f32 %v5670, 1.442695
        %v5672 = vpow.pop %v5671
        %v5673 = vsel %vm1032, %v5672, 0.0
        %5674 = vadd.xlane.f32.xlu0 %v5673
        %v5675 = vpop.xlane.xlu0 %5674
        %v5676 = vrcp.pop %v5675
        %v5677 = vmul.f32 %v5672, %v5676
        %5678 = vrot.lane.b32.xlu0 %v5422, 88
        %v5679 = vpop.permute.xlu0 %5678
        %v5682 = vsel %vm1032, %v5677, 0
        %5684 = vmatprep.subr.mxu0 0.0
        %5685 = vmatpush1.msra.mxu0 %v5679
        %5686 = vmatprep.subr.mxu0 0.0
        %5687 = vmatpush1.msra.mxu0 0.0
        %5688 = vmatprep.subr.mxu0 0.0
        %5689 = vmatpush1.msra.mxu0 0.0
        %5690 = vmatprep.subr.mxu0 0.0
        %5691 = vmatpush1.msra.mxu0 0.0
        %5692 = vmatprep.subr.mxu0 0.0
        %5693 = vmatpush1.msra.mxu0 0.0
        %5694 = vmatprep.subr.mxu0 0.0
        %5695 = vmatpush1.msra.mxu0 0.0
        %5696 = vmatprep.subr.mxu0 0.0
        %5697 = vmatpush1.msra.mxu0 0.0
        %5698 = vmatprep.subr.mxu0 0.0
        %5699 = vmatpush1.msra.mxu0 0.0
        %5700 = vmatprep.subr.mxu0 0.0
        %5701 = vmatpush1.msra.mxu0 0.0
        %5702 = vmatprep.subr.mxu0 0.0
        %5703 = vmatpush1.msra.mxu0 0.0
        %5704 = vmatprep.subr.mxu0 0.0
        %5705 = vmatpush1.msra.mxu0 0.0
        %5706 = vmatprep.subr.mxu0 0.0
        %5707 = vmatpush1.msra.mxu0 0.0
        %5708 = vmatprep.subr.mxu0 0.0
        %5709 = vmatpush1.msra.mxu0 0.0
        %5710 = vmatprep.subr.mxu0 0.0
        %5711 = vmatpush1.msra.mxu0 0.0
        %5712 = vmatprep.subr.mxu0 0.0
        %5713 = vmatpush1.msra.mxu0 0.0
        %5714 = vmatprep.subr.mxu0 0.0
        %5715 = vmatpush1.msra.mxu0 0.0
        %5716 = vmatprep.subr.mxu0 0.0
        %5717 = vmatpush1.msra.mxu0 0.0
        %5718 = vmatprep.subr.mxu0 0.0
        %5719 = vmatpush1.msra.mxu0 0.0
        %5720 = vmatprep.subr.mxu0 0.0
        %5721 = vmatpush1.msra.mxu0 0.0
        %5722 = vmatprep.subr.mxu0 0.0
        %5723 = vmatpush1.msra.mxu0 0.0
        %5724 = vmatprep.subr.mxu0 0.0
        %5725 = vmatpush1.msra.mxu0 0.0
        %5726 = vmatprep.subr.mxu0 0.0
        %5727 = vmatpush1.msra.mxu0 0.0
        %5728 = vmatprep.subr.mxu0 0.0
        %5729 = vmatpush1.msra.mxu0 0.0
        %5730 = vmatprep.subr.mxu0 0.0
        %5731 = vmatpush1.msra.mxu0 0.0
        %5732 = vmatprep.subr.mxu0 0.0
        %5733 = vmatpush1.msra.mxu0 0.0
        %5734 = vmatprep.subr.mxu0 0.0
        %5735 = vmatpush1.msra.mxu0 0.0
        %5736 = vmatprep.subr.mxu0 0.0
        %5737 = vmatpush1.msra.mxu0 0.0
        %5738 = vmatprep.subr.mxu0 0.0
        %5739 = vmatpush1.msra.mxu0 0.0
        %5740 = vmatprep.subr.mxu0 0.0
        %5741 = vmatpush1.msra.mxu0 0.0
        %5742 = vmatprep.subr.mxu0 0.0
        %5743 = vmatpush1.msra.mxu0 0.0
        %5744 = vmatprep.subr.mxu0 0.0
        %5745 = vmatpush1.msra.mxu0 0.0
        %5746 = vmatprep.subr.mxu0 0.0
        %5747 = vmatpush1.msra.mxu0 0.0
        %5748 = vmatprep.mubr.f32.mxu0 0.0
        %5749 = vmatmul.mubr.f32.gmra.mrb[0].mxu0 %v5682
        %v5750 = vpop.f32.mrb[0].mxu0
        %v5751 = vadd.f32 0.0, %v5750
        %v5752 = vpop.f32.mrb[0].mxu0
        %5753 = vdwg.mxu0
        %v5755 = vsel %vm1032, %v5751, 0
        %5757 = vmatprep.subr.mxu0 0.0
        %5758 = vmatpush1.msra.mxu0 %v5319
        %5759 = vmatprep.subr.mxu0 0.0
        %5760 = vmatpush1.msra.mxu0 0.0
        %5761 = vmatprep.subr.mxu0 0.0
        %5762 = vmatpush1.msra.mxu0 0.0
        %5763 = vmatprep.subr.mxu0 0.0
        %5764 = vmatpush1.msra.mxu0 0.0
        %5765 = vmatprep.subr.mxu0 0.0
        %5766 = vmatpush1.msra.mxu0 0.0
        %5767 = vmatprep.subr.mxu0 0.0
        %5768 = vmatpush1.msra.mxu0 0.0
        %5769 = vmatprep.subr.mxu0 0.0
        %5770 = vmatpush1.msra.mxu0 0.0
        %5771 = vmatprep.subr.mxu0 0.0
        %5772 = vmatpush1.msra.mxu0 0.0
        %5773 = vmatprep.subr.mxu0 0.0
        %5774 = vmatpush1.msra.mxu0 0.0
        %5775 = vmatprep.subr.mxu0 0.0
        %5776 = vmatpush1.msra.mxu0 0.0
        %5777 = vmatprep.subr.mxu0 0.0
        %5778 = vmatpush1.msra.mxu0 0.0
        %5779 = vmatprep.subr.mxu0 0.0
        %5780 = vmatpush1.msra.mxu0 0.0
        %5781 = vmatprep.subr.mxu0 0.0
        %5782 = vmatpush1.msra.mxu0 0.0
        %5783 = vmatprep.subr.mxu0 0.0
        %5784 = vmatpush1.msra.mxu0 0.0
        %5785 = vmatprep.subr.mxu0 0.0
        %5786 = vmatpush1.msra.mxu0 0.0
        %5787 = vmatprep.subr.mxu0 0.0
        %5788 = vmatpush1.msra.mxu0 0.0
        %5789 = vmatprep.subr.mxu0 0.0
        %5790 = vmatpush1.msra.mxu0 0.0
        %5791 = vmatprep.subr.mxu0 0.0
        %5792 = vmatpush1.msra.mxu0 0.0
        %5793 = vmatprep.subr.mxu0 0.0
        %5794 = vmatpush1.msra.mxu0 0.0
        %5795 = vmatprep.subr.mxu0 0.0
        %5796 = vmatpush1.msra.mxu0 0.0
        %5797 = vmatprep.subr.mxu0 0.0
        %5798 = vmatpush1.msra.mxu0 0.0
        %5799 = vmatprep.subr.mxu0 0.0
        %5800 = vmatpush1.msra.mxu0 0.0
        %5801 = vmatprep.subr.mxu0 0.0
        %5802 = vmatpush1.msra.mxu0 0.0
        %5803 = vmatprep.subr.mxu0 0.0
        %5804 = vmatpush1.msra.mxu0 0.0
        %5805 = vmatprep.subr.mxu0 0.0
        %5806 = vmatpush1.msra.mxu0 0.0
        %5807 = vmatprep.subr.mxu0 0.0
        %5808 = vmatpush1.msra.mxu0 0.0
        %5809 = vmatprep.subr.mxu0 0.0
        %5810 = vmatpush1.msra.mxu0 0.0
        %5811 = vmatprep.subr.mxu0 0.0
        %5812 = vmatpush1.msra.mxu0 0.0
        %5813 = vmatprep.subr.mxu0 0.0
        %5814 = vmatpush1.msra.mxu0 0.0
        %5815 = vmatprep.subr.mxu0 0.0
        %5816 = vmatpush1.msra.mxu0 0.0
        %5817 = vmatprep.subr.mxu0 0.0
        %5818 = vmatpush1.msra.mxu0 0.0
        %5819 = vmatprep.subr.mxu0 0.0
        %5820 = vmatpush1.msra.mxu0 0.0
        %5821 = vmatprep.mubr.f32.mxu0 0.0
        %5822 = vmatmul.mubr.f32.gmra.mrb[0].mxu0 %v5755
        %v5823 = vpop.f32.mrb[0].mxu0
        %v5824 = vadd.f32 0.0, %v5823
        %v5825 = vpop.f32.mrb[0].mxu0
        %5826 = vdwg.mxu0
        %v5828 = vsel %vm1032, %v5586, 0
        %5830 = vmatprep.subr.mxu0 0.0
        %5831 = vmatpush1.msra.mxu0 %v5318
        %5832 = vmatprep.subr.mxu0 0.0
        %5833 = vmatpush1.msra.mxu0 0.0
        %5834 = vmatprep.subr.mxu0 0.0
        %5835 = vmatpush1.msra.mxu0 0.0
        %5836 = vmatprep.subr.mxu0 0.0
        %5837 = vmatpush1.msra.mxu0 0.0
        %5838 = vmatprep.subr.mxu0 0.0
        %5839 = vmatpush1.msra.mxu0 0.0
        %5840 = vmatprep.subr.mxu0 0.0
        %5841 = vmatpush1.msra.mxu0 0.0
        %5842 = vmatprep.subr.mxu0 0.0
        %5843 = vmatpush1.msra.mxu0 0.0
        %5844 = vmatprep.subr.mxu0 0.0
        %5845 = vmatpush1.msra.mxu0 0.0
        %5846 = vmatprep.subr.mxu0 0.0
        %5847 = vmatpush1.msra.mxu0 0.0
        %5848 = vmatprep.subr.mxu0 0.0
        %5849 = vmatpush1.msra.mxu0 0.0
        %5850 = vmatprep.subr.mxu0 0.0
        %5851 = vmatpush1.msra.mxu0 0.0
        %5852 = vmatprep.subr.mxu0 0.0
        %5853 = vmatpush1.msra.mxu0 0.0
        %5854 = vmatprep.subr.mxu0 0.0
        %5855 = vmatpush1.msra.mxu0 0.0
        %5856 = vmatprep.subr.mxu0 0.0
        %5857 = vmatpush1.msra.mxu0 0.0
        %5858 = vmatprep.subr.mxu0 0.0
        %5859 = vmatpush1.msra.mxu0 0.0
        %5860 = vmatprep.subr.mxu0 0.0
        %5861 = vmatpush1.msra.mxu0 0.0
        %5862 = vmatprep.subr.mxu0 0.0
        %5863 = vmatpush1.msra.mxu0 0.0
        %5864 = vmatprep.subr.mxu0 0.0
        %5865 = vmatpush1.msra.mxu0 0.0
        %5866 = vmatprep.subr.mxu0 0.0
        %5867 = vmatpush1.msra.mxu0 0.0
        %5868 = vmatprep.subr.mxu0 0.0
        %5869 = vmatpush1.msra.mxu0 0.0
        %5870 = vmatprep.subr.mxu0 0.0
        %5871 = vmatpush1.msra.mxu0 0.0
        %5872 = vmatprep.subr.mxu0 0.0
        %5873 = vmatpush1.msra.mxu0 0.0
        %5874 = vmatprep.subr.mxu0 0.0
        %5875 = vmatpush1.msra.mxu0 0.0
        %5876 = vmatprep.subr.mxu0 0.0
        %5877 = vmatpush1.msra.mxu0 0.0
        %5878 = vmatprep.subr.mxu0 0.0
        %5879 = vmatpush1.msra.mxu0 0.0
        %5880 = vmatprep.subr.mxu0 0.0
        %5881 = vmatpush1.msra.mxu0 0.0
        %5882 = vmatprep.subr.mxu0 0.0
        %5883 = vmatpush1.msra.mxu0 0.0
        %5884 = vmatprep.subr.mxu0 0.0
        %5885 = vmatpush1.msra.mxu0 0.0
        %5886 = vmatprep.subr.mxu0 0.0
        %5887 = vmatpush1.msra.mxu0 0.0
        %5888 = vmatprep.subr.mxu0 0.0
        %5889 = vmatpush1.msra.mxu0 0.0
        %5890 = vmatprep.subr.mxu0 0.0
        %5891 = vmatpush1.msra.mxu0 0.0
        %5892 = vmatprep.subr.mxu0 0.0
        %5893 = vmatpush1.msra.mxu0 0.0
        %5894 = vmatprep.mubr.f32.mxu0 0.0
        %5895 = vmatmul.mubr.f32.gmra.mrb[0].mxu0 %v5828
        %v5896 = vpop.f32.mrb[0].mxu0
        %v5897 = vadd.f32 %v5824, %v5896
        %v5898 = vpop.f32.mrb[0].mxu0
        %5899 = vdwg.mxu0
        %v5900 = vlaneseq
        %v5901 = vshrl.u32 %v5900, 7
        %v5902 = vsub.s32 3, %v5901
        %v5903 = vrot.slane %v5324, %v5902
        %v5904 = vadd.f32 %v5897, %v5903
        %v5905 = vadd.f32 %v5315, %v5904
        %v5906 = vsel %vm3612, %v5905, 0.0
        %5907 = vadd.xlane.f32.xlu0 %v5906
        %v5908 = vpop.xlane.xlu0 %5907
        %v5909 = vmul.f32 %v5908, %v4196
        %v5910 = vsub.f32 %v5905, %v5909
        %v5911 = vmul.f32 %v5910, %v5910
        %v5912 = vsel %vm3612, %v5911, 0.0
        %5913 = vadd.xlane.f32.xlu0 %v5912
        %v5914 = vpop.xlane.xlu0 %5913
        %v5915 = vmul.f32 %v5914, %v4196
        %v5916 = vadd.f32 %v5915, 1e-05
        %v5917 = vrsqrt.pop %v5916
        %v5918 = vmul.f32 %v5910, %v5917
        %v5919 = vlaneseq
        %v5920 = vshrl.u32 %v5919, 7
        %v5921 = vsub.s32 4, %v5920
        %v5922 = vrot.slane %v5324, %v5921
        %v5923 = vmul.f32 %v5918, %v5922
        %v5924 = vlaneseq
        %v5925 = vshrl.u32 %v5924, 7
        %v5926 = vsub.s32 5, %v5925
        %v5927 = vrot.slane %v5324, %v5926
        %v5928 = vadd.f32 %v5923, %v5927
        %v5929 = vlaneseq
        %v5930 = vshrl.u32 %v5929, 7
        %v5931 = vsub.s32 6, %v5930
        %v5932 = vrot.slane %v5324, %v5931
        %v5934 = vsel %vm3612, %v5928, 0
        %5936 = vmatprep.subr.mxu0 0.0
        %5937 = vmatpush1.msra.mxu0 %v5320
        %5938 = vmatprep.subr.mxu0 0.0
        %5939 = vmatpush1.msra.mxu0 %v5321
        %5940 = vmatprep.subr.mxu0 0.0
        %5941 = vmatpush1.msra.mxu0 0.0
        %5942 = vmatprep.subr.mxu0 0.0
        %5943 = vmatpush1.msra.mxu0 0.0
        %5944 = vmatprep.subr.mxu0 0.0
        %5945 = vmatpush1.msra.mxu0 0.0
        %5946 = vmatprep.subr.mxu0 0.0
        %5947 = vmatpush1.msra.mxu0 0.0
        %5948 = vmatprep.subr.mxu0 0.0
        %5949 = vmatpush1.msra.mxu0 0.0
        %5950 = vmatprep.subr.mxu0 0.0
        %5951 = vmatpush1.msra.mxu0 0.0
        %5952 = vmatprep.subr.mxu0 0.0
        %5953 = vmatpush1.msra.mxu0 0.0
        %5954 = vmatprep.subr.mxu0 0.0
        %5955 = vmatpush1.msra.mxu0 0.0
        %5956 = vmatprep.subr.mxu0 0.0
        %5957 = vmatpush1.msra.mxu0 0.0
        %5958 = vmatprep.subr.mxu0 0.0
        %5959 = vmatpush1.msra.mxu0 0.0
        %5960 = vmatprep.subr.mxu0 0.0
        %5961 = vmatpush1.msra.mxu0 0.0
        %5962 = vmatprep.subr.mxu0 0.0
        %5963 = vmatpush1.msra.mxu0 0.0
        %5964 = vmatprep.subr.mxu0 0.0
        %5965 = vmatpush1.msra.mxu0 0.0
        %5966 = vmatprep.subr.mxu0 0.0
        %5967 = vmatpush1.msra.mxu0 0.0
        %5968 = vmatprep.subr.mxu0 0.0
        %5969 = vmatpush1.msra.mxu0 0.0
        %5970 = vmatprep.subr.mxu0 0.0
        %5971 = vmatpush1.msra.mxu0 0.0
        %5972 = vmatprep.subr.mxu0 0.0
        %5973 = vmatpush1.msra.mxu0 0.0
        %5974 = vmatprep.subr.mxu0 0.0
        %5975 = vmatpush1.msra.mxu0 0.0
        %5976 = vmatprep.subr.mxu0 0.0
        %5977 = vmatpush1.msra.mxu0 0.0
        %5978 = vmatprep.subr.mxu0 0.0
        %5979 = vmatpush1.msra.mxu0 0.0
        %5980 = vmatprep.subr.mxu0 0.0
        %5981 = vmatpush1.msra.mxu0 0.0
        %5982 = vmatprep.subr.mxu0 0.0
        %5983 = vmatpush1.msra.mxu0 0.0
        %5984 = vmatprep.subr.mxu0 0.0
        %5985 = vmatpush1.msra.mxu0 0.0
        %5986 = vmatprep.subr.mxu0 0.0
        %5987 = vmatpush1.msra.mxu0 0.0
        %5988 = vmatprep.subr.mxu0 0.0
        %5989 = vmatpush1.msra.mxu0 0.0
        %5990 = vmatprep.subr.mxu0 0.0
        %5991 = vmatpush1.msra.mxu0 0.0
        %5992 = vmatprep.subr.mxu0 0.0
        %5993 = vmatpush1.msra.mxu0 0.0
        %5994 = vmatprep.subr.mxu0 0.0
        %5995 = vmatpush1.msra.mxu0 0.0
        %5996 = vmatprep.subr.mxu0 0.0
        %5997 = vmatpush1.msra.mxu0 0.0
        %5998 = vmatprep.subr.mxu0 0.0
        %5999 = vmatpush1.msra.mxu0 0.0
        %6000 = vmatprep.mubr.f32.mxu0 0.0
        %6001 = vmatmul.mubr.f32.gmra.mrb[0].mxu0 %v5934
        %v6002 = vpop.f32.mrb[0].mxu0
        %v6003 = vadd.f32 %v5932, %v6002
        %v6004 = vpop.f32.mrb[0].mxu0
        %6005 = vdwg.mxu0
        %v6006 = vmul.f32 %v6003, 0.5
        %v6007 = vmul.f32 %v6003, 0.70710677
        %v6008 = verf.f32.pop %v6007
        %v6009 = vadd.f32 %v6008, 1.0
        %v6010 = vmul.f32 %v6006, %v6009
        %v6011 = vlaneseq
        %v6012 = vshrl.u32 %v6011, 7
        %v6013 = vsub.s32 7, %v6012
        %v6014 = vrot.slane %v5324, %v6013
        %v6016 = vsel %vm3612, %v6010, 0
        %6018 = vmatprep.subr.mxu0 0.0
        %6019 = vmatpush1.msra.mxu0 %v5322
        %6020 = vmatprep.subr.mxu0 0.0
        %6021 = vmatpush1.msra.mxu0 %v5323
        %6022 = vmatprep.subr.mxu0 0.0
        %6023 = vmatpush1.msra.mxu0 0.0
        %6024 = vmatprep.subr.mxu0 0.0
        %6025 = vmatpush1.msra.mxu0 0.0
        %6026 = vmatprep.subr.mxu0 0.0
        %6027 = vmatpush1.msra.mxu0 0.0
        %6028 = vmatprep.subr.mxu0 0.0
        %6029 = vmatpush1.msra.mxu0 0.0
        %6030 = vmatprep.subr.mxu0 0.0
        %6031 = vmatpush1.msra.mxu0 0.0
        %6032 = vmatprep.subr.mxu0 0.0
        %6033 = vmatpush1.msra.mxu0 0.0
        %6034 = vmatprep.subr.mxu0 0.0
        %6035 = vmatpush1.msra.mxu0 0.0
        %6036 = vmatprep.subr.mxu0 0.0
        %6037 = vmatpush1.msra.mxu0 0.0
        %6038 = vmatprep.subr.mxu0 0.0
        %6039 = vmatpush1.msra.mxu0 0.0
        %6040 = vmatprep.subr.mxu0 0.0
        %6041 = vmatpush1.msra.mxu0 0.0
        %6042 = vmatprep.subr.mxu0 0.0
        %6043 = vmatpush1.msra.mxu0 0.0
        %6044 = vmatprep.subr.mxu0 0.0
        %6045 = vmatpush1.msra.mxu0 0.0
        %6046 = vmatprep.subr.mxu0 0.0
        %6047 = vmatpush1.msra.mxu0 0.0
        %6048 = vmatprep.subr.mxu0 0.0
        %6049 = vmatpush1.msra.mxu0 0.0
        %6050 = vmatprep.subr.mxu0 0.0
        %6051 = vmatpush1.msra.mxu0 0.0
        %6052 = vmatprep.subr.mxu0 0.0
        %6053 = vmatpush1.msra.mxu0 0.0
        %6054 = vmatprep.subr.mxu0 0.0
        %6055 = vmatpush1.msra.mxu0 0.0
        %6056 = vmatprep.subr.mxu0 0.0
        %6057 = vmatpush1.msra.mxu0 0.0
        %6058 = vmatprep.subr.mxu0 0.0
        %6059 = vmatpush1.msra.mxu0 0.0
        %6060 = vmatprep.subr.mxu0 0.0
        %6061 = vmatpush1.msra.mxu0 0.0
        %6062 = vmatprep.subr.mxu0 0.0
        %6063 = vmatpush1.msra.mxu0 0.0
        %6064 = vmatprep.subr.mxu0 0.0
        %6065 = vmatpush1.msra.mxu0 0.0
        %6066 = vmatprep.subr.mxu0 0.0
        %6067 = vmatpush1.msra.mxu0 0.0
        %6068 = vmatprep.subr.mxu0 0.0
        %6069 = vmatpush1.msra.mxu0 0.0
        %6070 = vmatprep.subr.mxu0 0.0
        %6071 = vmatpush1.msra.mxu0 0.0
        %6072 = vmatprep.subr.mxu0 0.0
        %6073 = vmatpush1.msra.mxu0 0.0
        %6074 = vmatprep.subr.mxu0 0.0
        %6075 = vmatpush1.msra.mxu0 0.0
        %6076 = vmatprep.subr.mxu0 0.0
        %6077 = vmatpush1.msra.mxu0 0.0
        %6078 = vmatprep.subr.mxu0 0.0
        %6079 = vmatpush1.msra.mxu0 0.0
        %6080 = vmatprep.subr.mxu0 0.0
        %6081 = vmatpush1.msra.mxu0 0.0
        %6082 = vmatprep.mubr.f32.mxu0 0.0
        %6083 = vmatmul.mubr.f32.gmra.mrb[0].mxu0 %v6016
        %v6084 = vpop.f32.mrb[0].mxu0
        %v6085 = vadd.f32 %v6014, %v6084
        %v6086 = vpop.f32.mrb[0].mxu0
        %6087 = vdwg.mxu0
        %v6088 = vadd.f32 %v5928, %v6085
        %v6089 = vsel %vm3612, %v6088, 0.0
        %6090 = vadd.xlane.f32.xlu0 %v6089
        %v6091 = vpop.xlane.xlu0 %6090
        %v6092 = vmul.f32 %v6091, %v4196
        %v6093 = vsub.f32 %v6088, %v6092
        %v6094 = vmul.f32 %v6093, %v6093
        %v6095 = vsel %vm3612, %v6094, 0.0
        %6096 = vadd.xlane.f32.xlu0 %v6095
        %v6097 = vpop.xlane.xlu0 %6096
        %v6098 = vmul.f32 %v6097, %v4196
        %v6099 = vadd.f32 %v6098, 1e-05
        %v6100 = vrsqrt.pop %v6099
        %v6101 = vmul.f32 %v6093, %v6100
        %v6102 = vlaneseq
        %v6103 = vshrl.u32 %v6102, 7
        %v6104 = vsub.s32 0, %v6103
        %v6105 = vrot.slane %v5325, %v6104
        %v6106 = vmul.f32 %v6101, %v6105
        %v6107 = vlaneseq
        %v6108 = vshrl.u32 %v6107, 7
        %v6109 = vsub.s32 1, %v6108
        %v6110 = vrot.slane %v5325, %v6109
        %v6111 = vadd.f32 %v6106, %v6110
        %s6112 = scalar_lea.vmem [#allocation16], 16
        %v6113 = vld [vmem:[%s6112] sm:$0xff]
        %v6114 = vld [vmem:[%s6112 + $0x8] sm:$0xff]
        %s6115 = scalar_lea.vmem [#allocation17], 48
        %v6116 = vld [vmem:[%s6115] sm:$0xff]
        %v6117 = vld [vmem:[%s6115 + $0x8] sm:$0xff]
        %v6118 = vld [vmem:[%s6115 + $0x10] sm:$0xff]
        %v6119 = vld [vmem:[%s6115 + $0x18] sm:$0xff]
        %v6120 = vld [vmem:[%s6115 + $0x20] sm:$0xff]
        %v6121 = vld [vmem:[%s6115 + $0x28] sm:$0xff]
        %s6122 = scalar_lea.vmem [#allocation19], 16
        %v6123 = vld [vmem:[%s6122] sm:$0xff]
        %v6124 = vld [vmem:[%s6122 + $0x8] sm:$0x3]
        %v6126 = vsel %vm3612, %v6111, 0
        %6128 = vmatprep.subr.mxu0 0.0
        %6129 = vmatpush1.msra.mxu0 %v6113
        %6130 = vmatprep.subr.mxu0 0.0
        %6131 = vmatpush1.msra.mxu0 %v6114
        %6132 = vmatprep.subr.mxu0 0.0
        %6133 = vmatpush1.msra.mxu0 0.0
        %6134 = vmatprep.subr.mxu0 0.0
        %6135 = vmatpush1.msra.mxu0 0.0
        %6136 = vmatprep.subr.mxu0 0.0
        %6137 = vmatpush1.msra.mxu0 0.0
        %6138 = vmatprep.subr.mxu0 0.0
        %6139 = vmatpush1.msra.mxu0 0.0
        %6140 = vmatprep.subr.mxu0 0.0
        %6141 = vmatpush1.msra.mxu0 0.0
        %6142 = vmatprep.subr.mxu0 0.0
        %6143 = vmatpush1.msra.mxu0 0.0
        %6144 = vmatprep.subr.mxu0 0.0
        %6145 = vmatpush1.msra.mxu0 0.0
        %6146 = vmatprep.subr.mxu0 0.0
        %6147 = vmatpush1.msra.mxu0 0.0
        %6148 = vmatprep.subr.mxu0 0.0
        %6149 = vmatpush1.msra.mxu0 0.0
        %6150 = vmatprep.subr.mxu0 0.0
        %6151 = vmatpush1.msra.mxu0 0.0
        %6152 = vmatprep.subr.mxu0 0.0
        %6153 = vmatpush1.msra.mxu0 0.0
        %6154 = vmatprep.subr.mxu0 0.0
        %6155 = vmatpush1.msra.mxu0 0.0
        %6156 = vmatprep.subr.mxu0 0.0
        %6157 = vmatpush1.msra.mxu0 0.0
        %6158 = vmatprep.subr.mxu0 0.0
        %6159 = vmatpush1.msra.mxu0 0.0
        %6160 = vmatprep.subr.mxu0 0.0
        %6161 = vmatpush1.msra.mxu0 0.0
        %6162 = vmatprep.subr.mxu0 0.0
        %6163 = vmatpush1.msra.mxu0 0.0
        %6164 = vmatprep.subr.mxu0 0.0
        %6165 = vmatpush1.msra.mxu0 0.0
        %6166 = vmatprep.subr.mxu0 0.0
        %6167 = vmatpush1.msra.mxu0 0.0
        %6168 = vmatprep.subr.mxu0 0.0
        %6169 = vmatpush1.msra.mxu0 0.0
        %6170 = vmatprep.subr.mxu0 0.0
        %6171 = vmatpush1.msra.mxu0 0.0
        %6172 = vmatprep.subr.mxu0 0.0
        %6173 = vmatpush1.msra.mxu0 0.0
        %6174 = vmatprep.subr.mxu0 0.0
        %6175 = vmatpush1.msra.mxu0 0.0
        %6176 = vmatprep.subr.mxu0 0.0
        %6177 = vmatpush1.msra.mxu0 0.0
        %6178 = vmatprep.subr.mxu0 0.0
        %6179 = vmatpush1.msra.mxu0 0.0
        %6180 = vmatprep.subr.mxu0 0.0
        %6181 = vmatpush1.msra.mxu0 0.0
        %6182 = vmatprep.subr.mxu0 0.0
        %6183 = vmatpush1.msra.mxu0 0.0
        %6184 = vmatprep.subr.mxu0 0.0
        %6185 = vmatpush1.msra.mxu0 0.0
        %6186 = vmatprep.subr.mxu0 0.0
        %6187 = vmatpush1.msra.mxu0 0.0
        %6188 = vmatprep.subr.mxu0 0.0
        %6189 = vmatpush1.msra.mxu0 0.0
        %6190 = vmatprep.subr.mxu0 0.0
        %6191 = vmatpush1.msra.mxu0 0.0
        %6192 = vmatprep.mubr.f32.mxu0 0.0
        %6193 = vmatmul.mubr.f32.gmra.mrb[0].mxu0 %v6126
        %v6194 = vpop.f32.mrb[0].mxu0
        %v6195 = vadd.f32 0.0, %v6194
        %v6196 = vpop.f32.mrb[0].mxu0
        %6197 = vdwg.mxu0
        %v6198 = vlaneseq
        %v6199 = vshrl.u32 %v6198, 7
        %v6200 = vsub.s32 0, %v6199
        %v6201 = vrot.slane %v6123, %v6200
        %v6202 = vadd.f32 %v6195, %v6201
        %v6203 = vmul.f32 %v6202, 0.35355338
        %v6204 = vlaneseq
        %v6205 = vshrl.u32 %v6204, 7
        %v6206 = vsub.s32 1, %v6205
        %v6207 = vrot.slane %v6123, %v6206
        %6209 = vrot.lane.b32.xlu0 %v6207, 16
        %v6210 = vpop.permute.xlu0 %6209
        %v6212 = vadd.f32 %v6195, %v6210
        %v6213 = vlaneseq
        %v6214 = vshrl.u32 %v6213, 7
        %v6215 = vsub.s32 2, %v6214
        %v6216 = vrot.slane %v6123, %v6215
        %6218 = vrot.lane.b32.xlu0 %v6216, 32
        %v6219 = vpop.permute.xlu0 %6218
        %v6221 = vadd.f32 %v6195, %v6219
        %6223 = vrot.lane.b32.xlu0 %v6212, 112
        %v6224 = vpop.permute.xlu0 %6223
        %v6226 = vsel %vm1032, %v6203, 0
        %v6228 = vsel %vm1032, %v6224, 0
        %6230 = vmatprep.subr.mxu0 0.0
        %6231 = vmatpush1.xpose.msra.mxu0 %v6228
        %6232 = vmatprep.subr.mxu0 0.0
        %6233 = vmatpush1.xpose.msra.mxu0 0.0
        %6234 = vmatprep.subr.mxu0 0.0
        %6235 = vmatpush1.xpose.msra.mxu0 0.0
        %6236 = vmatprep.subr.mxu0 0.0
        %6237 = vmatpush1.xpose.msra.mxu0 0.0
        %6238 = vmatprep.subr.mxu0 0.0
        %6239 = vmatpush1.xpose.msra.mxu0 0.0
        %6240 = vmatprep.subr.mxu0 0.0
        %6241 = vmatpush1.xpose.msra.mxu0 0.0
        %6242 = vmatprep.subr.mxu0 0.0
        %6243 = vmatpush1.xpose.msra.mxu0 0.0
        %6244 = vmatprep.subr.mxu0 0.0
        %6245 = vmatpush1.xpose.msra.mxu0 0.0
        %6246 = vmatprep.subr.mxu0 0.0
        %6247 = vmatpush1.xpose.msra.mxu0 0.0
        %6248 = vmatprep.subr.mxu0 0.0
        %6249 = vmatpush1.xpose.msra.mxu0 0.0
        %6250 = vmatprep.subr.mxu0 0.0
        %6251 = vmatpush1.xpose.msra.mxu0 0.0
        %6252 = vmatprep.subr.mxu0 0.0
        %6253 = vmatpush1.xpose.msra.mxu0 0.0
        %6254 = vmatprep.subr.mxu0 0.0
        %6255 = vmatpush1.xpose.msra.mxu0 0.0
        %6256 = vmatprep.subr.mxu0 0.0
        %6257 = vmatpush1.xpose.msra.mxu0 0.0
        %6258 = vmatprep.subr.mxu0 0.0
        %6259 = vmatpush1.xpose.msra.mxu0 0.0
        %6260 = vmatprep.subr.mxu0 0.0
        %6261 = vmatpush1.xpose.msra.mxu0 0.0
        %6262 = vmatprep.subr.mxu0 0.0
        %6263 = vmatpush1.xpose.msra.mxu0 0.0
        %6264 = vmatprep.subr.mxu0 0.0
        %6265 = vmatpush1.xpose.msra.mxu0 0.0
        %6266 = vmatprep.subr.mxu0 0.0
        %6267 = vmatpush1.xpose.msra.mxu0 0.0
        %6268 = vmatprep.subr.mxu0 0.0
        %6269 = vmatpush1.xpose.msra.mxu0 0.0
        %6270 = vmatprep.subr.mxu0 0.0
        %6271 = vmatpush1.xpose.msra.mxu0 0.0
        %6272 = vmatprep.subr.mxu0 0.0
        %6273 = vmatpush1.xpose.msra.mxu0 0.0
        %6274 = vmatprep.subr.mxu0 0.0
        %6275 = vmatpush1.xpose.msra.mxu0 0.0
        %6276 = vmatprep.subr.mxu0 0.0
        %6277 = vmatpush1.xpose.msra.mxu0 0.0
        %6278 = vmatprep.subr.mxu0 0.0
        %6279 = vmatpush1.xpose.msra.mxu0 0.0
        %6280 = vmatprep.subr.mxu0 0.0
        %6281 = vmatpush1.xpose.msra.mxu0 0.0
        %6282 = vmatprep.subr.mxu0 0.0
        %6283 = vmatpush1.xpose.msra.mxu0 0.0
        %6284 = vmatprep.subr.mxu0 0.0
        %6285 = vmatpush1.xpose.msra.mxu0 0.0
        %6286 = vmatprep.subr.mxu0 0.0
        %6287 = vmatpush1.xpose.msra.mxu0 0.0
        %6288 = vmatprep.subr.mxu0 0.0
        %6289 = vmatpush1.xpose.msra.mxu0 0.0
        %6290 = vmatprep.subr.mxu0 0.0
        %6291 = vmatpush1.xpose.msra.mxu0 0.0
        %6292 = vmatprep.subr.mxu0 0.0
        %6293 = vmatpush1.xpose.msra.mxu0 0.0
        %6294 = vmatprep.mubr.f32.mxu0 0.0
        %6295 = vmatmul.mubr.f32.gmra.mrb[0].mxu0 %v6226
        %v6296 = vpop.f32.mrb[0].mxu0
        %v6297 = vadd.f32 0.0, %v6296
        %v6298 = vpop.f32.mrb[0].mxu0
        %6299 = vdwg.mxu0
        %v6300 = vsel %vm1032, %v6297, -inf
        %6301 = vmax.xlane.f32.xlu0 %v6300
        %v6302 = vpop.xlane.xlu0 %6301
        %v6303 = vsub.f32 %v6297, %v6302
        %v6304 = vmul.f32 %v6303, 1.442695
        %v6305 = vpow.pop %v6304
        %v6306 = vsel %vm1032, %v6305, 0.0
        %6307 = vadd.xlane.f32.xlu0 %v6306
        %v6308 = vpop.xlane.xlu0 %6307
        %v6309 = vrcp.pop %v6308
        %v6310 = vmul.f32 %v6305, %v6309
        %6312 = vrot.lane.b32.xlu0 %v6221, 96
        %v6313 = vpop.permute.xlu0 %6312
        %v6316 = vsel %vm1032, %v6310, 0
        %6318 = vmatprep.subr.mxu0 0.0
        %6319 = vmatpush1.msra.mxu0 %v6313
        %6320 = vmatprep.subr.mxu0 0.0
        %6321 = vmatpush1.msra.mxu0 0.0
        %6322 = vmatprep.subr.mxu0 0.0
        %6323 = vmatpush1.msra.mxu0 0.0
        %6324 = vmatprep.subr.mxu0 0.0
        %6325 = vmatpush1.msra.mxu0 0.0
        %6326 = vmatprep.subr.mxu0 0.0
        %6327 = vmatpush1.msra.mxu0 0.0
        %6328 = vmatprep.subr.mxu0 0.0
        %6329 = vmatpush1.msra.mxu0 0.0
        %6330 = vmatprep.subr.mxu0 0.0
        %6331 = vmatpush1.msra.mxu0 0.0
        %6332 = vmatprep.subr.mxu0 0.0
        %6333 = vmatpush1.msra.mxu0 0.0
        %6334 = vmatprep.subr.mxu0 0.0
        %6335 = vmatpush1.msra.mxu0 0.0
        %6336 = vmatprep.subr.mxu0 0.0
        %6337 = vmatpush1.msra.mxu0 0.0
        %6338 = vmatprep.subr.mxu0 0.0
        %6339 = vmatpush1.msra.mxu0 0.0
        %6340 = vmatprep.subr.mxu0 0.0
        %6341 = vmatpush1.msra.mxu0 0.0
        %6342 = vmatprep.subr.mxu0 0.0
        %6343 = vmatpush1.msra.mxu0 0.0
        %6344 = vmatprep.subr.mxu0 0.0
        %6345 = vmatpush1.msra.mxu0 0.0
        %6346 = vmatprep.subr.mxu0 0.0
        %6347 = vmatpush1.msra.mxu0 0.0
        %6348 = vmatprep.subr.mxu0 0.0
        %6349 = vmatpush1.msra.mxu0 0.0
        %6350 = vmatprep.subr.mxu0 0.0
        %6351 = vmatpush1.msra.mxu0 0.0
        %6352 = vmatprep.subr.mxu0 0.0
        %6353 = vmatpush1.msra.mxu0 0.0
        %6354 = vmatprep.subr.mxu0 0.0
        %6355 = vmatpush1.msra.mxu0 0.0
        %6356 = vmatprep.subr.mxu0 0.0
        %6357 = vmatpush1.msra.mxu0 0.0
        %6358 = vmatprep.subr.mxu0 0.0
        %6359 = vmatpush1.msra.mxu0 0.0
        %6360 = vmatprep.subr.mxu0 0.0
        %6361 = vmatpush1.msra.mxu0 0.0
        %6362 = vmatprep.subr.mxu0 0.0
        %6363 = vmatpush1.msra.mxu0 0.0
        %6364 = vmatprep.subr.mxu0 0.0
        %6365 = vmatpush1.msra.mxu0 0.0
        %6366 = vmatprep.subr.mxu0 0.0
        %6367 = vmatpush1.msra.mxu0 0.0
        %6368 = vmatprep.subr.mxu0 0.0
        %6369 = vmatpush1.msra.mxu0 0.0
        %6370 = vmatprep.subr.mxu0 0.0
        %6371 = vmatpush1.msra.mxu0 0.0
        %6372 = vmatprep.subr.mxu0 0.0
        %6373 = vmatpush1.msra.mxu0 0.0
        %6374 = vmatprep.subr.mxu0 0.0
        %6375 = vmatpush1.msra.mxu0 0.0
        %6376 = vmatprep.subr.mxu0 0.0
        %6377 = vmatpush1.msra.mxu0 0.0
        %6378 = vmatprep.subr.mxu0 0.0
        %6379 = vmatpush1.msra.mxu0 0.0
        %6380 = vmatprep.subr.mxu0 0.0
        %6381 = vmatpush1.msra.mxu0 0.0
        %6382 = vmatprep.mubr.f32.mxu0 0.0
        %6383 = vmatmul.mubr.f32.gmra.mrb[0].mxu0 %v6316
        %v6384 = vpop.f32.mrb[0].mxu0
        %v6385 = vadd.f32 0.0, %v6384
        %v6386 = vpop.f32.mrb[0].mxu0
        %6387 = vdwg.mxu0
        %6388 = vrot.lane.b32.xlu0 %v6203, 120
        %v6389 = vpop.permute.xlu0 %6388
        %6390 = vrot.lane.b32.xlu0 %v6212, 104
        %v6391 = vpop.permute.xlu0 %6390
        %v6392 = vsel %vm1032, %v6389, 0
        %v6394 = vsel %vm1032, %v6391, 0
        %6396 = vmatprep.subr.mxu0 0.0
        %6397 = vmatpush1.xpose.msra.mxu0 %v6394
        %6398 = vmatprep.subr.mxu0 0.0
        %6399 = vmatpush1.xpose.msra.mxu0 0.0
        %6400 = vmatprep.subr.mxu0 0.0
        %6401 = vmatpush1.xpose.msra.mxu0 0.0
        %6402 = vmatprep.subr.mxu0 0.0
        %6403 = vmatpush1.xpose.msra.mxu0 0.0
        %6404 = vmatprep.subr.mxu0 0.0
        %6405 = vmatpush1.xpose.msra.mxu0 0.0
        %6406 = vmatprep.subr.mxu0 0.0
        %6407 = vmatpush1.xpose.msra.mxu0 0.0
        %6408 = vmatprep.subr.mxu0 0.0
        %6409 = vmatpush1.xpose.msra.mxu0 0.0
        %6410 = vmatprep.subr.mxu0 0.0
        %6411 = vmatpush1.xpose.msra.mxu0 0.0
        %6412 = vmatprep.subr.mxu0 0.0
        %6413 = vmatpush1.xpose.msra.mxu0 0.0
        %6414 = vmatprep.subr.mxu0 0.0
        %6415 = vmatpush1.xpose.msra.mxu0 0.0
        %6416 = vmatprep.subr.mxu0 0.0
        %6417 = vmatpush1.xpose.msra.mxu0 0.0
        %6418 = vmatprep.subr.mxu0 0.0
        %6419 = vmatpush1.xpose.msra.mxu0 0.0
        %6420 = vmatprep.subr.mxu0 0.0
        %6421 = vmatpush1.xpose.msra.mxu0 0.0
        %6422 = vmatprep.subr.mxu0 0.0
        %6423 = vmatpush1.xpose.msra.mxu0 0.0
        %6424 = vmatprep.subr.mxu0 0.0
        %6425 = vmatpush1.xpose.msra.mxu0 0.0
        %6426 = vmatprep.subr.mxu0 0.0
        %6427 = vmatpush1.xpose.msra.mxu0 0.0
        %6428 = vmatprep.subr.mxu0 0.0
        %6429 = vmatpush1.xpose.msra.mxu0 0.0
        %6430 = vmatprep.subr.mxu0 0.0
        %6431 = vmatpush1.xpose.msra.mxu0 0.0
        %6432 = vmatprep.subr.mxu0 0.0
        %6433 = vmatpush1.xpose.msra.mxu0 0.0
        %6434 = vmatprep.subr.mxu0 0.0
        %6435 = vmatpush1.xpose.msra.mxu0 0.0
        %6436 = vmatprep.subr.mxu0 0.0
        %6437 = vmatpush1.xpose.msra.mxu0 0.0
        %6438 = vmatprep.subr.mxu0 0.0
        %6439 = vmatpush1.xpose.msra.mxu0 0.0
        %6440 = vmatprep.subr.mxu0 0.0
        %6441 = vmatpush1.xpose.msra.mxu0 0.0
        %6442 = vmatprep.subr.mxu0 0.0
        %6443 = vmatpush1.xpose.msra.mxu0 0.0
        %6444 = vmatprep.subr.mxu0 0.0
        %6445 = vmatpush1.xpose.msra.mxu0 0.0
        %6446 = vmatprep.subr.mxu0 0.0
        %6447 = vmatpush1.xpose.msra.mxu0 0.0
        %6448 = vmatprep.subr.mxu0 0.0
        %6449 = vmatpush1.xpose.msra.mxu0 0.0
        %6450 = vmatprep.subr.mxu0 0.0
        %6451 = vmatpush1.xpose.msra.mxu0 0.0
        %6452 = vmatprep.subr.mxu0 0.0
        %6453 = vmatpush1.xpose.msra.mxu0 0.0
        %6454 = vmatprep.subr.mxu0 0.0
        %6455 = vmatpush1.xpose.msra.mxu0 0.0
        %6456 = vmatprep.subr.mxu0 0.0
        %6457 = vmatpush1.xpose.msra.mxu0 0.0
        %6458 = vmatprep.subr.mxu0 0.0
        %6459 = vmatpush1.xpose.msra.mxu0 0.0
        %6460 = vmatprep.mubr.f32.mxu0 0.0
        %6461 = vmatmul.mubr.f32.gmra.mrb[0].mxu0 %v6392
        %v6462 = vpop.f32.mrb[0].mxu0
        %v6463 = vadd.f32 0.0, %v6462
        %v6464 = vpop.f32.mrb[0].mxu0
        %6465 = vdwg.mxu0
        %v6466 = vsel %vm1032, %v6463, -inf
        %6467 = vmax.xlane.f32.xlu0 %v6466
        %v6468 = vpop.xlane.xlu0 %6467
        %v6469 = vsub.f32 %v6463, %v6468
        %v6470 = vmul.f32 %v6469, 1.442695
        %v6471 = vpow.pop %v6470
        %v6472 = vsel %vm1032, %v6471, 0.0
        %6473 = vadd.xlane.f32.xlu0 %v6472
        %v6474 = vpop.xlane.xlu0 %6473
        %v6475 = vrcp.pop %v6474
        %v6476 = vmul.f32 %v6471, %v6475
        %6477 = vrot.lane.b32.xlu0 %v6221, 88
        %v6478 = vpop.permute.xlu0 %6477
        %v6481 = vsel %vm1032, %v6476, 0
        %6483 = vmatprep.subr.mxu0 0.0
        %6484 = vmatpush1.msra.mxu0 %v6478
        %6485 = vmatprep.subr.mxu0 0.0
        %6486 = vmatpush1.msra.mxu0 0.0
        %6487 = vmatprep.subr.mxu0 0.0
        %6488 = vmatpush1.msra.mxu0 0.0
        %6489 = vmatprep.subr.mxu0 0.0
        %6490 = vmatpush1.msra.mxu0 0.0
        %6491 = vmatprep.subr.mxu0 0.0
        %6492 = vmatpush1.msra.mxu0 0.0
        %6493 = vmatprep.subr.mxu0 0.0
        %6494 = vmatpush1.msra.mxu0 0.0
        %6495 = vmatprep.subr.mxu0 0.0
        %6496 = vmatpush1.msra.mxu0 0.0
        %6497 = vmatprep.subr.mxu0 0.0
        %6498 = vmatpush1.msra.mxu0 0.0
        %6499 = vmatprep.subr.mxu0 0.0
        %6500 = vmatpush1.msra.mxu0 0.0
        %6501 = vmatprep.subr.mxu0 0.0
        %6502 = vmatpush1.msra.mxu0 0.0
        %6503 = vmatprep.subr.mxu0 0.0
        %6504 = vmatpush1.msra.mxu0 0.0
        %6505 = vmatprep.subr.mxu0 0.0
        %6506 = vmatpush1.msra.mxu0 0.0
        %6507 = vmatprep.subr.mxu0 0.0
        %6508 = vmatpush1.msra.mxu0 0.0
        %6509 = vmatprep.subr.mxu0 0.0
        %6510 = vmatpush1.msra.mxu0 0.0
        %6511 = vmatprep.subr.mxu0 0.0
        %6512 = vmatpush1.msra.mxu0 0.0
        %6513 = vmatprep.subr.mxu0 0.0
        %6514 = vmatpush1.msra.mxu0 0.0
        %6515 = vmatprep.subr.mxu0 0.0
        %6516 = vmatpush1.msra.mxu0 0.0
        %6517 = vmatprep.subr.mxu0 0.0
        %6518 = vmatpush1.msra.mxu0 0.0
        %6519 = vmatprep.subr.mxu0 0.0
        %6520 = vmatpush1.msra.mxu0 0.0
        %6521 = vmatprep.subr.mxu0 0.0
        %6522 = vmatpush1.msra.mxu0 0.0
        %6523 = vmatprep.subr.mxu0 0.0
        %6524 = vmatpush1.msra.mxu0 0.0
        %6525 = vmatprep.subr.mxu0 0.0
        %6526 = vmatpush1.msra.mxu0 0.0
        %6527 = vmatprep.subr.mxu0 0.0
        %6528 = vmatpush1.msra.mxu0 0.0
        %6529 = vmatprep.subr.mxu0 0.0
        %6530 = vmatpush1.msra.mxu0 0.0
        %6531 = vmatprep.subr.mxu0 0.0
        %6532 = vmatpush1.msra.mxu0 0.0
        %6533 = vmatprep.subr.mxu0 0.0
        %6534 = vmatpush1.msra.mxu0 0.0
        %6535 = vmatprep.subr.mxu0 0.0
        %6536 = vmatpush1.msra.mxu0 0.0
        %6537 = vmatprep.subr.mxu0 0.0
        %6538 = vmatpush1.msra.mxu0 0.0
        %6539 = vmatprep.subr.mxu0 0.0
        %6540 = vmatpush1.msra.mxu0 0.0
        %6541 = vmatprep.subr.mxu0 0.0
        %6542 = vmatpush1.msra.mxu0 0.0
        %6543 = vmatprep.subr.mxu0 0.0
        %6544 = vmatpush1.msra.mxu0 0.0
        %6545 = vmatprep.subr.mxu0 0.0
        %6546 = vmatpush1.msra.mxu0 0.0
        %6547 = vmatprep.mubr.f32.mxu0 0.0
        %6548 = vmatmul.mubr.f32.gmra.mrb[0].mxu0 %v6481
        %v6549 = vpop.f32.mrb[0].mxu0
        %v6550 = vadd.f32 0.0, %v6549
        %v6551 = vpop.f32.mrb[0].mxu0
        %6552 = vdwg.mxu0
        %v6554 = vsel %vm1032, %v6550, 0
        %6556 = vmatprep.subr.mxu0 0.0
        %6557 = vmatpush1.msra.mxu0 %v6117
        %6558 = vmatprep.subr.mxu0 0.0
        %6559 = vmatpush1.msra.mxu0 0.0
        %6560 = vmatprep.subr.mxu0 0.0
        %6561 = vmatpush1.msra.mxu0 0.0
        %6562 = vmatprep.subr.mxu0 0.0
        %6563 = vmatpush1.msra.mxu0 0.0
        %6564 = vmatprep.subr.mxu0 0.0
        %6565 = vmatpush1.msra.mxu0 0.0
        %6566 = vmatprep.subr.mxu0 0.0
        %6567 = vmatpush1.msra.mxu0 0.0
        %6568 = vmatprep.subr.mxu0 0.0
        %6569 = vmatpush1.msra.mxu0 0.0
        %6570 = vmatprep.subr.mxu0 0.0
        %6571 = vmatpush1.msra.mxu0 0.0
        %6572 = vmatprep.subr.mxu0 0.0
        %6573 = vmatpush1.msra.mxu0 0.0
        %6574 = vmatprep.subr.mxu0 0.0
        %6575 = vmatpush1.msra.mxu0 0.0
        %6576 = vmatprep.subr.mxu0 0.0
        %6577 = vmatpush1.msra.mxu0 0.0
        %6578 = vmatprep.subr.mxu0 0.0
        %6579 = vmatpush1.msra.mxu0 0.0
        %6580 = vmatprep.subr.mxu0 0.0
        %6581 = vmatpush1.msra.mxu0 0.0
        %6582 = vmatprep.subr.mxu0 0.0
        %6583 = vmatpush1.msra.mxu0 0.0
        %6584 = vmatprep.subr.mxu0 0.0
        %6585 = vmatpush1.msra.mxu0 0.0
        %6586 = vmatprep.subr.mxu0 0.0
        %6587 = vmatpush1.msra.mxu0 0.0
        %6588 = vmatprep.subr.mxu0 0.0
        %6589 = vmatpush1.msra.mxu0 0.0
        %6590 = vmatprep.subr.mxu0 0.0
        %6591 = vmatpush1.msra.mxu0 0.0
        %6592 = vmatprep.subr.mxu0 0.0
        %6593 = vmatpush1.msra.mxu0 0.0
        %6594 = vmatprep.subr.mxu0 0.0
        %6595 = vmatpush1.msra.mxu0 0.0
        %6596 = vmatprep.subr.mxu0 0.0
        %6597 = vmatpush1.msra.mxu0 0.0
        %6598 = vmatprep.subr.mxu0 0.0
        %6599 = vmatpush1.msra.mxu0 0.0
        %6600 = vmatprep.subr.mxu0 0.0
        %6601 = vmatpush1.msra.mxu0 0.0
        %6602 = vmatprep.subr.mxu0 0.0
        %6603 = vmatpush1.msra.mxu0 0.0
        %6604 = vmatprep.subr.mxu0 0.0
        %6605 = vmatpush1.msra.mxu0 0.0
        %6606 = vmatprep.subr.mxu0 0.0
        %6607 = vmatpush1.msra.mxu0 0.0
        %6608 = vmatprep.subr.mxu0 0.0
        %6609 = vmatpush1.msra.mxu0 0.0
        %6610 = vmatprep.subr.mxu0 0.0
        %6611 = vmatpush1.msra.mxu0 0.0
        %6612 = vmatprep.subr.mxu0 0.0
        %6613 = vmatpush1.msra.mxu0 0.0
        %6614 = vmatprep.subr.mxu0 0.0
        %6615 = vmatpush1.msra.mxu0 0.0
        %6616 = vmatprep.subr.mxu0 0.0
        %6617 = vmatpush1.msra.mxu0 0.0
        %6618 = vmatprep.subr.mxu0 0.0
        %6619 = vmatpush1.msra.mxu0 0.0
        %6620 = vmatprep.mubr.f32.mxu0 0.0
        %6621 = vmatmul.mubr.f32.gmra.mrb[0].mxu0 %v6554
        %v6622 = vpop.f32.mrb[0].mxu0
        %v6623 = vadd.f32 0.0, %v6622
        %v6624 = vpop.f32.mrb[0].mxu0
        %6625 = vdwg.mxu0
        %v6627 = vsel %vm1032, %v6385, 0
        %6629 = vmatprep.subr.mxu0 0.0
        %6630 = vmatpush1.msra.mxu0 %v6116
        %6631 = vmatprep.subr.mxu0 0.0
        %6632 = vmatpush1.msra.mxu0 0.0
        %6633 = vmatprep.subr.mxu0 0.0
        %6634 = vmatpush1.msra.mxu0 0.0
        %6635 = vmatprep.subr.mxu0 0.0
        %6636 = vmatpush1.msra.mxu0 0.0
        %6637 = vmatprep.subr.mxu0 0.0
        %6638 = vmatpush1.msra.mxu0 0.0
        %6639 = vmatprep.subr.mxu0 0.0
        %6640 = vmatpush1.msra.mxu0 0.0
        %6641 = vmatprep.subr.mxu0 0.0
        %6642 = vmatpush1.msra.mxu0 0.0
        %6643 = vmatprep.subr.mxu0 0.0
        %6644 = vmatpush1.msra.mxu0 0.0
        %6645 = vmatprep.subr.mxu0 0.0
        %6646 = vmatpush1.msra.mxu0 0.0
        %6647 = vmatprep.subr.mxu0 0.0
        %6648 = vmatpush1.msra.mxu0 0.0
        %6649 = vmatprep.subr.mxu0 0.0
        %6650 = vmatpush1.msra.mxu0 0.0
        %6651 = vmatprep.subr.mxu0 0.0
        %6652 = vmatpush1.msra.mxu0 0.0
        %6653 = vmatprep.subr.mxu0 0.0
        %6654 = vmatpush1.msra.mxu0 0.0
        %6655 = vmatprep.subr.mxu0 0.0
        %6656 = vmatpush1.msra.mxu0 0.0
        %6657 = vmatprep.subr.mxu0 0.0
        %6658 = vmatpush1.msra.mxu0 0.0
        %6659 = vmatprep.subr.mxu0 0.0
        %6660 = vmatpush1.msra.mxu0 0.0
        %6661 = vmatprep.subr.mxu0 0.0
        %6662 = vmatpush1.msra.mxu0 0.0
        %6663 = vmatprep.subr.mxu0 0.0
        %6664 = vmatpush1.msra.mxu0 0.0
        %6665 = vmatprep.subr.mxu0 0.0
        %6666 = vmatpush1.msra.mxu0 0.0
        %6667 = vmatprep.subr.mxu0 0.0
        %6668 = vmatpush1.msra.mxu0 0.0
        %6669 = vmatprep.subr.mxu0 0.0
        %6670 = vmatpush1.msra.mxu0 0.0
        %6671 = vmatprep.subr.mxu0 0.0
        %6672 = vmatpush1.msra.mxu0 0.0
        %6673 = vmatprep.subr.mxu0 0.0
        %6674 = vmatpush1.msra.mxu0 0.0
        %6675 = vmatprep.subr.mxu0 0.0
        %6676 = vmatpush1.msra.mxu0 0.0
        %6677 = vmatprep.subr.mxu0 0.0
        %6678 = vmatpush1.msra.mxu0 0.0
        %6679 = vmatprep.subr.mxu0 0.0
        %6680 = vmatpush1.msra.mxu0 0.0
        %6681 = vmatprep.subr.mxu0 0.0
        %6682 = vmatpush1.msra.mxu0 0.0
        %6683 = vmatprep.subr.mxu0 0.0
        %6684 = vmatpush1.msra.mxu0 0.0
        %6685 = vmatprep.subr.mxu0 0.0
        %6686 = vmatpush1.msra.mxu0 0.0
        %6687 = vmatprep.subr.mxu0 0.0
        %6688 = vmatpush1.msra.mxu0 0.0
        %6689 = vmatprep.subr.mxu0 0.0
        %6690 = vmatpush1.msra.mxu0 0.0
        %6691 = vmatprep.subr.mxu0 0.0
        %6692 = vmatpush1.msra.mxu0 0.0
        %6693 = vmatprep.mubr.f32.mxu0 0.0
        %6694 = vmatmul.mubr.f32.gmra.mrb[0].mxu0 %v6627
        %v6695 = vpop.f32.mrb[0].mxu0
        %v6696 = vadd.f32 %v6623, %v6695
        %v6697 = vpop.f32.mrb[0].mxu0
        %6698 = vdwg.mxu0
        %v6699 = vlaneseq
        %v6700 = vshrl.u32 %v6699, 7
        %v6701 = vsub.s32 3, %v6700
        %v6702 = vrot.slane %v6123, %v6701
        %v6703 = vadd.f32 %v6696, %v6702
        %v6704 = vadd.f32 %v6111, %v6703
        %v6705 = vsel %vm3612, %v6704, 0.0
        %6706 = vadd.xlane.f32.xlu0 %v6705
        %v6707 = vpop.xlane.xlu0 %6706
        %v6708 = vmul.f32 %v6707, %v4196
        %v6709 = vsub.f32 %v6704, %v6708
        %v6710 = vmul.f32 %v6709, %v6709
        %v6711 = vsel %vm3612, %v6710, 0.0
        %6712 = vadd.xlane.f32.xlu0 %v6711
        %v6713 = vpop.xlane.xlu0 %6712
        %v6714 = vmul.f32 %v6713, %v4196
        %v6715 = vadd.f32 %v6714, 1e-05
        %v6716 = vrsqrt.pop %v6715
        %v6717 = vmul.f32 %v6709, %v6716
        %v6718 = vlaneseq
        %v6719 = vshrl.u32 %v6718, 7
        %v6720 = vsub.s32 4, %v6719
        %v6721 = vrot.slane %v6123, %v6720
        %v6722 = vmul.f32 %v6717, %v6721
        %v6723 = vlaneseq
        %v6724 = vshrl.u32 %v6723, 7
        %v6725 = vsub.s32 5, %v6724
        %v6726 = vrot.slane %v6123, %v6725
        %v6727 = vadd.f32 %v6722, %v6726
        %v6728 = vlaneseq
        %v6729 = vshrl.u32 %v6728, 7
        %v6730 = vsub.s32 6, %v6729
        %v6731 = vrot.slane %v6123, %v6730
        %v6733 = vsel %vm3612, %v6727, 0
        %6735 = vmatprep.subr.mxu0 0.0
        %6736 = vmatpush1.msra.mxu0 %v6118
        %6737 = vmatprep.subr.mxu0 0.0
        %6738 = vmatpush1.msra.mxu0 %v6119
        %6739 = vmatprep.subr.mxu0 0.0
        %6740 = vmatpush1.msra.mxu0 0.0
        %6741 = vmatprep.subr.mxu0 0.0
        %6742 = vmatpush1.msra.mxu0 0.0
        %6743 = vmatprep.subr.mxu0 0.0
        %6744 = vmatpush1.msra.mxu0 0.0
        %6745 = vmatprep.subr.mxu0 0.0
        %6746 = vmatpush1.msra.mxu0 0.0
        %6747 = vmatprep.subr.mxu0 0.0
        %6748 = vmatpush1.msra.mxu0 0.0
        %6749 = vmatprep.subr.mxu0 0.0
        %6750 = vmatpush1.msra.mxu0 0.0
        %6751 = vmatprep.subr.mxu0 0.0
        %6752 = vmatpush1.msra.mxu0 0.0
        %6753 = vmatprep.subr.mxu0 0.0
        %6754 = vmatpush1.msra.mxu0 0.0
        %6755 = vmatprep.subr.mxu0 0.0
        %6756 = vmatpush1.msra.mxu0 0.0
        %6757 = vmatprep.subr.mxu0 0.0
        %6758 = vmatpush1.msra.mxu0 0.0
        %6759 = vmatprep.subr.mxu0 0.0
        %6760 = vmatpush1.msra.mxu0 0.0
        %6761 = vmatprep.subr.mxu0 0.0
        %6762 = vmatpush1.msra.mxu0 0.0
        %6763 = vmatprep.subr.mxu0 0.0
        %6764 = vmatpush1.msra.mxu0 0.0
        %6765 = vmatprep.subr.mxu0 0.0
        %6766 = vmatpush1.msra.mxu0 0.0
        %6767 = vmatprep.subr.mxu0 0.0
        %6768 = vmatpush1.msra.mxu0 0.0
        %6769 = vmatprep.subr.mxu0 0.0
        %6770 = vmatpush1.msra.mxu0 0.0
        %6771 = vmatprep.subr.mxu0 0.0
        %6772 = vmatpush1.msra.mxu0 0.0
        %6773 = vmatprep.subr.mxu0 0.0
        %6774 = vmatpush1.msra.mxu0 0.0
        %6775 = vmatprep.subr.mxu0 0.0
        %6776 = vmatpush1.msra.mxu0 0.0
        %6777 = vmatprep.subr.mxu0 0.0
        %6778 = vmatpush1.msra.mxu0 0.0
        %6779 = vmatprep.subr.mxu0 0.0
        %6780 = vmatpush1.msra.mxu0 0.0
        %6781 = vmatprep.subr.mxu0 0.0
        %6782 = vmatpush1.msra.mxu0 0.0
        %6783 = vmatprep.subr.mxu0 0.0
        %6784 = vmatpush1.msra.mxu0 0.0
        %6785 = vmatprep.subr.mxu0 0.0
        %6786 = vmatpush1.msra.mxu0 0.0
        %6787 = vmatprep.subr.mxu0 0.0
        %6788 = vmatpush1.msra.mxu0 0.0
        %6789 = vmatprep.subr.mxu0 0.0
        %6790 = vmatpush1.msra.mxu0 0.0
        %6791 = vmatprep.subr.mxu0 0.0
        %6792 = vmatpush1.msra.mxu0 0.0
        %6793 = vmatprep.subr.mxu0 0.0
        %6794 = vmatpush1.msra.mxu0 0.0
        %6795 = vmatprep.subr.mxu0 0.0
        %6796 = vmatpush1.msra.mxu0 0.0
        %6797 = vmatprep.subr.mxu0 0.0
        %6798 = vmatpush1.msra.mxu0 0.0
        %6799 = vmatprep.mubr.f32.mxu0 0.0
        %6800 = vmatmul.mubr.f32.gmra.mrb[0].mxu0 %v6733
        %v6801 = vpop.f32.mrb[0].mxu0
        %v6802 = vadd.f32 %v6731, %v6801
        %v6803 = vpop.f32.mrb[0].mxu0
        %6804 = vdwg.mxu0
        %v6805 = vmul.f32 %v6802, 0.5
        %v6806 = vmul.f32 %v6802, 0.70710677
        %v6807 = verf.f32.pop %v6806
        %v6808 = vadd.f32 %v6807, 1.0
        %v6809 = vmul.f32 %v6805, %v6808
        %v6810 = vlaneseq
        %v6811 = vshrl.u32 %v6810, 7
        %v6812 = vsub.s32 7, %v6811
        %v6813 = vrot.slane %v6123, %v6812
        %v6815 = vsel %vm3612, %v6809, 0
        %6817 = vmatprep.subr.mxu0 0.0
        %6818 = vmatpush1.msra.mxu0 %v6120
        %6819 = vmatprep.subr.mxu0 0.0
        %6820 = vmatpush1.msra.mxu0 %v6121
        %6821 = vmatprep.subr.mxu0 0.0
        %6822 = vmatpush1.msra.mxu0 0.0
        %6823 = vmatprep.subr.mxu0 0.0
        %6824 = vmatpush1.msra.mxu0 0.0
        %6825 = vmatprep.subr.mxu0 0.0
        %6826 = vmatpush1.msra.mxu0 0.0
        %6827 = vmatprep.subr.mxu0 0.0
        %6828 = vmatpush1.msra.mxu0 0.0
        %6829 = vmatprep.subr.mxu0 0.0
        %6830 = vmatpush1.msra.mxu0 0.0
        %6831 = vmatprep.subr.mxu0 0.0
        %6832 = vmatpush1.msra.mxu0 0.0
        %6833 = vmatprep.subr.mxu0 0.0
        %6834 = vmatpush1.msra.mxu0 0.0
        %6835 = vmatprep.subr.mxu0 0.0
        %6836 = vmatpush1.msra.mxu0 0.0
        %6837 = vmatprep.subr.mxu0 0.0
        %6838 = vmatpush1.msra.mxu0 0.0
        %6839 = vmatprep.subr.mxu0 0.0
        %6840 = vmatpush1.msra.mxu0 0.0
        %6841 = vmatprep.subr.mxu0 0.0
        %6842 = vmatpush1.msra.mxu0 0.0
        %6843 = vmatprep.subr.mxu0 0.0
        %6844 = vmatpush1.msra.mxu0 0.0
        %6845 = vmatprep.subr.mxu0 0.0
        %6846 = vmatpush1.msra.mxu0 0.0
        %6847 = vmatprep.subr.mxu0 0.0
        %6848 = vmatpush1.msra.mxu0 0.0
        %6849 = vmatprep.subr.mxu0 0.0
        %6850 = vmatpush1.msra.mxu0 0.0
        %6851 = vmatprep.subr.mxu0 0.0
        %6852 = vmatpush1.msra.mxu0 0.0
        %6853 = vmatprep.subr.mxu0 0.0
        %6854 = vmatpush1.msra.mxu0 0.0
        %6855 = vmatprep.subr.mxu0 0.0
        %6856 = vmatpush1.msra.mxu0 0.0
        %6857 = vmatprep.subr.mxu0 0.0
        %6858 = vmatpush1.msra.mxu0 0.0
        %6859 = vmatprep.subr.mxu0 0.0
        %6860 = vmatpush1.msra.mxu0 0.0
        %6861 = vmatprep.subr.mxu0 0.0
        %6862 = vmatpush1.msra.mxu0 0.0
        %6863 = vmatprep.subr.mxu0 0.0
        %6864 = vmatpush1.msra.mxu0 0.0
        %6865 = vmatprep.subr.mxu0 0.0
        %6866 = vmatpush1.msra.mxu0 0.0
        %6867 = vmatprep.subr.mxu0 0.0
        %6868 = vmatpush1.msra.mxu0 0.0
        %6869 = vmatprep.subr.mxu0 0.0
        %6870 = vmatpush1.msra.mxu0 0.0
        %6871 = vmatprep.subr.mxu0 0.0
        %6872 = vmatpush1.msra.mxu0 0.0
        %6873 = vmatprep.subr.mxu0 0.0
        %6874 = vmatpush1.msra.mxu0 0.0
        %6875 = vmatprep.subr.mxu0 0.0
        %6876 = vmatpush1.msra.mxu0 0.0
        %6877 = vmatprep.subr.mxu0 0.0
        %6878 = vmatpush1.msra.mxu0 0.0
        %6879 = vmatprep.subr.mxu0 0.0
        %6880 = vmatpush1.msra.mxu0 0.0
        %6881 = vmatprep.mubr.f32.mxu0 0.0
        %6882 = vmatmul.mubr.f32.gmra.mrb[0].mxu0 %v6815
        %v6883 = vpop.f32.mrb[0].mxu0
        %v6884 = vadd.f32 %v6813, %v6883
        %v6885 = vpop.f32.mrb[0].mxu0
        %6886 = vdwg.mxu0
        %v6887 = vadd.f32 %v6727, %v6884
        %v6888 = vsel %vm3612, %v6887, 0.0
        %6889 = vadd.xlane.f32.xlu0 %v6888
        %v6890 = vpop.xlane.xlu0 %6889
        %v6891 = vmul.f32 %v6890, %v4196
        %v6892 = vsub.f32 %v6887, %v6891
        %v6893 = vmul.f32 %v6892, %v6892
        %v6894 = vsel %vm3612, %v6893, 0.0
        %6895 = vadd.xlane.f32.xlu0 %v6894
        %v6896 = vpop.xlane.xlu0 %6895
        %v6897 = vmul.f32 %v6896, %v4196
        %v6898 = vadd.f32 %v6897, 1e-05
        %v6899 = vrsqrt.pop %v6898
        %v6900 = vmul.f32 %v6892, %v6899
        %v6901 = vlaneseq
        %v6902 = vshrl.u32 %v6901, 7
        %v6903 = vsub.s32 0, %v6902
        %v6904 = vrot.slane %v6124, %v6903
        %v6905 = vmul.f32 %v6900, %v6904
        %v6906 = vlaneseq
        %v6907 = vshrl.u32 %v6906, 7
        %v6908 = vsub.s32 1, %v6907
        %v6909 = vrot.slane %v6124, %v6908
        %v6910 = vadd.f32 %v6905, %v6909
        %v6911 = vsel %vm3612, %v6910, 0.0
        %6912 = vadd.xlane.f32.xlu0 %v6911
        %v6913 = vpop.xlane.xlu0 %6912
        %v6914 = vmul.f32 %v6913, %v4196
        %v6915 = vsub.f32 %v6910, %v6914
        %v6916 = vmul.f32 %v6915, %v6915
        %v6917 = vsel %vm3612, %v6916, 0.0
        %6918 = vadd.xlane.f32.xlu0 %v6917
        %v6919 = vpop.xlane.xlu0 %6918
        %v6920 = vmul.f32 %v6919, %v4196
        %v6921 = vadd.f32 %v6920, 1e-05
        %v6922 = vrsqrt.pop %v6921
        %v6923 = vmul.f32 %v6915, %v6922
        %v6924 = vlaneseq
        %v6925 = vshrl.u32 %v6924, 7
        %v6926 = vsub.s32 1, %v6925
        %v6927 = vrot.slane %v5231, %v6926
        %v6928 = vmul.f32 %v6923, %v6927
        %v6929 = vlaneseq
        %v6930 = vshrl.u32 %v6929, 7
        %v6931 = vsub.s32 2, %v6930
        %v6932 = vrot.slane %v5231, %v6931
        %v6933 = vadd.f32 %v6928, %v6932
        %v6934 = vsel %vm3612, %v6933, 0.0
        %v6935 = vrot.slane %v6934, 4
        %v6936 = vadd.f32 %v6934, %v6935
        %v6937 = vrot.slane %v6936, 2
        %v6938 = vadd.f32 %v6936, %v6937
        %v6939 = vrot.slane %v6938, 1
        %v6940 = vadd.f32 %v6938, %v6939
        %v6941 = vmul.f32 %v6940, %v3513
        %v6942 = vld [vmem:[#allocation20] sm:$0xff]
        %v6943 = vld [vmem:[#allocation20 + $0x8] sm:$0xff]
        %v6944 = vld [vmem:[#allocation20 + $0x10] sm:$0xff]
        %v6945 = vld [vmem:[#allocation20 + $0x18] sm:$0xff]
        %v6946 = vld [vmem:[#allocation20 + $0x20] sm:$0xff]
        %v6947 = vld [vmem:[#allocation20 + $0x28] sm:$0xff]
        %v6948 = vld [vmem:[#allocation20 + $0x30] sm:$0xff]
        %v6949 = vld [vmem:[#allocation20 + $0x38] sm:$0xff]
        %v6951 = vsel %vm3612, %v5229, 0
        %6953 = vmatprep.subr.mxu0 0.0
        %6954 = vmatpush1.msra.mxu0 %v6946
        %6955 = vmatprep.subr.mxu0 0.0
        %6956 = vmatpush1.msra.mxu0 %v6947
        %6957 = vmatprep.subr.mxu0 0.0
        %6958 = vmatpush1.msra.mxu0 0.0
        %6959 = vmatprep.subr.mxu0 0.0
        %6960 = vmatpush1.msra.mxu0 0.0
        %6961 = vmatprep.subr.mxu0 0.0
        %6962 = vmatpush1.msra.mxu0 0.0
        %6963 = vmatprep.subr.mxu0 0.0
        %6964 = vmatpush1.msra.mxu0 0.0
        %6965 = vmatprep.subr.mxu0 0.0
        %6966 = vmatpush1.msra.mxu0 0.0
        %6967 = vmatprep.subr.mxu0 0.0
        %6968 = vmatpush1.msra.mxu0 0.0
        %6969 = vmatprep.subr.mxu0 0.0
        %6970 = vmatpush1.msra.mxu0 0.0
        %6971 = vmatprep.subr.mxu0 0.0
        %6972 = vmatpush1.msra.mxu0 0.0
        %6973 = vmatprep.subr.mxu0 0.0
        %6974 = vmatpush1.msra.mxu0 0.0
        %6975 = vmatprep.subr.mxu0 0.0
        %6976 = vmatpush1.msra.mxu0 0.0
        %6977 = vmatprep.subr.mxu0 0.0
        %6978 = vmatpush1.msra.mxu0 0.0
        %6979 = vmatprep.subr.mxu0 0.0
        %6980 = vmatpush1.msra.mxu0 0.0
        %6981 = vmatprep.subr.mxu0 0.0
        %6982 = vmatpush1.msra.mxu0 0.0
        %6983 = vmatprep.subr.mxu0 0.0
        %6984 = vmatpush1.msra.mxu0 0.0
        %6985 = vmatprep.subr.mxu0 0.0
        %6986 = vmatpush1.msra.mxu0 0.0
        %6987 = vmatprep.subr.mxu0 0.0
        %6988 = vmatpush1.msra.mxu0 0.0
        %6989 = vmatprep.subr.mxu0 0.0
        %6990 = vmatpush1.msra.mxu0 0.0
        %6991 = vmatprep.subr.mxu0 0.0
        %6992 = vmatpush1.msra.mxu0 0.0
        %6993 = vmatprep.subr.mxu0 0.0
        %6994 = vmatpush1.msra.mxu0 0.0
        %6995 = vmatprep.subr.mxu0 0.0
        %6996 = vmatpush1.msra.mxu0 0.0
        %6997 = vmatprep.subr.mxu0 0.0
        %6998 = vmatpush1.msra.mxu0 0.0
        %6999 = vmatprep.subr.mxu0 0.0
        %7000 = vmatpush1.msra.mxu0 0.0
        %7001 = vmatprep.subr.mxu0 0.0
        %7002 = vmatpush1.msra.mxu0 0.0
        %7003 = vmatprep.subr.mxu0 0.0
        %7004 = vmatpush1.msra.mxu0 0.0
        %7005 = vmatprep.subr.mxu0 0.0
        %7006 = vmatpush1.msra.mxu0 0.0
        %7007 = vmatprep.subr.mxu0 0.0
        %7008 = vmatpush1.msra.mxu0 0.0
        %7009 = vmatprep.subr.mxu0 0.0
        %7010 = vmatpush1.msra.mxu0 0.0
        %7011 = vmatprep.subr.mxu0 0.0
        %7012 = vmatpush1.msra.mxu0 0.0
        %7013 = vmatprep.subr.mxu0 0.0
        %7014 = vmatpush1.msra.mxu0 0.0
        %7015 = vmatprep.subr.mxu0 0.0
        %7016 = vmatpush1.msra.mxu0 0.0
        %7017 = vmatprep.mubr.f32.mxu0 0.0
        %7018 = vmatmul.mubr.f32.gmra.mrb[0].mxu0 %v6951
        %v7019 = vpop.f32.mrb[0].mxu0
        %v7020 = vadd.f32 0.0, %v7019
        %v7021 = vpop.f32.mrb[0].mxu0
        %7022 = vdwg.mxu0
        %v7024 = vsel %vm931, %v3514, 0
        %7026 = vmatprep.subr.mxu0 0.0
        %7027 = vmatpush1.msra.mxu0 %v6942
        %7028 = vmatprep.subr.mxu0 0.0
        %7029 = vmatpush1.msra.mxu0 %v6943
        %7030 = vmatprep.subr.mxu0 0.0
        %7031 = vmatpush1.msra.mxu0 %v6944
        %7032 = vmatprep.subr.mxu0 0.0
        %7033 = vmatpush1.msra.mxu0 %v6945
        %7034 = vmatprep.subr.mxu0 0.0
        %7035 = vmatpush1.msra.mxu0 0.0
        %7036 = vmatprep.subr.mxu0 0.0
        %7037 = vmatpush1.msra.mxu0 0.0
        %7038 = vmatprep.subr.mxu0 0.0
        %7039 = vmatpush1.msra.mxu0 0.0
        %7040 = vmatprep.subr.mxu0 0.0
        %7041 = vmatpush1.msra.mxu0 0.0
        %7042 = vmatprep.subr.mxu0 0.0
        %7043 = vmatpush1.msra.mxu0 0.0
        %7044 = vmatprep.subr.mxu0 0.0
        %7045 = vmatpush1.msra.mxu0 0.0
        %7046 = vmatprep.subr.mxu0 0.0
        %7047 = vmatpush1.msra.mxu0 0.0
        %7048 = vmatprep.subr.mxu0 0.0
        %7049 = vmatpush1.msra.mxu0 0.0
        %7050 = vmatprep.subr.mxu0 0.0
        %7051 = vmatpush1.msra.mxu0 0.0
        %7052 = vmatprep.subr.mxu0 0.0
        %7053 = vmatpush1.msra.mxu0 0.0
        %7054 = vmatprep.subr.mxu0 0.0
        %7055 = vmatpush1.msra.mxu0 0.0
        %7056 = vmatprep.subr.mxu0 0.0
        %7057 = vmatpush1.msra.mxu0 0.0
        %7058 = vmatprep.subr.mxu0 0.0
        %7059 = vmatpush1.msra.mxu0 0.0
        %7060 = vmatprep.subr.mxu0 0.0
        %7061 = vmatpush1.msra.mxu0 0.0
        %7062 = vmatprep.subr.mxu0 0.0
        %7063 = vmatpush1.msra.mxu0 0.0
        %7064 = vmatprep.subr.mxu0 0.0
        %7065 = vmatpush1.msra.mxu0 0.0
        %7066 = vmatprep.subr.mxu0 0.0
        %7067 = vmatpush1.msra.mxu0 0.0
        %7068 = vmatprep.subr.mxu0 0.0
        %7069 = vmatpush1.msra.mxu0 0.0
        %7070 = vmatprep.subr.mxu0 0.0
        %7071 = vmatpush1.msra.mxu0 0.0
        %7072 = vmatprep.subr.mxu0 0.0
        %7073 = vmatpush1.msra.mxu0 0.0
        %7074 = vmatprep.subr.mxu0 0.0
        %7075 = vmatpush1.msra.mxu0 0.0
        %7076 = vmatprep.subr.mxu0 0.0
        %7077 = vmatpush1.msra.mxu0 0.0
        %7078 = vmatprep.subr.mxu0 0.0
        %7079 = vmatpush1.msra.mxu0 0.0
        %7080 = vmatprep.subr.mxu0 0.0
        %7081 = vmatpush1.msra.mxu0 0.0
        %7082 = vmatprep.subr.mxu0 0.0
        %7083 = vmatpush1.msra.mxu0 0.0
        %7084 = vmatprep.subr.mxu0 0.0
        %7085 = vmatpush1.msra.mxu0 0.0
        %7086 = vmatprep.subr.mxu0 0.0
        %7087 = vmatpush1.msra.mxu0 0.0
        %7088 = vmatprep.subr.mxu0 0.0
        %7089 = vmatpush1.msra.mxu0 0.0
        %7090 = vmatprep.mubr.f32.mxu0 0.0
        %7091 = vmatmul.mubr.f32.gmra.mrb[0].mxu0 %v7024
        %v7092 = vpop.f32.mrb[0].mxu0
        %v7093 = vadd.f32 %v7020, %v7092
        %v7094 = vpop.f32.mrb[0].mxu0
        %7095 = vdwg.mxu0
        %v7097 = vsel %vm3612, %v6941, 0
        %7099 = vmatprep.subr.mxu0 0.0
        %7100 = vmatpush1.msra.mxu0 %v6948
        %7101 = vmatprep.subr.mxu0 0.0
        %7102 = vmatpush1.msra.mxu0 %v6949
        %7103 = vmatprep.subr.mxu0 0.0
        %7104 = vmatpush1.msra.mxu0 0.0
        %7105 = vmatprep.subr.mxu0 0.0
        %7106 = vmatpush1.msra.mxu0 0.0
        %7107 = vmatprep.subr.mxu0 0.0
        %7108 = vmatpush1.msra.mxu0 0.0
        %7109 = vmatprep.subr.mxu0 0.0
        %7110 = vmatpush1.msra.mxu0 0.0
        %7111 = vmatprep.subr.mxu0 0.0
        %7112 = vmatpush1.msra.mxu0 0.0
        %7113 = vmatprep.subr.mxu0 0.0
        %7114 = vmatpush1.msra.mxu0 0.0
        %7115 = vmatprep.subr.mxu0 0.0
        %7116 = vmatpush1.msra.mxu0 0.0
        %7117 = vmatprep.subr.mxu0 0.0
        %7118 = vmatpush1.msra.mxu0 0.0
        %7119 = vmatprep.subr.mxu0 0.0
        %7120 = vmatpush1.msra.mxu0 0.0
        %7121 = vmatprep.subr.mxu0 0.0
        %7122 = vmatpush1.msra.mxu0 0.0
        %7123 = vmatprep.subr.mxu0 0.0
        %7124 = vmatpush1.msra.mxu0 0.0
        %7125 = vmatprep.subr.mxu0 0.0
        %7126 = vmatpush1.msra.mxu0 0.0
        %7127 = vmatprep.subr.mxu0 0.0
        %7128 = vmatpush1.msra.mxu0 0.0
        %7129 = vmatprep.subr.mxu0 0.0
        %7130 = vmatpush1.msra.mxu0 0.0
        %7131 = vmatprep.subr.mxu0 0.0
        %7132 = vmatpush1.msra.mxu0 0.0
        %7133 = vmatprep.subr.mxu0 0.0
        %7134 = vmatpush1.msra.mxu0 0.0
        %7135 = vmatprep.subr.mxu0 0.0
        %7136 = vmatpush1.msra.mxu0 0.0
        %7137 = vmatprep.subr.mxu0 0.0
        %7138 = vmatpush1.msra.mxu0 0.0
        %7139 = vmatprep.subr.mxu0 0.0
        %7140 = vmatpush1.msra.mxu0 0.0
        %7141 = vmatprep.subr.mxu0 0.0
        %7142 = vmatpush1.msra.mxu0 0.0
        %7143 = vmatprep.subr.mxu0 0.0
        %7144 = vmatpush1.msra.mxu0 0.0
        %7145 = vmatprep.subr.mxu0 0.0
        %7146 = vmatpush1.msra.mxu0 0.0
        %7147 = vmatprep.subr.mxu0 0.0
        %7148 = vmatpush1.msra.mxu0 0.0
        %7149 = vmatprep.subr.mxu0 0.0
        %7150 = vmatpush1.msra.mxu0 0.0
        %7151 = vmatprep.subr.mxu0 0.0
        %7152 = vmatpush1.msra.mxu0 0.0
        %7153 = vmatprep.subr.mxu0 0.0
        %7154 = vmatpush1.msra.mxu0 0.0
        %7155 = vmatprep.subr.mxu0 0.0
        %7156 = vmatpush1.msra.mxu0 0.0
        %7157 = vmatprep.subr.mxu0 0.0
        %7158 = vmatpush1.msra.mxu0 0.0
        %7159 = vmatprep.subr.mxu0 0.0
        %7160 = vmatpush1.msra.mxu0 0.0
        %7161 = vmatprep.subr.mxu0 0.0
        %7162 = vmatpush1.msra.mxu0 0.0
        %7163 = vmatprep.mubr.f32.mxu0 0.0
        %7164 = vmatmul.mubr.f32.gmra.mrb[0].mxu0 %v7097
        %v7165 = vpop.f32.mrb[0].mxu0
        %v7166 = vadd.f32 0.0, %v7165
        %v7167 = vpop.f32.mrb[0].mxu0
        %7168 = vdwg.mxu0
        %v7169 = vadd.f32 %v7093, %v7166
        %v7170 = vld [vmem:[%s19] sm:$0x1]
        %v7171 = vadd.f32 %v7169, %v7170
        %v7172 = vxor.u32 %v7171, 2147483648
        %v7173 = vmul.f32 %v7172, 1.442695
        %v7174 = vpow.pop %v7173
        %v7175 = vadd.f32 %v7174, 1.0
        %v7176 = vrcp.pop %v7175
        %v7177 = vmul.f32 1.0, %v7176
        %vm7178 = vcmask 16384
        %7179 = vst.msk [vmem:[%s814] sm:$0x1] %vm7178, %v7177
        %s7180 = sand.u32 %s484, 1
        %s7181 = scalar_lea.sflag [#allocation4], %s7180
        %s7182 = sand.u32 %s484, 1
        %s7183 = scalar_lea.vmem [#allocation22], %s7182
        // Predicated region
        $region149: #{_lambda_.1} parent=99 // pred_check
          %p7184 = pneg %p494
        $region150: #{_lambda_.1} parent=99 // pred_check_branch
          %7186 = sbr.rel (%p7184) target = $region152
        $region151: #{_lambda_.1} parent=99 // pred_region
          %s7188 = ssub.s32 16, 16
          %7189 = vsyncadd %s7181, %s7188
          %s7190 = smul.addr %s41, 16
          %s7191 = scalar_lea.hbm %s20, %s7190
          %s7193 = sshll.u32 %s7183, 4
          %s7194 = int_to_ptr.vmem [resolvable:$true] %s7193
          %7196 = dma.vmem_to_hbm [thread:$0]  %s7194, 16, %s7191, %s7181
        $region152: #{_lambda_.1} parent=99 // pred_fallthru
          _
      $region100: #{_lambda_.1} parent=5 // pred_fallthru
        _
      %p7197 = scmp.le.s32.totalorder 2, %s36
      // Predicated region
      $region153: #{_lambda_.1} parent=5 // pred_check
        %p7198 = pneg %p7197
      $region154: #{_lambda_.1} parent=5 // pred_check_branch
        %7200 = sbr.rel (%p7198) target = $region156
      $region155: #{_lambda_.1} parent=5 // pred_region
        %s7201 = ssub.s32 %s36, 2
        // Predicated region
        $region157: #{_lambda_.1} parent=155 // pred_check
          %p7202 = pneg %p500
        $region158: #{_lambda_.1} parent=155 // pred_check_branch
          %7204 = sbr.rel (%p7202) target = $region160
        $region159: #{_lambda_.1} parent=155 // pred_region
          %s7205 = sand.u32 %s485, 1
          %s7206 = scalar_lea.sflag [#allocation4], %s7205
          %s7207 = sand.u32 %s485, 1
          %s7208 = scalar_lea.vmem [#allocation22], %s7207
          %7209 = dma.done %s7206, 16
        $region160: #{_lambda_.1} parent=155 // pred_fallthru
          _
      $region156: #{_lambda_.1} parent=5 // pred_fallthru
        _
    $region6: #{_lambda_.1} parent=1 // loop_footer
      %s40 = sadd.s32 1, %s36
    $region7: #{_lambda_.1} parent=1 // loop_footer_branch
      %35 = sbr.rel target = $region3
    $region8: #{_lambda_.1} parent=1 // loop_exit
      _
    %7210 = vsyncpa [#allocation3], 1
    %s7211 = scalar_lea.sflag [#allocation3], 1
    %7212 = vsyncpa %s7211, 1
    %7213 = vsyncpa [#allocation6], 1
    %7214 = vsyncpa [#allocation9], 1
    %7215 = vsyncpa [#allocation12], 1
    %7216 = vsyncpa [#allocation15], 1
    %7217 = vsyncpa [#allocation18], 1
    %7218 = vsyncpa [#allocation21], 1
    %7219 = vsyncpa [#allocation4], 1
    %s7220 = scalar_lea.sflag [#allocation4], 1
    %7221 = vsyncpa %s7220, 1

</llo_original>
